<compile_context>
chip_gen: v7x
topology: tpu7x:2x2x1
jax: 0.10.0
libtpu: 0.0.40
codegen_flags: <defaults>
</compile_context>

<pallas_src>
import jax
import jax.numpy as jnp
from jax import lax
from jax.experimental import pallas as pl
from jax.experimental.pallas import tpu as pltpu

IN_FEATURES = 64 * 3 * 32 * 32   # 196608
OUT_FEATURES = 10


def linear_kernel(x_ref, w_ref, o_ref):
    """One K-tile of one reduction-half:  o[c] += x_tile @ w_tile.T"""
    k = pl.program_id(1)

    @pl.when(k == 0)
    def _init():
        o_ref[...] = jnp.zeros_like(o_ref)

    # x_ref: (B, tk), w_ref: (N, tk) -> contract the lane (K) dims -> (B, N)
    partial = lax.dot_general(
        x_ref[...], w_ref[...],
        dimension_numbers=(((1,), (1,)), ((), ())),
        preferred_element_type=jnp.float32,
    )
    o_ref[...] += partial[None, :, :]


def linear_pallas(x, w, b, *, tk=32768, num_splits=2):
    """x: (B, K) f32, w: (N, K) f32 (native PyTorch layout), b: (N,) f32."""
    B, K = x.shape
    N, Kw = w.shape
    assert K == Kw
    assert K % (num_splits * tk) == 0, "K must divide evenly into splits*tk"
    ksteps = K // (num_splits * tk)

    partials = pl.pallas_call(
        linear_kernel,
        out_shape=jax.ShapeDtypeStruct((num_splits, B, N), jnp.float32),
        grid_spec=pltpu.PrefetchScalarGridSpec(
            num_scalar_prefetch=0,
            grid=(num_splits, ksteps),
            in_specs=[
                # x tile: (B, tk), lane-dense along K
                pl.BlockSpec((B, tk), lambda c, k: (0, c * ksteps + k)),
                # weight tile: (N, tk), lane-dense along K (no wrapper transpose)
                pl.BlockSpec((N, tk), lambda c, k: (0, c * ksteps + k)),
            ],
            # each reduction-half owns its own (1, B, N) output slab
            out_specs=pl.BlockSpec((1, B, N), lambda c, k: (c, 0, 0)),
        ),
        compiler_params=pltpu.CompilerParams(
            # leading split axis is parallel (uses both TCs on v7x);
            # the K axis is a reduction so it stays "arbitrary"
            dimension_semantics=("parallel", "arbitrary"),
        ),
    )(x, w)

    # Combine the two half-reductions and add the bias (tiny: 2*B*N floats).
    return partials.sum(axis=0) + b.reshape(1, N).astype(partials.dtype)


if __name__ == "__main__":
    key = jax.random.PRNGKey(0)
    kx, kw, kb = jax.random.split(key, 3)

    B = 2  # small batch; feature dim is fixed by the module definition
    # Deterministic parameter init (matches nn.Linear's uniform(+-1/sqrt(in)) range).
    bound = 1.0 / (IN_FEATURES ** 0.5)
    w = jax.random.uniform(
        kw, (OUT_FEATURES, IN_FEATURES), jnp.float32, -bound, bound
    )
    b = jax.random.uniform(kb, (OUT_FEATURES,), jnp.float32, -bound, bound)
    x = jax.random.normal(kx, (B, IN_FEATURES), jnp.float32)

    out = linear_pallas(x, w, b)
    out = jax.block_until_ready(out)

    # Full-precision reference (DEFAULT TPU matmul precision would add bf16
    # noise comparable to the tolerance over K=196608).
    ref = jnp.dot(x, w.T, precision=lax.Precision.HIGHEST) + b[None, :]
    assert out.shape == (B, OUT_FEATURES)
    assert jnp.allclose(out, ref, atol=1e-3, rtol=1e-3), "mismatch vs reference"

    print("KERNEL_OK")
</pallas_src>

<mosaic_0001>
module attributes {stable_mosaic.version = 11 : i64} {
  func.func @linear_kernel(%arg0: i32, %arg1: i32, %arg2: memref<2x32768xf32, #tpu.memory_space<vmem>>, %arg3: memref<10x32768xf32, #tpu.memory_space<vmem>>, %arg4: memref<1x2x10xf32, #tpu.memory_space<vmem>>) attributes {dimension_semantics = [#tpu.dimension_semantics<parallel>, #tpu.dimension_semantics<arbitrary>], iteration_bounds = array<i64: 2, 3>, scalar_prefetch = 0 : i64, scratch_operands = 0 : i64, tpu.core_type = #tpu.core_type<tc>, window_params = [{transform_indices = @transform_0, window_bounds = array<i64: 2, 32768>}, {transform_indices = @transform_1, window_bounds = array<i64: 10, 32768>}, {transform_indices = @transform_2, window_bounds = array<i64: 1, 2, 10>}]} {
    %c0_i32 = arith.constant 0 : i32
    %0 = arith.cmpi eq, %arg1, %c0_i32 : i32
    %1 = arith.extui %0 : i1 to i32
    %c0_i32_0 = arith.constant 0 : i32
    %2 = arith.cmpi ne, %1, %c0_i32_0 : i32
    scf.if %2 {
      %cst_10 = arith.constant 0.000000e+00 : f32
      %10 = vector.broadcast %cst_10 : f32 to vector<1x2x10xf32>
      %c0_11 = arith.constant 0 : index
      %c0_12 = arith.constant 0 : index
      %c0_13 = arith.constant 0 : index
      %11 = vector.load %arg4[%c0_11, %c0_12, %c0_13] : memref<1x2x10xf32, #tpu.memory_space<vmem>>, vector<1x2x10xf32>
      tpu.vector_store %arg4[%c0_11, %c0_12, %c0_13], %10 {strides = array<i32>} : memref<1x2x10xf32, #tpu.memory_space<vmem>>, vector<1x2x10xf32>,
    } else {
    }
    %c0 = arith.constant 0 : index
    %c0_1 = arith.constant 0 : index
    %3 = vector.load %arg2[%c0, %c0_1] : memref<2x32768xf32, #tpu.memory_space<vmem>>, vector<2x32768xf32>
    %c0_2 = arith.constant 0 : index
    %c0_3 = arith.constant 0 : index
    %4 = vector.load %arg3[%c0_2, %c0_3] : memref<10x32768xf32, #tpu.memory_space<vmem>>, vector<10x32768xf32>
    %cst = arith.constant dense<0.000000e+00> : vector<2x10xf32>
    %5 = tpu.matmul %3, %4, %cst {dimension_numbers = #tpu.dot_dimension_numbers<[1], [1], [0], [0], [0, 0, 1, 0], [], []>} : vector<2x32768xf32>, vector<10x32768xf32>, vector<2x10xf32> -> vector<2x10xf32>
    %c0_4 = arith.constant 0 : index
    %c0_5 = arith.constant 0 : index
    %c0_6 = arith.constant 0 : index
    %6 = vector.load %arg4[%c0_4, %c0_5, %c0_6] : memref<1x2x10xf32, #tpu.memory_space<vmem>>, vector<1x2x10xf32>
    %7 = vector.shape_cast %5 : vector<2x10xf32> to vector<1x2x10xf32>
    %8 = arith.addf %6, %7 : vector<1x2x10xf32>
    %c0_7 = arith.constant 0 : index
    %c0_8 = arith.constant 0 : index
    %c0_9 = arith.constant 0 : index
    %9 = vector.load %arg4[%c0_7, %c0_8, %c0_9] : memref<1x2x10xf32, #tpu.memory_space<vmem>>, vector<1x2x10xf32>
    tpu.vector_store %arg4[%c0_7, %c0_8, %c0_9], %8 {strides = array<i32>} : memref<1x2x10xf32, #tpu.memory_space<vmem>>, vector<1x2x10xf32>,
    return
  }
  func.func @transform_0(%arg0: i32, %arg1: i32) -> (i32, i32) {
    %c3_i32 = arith.constant 3 : i32
    %0 = arith.muli %arg0, %c3_i32 : i32
    %1 = arith.addi %0, %arg1 : i32
    %c0_i32 = arith.constant 0 : i32
    %c0_i32_0 = arith.constant 0 : i32
    return %c0_i32, %1 : i32, i32
  }
  func.func @transform_1(%arg0: i32, %arg1: i32) -> (i32, i32) {
    %c3_i32 = arith.constant 3 : i32
    %0 = arith.muli %arg0, %c3_i32 : i32
    %1 = arith.addi %0, %arg1 : i32
    %c0_i32 = arith.constant 0 : i32
    %c0_i32_0 = arith.constant 0 : i32
    return %c0_i32, %1 : i32, i32
  }
  func.func @transform_2(%arg0: i32, %arg1: i32) -> (i32, i32, i32) {
    %c0_i32 = arith.constant 0 : i32
    %c0_i32_0 = arith.constant 0 : i32
    %c0_i32_1 = arith.constant 0 : i32
    return %arg0, %c0_i32, %c0_i32_0 : i32, i32, i32
  }
}

</mosaic_0001>

<llo_original>
// kernel: tpu_custom_call.1
$region0: #{tpu_custom_call.1}
  #allocation0 [shape = 'u32[]', space=smem, size = 0x4, offset = 0x4, fixed_abs, tag = 'smem constant byte address 0x4 - core index']
  #allocation1 [shape = 'u32[144,128]{1,0:T(1,128)}', space=vmem, size = 0x12000, scoped, tag = 'internal scratch']
  %s0 = inlined_call_operand.hbm [shape: f32[2,196608], index: 0, kind: input, shape index: {}]
  %s1 = inlined_call_operand.hbm [shape: f32[10,196608], index: 1, kind: input, shape index: {}]
  %s2 = inlined_call_operand.hbm [shape: f32[2,2,10], index: 2, kind: output, shape index: {}]
  %s3 = sld [smem:[#allocation0]]
  $region53: #{tpu_custom_call.1} parent=0
    _
  %s5 = ssub.s32 1, %s3
  %s6 = scalar_select 0, %s5, %s3
  $region1: #{tpu_custom_call.1} parent=0
    #allocation2 [shape = 'u8[524288]{0}', space=vmem, size = 0x80000, scoped, tag = 'input window, operand 0']
    #allocation3 [shape = 's32[2]{0}', space=sflag, size = 0x8, scoped, tag = 'scoped memory for tpu_custom_call.1']
    #allocation4 [shape = 's32[2]{0}', space=sflag, size = 0x8, scoped, tag = 'scoped memory for tpu_custom_call.1']
    #allocation5 [shape = 'u8[4194304]{0}', space=vmem, size = 0x400000, scoped, tag = 'input window, operand 1']
    #allocation6 [shape = 's32[2]{0}', space=sflag, size = 0x8, scoped, tag = 'scoped memory for tpu_custom_call.1']
    #allocation7 [shape = 'u8[2048]{0}', space=vmem, size = 0x800, scoped, tag = 'output window, operand 0']
    %7 = vsyncpa [#allocation3], 0
    %s8 = scalar_lea.sflag [#allocation3], 1
    %9 = vsyncpa %s8, 0
    %10 = vsyncpa [#allocation6], 0
    %s11 = scalar_lea.sflag [#allocation6], 1
    %12 = vsyncpa %s11, 0
    %13 = vsyncpa [#allocation4], 0
    %s14 = scalar_lea.sflag [#allocation4], 1
    %15 = vsyncpa %s14, 0
    loop: start=0, step=1, limit=8
    $region2: #{tpu_custom_call.1} parent=1 // loop_pre_header
      _
    $region3: #{tpu_custom_call.1} parent=1 // loop_header
      %s17 = sphi 0, %s21
      %p18 = scmp.ge.s32.totalorder %s17, 8
      %s24 = sphi 0, %s36
      %s25 = sphi 0, %s32
      %s26 = sphi 0, %s24
      %s27 = sphi 0, %s25
      %s28 = sphi 0, %s26
      %s29 = sphi 0, %s27
      %s43 = sphi 0, %s45
      %s46 = sphi 0, %s43
      %s47 = sphi 0, %s46
      %s63 = sphi 0, %s47
      %s73 = sphi 0, %s75
      %s76 = sphi 0, %s73
      %s77 = sphi 0, %s76
      %s93 = sphi 0, %s77
      %s99 = sphi 0, %s101
      %s102 = sphi 0, %s99
      %s103 = sphi 0, %s102
      %s119 = sphi 0, %s103
    $region4: #{tpu_custom_call.1} parent=1 // loop_header_branch
      %20 = sbr.rel (%p18) target = $region8
    $region5: #{tpu_custom_call.1} parent=1 // loop_body
      %s22 = ssub.s32 %s17, 1
      %s23 = ssub.s32 %s17, 2
      %s30 = sadd.s32 1, %s25
      %p31 = scmp.ge.s32.totalorder %s30, 3
      %s32 = scalar_select %p31, 0, %s30
      %s33 = sadd.s32 1, %s24
      %s34 = scalar_select %p31, %s33, %s24
      %p35 = scmp.ge.s32.totalorder %s34, 2
      %s36 = scalar_select %p35, 0, %s34
      %s37 = smul.u32 %s24, 3
      %s38 = sadd.s32 %s37, %s25
      %s39 = smul.u32 %s36, 3
      %s40 = sadd.s32 %s39, %s32
      %s41 = ssub.s32 %s38, %s40
      %p42 = scmp.eq.s32.totalorder %s41, 0
      %s44 = sadd.s32 %s43, 1
      %s45 = scalar_select %p42, %s43, %s44
      %p48 = pneg %p42
      %p49 = scmp.eq.s32.totalorder %s17, 5
      %p50 = por %p48, %p49
      %p51 = scmp.ne.s32.totalorder %s43, %s46
      %p52 = scmp.eq.s32.totalorder %s17, 0
      %p53 = por %p51, %p52
      %p54 = scmp.ne.s32.totalorder %s43, %s46
      %p55 = scmp.eq.s32.totalorder %s22, 5
      %p56 = por %p54, %p55
      %p57 = scmp.ne.s32.totalorder %s46, %s47
      %p58 = scmp.eq.s32.totalorder %s22, 0
      %p59 = por %p57, %p58
      %p60 = scmp.ne.s32.totalorder %s46, %s47
      %p61 = scmp.eq.s32.totalorder %s23, 5
      %p62 = por %p60, %p61
      %p64 = scmp.ne.s32.totalorder %s47, %s63
      %p65 = scmp.eq.s32.totalorder %s23, 0
      %p66 = por %p64, %p65
      %s67 = smul.u32 %s24, 3
      %s68 = sadd.s32 %s67, %s25
      %s69 = smul.u32 %s36, 3
      %s70 = sadd.s32 %s69, %s32
      %s71 = ssub.s32 %s68, %s70
      %p72 = scmp.eq.s32.totalorder %s71, 0
      %s74 = sadd.s32 %s73, 1
      %s75 = scalar_select %p72, %s73, %s74
      %p78 = pneg %p72
      %p79 = scmp.eq.s32.totalorder %s17, 5
      %p80 = por %p78, %p79
      %p81 = scmp.ne.s32.totalorder %s73, %s76
      %p82 = scmp.eq.s32.totalorder %s17, 0
      %p83 = por %p81, %p82
      %p84 = scmp.ne.s32.totalorder %s73, %s76
      %p85 = scmp.eq.s32.totalorder %s22, 5
      %p86 = por %p84, %p85
      %p87 = scmp.ne.s32.totalorder %s76, %s77
      %p88 = scmp.eq.s32.totalorder %s22, 0
      %p89 = por %p87, %p88
      %p90 = scmp.ne.s32.totalorder %s76, %s77
      %p91 = scmp.eq.s32.totalorder %s23, 5
      %p92 = por %p90, %p91
      %p94 = scmp.ne.s32.totalorder %s77, %s93
      %p95 = scmp.eq.s32.totalorder %s23, 0
      %p96 = por %p94, %p95
      %s97 = ssub.s32 %s24, %s36
      %p98 = scmp.eq.s32.totalorder %s97, 0
      %s100 = sadd.s32 %s99, 1
      %s101 = scalar_select %p98, %s99, %s100
      %p104 = pneg %p98
      %p105 = scmp.eq.s32.totalorder %s17, 5
      %p106 = por %p104, %p105
      %p107 = scmp.ne.s32.totalorder %s99, %s102
      %p108 = scmp.eq.s32.totalorder %s17, 0
      %p109 = por %p107, %p108
      %p110 = scmp.ne.s32.totalorder %s99, %s102
      %p111 = scmp.eq.s32.totalorder %s22, 5
      %p112 = por %p110, %p111
      %p113 = scmp.ne.s32.totalorder %s102, %s103
      %p114 = scmp.eq.s32.totalorder %s22, 0
      %p115 = por %p113, %p114
      %p116 = scmp.ne.s32.totalorder %s102, %s103
      %p117 = scmp.eq.s32.totalorder %s23, 5
      %p118 = por %p116, %p117
      %p120 = scmp.ne.s32.totalorder %s103, %s119
      %p121 = scmp.eq.s32.totalorder %s23, 0
      %p122 = por %p120, %p121
      %p123 = scmp.le.s32.totalorder 1, %s17
      %p124 = scmp.lt.s32.totalorder %s17, 7
      %p125 = pnand %p123, %p124
      %p126 = pneg %p125
      // Predicated region
      $region9: #{tpu_custom_call.1} parent=5 // pred_check
        _
      $region10: #{tpu_custom_call.1} parent=5 // pred_check_branch
        %128 = sbr.rel (%p125) target = $region12
      $region11: #{tpu_custom_call.1} parent=5 // pred_region
        %s129 = ssub.s32 %s17, 1
      $region12: #{tpu_custom_call.1} parent=5 // pred_fallthru
        _
      %p130 = scmp.lt.s32.totalorder %s17, 6
      // Predicated region
      $region13: #{tpu_custom_call.1} parent=5 // pred_check
        %p131 = pneg %p130
      $region14: #{tpu_custom_call.1} parent=5 // pred_check_branch
        %133 = sbr.rel (%p131) target = $region16
      $region15: #{tpu_custom_call.1} parent=5 // pred_region
        // Predicated region
        $region17: #{tpu_custom_call.1} parent=15 // pred_check
          %p134 = pneg %p53
        $region18: #{tpu_custom_call.1} parent=15 // pred_check_branch
          %136 = sbr.rel (%p134) target = $region20
        $region19: #{tpu_custom_call.1} parent=15 // pred_region
          %s137 = sand.u32 %s43, 1
          %s138 = scalar_lea.sflag [#allocation3], %s137
          %s139 = sand.u32 %s43, 1
          %s140 = smul.addr %s139, 512
          %s141 = scalar_lea.vmem [#allocation2], %s140
          %s142 = smul.u32 %s24, 3
          %s143 = sadd.s32 %s142, %s25
          %s144 = smul.u32 256, %s143
          %s146 = ssub.s32 8192, 8192
          %147 = vsyncadd %s138, %s146
          %s148 = smul.addr %s144, 32
          %s149 = scalar_lea.hbm %s0, %s148
          %s151 = sshll.u32 %s141, 4
          %s152 = int_to_ptr.vmem [resolvable:$true] %s151
          %154 = dma.hbm_to_vmem [thread:$0]  %s149, 8192, %s152, %s138
        $region20: #{tpu_custom_call.1} parent=15 // pred_fallthru
          _
        // Predicated region
        $region21: #{tpu_custom_call.1} parent=15 // pred_check
          %p155 = pneg %p83
        $region22: #{tpu_custom_call.1} parent=15 // pred_check_branch
          %157 = sbr.rel (%p155) target = $region24
        $region23: #{tpu_custom_call.1} parent=15 // pred_region
          %s158 = sand.u32 %s73, 1
          %s159 = scalar_lea.sflag [#allocation6], %s158
          %s160 = sand.u32 %s73, 1
          %s161 = smul.addr %s160, 4096
          %s162 = scalar_lea.vmem [#allocation5], %s161
          %s163 = smul.u32 %s24, 3
          %s164 = sadd.s32 %s163, %s25
          %s165 = smul.u32 256, %s164
          %s167 = ssub.s32 65536, 65536
          %168 = vsyncadd %s159, %s167
          %s169 = smul.addr %s165, 128
          %s170 = scalar_lea.hbm %s1, %s169
          %s171 = sshll.u32 %s162, 4
          %s172 = int_to_ptr.vmem [resolvable:$true] %s171
          %177 = dma.hbm_to_vmem [thread:$0]  %s170, 65536, %s172, %s159, 196608, 32768, 2048
        $region24: #{tpu_custom_call.1} parent=15 // pred_fallthru
          _
      $region16: #{tpu_custom_call.1} parent=5 // pred_fallthru
        _
      %p178 = scmp.le.s32.totalorder 1, %s17
      %p179 = scmp.lt.s32.totalorder %s17, 7
      %p180 = pnand %p178, %p179
      %p181 = pneg %p180
      // Predicated region
      $region25: #{tpu_custom_call.1} parent=5 // pred_check
        _
      $region26: #{tpu_custom_call.1} parent=5 // pred_check_branch
        %183 = sbr.rel (%p180) target = $region28
      $region27: #{tpu_custom_call.1} parent=5 // pred_region
        %s184 = ssub.s32 %s17, 1
        %s185 = sand.u32 %s46, 1
        %s186 = scalar_lea.sflag [#allocation3], %s185
        %s187 = sand.u32 %s46, 1
        %s188 = smul.addr %s187, 512
        %s189 = scalar_lea.vmem [#allocation2], %s188
        // Predicated region
        $region29: #{tpu_custom_call.1} parent=27 // pred_check
          %p190 = pneg %p59
        $region30: #{tpu_custom_call.1} parent=27 // pred_check_branch
          %192 = sbr.rel (%p190) target = $region32
        $region31: #{tpu_custom_call.1} parent=27 // pred_region
          %193 = dma.done %s186, 8192
        $region32: #{tpu_custom_call.1} parent=27 // pred_fallthru
          _
        %s194 = sand.u32 %s76, 1
        %s195 = scalar_lea.sflag [#allocation6], %s194
        %s196 = sand.u32 %s76, 1
        %s197 = smul.addr %s196, 4096
        %s198 = scalar_lea.vmem [#allocation5], %s197
        // Predicated region
        $region33: #{tpu_custom_call.1} parent=27 // pred_check
          %p199 = pneg %p89
        $region34: #{tpu_custom_call.1} parent=27 // pred_check_branch
          %201 = sbr.rel (%p199) target = $region36
        $region35: #{tpu_custom_call.1} parent=27 // pred_region
          %202 = dma.done %s195, 65536
        $region36: #{tpu_custom_call.1} parent=27 // pred_fallthru
          _
        %s203 = sand.u32 %s46, 1
        %s204 = scalar_lea.sflag [#allocation3], %s203
        %s205 = sand.u32 %s46, 1
        %s206 = smul.addr %s205, 512
        %s207 = scalar_lea.vmem [#allocation2], %s206
        %p208 = pneg %p59
        %p209 = pneg %p56
        %s210 = sand.u32 %s76, 1
        %s211 = scalar_lea.sflag [#allocation6], %s210
        %s212 = sand.u32 %s76, 1
        %s213 = smul.addr %s212, 4096
        %s214 = scalar_lea.vmem [#allocation5], %s213
        %p215 = pneg %p89
        %p216 = pneg %p86
        %p217 = pneg %p115
        %p218 = pneg %p112
        %s219 = sand.u32 %s102, 1
        %s220 = scalar_lea.sflag [#allocation4], %s219
        %s221 = sand.u32 %s102, 1
        %s222 = smul.addr %s221, 2
        %s223 = scalar_lea.vmem [#allocation7], %s222
        %s224 = smul.u32 %s26, 3
        %s225 = sadd.s32 %s224, %s27
        %s226 = smul.u32 256, %s225
        %s227 = smul.u32 %s26, 3
        %s228 = sadd.s32 %s227, %s27
        %s229 = smul.u32 256, %s228
        %p230 = scmp.eq.s32.totalorder %s27, 0
        // Predicated region
        $region37: #{tpu_custom_call.1} parent=27 // pred_check
          %p231 = pneg %p230
        $region38: #{tpu_custom_call.1} parent=27 // pred_check_branch
          %233 = sbr.rel (%p231) target = $region40
        $region39: #{tpu_custom_call.1} parent=27 // pred_region
          %vm234 = vcmask 74752
          %235 = vst.msk [vmem:[%s223] sm:$0x3] %vm234, 0.0
        $region40: #{tpu_custom_call.1} parent=27 // pred_fallthru
          _
        %v236 = vld [vmem:[%s189] sm:$0xff]
        %v237 = vld [vmem:[%s189 + $0x8] sm:$0xff]
        %v238 = vld [vmem:[%s189 + $0x10] sm:$0xff]
        %v239 = vld [vmem:[%s189 + $0x18] sm:$0xff]
        %v240 = vld [vmem:[%s189 + $0x20] sm:$0xff]
        %v241 = vld [vmem:[%s189 + $0x28] sm:$0xff]
        %v242 = vld [vmem:[%s189 + $0x30] sm:$0xff]
        %v243 = vld [vmem:[%s189 + $0x38] sm:$0xff]
        %v244 = vld [vmem:[%s189 + $0x40] sm:$0xff]
        %v245 = vld [vmem:[%s189 + $0x48] sm:$0xff]
        %v246 = vld [vmem:[%s189 + $0x50] sm:$0xff]
        %v247 = vld [vmem:[%s189 + $0x58] sm:$0xff]
        %v248 = vld [vmem:[%s189 + $0x60] sm:$0xff]
        %v249 = vld [vmem:[%s189 + $0x68] sm:$0xff]
        %v250 = vld [vmem:[%s189 + $0x70] sm:$0xff]
        %v251 = vld [vmem:[%s189 + $0x78] sm:$0xff]
        %v252 = vld [vmem:[%s189 + $0x80] sm:$0xff]
        %v253 = vld [vmem:[%s189 + $0x88] sm:$0xff]
        %v254 = vld [vmem:[%s189 + $0x90] sm:$0xff]
        %v255 = vld [vmem:[%s189 + $0x98] sm:$0xff]
        %v256 = vld [vmem:[%s189 + $0xa0] sm:$0xff]
        %v257 = vld [vmem:[%s189 + $0xa8] sm:$0xff]
        %v258 = vld [vmem:[%s189 + $0xb0] sm:$0xff]
        %v259 = vld [vmem:[%s189 + $0xb8] sm:$0xff]
        %v260 = vld [vmem:[%s189 + $0xc0] sm:$0xff]
        %v261 = vld [vmem:[%s189 + $0xc8] sm:$0xff]
        %v262 = vld [vmem:[%s189 + $0xd0] sm:$0xff]
        %v263 = vld [vmem:[%s189 + $0xd8] sm:$0xff]
        %v264 = vld [vmem:[%s189 + $0xe0] sm:$0xff]
        %v265 = vld [vmem:[%s189 + $0xe8] sm:$0xff]
        %v266 = vld [vmem:[%s189 + $0xf0] sm:$0xff]
        %v267 = vld [vmem:[%s189 + $0xf8] sm:$0xff]
        %v268 = vld [vmem:[%s189 + $0x100] sm:$0xff]
        %v269 = vld [vmem:[%s189 + $0x108] sm:$0xff]
        %v270 = vld [vmem:[%s189 + $0x110] sm:$0xff]
        %v271 = vld [vmem:[%s189 + $0x118] sm:$0xff]
        %v272 = vld [vmem:[%s189 + $0x120] sm:$0xff]
        %v273 = vld [vmem:[%s189 + $0x128] sm:$0xff]
        %v274 = vld [vmem:[%s189 + $0x130] sm:$0xff]
        %v275 = vld [vmem:[%s189 + $0x138] sm:$0xff]
        %v276 = vld [vmem:[%s189 + $0x140] sm:$0xff]
        %v277 = vld [vmem:[%s189 + $0x148] sm:$0xff]
        %v278 = vld [vmem:[%s189 + $0x150] sm:$0xff]
        %v279 = vld [vmem:[%s189 + $0x158] sm:$0xff]
        %v280 = vld [vmem:[%s189 + $0x160] sm:$0xff]
        %v281 = vld [vmem:[%s189 + $0x168] sm:$0xff]
        %v282 = vld [vmem:[%s189 + $0x170] sm:$0xff]
        %v283 = vld [vmem:[%s189 + $0x178] sm:$0xff]
        %v284 = vld [vmem:[%s189 + $0x180] sm:$0xff]
        %v285 = vld [vmem:[%s189 + $0x188] sm:$0xff]
        %v286 = vld [vmem:[%s189 + $0x190] sm:$0xff]
        %v287 = vld [vmem:[%s189 + $0x198] sm:$0xff]
        %v288 = vld [vmem:[%s189 + $0x1a0] sm:$0xff]
        %v289 = vld [vmem:[%s189 + $0x1a8] sm:$0xff]
        %v290 = vld [vmem:[%s189 + $0x1b0] sm:$0xff]
        %v291 = vld [vmem:[%s189 + $0x1b8] sm:$0xff]
        %v292 = vld [vmem:[%s189 + $0x1c0] sm:$0xff]
        %v293 = vld [vmem:[%s189 + $0x1c8] sm:$0xff]
        %v294 = vld [vmem:[%s189 + $0x1d0] sm:$0xff]
        %v295 = vld [vmem:[%s189 + $0x1d8] sm:$0xff]
        %v296 = vld [vmem:[%s189 + $0x1e0] sm:$0xff]
        %v297 = vld [vmem:[%s189 + $0x1e8] sm:$0xff]
        %v298 = vld [vmem:[%s189 + $0x1f0] sm:$0xff]
        %v299 = vld [vmem:[%s189 + $0x1f8] sm:$0xff]
        %v300 = vld [vmem:[%s198] sm:$0xff]
        %v301 = vld [vmem:[%s198 + $0x8] sm:$0xff]
        %v302 = vld [vmem:[%s198 + $0x10] sm:$0xff]
        %v303 = vld [vmem:[%s198 + $0x18] sm:$0xff]
        %v304 = vld [vmem:[%s198 + $0x20] sm:$0xff]
        %v305 = vld [vmem:[%s198 + $0x28] sm:$0xff]
        %v306 = vld [vmem:[%s198 + $0x30] sm:$0xff]
        %v307 = vld [vmem:[%s198 + $0x38] sm:$0xff]
        %v308 = vld [vmem:[%s198 + $0x40] sm:$0xff]
        %v309 = vld [vmem:[%s198 + $0x48] sm:$0xff]
        %v310 = vld [vmem:[%s198 + $0x50] sm:$0xff]
        %v311 = vld [vmem:[%s198 + $0x58] sm:$0xff]
        %v312 = vld [vmem:[%s198 + $0x60] sm:$0xff]
        %v313 = vld [vmem:[%s198 + $0x68] sm:$0xff]
        %v314 = vld [vmem:[%s198 + $0x70] sm:$0xff]
        %v315 = vld [vmem:[%s198 + $0x78] sm:$0xff]
        %v316 = vld [vmem:[%s198 + $0x80] sm:$0xff]
        %v317 = vld [vmem:[%s198 + $0x88] sm:$0xff]
        %v318 = vld [vmem:[%s198 + $0x90] sm:$0xff]
        %v319 = vld [vmem:[%s198 + $0x98] sm:$0xff]
        %v320 = vld [vmem:[%s198 + $0xa0] sm:$0xff]
        %v321 = vld [vmem:[%s198 + $0xa8] sm:$0xff]
        %v322 = vld [vmem:[%s198 + $0xb0] sm:$0xff]
        %v323 = vld [vmem:[%s198 + $0xb8] sm:$0xff]
        %v324 = vld [vmem:[%s198 + $0xc0] sm:$0xff]
        %v325 = vld [vmem:[%s198 + $0xc8] sm:$0xff]
        %v326 = vld [vmem:[%s198 + $0xd0] sm:$0xff]
        %v327 = vld [vmem:[%s198 + $0xd8] sm:$0xff]
        %v328 = vld [vmem:[%s198 + $0xe0] sm:$0xff]
        %v329 = vld [vmem:[%s198 + $0xe8] sm:$0xff]
        %v330 = vld [vmem:[%s198 + $0xf0] sm:$0xff]
        %v331 = vld [vmem:[%s198 + $0xf8] sm:$0xff]
        %v332 = vld [vmem:[%s198 + $0x100] sm:$0xff]
        %v333 = vld [vmem:[%s198 + $0x108] sm:$0xff]
        %v334 = vld [vmem:[%s198 + $0x110] sm:$0xff]
        %v335 = vld [vmem:[%s198 + $0x118] sm:$0xff]
        %v336 = vld [vmem:[%s198 + $0x120] sm:$0xff]
        %v337 = vld [vmem:[%s198 + $0x128] sm:$0xff]
        %v338 = vld [vmem:[%s198 + $0x130] sm:$0xff]
        %v339 = vld [vmem:[%s198 + $0x138] sm:$0xff]
        %v340 = vld [vmem:[%s198 + $0x140] sm:$0xff]
        %v341 = vld [vmem:[%s198 + $0x148] sm:$0xff]
        %v342 = vld [vmem:[%s198 + $0x150] sm:$0xff]
        %v343 = vld [vmem:[%s198 + $0x158] sm:$0xff]
        %v344 = vld [vmem:[%s198 + $0x160] sm:$0xff]
        %v345 = vld [vmem:[%s198 + $0x168] sm:$0xff]
        %v346 = vld [vmem:[%s198 + $0x170] sm:$0xff]
        %v347 = vld [vmem:[%s198 + $0x178] sm:$0xff]
        %v348 = vld [vmem:[%s198 + $0x180] sm:$0xff]
        %v349 = vld [vmem:[%s198 + $0x188] sm:$0xff]
        %v350 = vld [vmem:[%s198 + $0x190] sm:$0xff]
        %v351 = vld [vmem:[%s198 + $0x198] sm:$0xff]
        %v352 = vld [vmem:[%s198 + $0x1a0] sm:$0xff]
        %v353 = vld [vmem:[%s198 + $0x1a8] sm:$0xff]
        %v354 = vld [vmem:[%s198 + $0x1b0] sm:$0xff]
        %v355 = vld [vmem:[%s198 + $0x1b8] sm:$0xff]
        %v356 = vld [vmem:[%s198 + $0x1c0] sm:$0xff]
        %v357 = vld [vmem:[%s198 + $0x1c8] sm:$0xff]
        %v358 = vld [vmem:[%s198 + $0x1d0] sm:$0xff]
        %v359 = vld [vmem:[%s198 + $0x1d8] sm:$0xff]
        %v360 = vld [vmem:[%s198 + $0x1e0] sm:$0xff]
        %v361 = vld [vmem:[%s198 + $0x1e8] sm:$0xff]
        %v362 = vld [vmem:[%s198 + $0x1f0] sm:$0xff]
        %v363 = vld [vmem:[%s198 + $0x1f8] sm:$0xff]
        %v364 = vld [vmem:[%s198 + $0x200] sm:$0xff]
        %v365 = vld [vmem:[%s198 + $0x208] sm:$0xff]
        %v366 = vld [vmem:[%s198 + $0x210] sm:$0xff]
        %v367 = vld [vmem:[%s198 + $0x218] sm:$0xff]
        %v368 = vld [vmem:[%s198 + $0x220] sm:$0xff]
        %v369 = vld [vmem:[%s198 + $0x228] sm:$0xff]
        %v370 = vld [vmem:[%s198 + $0x230] sm:$0xff]
        %v371 = vld [vmem:[%s198 + $0x238] sm:$0xff]
        %v372 = vld [vmem:[%s198 + $0x240] sm:$0xff]
        %v373 = vld [vmem:[%s198 + $0x248] sm:$0xff]
        %v374 = vld [vmem:[%s198 + $0x250] sm:$0xff]
        %v375 = vld [vmem:[%s198 + $0x258] sm:$0xff]
        %v376 = vld [vmem:[%s198 + $0x260] sm:$0xff]
        %v377 = vld [vmem:[%s198 + $0x268] sm:$0xff]
        %v378 = vld [vmem:[%s198 + $0x270] sm:$0xff]
        %v379 = vld [vmem:[%s198 + $0x278] sm:$0xff]
        %v380 = vld [vmem:[%s198 + $0x280] sm:$0xff]
        %v381 = vld [vmem:[%s198 + $0x288] sm:$0xff]
        %v382 = vld [vmem:[%s198 + $0x290] sm:$0xff]
        %v383 = vld [vmem:[%s198 + $0x298] sm:$0xff]
        %v384 = vld [vmem:[%s198 + $0x2a0] sm:$0xff]
        %v385 = vld [vmem:[%s198 + $0x2a8] sm:$0xff]
        %v386 = vld [vmem:[%s198 + $0x2b0] sm:$0xff]
        %v387 = vld [vmem:[%s198 + $0x2b8] sm:$0xff]
        %v388 = vld [vmem:[%s198 + $0x2c0] sm:$0xff]
        %v389 = vld [vmem:[%s198 + $0x2c8] sm:$0xff]
        %v390 = vld [vmem:[%s198 + $0x2d0] sm:$0xff]
        %v391 = vld [vmem:[%s198 + $0x2d8] sm:$0xff]
        %v392 = vld [vmem:[%s198 + $0x2e0] sm:$0xff]
        %v393 = vld [vmem:[%s198 + $0x2e8] sm:$0xff]
        %v394 = vld [vmem:[%s198 + $0x2f0] sm:$0xff]
        %v395 = vld [vmem:[%s198 + $0x2f8] sm:$0xff]
        %v396 = vld [vmem:[%s198 + $0x300] sm:$0xff]
        %v397 = vld [vmem:[%s198 + $0x308] sm:$0xff]
        %v398 = vld [vmem:[%s198 + $0x310] sm:$0xff]
        %v399 = vld [vmem:[%s198 + $0x318] sm:$0xff]
        %v400 = vld [vmem:[%s198 + $0x320] sm:$0xff]
        %v401 = vld [vmem:[%s198 + $0x328] sm:$0xff]
        %v402 = vld [vmem:[%s198 + $0x330] sm:$0xff]
        %v403 = vld [vmem:[%s198 + $0x338] sm:$0xff]
        %v404 = vld [vmem:[%s198 + $0x340] sm:$0xff]
        %v405 = vld [vmem:[%s198 + $0x348] sm:$0xff]
        %v406 = vld [vmem:[%s198 + $0x350] sm:$0xff]
        %v407 = vld [vmem:[%s198 + $0x358] sm:$0xff]
        %v408 = vld [vmem:[%s198 + $0x360] sm:$0xff]
        %v409 = vld [vmem:[%s198 + $0x368] sm:$0xff]
        %v410 = vld [vmem:[%s198 + $0x370] sm:$0xff]
        %v411 = vld [vmem:[%s198 + $0x378] sm:$0xff]
        %v412 = vld [vmem:[%s198 + $0x380] sm:$0xff]
        %v413 = vld [vmem:[%s198 + $0x388] sm:$0xff]
        %v414 = vld [vmem:[%s198 + $0x390] sm:$0xff]
        %v415 = vld [vmem:[%s198 + $0x398] sm:$0xff]
        %v416 = vld [vmem:[%s198 + $0x3a0] sm:$0xff]
        %v417 = vld [vmem:[%s198 + $0x3a8] sm:$0xff]
        %v418 = vld [vmem:[%s198 + $0x3b0] sm:$0xff]
        %v419 = vld [vmem:[%s198 + $0x3b8] sm:$0xff]
        %v420 = vld [vmem:[%s198 + $0x3c0] sm:$0xff]
        %v421 = vld [vmem:[%s198 + $0x3c8] sm:$0xff]
        %v422 = vld [vmem:[%s198 + $0x3d0] sm:$0xff]
        %v423 = vld [vmem:[%s198 + $0x3d8] sm:$0xff]
        %v424 = vld [vmem:[%s198 + $0x3e0] sm:$0xff]
        %v425 = vld [vmem:[%s198 + $0x3e8] sm:$0xff]
        %v426 = vld [vmem:[%s198 + $0x3f0] sm:$0xff]
        %v427 = vld [vmem:[%s198 + $0x3f8] sm:$0xff]
        %v428 = vld [vmem:[%s198 + $0x400] sm:$0xff]
        %v429 = vld [vmem:[%s198 + $0x408] sm:$0xff]
        %v430 = vld [vmem:[%s198 + $0x410] sm:$0xff]
        %v431 = vld [vmem:[%s198 + $0x418] sm:$0xff]
        %v432 = vld [vmem:[%s198 + $0x420] sm:$0xff]
        %v433 = vld [vmem:[%s198 + $0x428] sm:$0xff]
        %v434 = vld [vmem:[%s198 + $0x430] sm:$0xff]
        %v435 = vld [vmem:[%s198 + $0x438] sm:$0xff]
        %v436 = vld [vmem:[%s198 + $0x440] sm:$0xff]
        %v437 = vld [vmem:[%s198 + $0x448] sm:$0xff]
        %v438 = vld [vmem:[%s198 + $0x450] sm:$0xff]
        %v439 = vld [vmem:[%s198 + $0x458] sm:$0xff]
        %v440 = vld [vmem:[%s198 + $0x460] sm:$0xff]
        %v441 = vld [vmem:[%s198 + $0x468] sm:$0xff]
        %v442 = vld [vmem:[%s198 + $0x470] sm:$0xff]
        %v443 = vld [vmem:[%s198 + $0x478] sm:$0xff]
        %v444 = vld [vmem:[%s198 + $0x480] sm:$0xff]
        %v445 = vld [vmem:[%s198 + $0x488] sm:$0xff]
        %v446 = vld [vmem:[%s198 + $0x490] sm:$0xff]
        %v447 = vld [vmem:[%s198 + $0x498] sm:$0xff]
        %v448 = vld [vmem:[%s198 + $0x4a0] sm:$0xff]
        %v449 = vld [vmem:[%s198 + $0x4a8] sm:$0xff]
        %v450 = vld [vmem:[%s198 + $0x4b0] sm:$0xff]
        %v451 = vld [vmem:[%s198 + $0x4b8] sm:$0xff]
        %v452 = vld [vmem:[%s198 + $0x4c0] sm:$0xff]
        %v453 = vld [vmem:[%s198 + $0x4c8] sm:$0xff]
        %v454 = vld [vmem:[%s198 + $0x4d0] sm:$0xff]
        %v455 = vld [vmem:[%s198 + $0x4d8] sm:$0xff]
        %v456 = vld [vmem:[%s198 + $0x4e0] sm:$0xff]
        %v457 = vld [vmem:[%s198 + $0x4e8] sm:$0xff]
        %v458 = vld [vmem:[%s198 + $0x4f0] sm:$0xff]
        %v459 = vld [vmem:[%s198 + $0x4f8] sm:$0xff]
        %v460 = vld [vmem:[%s198 + $0x500] sm:$0xff]
        %v461 = vld [vmem:[%s198 + $0x508] sm:$0xff]
        %v462 = vld [vmem:[%s198 + $0x510] sm:$0xff]
        %v463 = vld [vmem:[%s198 + $0x518] sm:$0xff]
        %v464 = vld [vmem:[%s198 + $0x520] sm:$0xff]
        %v465 = vld [vmem:[%s198 + $0x528] sm:$0xff]
        %v466 = vld [vmem:[%s198 + $0x530] sm:$0xff]
        %v467 = vld [vmem:[%s198 + $0x538] sm:$0xff]
        %v468 = vld [vmem:[%s198 + $0x540] sm:$0xff]
        %v469 = vld [vmem:[%s198 + $0x548] sm:$0xff]
        %v470 = vld [vmem:[%s198 + $0x550] sm:$0xff]
        %v471 = vld [vmem:[%s198 + $0x558] sm:$0xff]
        %v472 = vld [vmem:[%s198 + $0x560] sm:$0xff]
        %v473 = vld [vmem:[%s198 + $0x568] sm:$0xff]
        %v474 = vld [vmem:[%s198 + $0x570] sm:$0xff]
        %v475 = vld [vmem:[%s198 + $0x578] sm:$0xff]
        %v476 = vld [vmem:[%s198 + $0x580] sm:$0xff]
        %v477 = vld [vmem:[%s198 + $0x588] sm:$0xff]
        %v478 = vld [vmem:[%s198 + $0x590] sm:$0xff]
        %v479 = vld [vmem:[%s198 + $0x598] sm:$0xff]
        %v480 = vld [vmem:[%s198 + $0x5a0] sm:$0xff]
        %v481 = vld [vmem:[%s198 + $0x5a8] sm:$0xff]
        %v482 = vld [vmem:[%s198 + $0x5b0] sm:$0xff]
        %v483 = vld [vmem:[%s198 + $0x5b8] sm:$0xff]
        %v484 = vld [vmem:[%s198 + $0x5c0] sm:$0xff]
        %v485 = vld [vmem:[%s198 + $0x5c8] sm:$0xff]
        %v486 = vld [vmem:[%s198 + $0x5d0] sm:$0xff]
        %v487 = vld [vmem:[%s198 + $0x5d8] sm:$0xff]
        %v488 = vld [vmem:[%s198 + $0x5e0] sm:$0xff]
        %v489 = vld [vmem:[%s198 + $0x5e8] sm:$0xff]
        %v490 = vld [vmem:[%s198 + $0x5f0] sm:$0xff]
        %v491 = vld [vmem:[%s198 + $0x5f8] sm:$0xff]
        %v492 = vld [vmem:[%s198 + $0x600] sm:$0xff]
        %v493 = vld [vmem:[%s198 + $0x608] sm:$0xff]
        %v494 = vld [vmem:[%s198 + $0x610] sm:$0xff]
        %v495 = vld [vmem:[%s198 + $0x618] sm:$0xff]
        %v496 = vld [vmem:[%s198 + $0x620] sm:$0xff]
        %v497 = vld [vmem:[%s198 + $0x628] sm:$0xff]
        %v498 = vld [vmem:[%s198 + $0x630] sm:$0xff]
        %v499 = vld [vmem:[%s198 + $0x638] sm:$0xff]
        %v500 = vld [vmem:[%s198 + $0x640] sm:$0xff]
        %v501 = vld [vmem:[%s198 + $0x648] sm:$0xff]
        %v502 = vld [vmem:[%s198 + $0x650] sm:$0xff]
        %v503 = vld [vmem:[%s198 + $0x658] sm:$0xff]
        %v504 = vld [vmem:[%s198 + $0x660] sm:$0xff]
        %v505 = vld [vmem:[%s198 + $0x668] sm:$0xff]
        %v506 = vld [vmem:[%s198 + $0x670] sm:$0xff]
        %v507 = vld [vmem:[%s198 + $0x678] sm:$0xff]
        %v508 = vld [vmem:[%s198 + $0x680] sm:$0xff]
        %v509 = vld [vmem:[%s198 + $0x688] sm:$0xff]
        %v510 = vld [vmem:[%s198 + $0x690] sm:$0xff]
        %v511 = vld [vmem:[%s198 + $0x698] sm:$0xff]
        %v512 = vld [vmem:[%s198 + $0x6a0] sm:$0xff]
        %v513 = vld [vmem:[%s198 + $0x6a8] sm:$0xff]
        %v514 = vld [vmem:[%s198 + $0x6b0] sm:$0xff]
        %v515 = vld [vmem:[%s198 + $0x6b8] sm:$0xff]
        %v516 = vld [vmem:[%s198 + $0x6c0] sm:$0xff]
        %v517 = vld [vmem:[%s198 + $0x6c8] sm:$0xff]
        %v518 = vld [vmem:[%s198 + $0x6d0] sm:$0xff]
        %v519 = vld [vmem:[%s198 + $0x6d8] sm:$0xff]
        %v520 = vld [vmem:[%s198 + $0x6e0] sm:$0xff]
        %v521 = vld [vmem:[%s198 + $0x6e8] sm:$0xff]
        %v522 = vld [vmem:[%s198 + $0x6f0] sm:$0xff]
        %v523 = vld [vmem:[%s198 + $0x6f8] sm:$0xff]
        %v524 = vld [vmem:[%s198 + $0x700] sm:$0xff]
        %v525 = vld [vmem:[%s198 + $0x708] sm:$0xff]
        %v526 = vld [vmem:[%s198 + $0x710] sm:$0xff]
        %v527 = vld [vmem:[%s198 + $0x718] sm:$0xff]
        %v528 = vld [vmem:[%s198 + $0x720] sm:$0xff]
        %v529 = vld [vmem:[%s198 + $0x728] sm:$0xff]
        %v530 = vld [vmem:[%s198 + $0x730] sm:$0xff]
        %v531 = vld [vmem:[%s198 + $0x738] sm:$0xff]
        %v532 = vld [vmem:[%s198 + $0x740] sm:$0xff]
        %v533 = vld [vmem:[%s198 + $0x748] sm:$0xff]
        %v534 = vld [vmem:[%s198 + $0x750] sm:$0xff]
        %v535 = vld [vmem:[%s198 + $0x758] sm:$0xff]
        %v536 = vld [vmem:[%s198 + $0x760] sm:$0xff]
        %v537 = vld [vmem:[%s198 + $0x768] sm:$0xff]
        %v538 = vld [vmem:[%s198 + $0x770] sm:$0xff]
        %v539 = vld [vmem:[%s198 + $0x778] sm:$0xff]
        %v540 = vld [vmem:[%s198 + $0x780] sm:$0xff]
        %v541 = vld [vmem:[%s198 + $0x788] sm:$0xff]
        %v542 = vld [vmem:[%s198 + $0x790] sm:$0xff]
        %v543 = vld [vmem:[%s198 + $0x798] sm:$0xff]
        %v544 = vld [vmem:[%s198 + $0x7a0] sm:$0xff]
        %v545 = vld [vmem:[%s198 + $0x7a8] sm:$0xff]
        %v546 = vld [vmem:[%s198 + $0x7b0] sm:$0xff]
        %v547 = vld [vmem:[%s198 + $0x7b8] sm:$0xff]
        %v548 = vld [vmem:[%s198 + $0x7c0] sm:$0xff]
        %v549 = vld [vmem:[%s198 + $0x7c8] sm:$0xff]
        %v550 = vld [vmem:[%s198 + $0x7d0] sm:$0xff]
        %v551 = vld [vmem:[%s198 + $0x7d8] sm:$0xff]
        %v552 = vld [vmem:[%s198 + $0x7e0] sm:$0xff]
        %v553 = vld [vmem:[%s198 + $0x7e8] sm:$0xff]
        %v554 = vld [vmem:[%s198 + $0x7f0] sm:$0xff]
        %v555 = vld [vmem:[%s198 + $0x7f8] sm:$0xff]
        %v556 = vld [vmem:[%s198 + $0x800] sm:$0x3]
        %v557 = vld [vmem:[%s198 + $0x808] sm:$0x3]
        %v558 = vld [vmem:[%s198 + $0x810] sm:$0x3]
        %v559 = vld [vmem:[%s198 + $0x818] sm:$0x3]
        %v560 = vld [vmem:[%s198 + $0x820] sm:$0x3]
        %v561 = vld [vmem:[%s198 + $0x828] sm:$0x3]
        %v562 = vld [vmem:[%s198 + $0x830] sm:$0x3]
        %v563 = vld [vmem:[%s198 + $0x838] sm:$0x3]
        %v564 = vld [vmem:[%s198 + $0x840] sm:$0x3]
        %v565 = vld [vmem:[%s198 + $0x848] sm:$0x3]
        %v566 = vld [vmem:[%s198 + $0x850] sm:$0x3]
        %v567 = vld [vmem:[%s198 + $0x858] sm:$0x3]
        %v568 = vld [vmem:[%s198 + $0x860] sm:$0x3]
        %v569 = vld [vmem:[%s198 + $0x868] sm:$0x3]
        %v570 = vld [vmem:[%s198 + $0x870] sm:$0x3]
        %v571 = vld [vmem:[%s198 + $0x878] sm:$0x3]
        %v572 = vld [vmem:[%s198 + $0x880] sm:$0x3]
        %v573 = vld [vmem:[%s198 + $0x888] sm:$0x3]
        %v574 = vld [vmem:[%s198 + $0x890] sm:$0x3]
        %v575 = vld [vmem:[%s198 + $0x898] sm:$0x3]
        %v576 = vld [vmem:[%s198 + $0x8a0] sm:$0x3]
        %v577 = vld [vmem:[%s198 + $0x8a8] sm:$0x3]
        %v578 = vld [vmem:[%s198 + $0x8b0] sm:$0x3]
        %v579 = vld [vmem:[%s198 + $0x8b8] sm:$0x3]
        %v580 = vld [vmem:[%s198 + $0x8c0] sm:$0x3]
        %v581 = vld [vmem:[%s198 + $0x8c8] sm:$0x3]
        %v582 = vld [vmem:[%s198 + $0x8d0] sm:$0x3]
        %v583 = vld [vmem:[%s198 + $0x8d8] sm:$0x3]
        %v584 = vld [vmem:[%s198 + $0x8e0] sm:$0x3]
        %v585 = vld [vmem:[%s198 + $0x8e8] sm:$0x3]
        %v586 = vld [vmem:[%s198 + $0x8f0] sm:$0x3]
        %v587 = vld [vmem:[%s198 + $0x8f8] sm:$0x3]
        %v588 = vld [vmem:[%s198 + $0x900] sm:$0x3]
        %v589 = vld [vmem:[%s198 + $0x908] sm:$0x3]
        %v590 = vld [vmem:[%s198 + $0x910] sm:$0x3]
        %v591 = vld [vmem:[%s198 + $0x918] sm:$0x3]
        %v592 = vld [vmem:[%s198 + $0x920] sm:$0x3]
        %v593 = vld [vmem:[%s198 + $0x928] sm:$0x3]
        %v594 = vld [vmem:[%s198 + $0x930] sm:$0x3]
        %v595 = vld [vmem:[%s198 + $0x938] sm:$0x3]
        %v596 = vld [vmem:[%s198 + $0x940] sm:$0x3]
        %v597 = vld [vmem:[%s198 + $0x948] sm:$0x3]
        %v598 = vld [vmem:[%s198 + $0x950] sm:$0x3]
        %v599 = vld [vmem:[%s198 + $0x958] sm:$0x3]
        %v600 = vld [vmem:[%s198 + $0x960] sm:$0x3]
        %v601 = vld [vmem:[%s198 + $0x968] sm:$0x3]
        %v602 = vld [vmem:[%s198 + $0x970] sm:$0x3]
        %v603 = vld [vmem:[%s198 + $0x978] sm:$0x3]
        %v604 = vld [vmem:[%s198 + $0x980] sm:$0x3]
        %v605 = vld [vmem:[%s198 + $0x988] sm:$0x3]
        %v606 = vld [vmem:[%s198 + $0x990] sm:$0x3]
        %v607 = vld [vmem:[%s198 + $0x998] sm:$0x3]
        %v608 = vld [vmem:[%s198 + $0x9a0] sm:$0x3]
        %v609 = vld [vmem:[%s198 + $0x9a8] sm:$0x3]
        %v610 = vld [vmem:[%s198 + $0x9b0] sm:$0x3]
        %v611 = vld [vmem:[%s198 + $0x9b8] sm:$0x3]
        %v612 = vld [vmem:[%s198 + $0x9c0] sm:$0x3]
        %v613 = vld [vmem:[%s198 + $0x9c8] sm:$0x3]
        %v614 = vld [vmem:[%s198 + $0x9d0] sm:$0x3]
        %v615 = vld [vmem:[%s198 + $0x9d8] sm:$0x3]
        %v616 = vld [vmem:[%s198 + $0x9e0] sm:$0x3]
        %v617 = vld [vmem:[%s198 + $0x9e8] sm:$0x3]
        %v618 = vld [vmem:[%s198 + $0x9f0] sm:$0x3]
        %v619 = vld [vmem:[%s198 + $0x9f8] sm:$0x3]
        %v620 = vld [vmem:[%s198 + $0xa00] sm:$0x3]
        %v621 = vld [vmem:[%s198 + $0xa08] sm:$0x3]
        %v622 = vld [vmem:[%s198 + $0xa10] sm:$0x3]
        %v623 = vld [vmem:[%s198 + $0xa18] sm:$0x3]
        %v624 = vld [vmem:[%s198 + $0xa20] sm:$0x3]
        %v625 = vld [vmem:[%s198 + $0xa28] sm:$0x3]
        %v626 = vld [vmem:[%s198 + $0xa30] sm:$0x3]
        %v627 = vld [vmem:[%s198 + $0xa38] sm:$0x3]
        %v628 = vld [vmem:[%s198 + $0xa40] sm:$0x3]
        %v629 = vld [vmem:[%s198 + $0xa48] sm:$0x3]
        %v630 = vld [vmem:[%s198 + $0xa50] sm:$0x3]
        %v631 = vld [vmem:[%s198 + $0xa58] sm:$0x3]
        %v632 = vld [vmem:[%s198 + $0xa60] sm:$0x3]
        %v633 = vld [vmem:[%s198 + $0xa68] sm:$0x3]
        %v634 = vld [vmem:[%s198 + $0xa70] sm:$0x3]
        %v635 = vld [vmem:[%s198 + $0xa78] sm:$0x3]
        %v636 = vld [vmem:[%s198 + $0xa80] sm:$0x3]
        %v637 = vld [vmem:[%s198 + $0xa88] sm:$0x3]
        %v638 = vld [vmem:[%s198 + $0xa90] sm:$0x3]
        %v639 = vld [vmem:[%s198 + $0xa98] sm:$0x3]
        %v640 = vld [vmem:[%s198 + $0xaa0] sm:$0x3]
        %v641 = vld [vmem:[%s198 + $0xaa8] sm:$0x3]
        %v642 = vld [vmem:[%s198 + $0xab0] sm:$0x3]
        %v643 = vld [vmem:[%s198 + $0xab8] sm:$0x3]
        %v644 = vld [vmem:[%s198 + $0xac0] sm:$0x3]
        %v645 = vld [vmem:[%s198 + $0xac8] sm:$0x3]
        %v646 = vld [vmem:[%s198 + $0xad0] sm:$0x3]
        %v647 = vld [vmem:[%s198 + $0xad8] sm:$0x3]
        %v648 = vld [vmem:[%s198 + $0xae0] sm:$0x3]
        %v649 = vld [vmem:[%s198 + $0xae8] sm:$0x3]
        %v650 = vld [vmem:[%s198 + $0xaf0] sm:$0x3]
        %v651 = vld [vmem:[%s198 + $0xaf8] sm:$0x3]
        %v652 = vld [vmem:[%s198 + $0xb00] sm:$0x3]
        %v653 = vld [vmem:[%s198 + $0xb08] sm:$0x3]
        %v654 = vld [vmem:[%s198 + $0xb10] sm:$0x3]
        %v655 = vld [vmem:[%s198 + $0xb18] sm:$0x3]
        %v656 = vld [vmem:[%s198 + $0xb20] sm:$0x3]
        %v657 = vld [vmem:[%s198 + $0xb28] sm:$0x3]
        %v658 = vld [vmem:[%s198 + $0xb30] sm:$0x3]
        %v659 = vld [vmem:[%s198 + $0xb38] sm:$0x3]
        %v660 = vld [vmem:[%s198 + $0xb40] sm:$0x3]
        %v661 = vld [vmem:[%s198 + $0xb48] sm:$0x3]
        %v662 = vld [vmem:[%s198 + $0xb50] sm:$0x3]
        %v663 = vld [vmem:[%s198 + $0xb58] sm:$0x3]
        %v664 = vld [vmem:[%s198 + $0xb60] sm:$0x3]
        %v665 = vld [vmem:[%s198 + $0xb68] sm:$0x3]
        %v666 = vld [vmem:[%s198 + $0xb70] sm:$0x3]
        %v667 = vld [vmem:[%s198 + $0xb78] sm:$0x3]
        %v668 = vld [vmem:[%s198 + $0xb80] sm:$0x3]
        %v669 = vld [vmem:[%s198 + $0xb88] sm:$0x3]
        %v670 = vld [vmem:[%s198 + $0xb90] sm:$0x3]
        %v671 = vld [vmem:[%s198 + $0xb98] sm:$0x3]
        %v672 = vld [vmem:[%s198 + $0xba0] sm:$0x3]
        %v673 = vld [vmem:[%s198 + $0xba8] sm:$0x3]
        %v674 = vld [vmem:[%s198 + $0xbb0] sm:$0x3]
        %v675 = vld [vmem:[%s198 + $0xbb8] sm:$0x3]
        %v676 = vld [vmem:[%s198 + $0xbc0] sm:$0x3]
        %v677 = vld [vmem:[%s198 + $0xbc8] sm:$0x3]
        %v678 = vld [vmem:[%s198 + $0xbd0] sm:$0x3]
        %v679 = vld [vmem:[%s198 + $0xbd8] sm:$0x3]
        %v680 = vld [vmem:[%s198 + $0xbe0] sm:$0x3]
        %v681 = vld [vmem:[%s198 + $0xbe8] sm:$0x3]
        %v682 = vld [vmem:[%s198 + $0xbf0] sm:$0x3]
        %v683 = vld [vmem:[%s198 + $0xbf8] sm:$0x3]
        %v684 = vld [vmem:[%s198 + $0xc00] sm:$0x3]
        %v685 = vld [vmem:[%s198 + $0xc08] sm:$0x3]
        %v686 = vld [vmem:[%s198 + $0xc10] sm:$0x3]
        %v687 = vld [vmem:[%s198 + $0xc18] sm:$0x3]
        %v688 = vld [vmem:[%s198 + $0xc20] sm:$0x3]
        %v689 = vld [vmem:[%s198 + $0xc28] sm:$0x3]
        %v690 = vld [vmem:[%s198 + $0xc30] sm:$0x3]
        %v691 = vld [vmem:[%s198 + $0xc38] sm:$0x3]
        %v692 = vld [vmem:[%s198 + $0xc40] sm:$0x3]
        %v693 = vld [vmem:[%s198 + $0xc48] sm:$0x3]
        %v694 = vld [vmem:[%s198 + $0xc50] sm:$0x3]
        %v695 = vld [vmem:[%s198 + $0xc58] sm:$0x3]
        %v696 = vld [vmem:[%s198 + $0xc60] sm:$0x3]
        %v697 = vld [vmem:[%s198 + $0xc68] sm:$0x3]
        %v698 = vld [vmem:[%s198 + $0xc70] sm:$0x3]
        %v699 = vld [vmem:[%s198 + $0xc78] sm:$0x3]
        %v700 = vld [vmem:[%s198 + $0xc80] sm:$0x3]
        %v701 = vld [vmem:[%s198 + $0xc88] sm:$0x3]
        %v702 = vld [vmem:[%s198 + $0xc90] sm:$0x3]
        %v703 = vld [vmem:[%s198 + $0xc98] sm:$0x3]
        %v704 = vld [vmem:[%s198 + $0xca0] sm:$0x3]
        %v705 = vld [vmem:[%s198 + $0xca8] sm:$0x3]
        %v706 = vld [vmem:[%s198 + $0xcb0] sm:$0x3]
        %v707 = vld [vmem:[%s198 + $0xcb8] sm:$0x3]
        %v708 = vld [vmem:[%s198 + $0xcc0] sm:$0x3]
        %v709 = vld [vmem:[%s198 + $0xcc8] sm:$0x3]
        %v710 = vld [vmem:[%s198 + $0xcd0] sm:$0x3]
        %v711 = vld [vmem:[%s198 + $0xcd8] sm:$0x3]
        %v712 = vld [vmem:[%s198 + $0xce0] sm:$0x3]
        %v713 = vld [vmem:[%s198 + $0xce8] sm:$0x3]
        %v714 = vld [vmem:[%s198 + $0xcf0] sm:$0x3]
        %v715 = vld [vmem:[%s198 + $0xcf8] sm:$0x3]
        %v716 = vld [vmem:[%s198 + $0xd00] sm:$0x3]
        %v717 = vld [vmem:[%s198 + $0xd08] sm:$0x3]
        %v718 = vld [vmem:[%s198 + $0xd10] sm:$0x3]
        %v719 = vld [vmem:[%s198 + $0xd18] sm:$0x3]
        %v720 = vld [vmem:[%s198 + $0xd20] sm:$0x3]
        %v721 = vld [vmem:[%s198 + $0xd28] sm:$0x3]
        %v722 = vld [vmem:[%s198 + $0xd30] sm:$0x3]
        %v723 = vld [vmem:[%s198 + $0xd38] sm:$0x3]
        %v724 = vld [vmem:[%s198 + $0xd40] sm:$0x3]
        %v725 = vld [vmem:[%s198 + $0xd48] sm:$0x3]
        %v726 = vld [vmem:[%s198 + $0xd50] sm:$0x3]
        %v727 = vld [vmem:[%s198 + $0xd58] sm:$0x3]
        %v728 = vld [vmem:[%s198 + $0xd60] sm:$0x3]
        %v729 = vld [vmem:[%s198 + $0xd68] sm:$0x3]
        %v730 = vld [vmem:[%s198 + $0xd70] sm:$0x3]
        %v731 = vld [vmem:[%s198 + $0xd78] sm:$0x3]
        %v732 = vld [vmem:[%s198 + $0xd80] sm:$0x3]
        %v733 = vld [vmem:[%s198 + $0xd88] sm:$0x3]
        %v734 = vld [vmem:[%s198 + $0xd90] sm:$0x3]
        %v735 = vld [vmem:[%s198 + $0xd98] sm:$0x3]
        %v736 = vld [vmem:[%s198 + $0xda0] sm:$0x3]
        %v737 = vld [vmem:[%s198 + $0xda8] sm:$0x3]
        %v738 = vld [vmem:[%s198 + $0xdb0] sm:$0x3]
        %v739 = vld [vmem:[%s198 + $0xdb8] sm:$0x3]
        %v740 = vld [vmem:[%s198 + $0xdc0] sm:$0x3]
        %v741 = vld [vmem:[%s198 + $0xdc8] sm:$0x3]
        %v742 = vld [vmem:[%s198 + $0xdd0] sm:$0x3]
        %v743 = vld [vmem:[%s198 + $0xdd8] sm:$0x3]
        %v744 = vld [vmem:[%s198 + $0xde0] sm:$0x3]
        %v745 = vld [vmem:[%s198 + $0xde8] sm:$0x3]
        %v746 = vld [vmem:[%s198 + $0xdf0] sm:$0x3]
        %v747 = vld [vmem:[%s198 + $0xdf8] sm:$0x3]
        %v748 = vld [vmem:[%s198 + $0xe00] sm:$0x3]
        %v749 = vld [vmem:[%s198 + $0xe08] sm:$0x3]
        %v750 = vld [vmem:[%s198 + $0xe10] sm:$0x3]
        %v751 = vld [vmem:[%s198 + $0xe18] sm:$0x3]
        %v752 = vld [vmem:[%s198 + $0xe20] sm:$0x3]
        %v753 = vld [vmem:[%s198 + $0xe28] sm:$0x3]
        %v754 = vld [vmem:[%s198 + $0xe30] sm:$0x3]
        %v755 = vld [vmem:[%s198 + $0xe38] sm:$0x3]
        %v756 = vld [vmem:[%s198 + $0xe40] sm:$0x3]
        %v757 = vld [vmem:[%s198 + $0xe48] sm:$0x3]
        %v758 = vld [vmem:[%s198 + $0xe50] sm:$0x3]
        %v759 = vld [vmem:[%s198 + $0xe58] sm:$0x3]
        %v760 = vld [vmem:[%s198 + $0xe60] sm:$0x3]
        %v761 = vld [vmem:[%s198 + $0xe68] sm:$0x3]
        %v762 = vld [vmem:[%s198 + $0xe70] sm:$0x3]
        %v763 = vld [vmem:[%s198 + $0xe78] sm:$0x3]
        %v764 = vld [vmem:[%s198 + $0xe80] sm:$0x3]
        %v765 = vld [vmem:[%s198 + $0xe88] sm:$0x3]
        %v766 = vld [vmem:[%s198 + $0xe90] sm:$0x3]
        %v767 = vld [vmem:[%s198 + $0xe98] sm:$0x3]
        %v768 = vld [vmem:[%s198 + $0xea0] sm:$0x3]
        %v769 = vld [vmem:[%s198 + $0xea8] sm:$0x3]
        %v770 = vld [vmem:[%s198 + $0xeb0] sm:$0x3]
        %v771 = vld [vmem:[%s198 + $0xeb8] sm:$0x3]
        %v772 = vld [vmem:[%s198 + $0xec0] sm:$0x3]
        %v773 = vld [vmem:[%s198 + $0xec8] sm:$0x3]
        %v774 = vld [vmem:[%s198 + $0xed0] sm:$0x3]
        %v775 = vld [vmem:[%s198 + $0xed8] sm:$0x3]
        %v776 = vld [vmem:[%s198 + $0xee0] sm:$0x3]
        %v777 = vld [vmem:[%s198 + $0xee8] sm:$0x3]
        %v778 = vld [vmem:[%s198 + $0xef0] sm:$0x3]
        %v779 = vld [vmem:[%s198 + $0xef8] sm:$0x3]
        %v780 = vld [vmem:[%s198 + $0xf00] sm:$0x3]
        %v781 = vld [vmem:[%s198 + $0xf08] sm:$0x3]
        %v782 = vld [vmem:[%s198 + $0xf10] sm:$0x3]
        %v783 = vld [vmem:[%s198 + $0xf18] sm:$0x3]
        %v784 = vld [vmem:[%s198 + $0xf20] sm:$0x3]
        %v785 = vld [vmem:[%s198 + $0xf28] sm:$0x3]
        %v786 = vld [vmem:[%s198 + $0xf30] sm:$0x3]
        %v787 = vld [vmem:[%s198 + $0xf38] sm:$0x3]
        %v788 = vld [vmem:[%s198 + $0xf40] sm:$0x3]
        %v789 = vld [vmem:[%s198 + $0xf48] sm:$0x3]
        %v790 = vld [vmem:[%s198 + $0xf50] sm:$0x3]
        %v791 = vld [vmem:[%s198 + $0xf58] sm:$0x3]
        %v792 = vld [vmem:[%s198 + $0xf60] sm:$0x3]
        %v793 = vld [vmem:[%s198 + $0xf68] sm:$0x3]
        %v794 = vld [vmem:[%s198 + $0xf70] sm:$0x3]
        %v795 = vld [vmem:[%s198 + $0xf78] sm:$0x3]
        %v796 = vld [vmem:[%s198 + $0xf80] sm:$0x3]
        %v797 = vld [vmem:[%s198 + $0xf88] sm:$0x3]
        %v798 = vld [vmem:[%s198 + $0xf90] sm:$0x3]
        %v799 = vld [vmem:[%s198 + $0xf98] sm:$0x3]
        %v800 = vld [vmem:[%s198 + $0xfa0] sm:$0x3]
        %v801 = vld [vmem:[%s198 + $0xfa8] sm:$0x3]
        %v802 = vld [vmem:[%s198 + $0xfb0] sm:$0x3]
        %v803 = vld [vmem:[%s198 + $0xfb8] sm:$0x3]
        %v804 = vld [vmem:[%s198 + $0xfc0] sm:$0x3]
        %v805 = vld [vmem:[%s198 + $0xfc8] sm:$0x3]
        %v806 = vld [vmem:[%s198 + $0xfd0] sm:$0x3]
        %v807 = vld [vmem:[%s198 + $0xfd8] sm:$0x3]
        %v808 = vld [vmem:[%s198 + $0xfe0] sm:$0x3]
        %v809 = vld [vmem:[%s198 + $0xfe8] sm:$0x3]
        %v810 = vld [vmem:[%s198 + $0xff0] sm:$0x3]
        %v811 = vld [vmem:[%s198 + $0xff8] sm:$0x3]
        %v876 = vcombine.high %v236, %v236
        %v878 = vunpack.c.l.s4 1983009808
        %v879 = vunpack.c.0.s8 %v878
        %v880 = vlaneseq
        %v881 = vshrl.u32 %v880, 7
        %v882 = vsub.s32 %v879, %v881
        %v883 = vrot.slane %v236, %v882
        %v885 = vunpack.c.l.s4 1983009808
        %v886 = vunpack.c.0.s8 %v885
        %v887 = vlaneseq
        %v888 = vshrl.u32 %v887, 7
        %v889 = vsub.s32 %v886, %v888
        %v890 = vrot.slane %v876, %v889
        %v891 = vcombine.high %v883, %v883
        %v892 = vcombine.high %v890, %v890
        %v893 = vcombine.high %v237, %v237
        %v895 = vunpack.c.l.s4 1983009808
        %v896 = vunpack.c.0.s8 %v895
        %v897 = vlaneseq
        %v898 = vshrl.u32 %v897, 7
        %v899 = vsub.s32 %v896, %v898
        %v900 = vrot.slane %v237, %v899
        %v902 = vunpack.c.l.s4 1983009808
        %v903 = vunpack.c.0.s8 %v902
        %v904 = vlaneseq
        %v905 = vshrl.u32 %v904, 7
        %v906 = vsub.s32 %v903, %v905
        %v907 = vrot.slane %v893, %v906
        %v908 = vcombine.high %v900, %v900
        %v909 = vcombine.high %v907, %v907
        %v910 = vcombine.high %v238, %v238
        %v912 = vunpack.c.l.s4 1983009808
        %v913 = vunpack.c.0.s8 %v912
        %v914 = vlaneseq
        %v915 = vshrl.u32 %v914, 7
        %v916 = vsub.s32 %v913, %v915
        %v917 = vrot.slane %v238, %v916
        %v919 = vunpack.c.l.s4 1983009808
        %v920 = vunpack.c.0.s8 %v919
        %v921 = vlaneseq
        %v922 = vshrl.u32 %v921, 7
        %v923 = vsub.s32 %v920, %v922
        %v924 = vrot.slane %v910, %v923
        %v925 = vcombine.high %v917, %v917
        %v926 = vcombine.high %v924, %v924
        %v927 = vcombine.high %v239, %v239
        %v929 = vunpack.c.l.s4 1983009808
        %v930 = vunpack.c.0.s8 %v929
        %v931 = vlaneseq
        %v932 = vshrl.u32 %v931, 7
        %v933 = vsub.s32 %v930, %v932
        %v934 = vrot.slane %v239, %v933
        %v936 = vunpack.c.l.s4 1983009808
        %v937 = vunpack.c.0.s8 %v936
        %v938 = vlaneseq
        %v939 = vshrl.u32 %v938, 7
        %v940 = vsub.s32 %v937, %v939
        %v941 = vrot.slane %v927, %v940
        %v942 = vcombine.high %v934, %v934
        %v943 = vcombine.high %v941, %v941
        %v944 = vcombine.high %v240, %v240
        %v946 = vunpack.c.l.s4 1983009808
        %v947 = vunpack.c.0.s8 %v946
        %v948 = vlaneseq
        %v949 = vshrl.u32 %v948, 7
        %v950 = vsub.s32 %v947, %v949
        %v951 = vrot.slane %v240, %v950
        %v953 = vunpack.c.l.s4 1983009808
        %v954 = vunpack.c.0.s8 %v953
        %v955 = vlaneseq
        %v956 = vshrl.u32 %v955, 7
        %v957 = vsub.s32 %v954, %v956
        %v958 = vrot.slane %v944, %v957
        %v959 = vcombine.high %v951, %v951
        %v960 = vcombine.high %v958, %v958
        %v961 = vcombine.high %v241, %v241
        %v963 = vunpack.c.l.s4 1983009808
        %v964 = vunpack.c.0.s8 %v963
        %v965 = vlaneseq
        %v966 = vshrl.u32 %v965, 7
        %v967 = vsub.s32 %v964, %v966
        %v968 = vrot.slane %v241, %v967
        %v970 = vunpack.c.l.s4 1983009808
        %v971 = vunpack.c.0.s8 %v970
        %v972 = vlaneseq
        %v973 = vshrl.u32 %v972, 7
        %v974 = vsub.s32 %v971, %v973
        %v975 = vrot.slane %v961, %v974
        %v976 = vcombine.high %v968, %v968
        %v977 = vcombine.high %v975, %v975
        %v978 = vcombine.high %v242, %v242
        %v980 = vunpack.c.l.s4 1983009808
        %v981 = vunpack.c.0.s8 %v980
        %v982 = vlaneseq
        %v983 = vshrl.u32 %v982, 7
        %v984 = vsub.s32 %v981, %v983
        %v985 = vrot.slane %v242, %v984
        %v987 = vunpack.c.l.s4 1983009808
        %v988 = vunpack.c.0.s8 %v987
        %v989 = vlaneseq
        %v990 = vshrl.u32 %v989, 7
        %v991 = vsub.s32 %v988, %v990
        %v992 = vrot.slane %v978, %v991
        %v993 = vcombine.high %v985, %v985
        %v994 = vcombine.high %v992, %v992
        %v995 = vcombine.high %v243, %v243
        %v997 = vunpack.c.l.s4 1983009808
        %v998 = vunpack.c.0.s8 %v997
        %v999 = vlaneseq
        %v1000 = vshrl.u32 %v999, 7
        %v1001 = vsub.s32 %v998, %v1000
        %v1002 = vrot.slane %v243, %v1001
        %v1004 = vunpack.c.l.s4 1983009808
        %v1005 = vunpack.c.0.s8 %v1004
        %v1006 = vlaneseq
        %v1007 = vshrl.u32 %v1006, 7
        %v1008 = vsub.s32 %v1005, %v1007
        %v1009 = vrot.slane %v995, %v1008
        %v1010 = vcombine.high %v1002, %v1002
        %v1011 = vcombine.high %v1009, %v1009
        %v1012 = vcombine.high %v244, %v244
        %v1014 = vunpack.c.l.s4 1983009808
        %v1015 = vunpack.c.0.s8 %v1014
        %v1016 = vlaneseq
        %v1017 = vshrl.u32 %v1016, 7
        %v1018 = vsub.s32 %v1015, %v1017
        %v1019 = vrot.slane %v244, %v1018
        %v1021 = vunpack.c.l.s4 1983009808
        %v1022 = vunpack.c.0.s8 %v1021
        %v1023 = vlaneseq
        %v1024 = vshrl.u32 %v1023, 7
        %v1025 = vsub.s32 %v1022, %v1024
        %v1026 = vrot.slane %v1012, %v1025
        %v1027 = vcombine.high %v1019, %v1019
        %v1028 = vcombine.high %v1026, %v1026
        %v1029 = vcombine.high %v245, %v245
        %v1031 = vunpack.c.l.s4 1983009808
        %v1032 = vunpack.c.0.s8 %v1031
        %v1033 = vlaneseq
        %v1034 = vshrl.u32 %v1033, 7
        %v1035 = vsub.s32 %v1032, %v1034
        %v1036 = vrot.slane %v245, %v1035
        %v1038 = vunpack.c.l.s4 1983009808
        %v1039 = vunpack.c.0.s8 %v1038
        %v1040 = vlaneseq
        %v1041 = vshrl.u32 %v1040, 7
        %v1042 = vsub.s32 %v1039, %v1041
        %v1043 = vrot.slane %v1029, %v1042
        %v1044 = vcombine.high %v1036, %v1036
        %v1045 = vcombine.high %v1043, %v1043
        %v1046 = vcombine.high %v246, %v246
        %v1048 = vunpack.c.l.s4 1983009808
        %v1049 = vunpack.c.0.s8 %v1048
        %v1050 = vlaneseq
        %v1051 = vshrl.u32 %v1050, 7
        %v1052 = vsub.s32 %v1049, %v1051
        %v1053 = vrot.slane %v246, %v1052
        %v1055 = vunpack.c.l.s4 1983009808
        %v1056 = vunpack.c.0.s8 %v1055
        %v1057 = vlaneseq
        %v1058 = vshrl.u32 %v1057, 7
        %v1059 = vsub.s32 %v1056, %v1058
        %v1060 = vrot.slane %v1046, %v1059
        %v1061 = vcombine.high %v1053, %v1053
        %v1062 = vcombine.high %v1060, %v1060
        %v1063 = vcombine.high %v247, %v247
        %v1065 = vunpack.c.l.s4 1983009808
        %v1066 = vunpack.c.0.s8 %v1065
        %v1067 = vlaneseq
        %v1068 = vshrl.u32 %v1067, 7
        %v1069 = vsub.s32 %v1066, %v1068
        %v1070 = vrot.slane %v247, %v1069
        %v1072 = vunpack.c.l.s4 1983009808
        %v1073 = vunpack.c.0.s8 %v1072
        %v1074 = vlaneseq
        %v1075 = vshrl.u32 %v1074, 7
        %v1076 = vsub.s32 %v1073, %v1075
        %v1077 = vrot.slane %v1063, %v1076
        %v1078 = vcombine.high %v1070, %v1070
        %v1079 = vcombine.high %v1077, %v1077
        %v1080 = vcombine.high %v248, %v248
        %v1082 = vunpack.c.l.s4 1983009808
        %v1083 = vunpack.c.0.s8 %v1082
        %v1084 = vlaneseq
        %v1085 = vshrl.u32 %v1084, 7
        %v1086 = vsub.s32 %v1083, %v1085
        %v1087 = vrot.slane %v248, %v1086
        %v1089 = vunpack.c.l.s4 1983009808
        %v1090 = vunpack.c.0.s8 %v1089
        %v1091 = vlaneseq
        %v1092 = vshrl.u32 %v1091, 7
        %v1093 = vsub.s32 %v1090, %v1092
        %v1094 = vrot.slane %v1080, %v1093
        %v1095 = vcombine.high %v1087, %v1087
        %v1096 = vcombine.high %v1094, %v1094
        %v1097 = vcombine.high %v249, %v249
        %v1099 = vunpack.c.l.s4 1983009808
        %v1100 = vunpack.c.0.s8 %v1099
        %v1101 = vlaneseq
        %v1102 = vshrl.u32 %v1101, 7
        %v1103 = vsub.s32 %v1100, %v1102
        %v1104 = vrot.slane %v249, %v1103
        %v1106 = vunpack.c.l.s4 1983009808
        %v1107 = vunpack.c.0.s8 %v1106
        %v1108 = vlaneseq
        %v1109 = vshrl.u32 %v1108, 7
        %v1110 = vsub.s32 %v1107, %v1109
        %v1111 = vrot.slane %v1097, %v1110
        %v1112 = vcombine.high %v1104, %v1104
        %v1113 = vcombine.high %v1111, %v1111
        %v1114 = vcombine.high %v250, %v250
        %v1116 = vunpack.c.l.s4 1983009808
        %v1117 = vunpack.c.0.s8 %v1116
        %v1118 = vlaneseq
        %v1119 = vshrl.u32 %v1118, 7
        %v1120 = vsub.s32 %v1117, %v1119
        %v1121 = vrot.slane %v250, %v1120
        %v1123 = vunpack.c.l.s4 1983009808
        %v1124 = vunpack.c.0.s8 %v1123
        %v1125 = vlaneseq
        %v1126 = vshrl.u32 %v1125, 7
        %v1127 = vsub.s32 %v1124, %v1126
        %v1128 = vrot.slane %v1114, %v1127
        %v1129 = vcombine.high %v1121, %v1121
        %v1130 = vcombine.high %v1128, %v1128
        %v1131 = vcombine.high %v251, %v251
        %v1133 = vunpack.c.l.s4 1983009808
        %v1134 = vunpack.c.0.s8 %v1133
        %v1135 = vlaneseq
        %v1136 = vshrl.u32 %v1135, 7
        %v1137 = vsub.s32 %v1134, %v1136
        %v1138 = vrot.slane %v251, %v1137
        %v1140 = vunpack.c.l.s4 1983009808
        %v1141 = vunpack.c.0.s8 %v1140
        %v1142 = vlaneseq
        %v1143 = vshrl.u32 %v1142, 7
        %v1144 = vsub.s32 %v1141, %v1143
        %v1145 = vrot.slane %v1131, %v1144
        %v1146 = vcombine.high %v1138, %v1138
        %v1147 = vcombine.high %v1145, %v1145
        %v1148 = vcombine.high %v252, %v252
        %v1150 = vunpack.c.l.s4 1983009808
        %v1151 = vunpack.c.0.s8 %v1150
        %v1152 = vlaneseq
        %v1153 = vshrl.u32 %v1152, 7
        %v1154 = vsub.s32 %v1151, %v1153
        %v1155 = vrot.slane %v252, %v1154
        %v1157 = vunpack.c.l.s4 1983009808
        %v1158 = vunpack.c.0.s8 %v1157
        %v1159 = vlaneseq
        %v1160 = vshrl.u32 %v1159, 7
        %v1161 = vsub.s32 %v1158, %v1160
        %v1162 = vrot.slane %v1148, %v1161
        %v1163 = vcombine.high %v1155, %v1155
        %v1164 = vcombine.high %v1162, %v1162
        %v1165 = vcombine.high %v253, %v253
        %v1167 = vunpack.c.l.s4 1983009808
        %v1168 = vunpack.c.0.s8 %v1167
        %v1169 = vlaneseq
        %v1170 = vshrl.u32 %v1169, 7
        %v1171 = vsub.s32 %v1168, %v1170
        %v1172 = vrot.slane %v253, %v1171
        %v1174 = vunpack.c.l.s4 1983009808
        %v1175 = vunpack.c.0.s8 %v1174
        %v1176 = vlaneseq
        %v1177 = vshrl.u32 %v1176, 7
        %v1178 = vsub.s32 %v1175, %v1177
        %v1179 = vrot.slane %v1165, %v1178
        %v1180 = vcombine.high %v1172, %v1172
        %v1181 = vcombine.high %v1179, %v1179
        %v1182 = vcombine.high %v254, %v254
        %v1184 = vunpack.c.l.s4 1983009808
        %v1185 = vunpack.c.0.s8 %v1184
        %v1186 = vlaneseq
        %v1187 = vshrl.u32 %v1186, 7
        %v1188 = vsub.s32 %v1185, %v1187
        %v1189 = vrot.slane %v254, %v1188
        %v1191 = vunpack.c.l.s4 1983009808
        %v1192 = vunpack.c.0.s8 %v1191
        %v1193 = vlaneseq
        %v1194 = vshrl.u32 %v1193, 7
        %v1195 = vsub.s32 %v1192, %v1194
        %v1196 = vrot.slane %v1182, %v1195
        %v1197 = vcombine.high %v1189, %v1189
        %v1198 = vcombine.high %v1196, %v1196
        %v1199 = vcombine.high %v255, %v255
        %v1201 = vunpack.c.l.s4 1983009808
        %v1202 = vunpack.c.0.s8 %v1201
        %v1203 = vlaneseq
        %v1204 = vshrl.u32 %v1203, 7
        %v1205 = vsub.s32 %v1202, %v1204
        %v1206 = vrot.slane %v255, %v1205
        %v1208 = vunpack.c.l.s4 1983009808
        %v1209 = vunpack.c.0.s8 %v1208
        %v1210 = vlaneseq
        %v1211 = vshrl.u32 %v1210, 7
        %v1212 = vsub.s32 %v1209, %v1211
        %v1213 = vrot.slane %v1199, %v1212
        %v1214 = vcombine.high %v1206, %v1206
        %v1215 = vcombine.high %v1213, %v1213
        %v1216 = vcombine.high %v256, %v256
        %v1218 = vunpack.c.l.s4 1983009808
        %v1219 = vunpack.c.0.s8 %v1218
        %v1220 = vlaneseq
        %v1221 = vshrl.u32 %v1220, 7
        %v1222 = vsub.s32 %v1219, %v1221
        %v1223 = vrot.slane %v256, %v1222
        %v1225 = vunpack.c.l.s4 1983009808
        %v1226 = vunpack.c.0.s8 %v1225
        %v1227 = vlaneseq
        %v1228 = vshrl.u32 %v1227, 7
        %v1229 = vsub.s32 %v1226, %v1228
        %v1230 = vrot.slane %v1216, %v1229
        %v1231 = vcombine.high %v1223, %v1223
        %v1232 = vcombine.high %v1230, %v1230
        %v1233 = vcombine.high %v257, %v257
        %v1235 = vunpack.c.l.s4 1983009808
        %v1236 = vunpack.c.0.s8 %v1235
        %v1237 = vlaneseq
        %v1238 = vshrl.u32 %v1237, 7
        %v1239 = vsub.s32 %v1236, %v1238
        %v1240 = vrot.slane %v257, %v1239
        %v1242 = vunpack.c.l.s4 1983009808
        %v1243 = vunpack.c.0.s8 %v1242
        %v1244 = vlaneseq
        %v1245 = vshrl.u32 %v1244, 7
        %v1246 = vsub.s32 %v1243, %v1245
        %v1247 = vrot.slane %v1233, %v1246
        %v1248 = vcombine.high %v1240, %v1240
        %v1249 = vcombine.high %v1247, %v1247
        %v1250 = vcombine.high %v258, %v258
        %v1252 = vunpack.c.l.s4 1983009808
        %v1253 = vunpack.c.0.s8 %v1252
        %v1254 = vlaneseq
        %v1255 = vshrl.u32 %v1254, 7
        %v1256 = vsub.s32 %v1253, %v1255
        %v1257 = vrot.slane %v258, %v1256
        %v1259 = vunpack.c.l.s4 1983009808
        %v1260 = vunpack.c.0.s8 %v1259
        %v1261 = vlaneseq
        %v1262 = vshrl.u32 %v1261, 7
        %v1263 = vsub.s32 %v1260, %v1262
        %v1264 = vrot.slane %v1250, %v1263
        %v1265 = vcombine.high %v1257, %v1257
        %v1266 = vcombine.high %v1264, %v1264
        %v1267 = vcombine.high %v259, %v259
        %v1269 = vunpack.c.l.s4 1983009808
        %v1270 = vunpack.c.0.s8 %v1269
        %v1271 = vlaneseq
        %v1272 = vshrl.u32 %v1271, 7
        %v1273 = vsub.s32 %v1270, %v1272
        %v1274 = vrot.slane %v259, %v1273
        %v1276 = vunpack.c.l.s4 1983009808
        %v1277 = vunpack.c.0.s8 %v1276
        %v1278 = vlaneseq
        %v1279 = vshrl.u32 %v1278, 7
        %v1280 = vsub.s32 %v1277, %v1279
        %v1281 = vrot.slane %v1267, %v1280
        %v1282 = vcombine.high %v1274, %v1274
        %v1283 = vcombine.high %v1281, %v1281
        %v1284 = vcombine.high %v260, %v260
        %v1286 = vunpack.c.l.s4 1983009808
        %v1287 = vunpack.c.0.s8 %v1286
        %v1288 = vlaneseq
        %v1289 = vshrl.u32 %v1288, 7
        %v1290 = vsub.s32 %v1287, %v1289
        %v1291 = vrot.slane %v260, %v1290
        %v1293 = vunpack.c.l.s4 1983009808
        %v1294 = vunpack.c.0.s8 %v1293
        %v1295 = vlaneseq
        %v1296 = vshrl.u32 %v1295, 7
        %v1297 = vsub.s32 %v1294, %v1296
        %v1298 = vrot.slane %v1284, %v1297
        %v1299 = vcombine.high %v1291, %v1291
        %v1300 = vcombine.high %v1298, %v1298
        %v1301 = vcombine.high %v261, %v261
        %v1303 = vunpack.c.l.s4 1983009808
        %v1304 = vunpack.c.0.s8 %v1303
        %v1305 = vlaneseq
        %v1306 = vshrl.u32 %v1305, 7
        %v1307 = vsub.s32 %v1304, %v1306
        %v1308 = vrot.slane %v261, %v1307
        %v1310 = vunpack.c.l.s4 1983009808
        %v1311 = vunpack.c.0.s8 %v1310
        %v1312 = vlaneseq
        %v1313 = vshrl.u32 %v1312, 7
        %v1314 = vsub.s32 %v1311, %v1313
        %v1315 = vrot.slane %v1301, %v1314
        %v1316 = vcombine.high %v1308, %v1308
        %v1317 = vcombine.high %v1315, %v1315
        %v1318 = vcombine.high %v262, %v262
        %v1320 = vunpack.c.l.s4 1983009808
        %v1321 = vunpack.c.0.s8 %v1320
        %v1322 = vlaneseq
        %v1323 = vshrl.u32 %v1322, 7
        %v1324 = vsub.s32 %v1321, %v1323
        %v1325 = vrot.slane %v262, %v1324
        %v1327 = vunpack.c.l.s4 1983009808
        %v1328 = vunpack.c.0.s8 %v1327
        %v1329 = vlaneseq
        %v1330 = vshrl.u32 %v1329, 7
        %v1331 = vsub.s32 %v1328, %v1330
        %v1332 = vrot.slane %v1318, %v1331
        %v1333 = vcombine.high %v1325, %v1325
        %v1334 = vcombine.high %v1332, %v1332
        %v1335 = vcombine.high %v263, %v263
        %v1337 = vunpack.c.l.s4 1983009808
        %v1338 = vunpack.c.0.s8 %v1337
        %v1339 = vlaneseq
        %v1340 = vshrl.u32 %v1339, 7
        %v1341 = vsub.s32 %v1338, %v1340
        %v1342 = vrot.slane %v263, %v1341
        %v1344 = vunpack.c.l.s4 1983009808
        %v1345 = vunpack.c.0.s8 %v1344
        %v1346 = vlaneseq
        %v1347 = vshrl.u32 %v1346, 7
        %v1348 = vsub.s32 %v1345, %v1347
        %v1349 = vrot.slane %v1335, %v1348
        %v1350 = vcombine.high %v1342, %v1342
        %v1351 = vcombine.high %v1349, %v1349
        %v1352 = vcombine.high %v264, %v264
        %v1354 = vunpack.c.l.s4 1983009808
        %v1355 = vunpack.c.0.s8 %v1354
        %v1356 = vlaneseq
        %v1357 = vshrl.u32 %v1356, 7
        %v1358 = vsub.s32 %v1355, %v1357
        %v1359 = vrot.slane %v264, %v1358
        %v1361 = vunpack.c.l.s4 1983009808
        %v1362 = vunpack.c.0.s8 %v1361
        %v1363 = vlaneseq
        %v1364 = vshrl.u32 %v1363, 7
        %v1365 = vsub.s32 %v1362, %v1364
        %v1366 = vrot.slane %v1352, %v1365
        %v1367 = vcombine.high %v1359, %v1359
        %v1368 = vcombine.high %v1366, %v1366
        %v1369 = vcombine.high %v265, %v265
        %v1371 = vunpack.c.l.s4 1983009808
        %v1372 = vunpack.c.0.s8 %v1371
        %v1373 = vlaneseq
        %v1374 = vshrl.u32 %v1373, 7
        %v1375 = vsub.s32 %v1372, %v1374
        %v1376 = vrot.slane %v265, %v1375
        %v1378 = vunpack.c.l.s4 1983009808
        %v1379 = vunpack.c.0.s8 %v1378
        %v1380 = vlaneseq
        %v1381 = vshrl.u32 %v1380, 7
        %v1382 = vsub.s32 %v1379, %v1381
        %v1383 = vrot.slane %v1369, %v1382
        %v1384 = vcombine.high %v1376, %v1376
        %v1385 = vcombine.high %v1383, %v1383
        %v1386 = vcombine.high %v266, %v266
        %v1388 = vunpack.c.l.s4 1983009808
        %v1389 = vunpack.c.0.s8 %v1388
        %v1390 = vlaneseq
        %v1391 = vshrl.u32 %v1390, 7
        %v1392 = vsub.s32 %v1389, %v1391
        %v1393 = vrot.slane %v266, %v1392
        %v1395 = vunpack.c.l.s4 1983009808
        %v1396 = vunpack.c.0.s8 %v1395
        %v1397 = vlaneseq
        %v1398 = vshrl.u32 %v1397, 7
        %v1399 = vsub.s32 %v1396, %v1398
        %v1400 = vrot.slane %v1386, %v1399
        %v1401 = vcombine.high %v1393, %v1393
        %v1402 = vcombine.high %v1400, %v1400
        %v1403 = vcombine.high %v267, %v267
        %v1405 = vunpack.c.l.s4 1983009808
        %v1406 = vunpack.c.0.s8 %v1405
        %v1407 = vlaneseq
        %v1408 = vshrl.u32 %v1407, 7
        %v1409 = vsub.s32 %v1406, %v1408
        %v1410 = vrot.slane %v267, %v1409
        %v1412 = vunpack.c.l.s4 1983009808
        %v1413 = vunpack.c.0.s8 %v1412
        %v1414 = vlaneseq
        %v1415 = vshrl.u32 %v1414, 7
        %v1416 = vsub.s32 %v1413, %v1415
        %v1417 = vrot.slane %v1403, %v1416
        %v1418 = vcombine.high %v1410, %v1410
        %v1419 = vcombine.high %v1417, %v1417
        %v1420 = vcombine.high %v268, %v268
        %v1422 = vunpack.c.l.s4 1983009808
        %v1423 = vunpack.c.0.s8 %v1422
        %v1424 = vlaneseq
        %v1425 = vshrl.u32 %v1424, 7
        %v1426 = vsub.s32 %v1423, %v1425
        %v1427 = vrot.slane %v268, %v1426
        %v1429 = vunpack.c.l.s4 1983009808
        %v1430 = vunpack.c.0.s8 %v1429
        %v1431 = vlaneseq
        %v1432 = vshrl.u32 %v1431, 7
        %v1433 = vsub.s32 %v1430, %v1432
        %v1434 = vrot.slane %v1420, %v1433
        %v1435 = vcombine.high %v1427, %v1427
        %v1436 = vcombine.high %v1434, %v1434
        %v1437 = vcombine.high %v269, %v269
        %v1439 = vunpack.c.l.s4 1983009808
        %v1440 = vunpack.c.0.s8 %v1439
        %v1441 = vlaneseq
        %v1442 = vshrl.u32 %v1441, 7
        %v1443 = vsub.s32 %v1440, %v1442
        %v1444 = vrot.slane %v269, %v1443
        %v1446 = vunpack.c.l.s4 1983009808
        %v1447 = vunpack.c.0.s8 %v1446
        %v1448 = vlaneseq
        %v1449 = vshrl.u32 %v1448, 7
        %v1450 = vsub.s32 %v1447, %v1449
        %v1451 = vrot.slane %v1437, %v1450
        %v1452 = vcombine.high %v1444, %v1444
        %v1453 = vcombine.high %v1451, %v1451
        %v1454 = vcombine.high %v270, %v270
        %v1456 = vunpack.c.l.s4 1983009808
        %v1457 = vunpack.c.0.s8 %v1456
        %v1458 = vlaneseq
        %v1459 = vshrl.u32 %v1458, 7
        %v1460 = vsub.s32 %v1457, %v1459
        %v1461 = vrot.slane %v270, %v1460
        %v1463 = vunpack.c.l.s4 1983009808
        %v1464 = vunpack.c.0.s8 %v1463
        %v1465 = vlaneseq
        %v1466 = vshrl.u32 %v1465, 7
        %v1467 = vsub.s32 %v1464, %v1466
        %v1468 = vrot.slane %v1454, %v1467
        %v1469 = vcombine.high %v1461, %v1461
        %v1470 = vcombine.high %v1468, %v1468
        %v1471 = vcombine.high %v271, %v271
        %v1473 = vunpack.c.l.s4 1983009808
        %v1474 = vunpack.c.0.s8 %v1473
        %v1475 = vlaneseq
        %v1476 = vshrl.u32 %v1475, 7
        %v1477 = vsub.s32 %v1474, %v1476
        %v1478 = vrot.slane %v271, %v1477
        %v1480 = vunpack.c.l.s4 1983009808
        %v1481 = vunpack.c.0.s8 %v1480
        %v1482 = vlaneseq
        %v1483 = vshrl.u32 %v1482, 7
        %v1484 = vsub.s32 %v1481, %v1483
        %v1485 = vrot.slane %v1471, %v1484
        %v1486 = vcombine.high %v1478, %v1478
        %v1487 = vcombine.high %v1485, %v1485
        %v1488 = vcombine.high %v272, %v272
        %v1490 = vunpack.c.l.s4 1983009808
        %v1491 = vunpack.c.0.s8 %v1490
        %v1492 = vlaneseq
        %v1493 = vshrl.u32 %v1492, 7
        %v1494 = vsub.s32 %v1491, %v1493
        %v1495 = vrot.slane %v272, %v1494
        %v1497 = vunpack.c.l.s4 1983009808
        %v1498 = vunpack.c.0.s8 %v1497
        %v1499 = vlaneseq
        %v1500 = vshrl.u32 %v1499, 7
        %v1501 = vsub.s32 %v1498, %v1500
        %v1502 = vrot.slane %v1488, %v1501
        %v1503 = vcombine.high %v1495, %v1495
        %v1504 = vcombine.high %v1502, %v1502
        %v1505 = vcombine.high %v273, %v273
        %v1507 = vunpack.c.l.s4 1983009808
        %v1508 = vunpack.c.0.s8 %v1507
        %v1509 = vlaneseq
        %v1510 = vshrl.u32 %v1509, 7
        %v1511 = vsub.s32 %v1508, %v1510
        %v1512 = vrot.slane %v273, %v1511
        %v1514 = vunpack.c.l.s4 1983009808
        %v1515 = vunpack.c.0.s8 %v1514
        %v1516 = vlaneseq
        %v1517 = vshrl.u32 %v1516, 7
        %v1518 = vsub.s32 %v1515, %v1517
        %v1519 = vrot.slane %v1505, %v1518
        %v1520 = vcombine.high %v1512, %v1512
        %v1521 = vcombine.high %v1519, %v1519
        %v1522 = vcombine.high %v274, %v274
        %v1524 = vunpack.c.l.s4 1983009808
        %v1525 = vunpack.c.0.s8 %v1524
        %v1526 = vlaneseq
        %v1527 = vshrl.u32 %v1526, 7
        %v1528 = vsub.s32 %v1525, %v1527
        %v1529 = vrot.slane %v274, %v1528
        %v1531 = vunpack.c.l.s4 1983009808
        %v1532 = vunpack.c.0.s8 %v1531
        %v1533 = vlaneseq
        %v1534 = vshrl.u32 %v1533, 7
        %v1535 = vsub.s32 %v1532, %v1534
        %v1536 = vrot.slane %v1522, %v1535
        %v1537 = vcombine.high %v1529, %v1529
        %v1538 = vcombine.high %v1536, %v1536
        %v1539 = vcombine.high %v275, %v275
        %v1541 = vunpack.c.l.s4 1983009808
        %v1542 = vunpack.c.0.s8 %v1541
        %v1543 = vlaneseq
        %v1544 = vshrl.u32 %v1543, 7
        %v1545 = vsub.s32 %v1542, %v1544
        %v1546 = vrot.slane %v275, %v1545
        %v1548 = vunpack.c.l.s4 1983009808
        %v1549 = vunpack.c.0.s8 %v1548
        %v1550 = vlaneseq
        %v1551 = vshrl.u32 %v1550, 7
        %v1552 = vsub.s32 %v1549, %v1551
        %v1553 = vrot.slane %v1539, %v1552
        %v1554 = vcombine.high %v1546, %v1546
        %v1555 = vcombine.high %v1553, %v1553
        %v1556 = vcombine.high %v276, %v276
        %v1558 = vunpack.c.l.s4 1983009808
        %v1559 = vunpack.c.0.s8 %v1558
        %v1560 = vlaneseq
        %v1561 = vshrl.u32 %v1560, 7
        %v1562 = vsub.s32 %v1559, %v1561
        %v1563 = vrot.slane %v276, %v1562
        %v1565 = vunpack.c.l.s4 1983009808
        %v1566 = vunpack.c.0.s8 %v1565
        %v1567 = vlaneseq
        %v1568 = vshrl.u32 %v1567, 7
        %v1569 = vsub.s32 %v1566, %v1568
        %v1570 = vrot.slane %v1556, %v1569
        %v1571 = vcombine.high %v1563, %v1563
        %v1572 = vcombine.high %v1570, %v1570
        %v1573 = vcombine.high %v277, %v277
        %v1575 = vunpack.c.l.s4 1983009808
        %v1576 = vunpack.c.0.s8 %v1575
        %v1577 = vlaneseq
        %v1578 = vshrl.u32 %v1577, 7
        %v1579 = vsub.s32 %v1576, %v1578
        %v1580 = vrot.slane %v277, %v1579
        %v1582 = vunpack.c.l.s4 1983009808
        %v1583 = vunpack.c.0.s8 %v1582
        %v1584 = vlaneseq
        %v1585 = vshrl.u32 %v1584, 7
        %v1586 = vsub.s32 %v1583, %v1585
        %v1587 = vrot.slane %v1573, %v1586
        %v1588 = vcombine.high %v1580, %v1580
        %v1589 = vcombine.high %v1587, %v1587
        %v1590 = vcombine.high %v278, %v278
        %v1592 = vunpack.c.l.s4 1983009808
        %v1593 = vunpack.c.0.s8 %v1592
        %v1594 = vlaneseq
        %v1595 = vshrl.u32 %v1594, 7
        %v1596 = vsub.s32 %v1593, %v1595
        %v1597 = vrot.slane %v278, %v1596
        %v1599 = vunpack.c.l.s4 1983009808
        %v1600 = vunpack.c.0.s8 %v1599
        %v1601 = vlaneseq
        %v1602 = vshrl.u32 %v1601, 7
        %v1603 = vsub.s32 %v1600, %v1602
        %v1604 = vrot.slane %v1590, %v1603
        %v1605 = vcombine.high %v1597, %v1597
        %v1606 = vcombine.high %v1604, %v1604
        %v1607 = vcombine.high %v279, %v279
        %v1609 = vunpack.c.l.s4 1983009808
        %v1610 = vunpack.c.0.s8 %v1609
        %v1611 = vlaneseq
        %v1612 = vshrl.u32 %v1611, 7
        %v1613 = vsub.s32 %v1610, %v1612
        %v1614 = vrot.slane %v279, %v1613
        %v1616 = vunpack.c.l.s4 1983009808
        %v1617 = vunpack.c.0.s8 %v1616
        %v1618 = vlaneseq
        %v1619 = vshrl.u32 %v1618, 7
        %v1620 = vsub.s32 %v1617, %v1619
        %v1621 = vrot.slane %v1607, %v1620
        %v1622 = vcombine.high %v1614, %v1614
        %v1623 = vcombine.high %v1621, %v1621
        %v1624 = vcombine.high %v280, %v280
        %v1626 = vunpack.c.l.s4 1983009808
        %v1627 = vunpack.c.0.s8 %v1626
        %v1628 = vlaneseq
        %v1629 = vshrl.u32 %v1628, 7
        %v1630 = vsub.s32 %v1627, %v1629
        %v1631 = vrot.slane %v280, %v1630
        %v1633 = vunpack.c.l.s4 1983009808
        %v1634 = vunpack.c.0.s8 %v1633
        %v1635 = vlaneseq
        %v1636 = vshrl.u32 %v1635, 7
        %v1637 = vsub.s32 %v1634, %v1636
        %v1638 = vrot.slane %v1624, %v1637
        %v1639 = vcombine.high %v1631, %v1631
        %v1640 = vcombine.high %v1638, %v1638
        %v1641 = vcombine.high %v281, %v281
        %v1643 = vunpack.c.l.s4 1983009808
        %v1644 = vunpack.c.0.s8 %v1643
        %v1645 = vlaneseq
        %v1646 = vshrl.u32 %v1645, 7
        %v1647 = vsub.s32 %v1644, %v1646
        %v1648 = vrot.slane %v281, %v1647
        %v1650 = vunpack.c.l.s4 1983009808
        %v1651 = vunpack.c.0.s8 %v1650
        %v1652 = vlaneseq
        %v1653 = vshrl.u32 %v1652, 7
        %v1654 = vsub.s32 %v1651, %v1653
        %v1655 = vrot.slane %v1641, %v1654
        %v1656 = vcombine.high %v1648, %v1648
        %v1657 = vcombine.high %v1655, %v1655
        %v1658 = vcombine.high %v282, %v282
        %v1660 = vunpack.c.l.s4 1983009808
        %v1661 = vunpack.c.0.s8 %v1660
        %v1662 = vlaneseq
        %v1663 = vshrl.u32 %v1662, 7
        %v1664 = vsub.s32 %v1661, %v1663
        %v1665 = vrot.slane %v282, %v1664
        %v1667 = vunpack.c.l.s4 1983009808
        %v1668 = vunpack.c.0.s8 %v1667
        %v1669 = vlaneseq
        %v1670 = vshrl.u32 %v1669, 7
        %v1671 = vsub.s32 %v1668, %v1670
        %v1672 = vrot.slane %v1658, %v1671
        %v1673 = vcombine.high %v1665, %v1665
        %v1674 = vcombine.high %v1672, %v1672
        %v1675 = vcombine.high %v283, %v283
        %v1677 = vunpack.c.l.s4 1983009808
        %v1678 = vunpack.c.0.s8 %v1677
        %v1679 = vlaneseq
        %v1680 = vshrl.u32 %v1679, 7
        %v1681 = vsub.s32 %v1678, %v1680
        %v1682 = vrot.slane %v283, %v1681
        %v1684 = vunpack.c.l.s4 1983009808
        %v1685 = vunpack.c.0.s8 %v1684
        %v1686 = vlaneseq
        %v1687 = vshrl.u32 %v1686, 7
        %v1688 = vsub.s32 %v1685, %v1687
        %v1689 = vrot.slane %v1675, %v1688
        %v1690 = vcombine.high %v1682, %v1682
        %v1691 = vcombine.high %v1689, %v1689
        %v1692 = vcombine.high %v284, %v284
        %v1694 = vunpack.c.l.s4 1983009808
        %v1695 = vunpack.c.0.s8 %v1694
        %v1696 = vlaneseq
        %v1697 = vshrl.u32 %v1696, 7
        %v1698 = vsub.s32 %v1695, %v1697
        %v1699 = vrot.slane %v284, %v1698
        %v1701 = vunpack.c.l.s4 1983009808
        %v1702 = vunpack.c.0.s8 %v1701
        %v1703 = vlaneseq
        %v1704 = vshrl.u32 %v1703, 7
        %v1705 = vsub.s32 %v1702, %v1704
        %v1706 = vrot.slane %v1692, %v1705
        %v1707 = vcombine.high %v1699, %v1699
        %v1708 = vcombine.high %v1706, %v1706
        %v1709 = vcombine.high %v285, %v285
        %v1711 = vunpack.c.l.s4 1983009808
        %v1712 = vunpack.c.0.s8 %v1711
        %v1713 = vlaneseq
        %v1714 = vshrl.u32 %v1713, 7
        %v1715 = vsub.s32 %v1712, %v1714
        %v1716 = vrot.slane %v285, %v1715
        %v1718 = vunpack.c.l.s4 1983009808
        %v1719 = vunpack.c.0.s8 %v1718
        %v1720 = vlaneseq
        %v1721 = vshrl.u32 %v1720, 7
        %v1722 = vsub.s32 %v1719, %v1721
        %v1723 = vrot.slane %v1709, %v1722
        %v1724 = vcombine.high %v1716, %v1716
        %v1725 = vcombine.high %v1723, %v1723
        %v1726 = vcombine.high %v286, %v286
        %v1728 = vunpack.c.l.s4 1983009808
        %v1729 = vunpack.c.0.s8 %v1728
        %v1730 = vlaneseq
        %v1731 = vshrl.u32 %v1730, 7
        %v1732 = vsub.s32 %v1729, %v1731
        %v1733 = vrot.slane %v286, %v1732
        %v1735 = vunpack.c.l.s4 1983009808
        %v1736 = vunpack.c.0.s8 %v1735
        %v1737 = vlaneseq
        %v1738 = vshrl.u32 %v1737, 7
        %v1739 = vsub.s32 %v1736, %v1738
        %v1740 = vrot.slane %v1726, %v1739
        %v1741 = vcombine.high %v1733, %v1733
        %v1742 = vcombine.high %v1740, %v1740
        %v1743 = vcombine.high %v287, %v287
        %v1745 = vunpack.c.l.s4 1983009808
        %v1746 = vunpack.c.0.s8 %v1745
        %v1747 = vlaneseq
        %v1748 = vshrl.u32 %v1747, 7
        %v1749 = vsub.s32 %v1746, %v1748
        %v1750 = vrot.slane %v287, %v1749
        %v1752 = vunpack.c.l.s4 1983009808
        %v1753 = vunpack.c.0.s8 %v1752
        %v1754 = vlaneseq
        %v1755 = vshrl.u32 %v1754, 7
        %v1756 = vsub.s32 %v1753, %v1755
        %v1757 = vrot.slane %v1743, %v1756
        %v1758 = vcombine.high %v1750, %v1750
        %v1759 = vcombine.high %v1757, %v1757
        %v1760 = vcombine.high %v288, %v288
        %v1762 = vunpack.c.l.s4 1983009808
        %v1763 = vunpack.c.0.s8 %v1762
        %v1764 = vlaneseq
        %v1765 = vshrl.u32 %v1764, 7
        %v1766 = vsub.s32 %v1763, %v1765
        %v1767 = vrot.slane %v288, %v1766
        %v1769 = vunpack.c.l.s4 1983009808
        %v1770 = vunpack.c.0.s8 %v1769
        %v1771 = vlaneseq
        %v1772 = vshrl.u32 %v1771, 7
        %v1773 = vsub.s32 %v1770, %v1772
        %v1774 = vrot.slane %v1760, %v1773
        %v1775 = vcombine.high %v1767, %v1767
        %v1776 = vcombine.high %v1774, %v1774
        %v1777 = vcombine.high %v289, %v289
        %v1779 = vunpack.c.l.s4 1983009808
        %v1780 = vunpack.c.0.s8 %v1779
        %v1781 = vlaneseq
        %v1782 = vshrl.u32 %v1781, 7
        %v1783 = vsub.s32 %v1780, %v1782
        %v1784 = vrot.slane %v289, %v1783
        %v1786 = vunpack.c.l.s4 1983009808
        %v1787 = vunpack.c.0.s8 %v1786
        %v1788 = vlaneseq
        %v1789 = vshrl.u32 %v1788, 7
        %v1790 = vsub.s32 %v1787, %v1789
        %v1791 = vrot.slane %v1777, %v1790
        %v1792 = vcombine.high %v1784, %v1784
        %v1793 = vcombine.high %v1791, %v1791
        %v1794 = vcombine.high %v290, %v290
        %v1796 = vunpack.c.l.s4 1983009808
        %v1797 = vunpack.c.0.s8 %v1796
        %v1798 = vlaneseq
        %v1799 = vshrl.u32 %v1798, 7
        %v1800 = vsub.s32 %v1797, %v1799
        %v1801 = vrot.slane %v290, %v1800
        %v1803 = vunpack.c.l.s4 1983009808
        %v1804 = vunpack.c.0.s8 %v1803
        %v1805 = vlaneseq
        %v1806 = vshrl.u32 %v1805, 7
        %v1807 = vsub.s32 %v1804, %v1806
        %v1808 = vrot.slane %v1794, %v1807
        %v1809 = vcombine.high %v1801, %v1801
        %v1810 = vcombine.high %v1808, %v1808
        %v1811 = vcombine.high %v291, %v291
        %v1813 = vunpack.c.l.s4 1983009808
        %v1814 = vunpack.c.0.s8 %v1813
        %v1815 = vlaneseq
        %v1816 = vshrl.u32 %v1815, 7
        %v1817 = vsub.s32 %v1814, %v1816
        %v1818 = vrot.slane %v291, %v1817
        %v1820 = vunpack.c.l.s4 1983009808
        %v1821 = vunpack.c.0.s8 %v1820
        %v1822 = vlaneseq
        %v1823 = vshrl.u32 %v1822, 7
        %v1824 = vsub.s32 %v1821, %v1823
        %v1825 = vrot.slane %v1811, %v1824
        %v1826 = vcombine.high %v1818, %v1818
        %v1827 = vcombine.high %v1825, %v1825
        %v1828 = vcombine.high %v292, %v292
        %v1830 = vunpack.c.l.s4 1983009808
        %v1831 = vunpack.c.0.s8 %v1830
        %v1832 = vlaneseq
        %v1833 = vshrl.u32 %v1832, 7
        %v1834 = vsub.s32 %v1831, %v1833
        %v1835 = vrot.slane %v292, %v1834
        %v1837 = vunpack.c.l.s4 1983009808
        %v1838 = vunpack.c.0.s8 %v1837
        %v1839 = vlaneseq
        %v1840 = vshrl.u32 %v1839, 7
        %v1841 = vsub.s32 %v1838, %v1840
        %v1842 = vrot.slane %v1828, %v1841
        %v1843 = vcombine.high %v1835, %v1835
        %v1844 = vcombine.high %v1842, %v1842
        %v1845 = vcombine.high %v293, %v293
        %v1847 = vunpack.c.l.s4 1983009808
        %v1848 = vunpack.c.0.s8 %v1847
        %v1849 = vlaneseq
        %v1850 = vshrl.u32 %v1849, 7
        %v1851 = vsub.s32 %v1848, %v1850
        %v1852 = vrot.slane %v293, %v1851
        %v1854 = vunpack.c.l.s4 1983009808
        %v1855 = vunpack.c.0.s8 %v1854
        %v1856 = vlaneseq
        %v1857 = vshrl.u32 %v1856, 7
        %v1858 = vsub.s32 %v1855, %v1857
        %v1859 = vrot.slane %v1845, %v1858
        %v1860 = vcombine.high %v1852, %v1852
        %v1861 = vcombine.high %v1859, %v1859
        %v1862 = vcombine.high %v294, %v294
        %v1864 = vunpack.c.l.s4 1983009808
        %v1865 = vunpack.c.0.s8 %v1864
        %v1866 = vlaneseq
        %v1867 = vshrl.u32 %v1866, 7
        %v1868 = vsub.s32 %v1865, %v1867
        %v1869 = vrot.slane %v294, %v1868
        %v1871 = vunpack.c.l.s4 1983009808
        %v1872 = vunpack.c.0.s8 %v1871
        %v1873 = vlaneseq
        %v1874 = vshrl.u32 %v1873, 7
        %v1875 = vsub.s32 %v1872, %v1874
        %v1876 = vrot.slane %v1862, %v1875
        %v1877 = vcombine.high %v1869, %v1869
        %v1878 = vcombine.high %v1876, %v1876
        %v1879 = vcombine.high %v295, %v295
        %v1881 = vunpack.c.l.s4 1983009808
        %v1882 = vunpack.c.0.s8 %v1881
        %v1883 = vlaneseq
        %v1884 = vshrl.u32 %v1883, 7
        %v1885 = vsub.s32 %v1882, %v1884
        %v1886 = vrot.slane %v295, %v1885
        %v1888 = vunpack.c.l.s4 1983009808
        %v1889 = vunpack.c.0.s8 %v1888
        %v1890 = vlaneseq
        %v1891 = vshrl.u32 %v1890, 7
        %v1892 = vsub.s32 %v1889, %v1891
        %v1893 = vrot.slane %v1879, %v1892
        %v1894 = vcombine.high %v1886, %v1886
        %v1895 = vcombine.high %v1893, %v1893
        %v1896 = vcombine.high %v296, %v296
        %v1898 = vunpack.c.l.s4 1983009808
        %v1899 = vunpack.c.0.s8 %v1898
        %v1900 = vlaneseq
        %v1901 = vshrl.u32 %v1900, 7
        %v1902 = vsub.s32 %v1899, %v1901
        %v1903 = vrot.slane %v296, %v1902
        %v1905 = vunpack.c.l.s4 1983009808
        %v1906 = vunpack.c.0.s8 %v1905
        %v1907 = vlaneseq
        %v1908 = vshrl.u32 %v1907, 7
        %v1909 = vsub.s32 %v1906, %v1908
        %v1910 = vrot.slane %v1896, %v1909
        %v1911 = vcombine.high %v1903, %v1903
        %v1912 = vcombine.high %v1910, %v1910
        %v1913 = vcombine.high %v297, %v297
        %v1915 = vunpack.c.l.s4 1983009808
        %v1916 = vunpack.c.0.s8 %v1915
        %v1917 = vlaneseq
        %v1918 = vshrl.u32 %v1917, 7
        %v1919 = vsub.s32 %v1916, %v1918
        %v1920 = vrot.slane %v297, %v1919
        %v1922 = vunpack.c.l.s4 1983009808
        %v1923 = vunpack.c.0.s8 %v1922
        %v1924 = vlaneseq
        %v1925 = vshrl.u32 %v1924, 7
        %v1926 = vsub.s32 %v1923, %v1925
        %v1927 = vrot.slane %v1913, %v1926
        %v1928 = vcombine.high %v1920, %v1920
        %v1929 = vcombine.high %v1927, %v1927
        %v1930 = vcombine.high %v298, %v298
        %v1932 = vunpack.c.l.s4 1983009808
        %v1933 = vunpack.c.0.s8 %v1932
        %v1934 = vlaneseq
        %v1935 = vshrl.u32 %v1934, 7
        %v1936 = vsub.s32 %v1933, %v1935
        %v1937 = vrot.slane %v298, %v1936
        %v1939 = vunpack.c.l.s4 1983009808
        %v1940 = vunpack.c.0.s8 %v1939
        %v1941 = vlaneseq
        %v1942 = vshrl.u32 %v1941, 7
        %v1943 = vsub.s32 %v1940, %v1942
        %v1944 = vrot.slane %v1930, %v1943
        %v1945 = vcombine.high %v1937, %v1937
        %v1946 = vcombine.high %v1944, %v1944
        %v1947 = vcombine.high %v299, %v299
        %v1949 = vunpack.c.l.s4 1983009808
        %v1950 = vunpack.c.0.s8 %v1949
        %v1951 = vlaneseq
        %v1952 = vshrl.u32 %v1951, 7
        %v1953 = vsub.s32 %v1950, %v1952
        %v1954 = vrot.slane %v299, %v1953
        %v1956 = vunpack.c.l.s4 1983009808
        %v1957 = vunpack.c.0.s8 %v1956
        %v1958 = vlaneseq
        %v1959 = vshrl.u32 %v1958, 7
        %v1960 = vsub.s32 %v1957, %v1959
        %v1961 = vrot.slane %v1947, %v1960
        %v1962 = vcombine.high %v1954, %v1954
        %v1963 = vcombine.high %v1961, %v1961
        %2220 = vmatprep.subr.mxu0 %v301
        %2221 = vmatpush1.xpose.msra.mxu0 %v300
        %2222 = vmatprep.subr.mxu0 %v557
        %2223 = vmatpush1.xpose.msra.mxu0 %v556
        %2224 = vmatprep.subr.mxu0 0.0
        %2225 = vmatpush1.xpose.msra.mxu0 0.0
        %2226 = vmatprep.subr.mxu0 0.0
        %2227 = vmatpush1.xpose.msra.mxu0 0.0
        %2228 = vmatprep.subr.mxu0 0.0
        %2229 = vmatpush1.xpose.msra.mxu0 0.0
        %2230 = vmatprep.subr.mxu0 0.0
        %2231 = vmatpush1.xpose.msra.mxu0 0.0
        %2232 = vmatprep.subr.mxu0 0.0
        %2233 = vmatpush1.xpose.msra.mxu0 0.0
        %2234 = vmatprep.subr.mxu0 0.0
        %2235 = vmatpush1.xpose.msra.mxu0 0.0
        %2236 = vmatprep.subr.mxu0 0.0
        %2237 = vmatpush1.xpose.msra.mxu0 0.0
        %2238 = vmatprep.subr.mxu0 0.0
        %2239 = vmatpush1.xpose.msra.mxu0 0.0
        %2240 = vmatprep.subr.mxu0 0.0
        %2241 = vmatpush1.xpose.msra.mxu0 0.0
        %2242 = vmatprep.subr.mxu0 0.0
        %2243 = vmatpush1.xpose.msra.mxu0 0.0
        %2244 = vmatprep.subr.mxu0 0.0
        %2245 = vmatpush1.xpose.msra.mxu0 0.0
        %2246 = vmatprep.subr.mxu0 0.0
        %2247 = vmatpush1.xpose.msra.mxu0 0.0
        %2248 = vmatprep.subr.mxu0 0.0
        %2249 = vmatpush1.xpose.msra.mxu0 0.0
        %2250 = vmatprep.subr.mxu0 0.0
        %2251 = vmatpush1.xpose.msra.mxu0 0.0
        %2252 = vmatprep.subr.mxu0 0.0
        %2253 = vmatpush1.xpose.msra.mxu0 0.0
        %2254 = vmatprep.subr.mxu0 0.0
        %2255 = vmatpush1.xpose.msra.mxu0 0.0
        %2256 = vmatprep.subr.mxu0 0.0
        %2257 = vmatpush1.xpose.msra.mxu0 0.0
        %2258 = vmatprep.subr.mxu0 0.0
        %2259 = vmatpush1.xpose.msra.mxu0 0.0
        %2260 = vmatprep.subr.mxu0 0.0
        %2261 = vmatpush1.xpose.msra.mxu0 0.0
        %2262 = vmatprep.subr.mxu0 0.0
        %2263 = vmatpush1.xpose.msra.mxu0 0.0
        %2264 = vmatprep.subr.mxu0 0.0
        %2265 = vmatpush1.xpose.msra.mxu0 0.0
        %2266 = vmatprep.subr.mxu0 0.0
        %2267 = vmatpush1.xpose.msra.mxu0 0.0
        %2268 = vmatprep.subr.mxu0 0.0
        %2269 = vmatpush1.xpose.msra.mxu0 0.0
        %2270 = vmatprep.subr.mxu0 0.0
        %2271 = vmatpush1.xpose.msra.mxu0 0.0
        %2272 = vmatprep.subr.mxu0 0.0
        %2273 = vmatpush1.xpose.msra.mxu0 0.0
        %2274 = vmatprep.subr.mxu0 0.0
        %2275 = vmatpush1.xpose.msra.mxu0 0.0
        %2276 = vmatprep.subr.mxu0 0.0
        %2277 = vmatpush1.xpose.msra.mxu0 0.0
        %2278 = vmatprep.subr.mxu0 0.0
        %2279 = vmatpush1.xpose.msra.mxu0 0.0
        %2280 = vmatprep.subr.mxu0 0.0
        %2281 = vmatpush1.xpose.msra.mxu0 0.0
        %2282 = vmatprep.subr.mxu0 0.0
        %2283 = vmatpush1.xpose.msra.mxu0 0.0
        %2284 = vmatprep.mubr.f32.mxu0 %v891
        %2285 = vmatmul.mubr.f32.gmra.mrb[0].mxu0 %v883
        %v2286 = vpop.f32.mrb[0].mxu0
        %v2287 = vadd.f32 0.0, %v2286
        %v2288 = vpop.f32.mrb[0].mxu0
        %2289 = vdwg.mxu0
        %2290 = vmatprep.subr.mxu0 %v303
        %2291 = vmatpush1.xpose.msra.mxu0 %v302
        %2292 = vmatprep.subr.mxu0 %v559
        %2293 = vmatpush1.xpose.msra.mxu0 %v558
        %2294 = vmatprep.subr.mxu0 0.0
        %2295 = vmatpush1.xpose.msra.mxu0 0.0
        %2296 = vmatprep.subr.mxu0 0.0
        %2297 = vmatpush1.xpose.msra.mxu0 0.0
        %2298 = vmatprep.subr.mxu0 0.0
        %2299 = vmatpush1.xpose.msra.mxu0 0.0
        %2300 = vmatprep.subr.mxu0 0.0
        %2301 = vmatpush1.xpose.msra.mxu0 0.0
        %2302 = vmatprep.subr.mxu0 0.0
        %2303 = vmatpush1.xpose.msra.mxu0 0.0
        %2304 = vmatprep.subr.mxu0 0.0
        %2305 = vmatpush1.xpose.msra.mxu0 0.0
        %2306 = vmatprep.subr.mxu0 0.0
        %2307 = vmatpush1.xpose.msra.mxu0 0.0
        %2308 = vmatprep.subr.mxu0 0.0
        %2309 = vmatpush1.xpose.msra.mxu0 0.0
        %2310 = vmatprep.subr.mxu0 0.0
        %2311 = vmatpush1.xpose.msra.mxu0 0.0
        %2312 = vmatprep.subr.mxu0 0.0
        %2313 = vmatpush1.xpose.msra.mxu0 0.0
        %2314 = vmatprep.subr.mxu0 0.0
        %2315 = vmatpush1.xpose.msra.mxu0 0.0
        %2316 = vmatprep.subr.mxu0 0.0
        %2317 = vmatpush1.xpose.msra.mxu0 0.0
        %2318 = vmatprep.subr.mxu0 0.0
        %2319 = vmatpush1.xpose.msra.mxu0 0.0
        %2320 = vmatprep.subr.mxu0 0.0
        %2321 = vmatpush1.xpose.msra.mxu0 0.0
        %2322 = vmatprep.subr.mxu0 0.0
        %2323 = vmatpush1.xpose.msra.mxu0 0.0
        %2324 = vmatprep.subr.mxu0 0.0
        %2325 = vmatpush1.xpose.msra.mxu0 0.0
        %2326 = vmatprep.subr.mxu0 0.0
        %2327 = vmatpush1.xpose.msra.mxu0 0.0
        %2328 = vmatprep.subr.mxu0 0.0
        %2329 = vmatpush1.xpose.msra.mxu0 0.0
        %2330 = vmatprep.subr.mxu0 0.0
        %2331 = vmatpush1.xpose.msra.mxu0 0.0
        %2332 = vmatprep.subr.mxu0 0.0
        %2333 = vmatpush1.xpose.msra.mxu0 0.0
        %2334 = vmatprep.subr.mxu0 0.0
        %2335 = vmatpush1.xpose.msra.mxu0 0.0
        %2336 = vmatprep.subr.mxu0 0.0
        %2337 = vmatpush1.xpose.msra.mxu0 0.0
        %2338 = vmatprep.subr.mxu0 0.0
        %2339 = vmatpush1.xpose.msra.mxu0 0.0
        %2340 = vmatprep.subr.mxu0 0.0
        %2341 = vmatpush1.xpose.msra.mxu0 0.0
        %2342 = vmatprep.subr.mxu0 0.0
        %2343 = vmatpush1.xpose.msra.mxu0 0.0
        %2344 = vmatprep.subr.mxu0 0.0
        %2345 = vmatpush1.xpose.msra.mxu0 0.0
        %2346 = vmatprep.subr.mxu0 0.0
        %2347 = vmatpush1.xpose.msra.mxu0 0.0
        %2348 = vmatprep.subr.mxu0 0.0
        %2349 = vmatpush1.xpose.msra.mxu0 0.0
        %2350 = vmatprep.subr.mxu0 0.0
        %2351 = vmatpush1.xpose.msra.mxu0 0.0
        %2352 = vmatprep.subr.mxu0 0.0
        %2353 = vmatpush1.xpose.msra.mxu0 0.0
        %2354 = vmatprep.mubr.f32.mxu0 %v892
        %2355 = vmatmul.mubr.f32.gmra.mrb[0].mxu0 %v890
        %v2356 = vpop.f32.mrb[0].mxu0
        %v2357 = vadd.f32 %v2287, %v2356
        %v2358 = vpop.f32.mrb[0].mxu0
        %2359 = vdwg.mxu0
        %2360 = vmatprep.subr.mxu0 %v305
        %2361 = vmatpush1.xpose.msra.mxu0 %v304
        %2362 = vmatprep.subr.mxu0 %v561
        %2363 = vmatpush1.xpose.msra.mxu0 %v560
        %2364 = vmatprep.subr.mxu0 0.0
        %2365 = vmatpush1.xpose.msra.mxu0 0.0
        %2366 = vmatprep.subr.mxu0 0.0
        %2367 = vmatpush1.xpose.msra.mxu0 0.0
        %2368 = vmatprep.subr.mxu0 0.0
        %2369 = vmatpush1.xpose.msra.mxu0 0.0
        %2370 = vmatprep.subr.mxu0 0.0
        %2371 = vmatpush1.xpose.msra.mxu0 0.0
        %2372 = vmatprep.subr.mxu0 0.0
        %2373 = vmatpush1.xpose.msra.mxu0 0.0
        %2374 = vmatprep.subr.mxu0 0.0
        %2375 = vmatpush1.xpose.msra.mxu0 0.0
        %2376 = vmatprep.subr.mxu0 0.0
        %2377 = vmatpush1.xpose.msra.mxu0 0.0
        %2378 = vmatprep.subr.mxu0 0.0
        %2379 = vmatpush1.xpose.msra.mxu0 0.0
        %2380 = vmatprep.subr.mxu0 0.0
        %2381 = vmatpush1.xpose.msra.mxu0 0.0
        %2382 = vmatprep.subr.mxu0 0.0
        %2383 = vmatpush1.xpose.msra.mxu0 0.0
        %2384 = vmatprep.subr.mxu0 0.0
        %2385 = vmatpush1.xpose.msra.mxu0 0.0
        %2386 = vmatprep.subr.mxu0 0.0
        %2387 = vmatpush1.xpose.msra.mxu0 0.0
        %2388 = vmatprep.subr.mxu0 0.0
        %2389 = vmatpush1.xpose.msra.mxu0 0.0
        %2390 = vmatprep.subr.mxu0 0.0
        %2391 = vmatpush1.xpose.msra.mxu0 0.0
        %2392 = vmatprep.subr.mxu0 0.0
        %2393 = vmatpush1.xpose.msra.mxu0 0.0
        %2394 = vmatprep.subr.mxu0 0.0
        %2395 = vmatpush1.xpose.msra.mxu0 0.0
        %2396 = vmatprep.subr.mxu0 0.0
        %2397 = vmatpush1.xpose.msra.mxu0 0.0
        %2398 = vmatprep.subr.mxu0 0.0
        %2399 = vmatpush1.xpose.msra.mxu0 0.0
        %2400 = vmatprep.subr.mxu0 0.0
        %2401 = vmatpush1.xpose.msra.mxu0 0.0
        %2402 = vmatprep.subr.mxu0 0.0
        %2403 = vmatpush1.xpose.msra.mxu0 0.0
        %2404 = vmatprep.subr.mxu0 0.0
        %2405 = vmatpush1.xpose.msra.mxu0 0.0
        %2406 = vmatprep.subr.mxu0 0.0
        %2407 = vmatpush1.xpose.msra.mxu0 0.0
        %2408 = vmatprep.subr.mxu0 0.0
        %2409 = vmatpush1.xpose.msra.mxu0 0.0
        %2410 = vmatprep.subr.mxu0 0.0
        %2411 = vmatpush1.xpose.msra.mxu0 0.0
        %2412 = vmatprep.subr.mxu0 0.0
        %2413 = vmatpush1.xpose.msra.mxu0 0.0
        %2414 = vmatprep.subr.mxu0 0.0
        %2415 = vmatpush1.xpose.msra.mxu0 0.0
        %2416 = vmatprep.subr.mxu0 0.0
        %2417 = vmatpush1.xpose.msra.mxu0 0.0
        %2418 = vmatprep.subr.mxu0 0.0
        %2419 = vmatpush1.xpose.msra.mxu0 0.0
        %2420 = vmatprep.subr.mxu0 0.0
        %2421 = vmatpush1.xpose.msra.mxu0 0.0
        %2422 = vmatprep.subr.mxu0 0.0
        %2423 = vmatpush1.xpose.msra.mxu0 0.0
        %2424 = vmatprep.mubr.f32.mxu0 %v908
        %2425 = vmatmul.mubr.f32.gmra.mrb[0].mxu0 %v900
        %v2426 = vpop.f32.mrb[0].mxu0
        %v2427 = vadd.f32 %v2357, %v2426
        %v2428 = vpop.f32.mrb[0].mxu0
        %2429 = vdwg.mxu0
        %2430 = vmatprep.subr.mxu0 %v307
        %2431 = vmatpush1.xpose.msra.mxu0 %v306
        %2432 = vmatprep.subr.mxu0 %v563
        %2433 = vmatpush1.xpose.msra.mxu0 %v562
        %2434 = vmatprep.subr.mxu0 0.0
        %2435 = vmatpush1.xpose.msra.mxu0 0.0
        %2436 = vmatprep.subr.mxu0 0.0
        %2437 = vmatpush1.xpose.msra.mxu0 0.0
        %2438 = vmatprep.subr.mxu0 0.0
        %2439 = vmatpush1.xpose.msra.mxu0 0.0
        %2440 = vmatprep.subr.mxu0 0.0
        %2441 = vmatpush1.xpose.msra.mxu0 0.0
        %2442 = vmatprep.subr.mxu0 0.0
        %2443 = vmatpush1.xpose.msra.mxu0 0.0
        %2444 = vmatprep.subr.mxu0 0.0
        %2445 = vmatpush1.xpose.msra.mxu0 0.0
        %2446 = vmatprep.subr.mxu0 0.0
        %2447 = vmatpush1.xpose.msra.mxu0 0.0
        %2448 = vmatprep.subr.mxu0 0.0
        %2449 = vmatpush1.xpose.msra.mxu0 0.0
        %2450 = vmatprep.subr.mxu0 0.0
        %2451 = vmatpush1.xpose.msra.mxu0 0.0
        %2452 = vmatprep.subr.mxu0 0.0
        %2453 = vmatpush1.xpose.msra.mxu0 0.0
        %2454 = vmatprep.subr.mxu0 0.0
        %2455 = vmatpush1.xpose.msra.mxu0 0.0
        %2456 = vmatprep.subr.mxu0 0.0
        %2457 = vmatpush1.xpose.msra.mxu0 0.0
        %2458 = vmatprep.subr.mxu0 0.0
        %2459 = vmatpush1.xpose.msra.mxu0 0.0
        %2460 = vmatprep.subr.mxu0 0.0
        %2461 = vmatpush1.xpose.msra.mxu0 0.0
        %2462 = vmatprep.subr.mxu0 0.0
        %2463 = vmatpush1.xpose.msra.mxu0 0.0
        %2464 = vmatprep.subr.mxu0 0.0
        %2465 = vmatpush1.xpose.msra.mxu0 0.0
        %2466 = vmatprep.subr.mxu0 0.0
        %2467 = vmatpush1.xpose.msra.mxu0 0.0
        %2468 = vmatprep.subr.mxu0 0.0
        %2469 = vmatpush1.xpose.msra.mxu0 0.0
        %2470 = vmatprep.subr.mxu0 0.0
        %2471 = vmatpush1.xpose.msra.mxu0 0.0
        %2472 = vmatprep.subr.mxu0 0.0
        %2473 = vmatpush1.xpose.msra.mxu0 0.0
        %2474 = vmatprep.subr.mxu0 0.0
        %2475 = vmatpush1.xpose.msra.mxu0 0.0
        %2476 = vmatprep.subr.mxu0 0.0
        %2477 = vmatpush1.xpose.msra.mxu0 0.0
        %2478 = vmatprep.subr.mxu0 0.0
        %2479 = vmatpush1.xpose.msra.mxu0 0.0
        %2480 = vmatprep.subr.mxu0 0.0
        %2481 = vmatpush1.xpose.msra.mxu0 0.0
        %2482 = vmatprep.subr.mxu0 0.0
        %2483 = vmatpush1.xpose.msra.mxu0 0.0
        %2484 = vmatprep.subr.mxu0 0.0
        %2485 = vmatpush1.xpose.msra.mxu0 0.0
        %2486 = vmatprep.subr.mxu0 0.0
        %2487 = vmatpush1.xpose.msra.mxu0 0.0
        %2488 = vmatprep.subr.mxu0 0.0
        %2489 = vmatpush1.xpose.msra.mxu0 0.0
        %2490 = vmatprep.subr.mxu0 0.0
        %2491 = vmatpush1.xpose.msra.mxu0 0.0
        %2492 = vmatprep.subr.mxu0 0.0
        %2493 = vmatpush1.xpose.msra.mxu0 0.0
        %2494 = vmatprep.mubr.f32.mxu0 %v909
        %2495 = vmatmul.mubr.f32.gmra.mrb[0].mxu0 %v907
        %v2496 = vpop.f32.mrb[0].mxu0
        %v2497 = vadd.f32 %v2427, %v2496
        %v2498 = vpop.f32.mrb[0].mxu0
        %2499 = vdwg.mxu0
        %2500 = vmatprep.subr.mxu0 %v309
        %2501 = vmatpush1.xpose.msra.mxu0 %v308
        %2502 = vmatprep.subr.mxu0 %v565
        %2503 = vmatpush1.xpose.msra.mxu0 %v564
        %2504 = vmatprep.subr.mxu0 0.0
        %2505 = vmatpush1.xpose.msra.mxu0 0.0
        %2506 = vmatprep.subr.mxu0 0.0
        %2507 = vmatpush1.xpose.msra.mxu0 0.0
        %2508 = vmatprep.subr.mxu0 0.0
        %2509 = vmatpush1.xpose.msra.mxu0 0.0
        %2510 = vmatprep.subr.mxu0 0.0
        %2511 = vmatpush1.xpose.msra.mxu0 0.0
        %2512 = vmatprep.subr.mxu0 0.0
        %2513 = vmatpush1.xpose.msra.mxu0 0.0
        %2514 = vmatprep.subr.mxu0 0.0
        %2515 = vmatpush1.xpose.msra.mxu0 0.0
        %2516 = vmatprep.subr.mxu0 0.0
        %2517 = vmatpush1.xpose.msra.mxu0 0.0
        %2518 = vmatprep.subr.mxu0 0.0
        %2519 = vmatpush1.xpose.msra.mxu0 0.0
        %2520 = vmatprep.subr.mxu0 0.0
        %2521 = vmatpush1.xpose.msra.mxu0 0.0
        %2522 = vmatprep.subr.mxu0 0.0
        %2523 = vmatpush1.xpose.msra.mxu0 0.0
        %2524 = vmatprep.subr.mxu0 0.0
        %2525 = vmatpush1.xpose.msra.mxu0 0.0
        %2526 = vmatprep.subr.mxu0 0.0
        %2527 = vmatpush1.xpose.msra.mxu0 0.0
        %2528 = vmatprep.subr.mxu0 0.0
        %2529 = vmatpush1.xpose.msra.mxu0 0.0
        %2530 = vmatprep.subr.mxu0 0.0
        %2531 = vmatpush1.xpose.msra.mxu0 0.0
        %2532 = vmatprep.subr.mxu0 0.0
        %2533 = vmatpush1.xpose.msra.mxu0 0.0
        %2534 = vmatprep.subr.mxu0 0.0
        %2535 = vmatpush1.xpose.msra.mxu0 0.0
        %2536 = vmatprep.subr.mxu0 0.0
        %2537 = vmatpush1.xpose.msra.mxu0 0.0
        %2538 = vmatprep.subr.mxu0 0.0
        %2539 = vmatpush1.xpose.msra.mxu0 0.0
        %2540 = vmatprep.subr.mxu0 0.0
        %2541 = vmatpush1.xpose.msra.mxu0 0.0
        %2542 = vmatprep.subr.mxu0 0.0
        %2543 = vmatpush1.xpose.msra.mxu0 0.0
        %2544 = vmatprep.subr.mxu0 0.0
        %2545 = vmatpush1.xpose.msra.mxu0 0.0
        %2546 = vmatprep.subr.mxu0 0.0
        %2547 = vmatpush1.xpose.msra.mxu0 0.0
        %2548 = vmatprep.subr.mxu0 0.0
        %2549 = vmatpush1.xpose.msra.mxu0 0.0
        %2550 = vmatprep.subr.mxu0 0.0
        %2551 = vmatpush1.xpose.msra.mxu0 0.0
        %2552 = vmatprep.subr.mxu0 0.0
        %2553 = vmatpush1.xpose.msra.mxu0 0.0
        %2554 = vmatprep.subr.mxu0 0.0
        %2555 = vmatpush1.xpose.msra.mxu0 0.0
        %2556 = vmatprep.subr.mxu0 0.0
        %2557 = vmatpush1.xpose.msra.mxu0 0.0
        %2558 = vmatprep.subr.mxu0 0.0
        %2559 = vmatpush1.xpose.msra.mxu0 0.0
        %2560 = vmatprep.subr.mxu0 0.0
        %2561 = vmatpush1.xpose.msra.mxu0 0.0
        %2562 = vmatprep.subr.mxu0 0.0
        %2563 = vmatpush1.xpose.msra.mxu0 0.0
        %2564 = vmatprep.mubr.f32.mxu0 %v925
        %2565 = vmatmul.mubr.f32.gmra.mrb[0].mxu0 %v917
        %v2566 = vpop.f32.mrb[0].mxu0
        %v2567 = vadd.f32 %v2497, %v2566
        %v2568 = vpop.f32.mrb[0].mxu0
        %2569 = vdwg.mxu0
        %2570 = vmatprep.subr.mxu0 %v311
        %2571 = vmatpush1.xpose.msra.mxu0 %v310
        %2572 = vmatprep.subr.mxu0 %v567
        %2573 = vmatpush1.xpose.msra.mxu0 %v566
        %2574 = vmatprep.subr.mxu0 0.0
        %2575 = vmatpush1.xpose.msra.mxu0 0.0
        %2576 = vmatprep.subr.mxu0 0.0
        %2577 = vmatpush1.xpose.msra.mxu0 0.0
        %2578 = vmatprep.subr.mxu0 0.0
        %2579 = vmatpush1.xpose.msra.mxu0 0.0
        %2580 = vmatprep.subr.mxu0 0.0
        %2581 = vmatpush1.xpose.msra.mxu0 0.0
        %2582 = vmatprep.subr.mxu0 0.0
        %2583 = vmatpush1.xpose.msra.mxu0 0.0
        %2584 = vmatprep.subr.mxu0 0.0
        %2585 = vmatpush1.xpose.msra.mxu0 0.0
        %2586 = vmatprep.subr.mxu0 0.0
        %2587 = vmatpush1.xpose.msra.mxu0 0.0
        %2588 = vmatprep.subr.mxu0 0.0
        %2589 = vmatpush1.xpose.msra.mxu0 0.0
        %2590 = vmatprep.subr.mxu0 0.0
        %2591 = vmatpush1.xpose.msra.mxu0 0.0
        %2592 = vmatprep.subr.mxu0 0.0
        %2593 = vmatpush1.xpose.msra.mxu0 0.0
        %2594 = vmatprep.subr.mxu0 0.0
        %2595 = vmatpush1.xpose.msra.mxu0 0.0
        %2596 = vmatprep.subr.mxu0 0.0
        %2597 = vmatpush1.xpose.msra.mxu0 0.0
        %2598 = vmatprep.subr.mxu0 0.0
        %2599 = vmatpush1.xpose.msra.mxu0 0.0
        %2600 = vmatprep.subr.mxu0 0.0
        %2601 = vmatpush1.xpose.msra.mxu0 0.0
        %2602 = vmatprep.subr.mxu0 0.0
        %2603 = vmatpush1.xpose.msra.mxu0 0.0
        %2604 = vmatprep.subr.mxu0 0.0
        %2605 = vmatpush1.xpose.msra.mxu0 0.0
        %2606 = vmatprep.subr.mxu0 0.0
        %2607 = vmatpush1.xpose.msra.mxu0 0.0
        %2608 = vmatprep.subr.mxu0 0.0
        %2609 = vmatpush1.xpose.msra.mxu0 0.0
        %2610 = vmatprep.subr.mxu0 0.0
        %2611 = vmatpush1.xpose.msra.mxu0 0.0
        %2612 = vmatprep.subr.mxu0 0.0
        %2613 = vmatpush1.xpose.msra.mxu0 0.0
        %2614 = vmatprep.subr.mxu0 0.0
        %2615 = vmatpush1.xpose.msra.mxu0 0.0
        %2616 = vmatprep.subr.mxu0 0.0
        %2617 = vmatpush1.xpose.msra.mxu0 0.0
        %2618 = vmatprep.subr.mxu0 0.0
        %2619 = vmatpush1.xpose.msra.mxu0 0.0
        %2620 = vmatprep.subr.mxu0 0.0
        %2621 = vmatpush1.xpose.msra.mxu0 0.0
        %2622 = vmatprep.subr.mxu0 0.0
        %2623 = vmatpush1.xpose.msra.mxu0 0.0
        %2624 = vmatprep.subr.mxu0 0.0
        %2625 = vmatpush1.xpose.msra.mxu0 0.0
        %2626 = vmatprep.subr.mxu0 0.0
        %2627 = vmatpush1.xpose.msra.mxu0 0.0
        %2628 = vmatprep.subr.mxu0 0.0
        %2629 = vmatpush1.xpose.msra.mxu0 0.0
        %2630 = vmatprep.subr.mxu0 0.0
        %2631 = vmatpush1.xpose.msra.mxu0 0.0
        %2632 = vmatprep.subr.mxu0 0.0
        %2633 = vmatpush1.xpose.msra.mxu0 0.0
        %2634 = vmatprep.mubr.f32.mxu0 %v926
        %2635 = vmatmul.mubr.f32.gmra.mrb[0].mxu0 %v924
        %v2636 = vpop.f32.mrb[0].mxu0
        %v2637 = vadd.f32 %v2567, %v2636
        %v2638 = vpop.f32.mrb[0].mxu0
        %2639 = vdwg.mxu0
        %2640 = vmatprep.subr.mxu0 %v313
        %2641 = vmatpush1.xpose.msra.mxu0 %v312
        %2642 = vmatprep.subr.mxu0 %v569
        %2643 = vmatpush1.xpose.msra.mxu0 %v568
        %2644 = vmatprep.subr.mxu0 0.0
        %2645 = vmatpush1.xpose.msra.mxu0 0.0
        %2646 = vmatprep.subr.mxu0 0.0
        %2647 = vmatpush1.xpose.msra.mxu0 0.0
        %2648 = vmatprep.subr.mxu0 0.0
        %2649 = vmatpush1.xpose.msra.mxu0 0.0
        %2650 = vmatprep.subr.mxu0 0.0
        %2651 = vmatpush1.xpose.msra.mxu0 0.0
        %2652 = vmatprep.subr.mxu0 0.0
        %2653 = vmatpush1.xpose.msra.mxu0 0.0
        %2654 = vmatprep.subr.mxu0 0.0
        %2655 = vmatpush1.xpose.msra.mxu0 0.0
        %2656 = vmatprep.subr.mxu0 0.0
        %2657 = vmatpush1.xpose.msra.mxu0 0.0
        %2658 = vmatprep.subr.mxu0 0.0
        %2659 = vmatpush1.xpose.msra.mxu0 0.0
        %2660 = vmatprep.subr.mxu0 0.0
        %2661 = vmatpush1.xpose.msra.mxu0 0.0
        %2662 = vmatprep.subr.mxu0 0.0
        %2663 = vmatpush1.xpose.msra.mxu0 0.0
        %2664 = vmatprep.subr.mxu0 0.0
        %2665 = vmatpush1.xpose.msra.mxu0 0.0
        %2666 = vmatprep.subr.mxu0 0.0
        %2667 = vmatpush1.xpose.msra.mxu0 0.0
        %2668 = vmatprep.subr.mxu0 0.0
        %2669 = vmatpush1.xpose.msra.mxu0 0.0
        %2670 = vmatprep.subr.mxu0 0.0
        %2671 = vmatpush1.xpose.msra.mxu0 0.0
        %2672 = vmatprep.subr.mxu0 0.0
        %2673 = vmatpush1.xpose.msra.mxu0 0.0
        %2674 = vmatprep.subr.mxu0 0.0
        %2675 = vmatpush1.xpose.msra.mxu0 0.0
        %2676 = vmatprep.subr.mxu0 0.0
        %2677 = vmatpush1.xpose.msra.mxu0 0.0
        %2678 = vmatprep.subr.mxu0 0.0
        %2679 = vmatpush1.xpose.msra.mxu0 0.0
        %2680 = vmatprep.subr.mxu0 0.0
        %2681 = vmatpush1.xpose.msra.mxu0 0.0
        %2682 = vmatprep.subr.mxu0 0.0
        %2683 = vmatpush1.xpose.msra.mxu0 0.0
        %2684 = vmatprep.subr.mxu0 0.0
        %2685 = vmatpush1.xpose.msra.mxu0 0.0
        %2686 = vmatprep.subr.mxu0 0.0
        %2687 = vmatpush1.xpose.msra.mxu0 0.0
        %2688 = vmatprep.subr.mxu0 0.0
        %2689 = vmatpush1.xpose.msra.mxu0 0.0
        %2690 = vmatprep.subr.mxu0 0.0
        %2691 = vmatpush1.xpose.msra.mxu0 0.0
        %2692 = vmatprep.subr.mxu0 0.0
        %2693 = vmatpush1.xpose.msra.mxu0 0.0
        %2694 = vmatprep.subr.mxu0 0.0
        %2695 = vmatpush1.xpose.msra.mxu0 0.0
        %2696 = vmatprep.subr.mxu0 0.0
        %2697 = vmatpush1.xpose.msra.mxu0 0.0
        %2698 = vmatprep.subr.mxu0 0.0
        %2699 = vmatpush1.xpose.msra.mxu0 0.0
        %2700 = vmatprep.subr.mxu0 0.0
        %2701 = vmatpush1.xpose.msra.mxu0 0.0
        %2702 = vmatprep.subr.mxu0 0.0
        %2703 = vmatpush1.xpose.msra.mxu0 0.0
        %2704 = vmatprep.mubr.f32.mxu0 %v942
        %2705 = vmatmul.mubr.f32.gmra.mrb[0].mxu0 %v934
        %v2706 = vpop.f32.mrb[0].mxu0
        %v2707 = vadd.f32 %v2637, %v2706
        %v2708 = vpop.f32.mrb[0].mxu0
        %2709 = vdwg.mxu0
        %2710 = vmatprep.subr.mxu0 %v315
        %2711 = vmatpush1.xpose.msra.mxu0 %v314
        %2712 = vmatprep.subr.mxu0 %v571
        %2713 = vmatpush1.xpose.msra.mxu0 %v570
        %2714 = vmatprep.subr.mxu0 0.0
        %2715 = vmatpush1.xpose.msra.mxu0 0.0
        %2716 = vmatprep.subr.mxu0 0.0
        %2717 = vmatpush1.xpose.msra.mxu0 0.0
        %2718 = vmatprep.subr.mxu0 0.0
        %2719 = vmatpush1.xpose.msra.mxu0 0.0
        %2720 = vmatprep.subr.mxu0 0.0
        %2721 = vmatpush1.xpose.msra.mxu0 0.0
        %2722 = vmatprep.subr.mxu0 0.0
        %2723 = vmatpush1.xpose.msra.mxu0 0.0
        %2724 = vmatprep.subr.mxu0 0.0
        %2725 = vmatpush1.xpose.msra.mxu0 0.0
        %2726 = vmatprep.subr.mxu0 0.0
        %2727 = vmatpush1.xpose.msra.mxu0 0.0
        %2728 = vmatprep.subr.mxu0 0.0
        %2729 = vmatpush1.xpose.msra.mxu0 0.0
        %2730 = vmatprep.subr.mxu0 0.0
        %2731 = vmatpush1.xpose.msra.mxu0 0.0
        %2732 = vmatprep.subr.mxu0 0.0
        %2733 = vmatpush1.xpose.msra.mxu0 0.0
        %2734 = vmatprep.subr.mxu0 0.0
        %2735 = vmatpush1.xpose.msra.mxu0 0.0
        %2736 = vmatprep.subr.mxu0 0.0
        %2737 = vmatpush1.xpose.msra.mxu0 0.0
        %2738 = vmatprep.subr.mxu0 0.0
        %2739 = vmatpush1.xpose.msra.mxu0 0.0
        %2740 = vmatprep.subr.mxu0 0.0
        %2741 = vmatpush1.xpose.msra.mxu0 0.0
        %2742 = vmatprep.subr.mxu0 0.0
        %2743 = vmatpush1.xpose.msra.mxu0 0.0
        %2744 = vmatprep.subr.mxu0 0.0
        %2745 = vmatpush1.xpose.msra.mxu0 0.0
        %2746 = vmatprep.subr.mxu0 0.0
        %2747 = vmatpush1.xpose.msra.mxu0 0.0
        %2748 = vmatprep.subr.mxu0 0.0
        %2749 = vmatpush1.xpose.msra.mxu0 0.0
        %2750 = vmatprep.subr.mxu0 0.0
        %2751 = vmatpush1.xpose.msra.mxu0 0.0
        %2752 = vmatprep.subr.mxu0 0.0
        %2753 = vmatpush1.xpose.msra.mxu0 0.0
        %2754 = vmatprep.subr.mxu0 0.0
        %2755 = vmatpush1.xpose.msra.mxu0 0.0
        %2756 = vmatprep.subr.mxu0 0.0
        %2757 = vmatpush1.xpose.msra.mxu0 0.0
        %2758 = vmatprep.subr.mxu0 0.0
        %2759 = vmatpush1.xpose.msra.mxu0 0.0
        %2760 = vmatprep.subr.mxu0 0.0
        %2761 = vmatpush1.xpose.msra.mxu0 0.0
        %2762 = vmatprep.subr.mxu0 0.0
        %2763 = vmatpush1.xpose.msra.mxu0 0.0
        %2764 = vmatprep.subr.mxu0 0.0
        %2765 = vmatpush1.xpose.msra.mxu0 0.0
        %2766 = vmatprep.subr.mxu0 0.0
        %2767 = vmatpush1.xpose.msra.mxu0 0.0
        %2768 = vmatprep.subr.mxu0 0.0
        %2769 = vmatpush1.xpose.msra.mxu0 0.0
        %2770 = vmatprep.subr.mxu0 0.0
        %2771 = vmatpush1.xpose.msra.mxu0 0.0
        %2772 = vmatprep.subr.mxu0 0.0
        %2773 = vmatpush1.xpose.msra.mxu0 0.0
        %2774 = vmatprep.mubr.f32.mxu0 %v943
        %2775 = vmatmul.mubr.f32.gmra.mrb[0].mxu0 %v941
        %v2776 = vpop.f32.mrb[0].mxu0
        %v2777 = vadd.f32 %v2707, %v2776
        %v2778 = vpop.f32.mrb[0].mxu0
        %2779 = vdwg.mxu0
        %2780 = vmatprep.subr.mxu0 %v317
        %2781 = vmatpush1.xpose.msra.mxu0 %v316
        %2782 = vmatprep.subr.mxu0 %v573
        %2783 = vmatpush1.xpose.msra.mxu0 %v572
        %2784 = vmatprep.subr.mxu0 0.0
        %2785 = vmatpush1.xpose.msra.mxu0 0.0
        %2786 = vmatprep.subr.mxu0 0.0
        %2787 = vmatpush1.xpose.msra.mxu0 0.0
        %2788 = vmatprep.subr.mxu0 0.0
        %2789 = vmatpush1.xpose.msra.mxu0 0.0
        %2790 = vmatprep.subr.mxu0 0.0
        %2791 = vmatpush1.xpose.msra.mxu0 0.0
        %2792 = vmatprep.subr.mxu0 0.0
        %2793 = vmatpush1.xpose.msra.mxu0 0.0
        %2794 = vmatprep.subr.mxu0 0.0
        %2795 = vmatpush1.xpose.msra.mxu0 0.0
        %2796 = vmatprep.subr.mxu0 0.0
        %2797 = vmatpush1.xpose.msra.mxu0 0.0
        %2798 = vmatprep.subr.mxu0 0.0
        %2799 = vmatpush1.xpose.msra.mxu0 0.0
        %2800 = vmatprep.subr.mxu0 0.0
        %2801 = vmatpush1.xpose.msra.mxu0 0.0
        %2802 = vmatprep.subr.mxu0 0.0
        %2803 = vmatpush1.xpose.msra.mxu0 0.0
        %2804 = vmatprep.subr.mxu0 0.0
        %2805 = vmatpush1.xpose.msra.mxu0 0.0
        %2806 = vmatprep.subr.mxu0 0.0
        %2807 = vmatpush1.xpose.msra.mxu0 0.0
        %2808 = vmatprep.subr.mxu0 0.0
        %2809 = vmatpush1.xpose.msra.mxu0 0.0
        %2810 = vmatprep.subr.mxu0 0.0
        %2811 = vmatpush1.xpose.msra.mxu0 0.0
        %2812 = vmatprep.subr.mxu0 0.0
        %2813 = vmatpush1.xpose.msra.mxu0 0.0
        %2814 = vmatprep.subr.mxu0 0.0
        %2815 = vmatpush1.xpose.msra.mxu0 0.0
        %2816 = vmatprep.subr.mxu0 0.0
        %2817 = vmatpush1.xpose.msra.mxu0 0.0
        %2818 = vmatprep.subr.mxu0 0.0
        %2819 = vmatpush1.xpose.msra.mxu0 0.0
        %2820 = vmatprep.subr.mxu0 0.0
        %2821 = vmatpush1.xpose.msra.mxu0 0.0
        %2822 = vmatprep.subr.mxu0 0.0
        %2823 = vmatpush1.xpose.msra.mxu0 0.0
        %2824 = vmatprep.subr.mxu0 0.0
        %2825 = vmatpush1.xpose.msra.mxu0 0.0
        %2826 = vmatprep.subr.mxu0 0.0
        %2827 = vmatpush1.xpose.msra.mxu0 0.0
        %2828 = vmatprep.subr.mxu0 0.0
        %2829 = vmatpush1.xpose.msra.mxu0 0.0
        %2830 = vmatprep.subr.mxu0 0.0
        %2831 = vmatpush1.xpose.msra.mxu0 0.0
        %2832 = vmatprep.subr.mxu0 0.0
        %2833 = vmatpush1.xpose.msra.mxu0 0.0
        %2834 = vmatprep.subr.mxu0 0.0
        %2835 = vmatpush1.xpose.msra.mxu0 0.0
        %2836 = vmatprep.subr.mxu0 0.0
        %2837 = vmatpush1.xpose.msra.mxu0 0.0
        %2838 = vmatprep.subr.mxu0 0.0
        %2839 = vmatpush1.xpose.msra.mxu0 0.0
        %2840 = vmatprep.subr.mxu0 0.0
        %2841 = vmatpush1.xpose.msra.mxu0 0.0
        %2842 = vmatprep.subr.mxu0 0.0
        %2843 = vmatpush1.xpose.msra.mxu0 0.0
        %2844 = vmatprep.mubr.f32.mxu0 %v959
        %2845 = vmatmul.mubr.f32.gmra.mrb[0].mxu0 %v951
        %v2846 = vpop.f32.mrb[0].mxu0
        %v2847 = vadd.f32 %v2777, %v2846
        %v2848 = vpop.f32.mrb[0].mxu0
        %2849 = vdwg.mxu0
        %2850 = vmatprep.subr.mxu0 %v319
        %2851 = vmatpush1.xpose.msra.mxu0 %v318
        %2852 = vmatprep.subr.mxu0 %v575
        %2853 = vmatpush1.xpose.msra.mxu0 %v574
        %2854 = vmatprep.subr.mxu0 0.0
        %2855 = vmatpush1.xpose.msra.mxu0 0.0
        %2856 = vmatprep.subr.mxu0 0.0
        %2857 = vmatpush1.xpose.msra.mxu0 0.0
        %2858 = vmatprep.subr.mxu0 0.0
        %2859 = vmatpush1.xpose.msra.mxu0 0.0
        %2860 = vmatprep.subr.mxu0 0.0
        %2861 = vmatpush1.xpose.msra.mxu0 0.0
        %2862 = vmatprep.subr.mxu0 0.0
        %2863 = vmatpush1.xpose.msra.mxu0 0.0
        %2864 = vmatprep.subr.mxu0 0.0
        %2865 = vmatpush1.xpose.msra.mxu0 0.0
        %2866 = vmatprep.subr.mxu0 0.0
        %2867 = vmatpush1.xpose.msra.mxu0 0.0
        %2868 = vmatprep.subr.mxu0 0.0
        %2869 = vmatpush1.xpose.msra.mxu0 0.0
        %2870 = vmatprep.subr.mxu0 0.0
        %2871 = vmatpush1.xpose.msra.mxu0 0.0
        %2872 = vmatprep.subr.mxu0 0.0
        %2873 = vmatpush1.xpose.msra.mxu0 0.0
        %2874 = vmatprep.subr.mxu0 0.0
        %2875 = vmatpush1.xpose.msra.mxu0 0.0
        %2876 = vmatprep.subr.mxu0 0.0
        %2877 = vmatpush1.xpose.msra.mxu0 0.0
        %2878 = vmatprep.subr.mxu0 0.0
        %2879 = vmatpush1.xpose.msra.mxu0 0.0
        %2880 = vmatprep.subr.mxu0 0.0
        %2881 = vmatpush1.xpose.msra.mxu0 0.0
        %2882 = vmatprep.subr.mxu0 0.0
        %2883 = vmatpush1.xpose.msra.mxu0 0.0
        %2884 = vmatprep.subr.mxu0 0.0
        %2885 = vmatpush1.xpose.msra.mxu0 0.0
        %2886 = vmatprep.subr.mxu0 0.0
        %2887 = vmatpush1.xpose.msra.mxu0 0.0
        %2888 = vmatprep.subr.mxu0 0.0
        %2889 = vmatpush1.xpose.msra.mxu0 0.0
        %2890 = vmatprep.subr.mxu0 0.0
        %2891 = vmatpush1.xpose.msra.mxu0 0.0
        %2892 = vmatprep.subr.mxu0 0.0
        %2893 = vmatpush1.xpose.msra.mxu0 0.0
        %2894 = vmatprep.subr.mxu0 0.0
        %2895 = vmatpush1.xpose.msra.mxu0 0.0
        %2896 = vmatprep.subr.mxu0 0.0
        %2897 = vmatpush1.xpose.msra.mxu0 0.0
        %2898 = vmatprep.subr.mxu0 0.0
        %2899 = vmatpush1.xpose.msra.mxu0 0.0
        %2900 = vmatprep.subr.mxu0 0.0
        %2901 = vmatpush1.xpose.msra.mxu0 0.0
        %2902 = vmatprep.subr.mxu0 0.0
        %2903 = vmatpush1.xpose.msra.mxu0 0.0
        %2904 = vmatprep.subr.mxu0 0.0
        %2905 = vmatpush1.xpose.msra.mxu0 0.0
        %2906 = vmatprep.subr.mxu0 0.0
        %2907 = vmatpush1.xpose.msra.mxu0 0.0
        %2908 = vmatprep.subr.mxu0 0.0
        %2909 = vmatpush1.xpose.msra.mxu0 0.0
        %2910 = vmatprep.subr.mxu0 0.0
        %2911 = vmatpush1.xpose.msra.mxu0 0.0
        %2912 = vmatprep.subr.mxu0 0.0
        %2913 = vmatpush1.xpose.msra.mxu0 0.0
        %2914 = vmatprep.mubr.f32.mxu0 %v960
        %2915 = vmatmul.mubr.f32.gmra.mrb[0].mxu0 %v958
        %v2916 = vpop.f32.mrb[0].mxu0
        %v2917 = vadd.f32 %v2847, %v2916
        %v2918 = vpop.f32.mrb[0].mxu0
        %2919 = vdwg.mxu0
        %2920 = vmatprep.subr.mxu0 %v321
        %2921 = vmatpush1.xpose.msra.mxu0 %v320
        %2922 = vmatprep.subr.mxu0 %v577
        %2923 = vmatpush1.xpose.msra.mxu0 %v576
        %2924 = vmatprep.subr.mxu0 0.0
        %2925 = vmatpush1.xpose.msra.mxu0 0.0
        %2926 = vmatprep.subr.mxu0 0.0
        %2927 = vmatpush1.xpose.msra.mxu0 0.0
        %2928 = vmatprep.subr.mxu0 0.0
        %2929 = vmatpush1.xpose.msra.mxu0 0.0
        %2930 = vmatprep.subr.mxu0 0.0
        %2931 = vmatpush1.xpose.msra.mxu0 0.0
        %2932 = vmatprep.subr.mxu0 0.0
        %2933 = vmatpush1.xpose.msra.mxu0 0.0
        %2934 = vmatprep.subr.mxu0 0.0
        %2935 = vmatpush1.xpose.msra.mxu0 0.0
        %2936 = vmatprep.subr.mxu0 0.0
        %2937 = vmatpush1.xpose.msra.mxu0 0.0
        %2938 = vmatprep.subr.mxu0 0.0
        %2939 = vmatpush1.xpose.msra.mxu0 0.0
        %2940 = vmatprep.subr.mxu0 0.0
        %2941 = vmatpush1.xpose.msra.mxu0 0.0
        %2942 = vmatprep.subr.mxu0 0.0
        %2943 = vmatpush1.xpose.msra.mxu0 0.0
        %2944 = vmatprep.subr.mxu0 0.0
        %2945 = vmatpush1.xpose.msra.mxu0 0.0
        %2946 = vmatprep.subr.mxu0 0.0
        %2947 = vmatpush1.xpose.msra.mxu0 0.0
        %2948 = vmatprep.subr.mxu0 0.0
        %2949 = vmatpush1.xpose.msra.mxu0 0.0
        %2950 = vmatprep.subr.mxu0 0.0
        %2951 = vmatpush1.xpose.msra.mxu0 0.0
        %2952 = vmatprep.subr.mxu0 0.0
        %2953 = vmatpush1.xpose.msra.mxu0 0.0
        %2954 = vmatprep.subr.mxu0 0.0
        %2955 = vmatpush1.xpose.msra.mxu0 0.0
        %2956 = vmatprep.subr.mxu0 0.0
        %2957 = vmatpush1.xpose.msra.mxu0 0.0
        %2958 = vmatprep.subr.mxu0 0.0
        %2959 = vmatpush1.xpose.msra.mxu0 0.0
        %2960 = vmatprep.subr.mxu0 0.0
        %2961 = vmatpush1.xpose.msra.mxu0 0.0
        %2962 = vmatprep.subr.mxu0 0.0
        %2963 = vmatpush1.xpose.msra.mxu0 0.0
        %2964 = vmatprep.subr.mxu0 0.0
        %2965 = vmatpush1.xpose.msra.mxu0 0.0
        %2966 = vmatprep.subr.mxu0 0.0
        %2967 = vmatpush1.xpose.msra.mxu0 0.0
        %2968 = vmatprep.subr.mxu0 0.0
        %2969 = vmatpush1.xpose.msra.mxu0 0.0
        %2970 = vmatprep.subr.mxu0 0.0
        %2971 = vmatpush1.xpose.msra.mxu0 0.0
        %2972 = vmatprep.subr.mxu0 0.0
        %2973 = vmatpush1.xpose.msra.mxu0 0.0
        %2974 = vmatprep.subr.mxu0 0.0
        %2975 = vmatpush1.xpose.msra.mxu0 0.0
        %2976 = vmatprep.subr.mxu0 0.0
        %2977 = vmatpush1.xpose.msra.mxu0 0.0
        %2978 = vmatprep.subr.mxu0 0.0
        %2979 = vmatpush1.xpose.msra.mxu0 0.0
        %2980 = vmatprep.subr.mxu0 0.0
        %2981 = vmatpush1.xpose.msra.mxu0 0.0
        %2982 = vmatprep.subr.mxu0 0.0
        %2983 = vmatpush1.xpose.msra.mxu0 0.0
        %2984 = vmatprep.mubr.f32.mxu0 %v976
        %2985 = vmatmul.mubr.f32.gmra.mrb[0].mxu0 %v968
        %v2986 = vpop.f32.mrb[0].mxu0
        %v2987 = vadd.f32 %v2917, %v2986
        %v2988 = vpop.f32.mrb[0].mxu0
        %2989 = vdwg.mxu0
        %2990 = vmatprep.subr.mxu0 %v323
        %2991 = vmatpush1.xpose.msra.mxu0 %v322
        %2992 = vmatprep.subr.mxu0 %v579
        %2993 = vmatpush1.xpose.msra.mxu0 %v578
        %2994 = vmatprep.subr.mxu0 0.0
        %2995 = vmatpush1.xpose.msra.mxu0 0.0
        %2996 = vmatprep.subr.mxu0 0.0
        %2997 = vmatpush1.xpose.msra.mxu0 0.0
        %2998 = vmatprep.subr.mxu0 0.0
        %2999 = vmatpush1.xpose.msra.mxu0 0.0
        %3000 = vmatprep.subr.mxu0 0.0
        %3001 = vmatpush1.xpose.msra.mxu0 0.0
        %3002 = vmatprep.subr.mxu0 0.0
        %3003 = vmatpush1.xpose.msra.mxu0 0.0
        %3004 = vmatprep.subr.mxu0 0.0
        %3005 = vmatpush1.xpose.msra.mxu0 0.0
        %3006 = vmatprep.subr.mxu0 0.0
        %3007 = vmatpush1.xpose.msra.mxu0 0.0
        %3008 = vmatprep.subr.mxu0 0.0
        %3009 = vmatpush1.xpose.msra.mxu0 0.0
        %3010 = vmatprep.subr.mxu0 0.0
        %3011 = vmatpush1.xpose.msra.mxu0 0.0
        %3012 = vmatprep.subr.mxu0 0.0
        %3013 = vmatpush1.xpose.msra.mxu0 0.0
        %3014 = vmatprep.subr.mxu0 0.0
        %3015 = vmatpush1.xpose.msra.mxu0 0.0
        %3016 = vmatprep.subr.mxu0 0.0
        %3017 = vmatpush1.xpose.msra.mxu0 0.0
        %3018 = vmatprep.subr.mxu0 0.0
        %3019 = vmatpush1.xpose.msra.mxu0 0.0
        %3020 = vmatprep.subr.mxu0 0.0
        %3021 = vmatpush1.xpose.msra.mxu0 0.0
        %3022 = vmatprep.subr.mxu0 0.0
        %3023 = vmatpush1.xpose.msra.mxu0 0.0
        %3024 = vmatprep.subr.mxu0 0.0
        %3025 = vmatpush1.xpose.msra.mxu0 0.0
        %3026 = vmatprep.subr.mxu0 0.0
        %3027 = vmatpush1.xpose.msra.mxu0 0.0
        %3028 = vmatprep.subr.mxu0 0.0
        %3029 = vmatpush1.xpose.msra.mxu0 0.0
        %3030 = vmatprep.subr.mxu0 0.0
        %3031 = vmatpush1.xpose.msra.mxu0 0.0
        %3032 = vmatprep.subr.mxu0 0.0
        %3033 = vmatpush1.xpose.msra.mxu0 0.0
        %3034 = vmatprep.subr.mxu0 0.0
        %3035 = vmatpush1.xpose.msra.mxu0 0.0
        %3036 = vmatprep.subr.mxu0 0.0
        %3037 = vmatpush1.xpose.msra.mxu0 0.0
        %3038 = vmatprep.subr.mxu0 0.0
        %3039 = vmatpush1.xpose.msra.mxu0 0.0
        %3040 = vmatprep.subr.mxu0 0.0
        %3041 = vmatpush1.xpose.msra.mxu0 0.0
        %3042 = vmatprep.subr.mxu0 0.0
        %3043 = vmatpush1.xpose.msra.mxu0 0.0
        %3044 = vmatprep.subr.mxu0 0.0
        %3045 = vmatpush1.xpose.msra.mxu0 0.0
        %3046 = vmatprep.subr.mxu0 0.0
        %3047 = vmatpush1.xpose.msra.mxu0 0.0
        %3048 = vmatprep.subr.mxu0 0.0
        %3049 = vmatpush1.xpose.msra.mxu0 0.0
        %3050 = vmatprep.subr.mxu0 0.0
        %3051 = vmatpush1.xpose.msra.mxu0 0.0
        %3052 = vmatprep.subr.mxu0 0.0
        %3053 = vmatpush1.xpose.msra.mxu0 0.0
        %3054 = vmatprep.mubr.f32.mxu0 %v977
        %3055 = vmatmul.mubr.f32.gmra.mrb[0].mxu0 %v975
        %v3056 = vpop.f32.mrb[0].mxu0
        %v3057 = vadd.f32 %v2987, %v3056
        %v3058 = vpop.f32.mrb[0].mxu0
        %3059 = vdwg.mxu0
        %3060 = vmatprep.subr.mxu0 %v325
        %3061 = vmatpush1.xpose.msra.mxu0 %v324
        %3062 = vmatprep.subr.mxu0 %v581
        %3063 = vmatpush1.xpose.msra.mxu0 %v580
        %3064 = vmatprep.subr.mxu0 0.0
        %3065 = vmatpush1.xpose.msra.mxu0 0.0
        %3066 = vmatprep.subr.mxu0 0.0
        %3067 = vmatpush1.xpose.msra.mxu0 0.0
        %3068 = vmatprep.subr.mxu0 0.0
        %3069 = vmatpush1.xpose.msra.mxu0 0.0
        %3070 = vmatprep.subr.mxu0 0.0
        %3071 = vmatpush1.xpose.msra.mxu0 0.0
        %3072 = vmatprep.subr.mxu0 0.0
        %3073 = vmatpush1.xpose.msra.mxu0 0.0
        %3074 = vmatprep.subr.mxu0 0.0
        %3075 = vmatpush1.xpose.msra.mxu0 0.0
        %3076 = vmatprep.subr.mxu0 0.0
        %3077 = vmatpush1.xpose.msra.mxu0 0.0
        %3078 = vmatprep.subr.mxu0 0.0
        %3079 = vmatpush1.xpose.msra.mxu0 0.0
        %3080 = vmatprep.subr.mxu0 0.0
        %3081 = vmatpush1.xpose.msra.mxu0 0.0
        %3082 = vmatprep.subr.mxu0 0.0
        %3083 = vmatpush1.xpose.msra.mxu0 0.0
        %3084 = vmatprep.subr.mxu0 0.0
        %3085 = vmatpush1.xpose.msra.mxu0 0.0
        %3086 = vmatprep.subr.mxu0 0.0
        %3087 = vmatpush1.xpose.msra.mxu0 0.0
        %3088 = vmatprep.subr.mxu0 0.0
        %3089 = vmatpush1.xpose.msra.mxu0 0.0
        %3090 = vmatprep.subr.mxu0 0.0
        %3091 = vmatpush1.xpose.msra.mxu0 0.0
        %3092 = vmatprep.subr.mxu0 0.0
        %3093 = vmatpush1.xpose.msra.mxu0 0.0
        %3094 = vmatprep.subr.mxu0 0.0
        %3095 = vmatpush1.xpose.msra.mxu0 0.0
        %3096 = vmatprep.subr.mxu0 0.0
        %3097 = vmatpush1.xpose.msra.mxu0 0.0
        %3098 = vmatprep.subr.mxu0 0.0
        %3099 = vmatpush1.xpose.msra.mxu0 0.0
        %3100 = vmatprep.subr.mxu0 0.0
        %3101 = vmatpush1.xpose.msra.mxu0 0.0
        %3102 = vmatprep.subr.mxu0 0.0
        %3103 = vmatpush1.xpose.msra.mxu0 0.0
        %3104 = vmatprep.subr.mxu0 0.0
        %3105 = vmatpush1.xpose.msra.mxu0 0.0
        %3106 = vmatprep.subr.mxu0 0.0
        %3107 = vmatpush1.xpose.msra.mxu0 0.0
        %3108 = vmatprep.subr.mxu0 0.0
        %3109 = vmatpush1.xpose.msra.mxu0 0.0
        %3110 = vmatprep.subr.mxu0 0.0
        %3111 = vmatpush1.xpose.msra.mxu0 0.0
        %3112 = vmatprep.subr.mxu0 0.0
        %3113 = vmatpush1.xpose.msra.mxu0 0.0
        %3114 = vmatprep.subr.mxu0 0.0
        %3115 = vmatpush1.xpose.msra.mxu0 0.0
        %3116 = vmatprep.subr.mxu0 0.0
        %3117 = vmatpush1.xpose.msra.mxu0 0.0
        %3118 = vmatprep.subr.mxu0 0.0
        %3119 = vmatpush1.xpose.msra.mxu0 0.0
        %3120 = vmatprep.subr.mxu0 0.0
        %3121 = vmatpush1.xpose.msra.mxu0 0.0
        %3122 = vmatprep.subr.mxu0 0.0
        %3123 = vmatpush1.xpose.msra.mxu0 0.0
        %3124 = vmatprep.mubr.f32.mxu0 %v993
        %3125 = vmatmul.mubr.f32.gmra.mrb[0].mxu0 %v985
        %v3126 = vpop.f32.mrb[0].mxu0
        %v3127 = vadd.f32 %v3057, %v3126
        %v3128 = vpop.f32.mrb[0].mxu0
        %3129 = vdwg.mxu0
        %3130 = vmatprep.subr.mxu0 %v327
        %3131 = vmatpush1.xpose.msra.mxu0 %v326
        %3132 = vmatprep.subr.mxu0 %v583
        %3133 = vmatpush1.xpose.msra.mxu0 %v582
        %3134 = vmatprep.subr.mxu0 0.0
        %3135 = vmatpush1.xpose.msra.mxu0 0.0
        %3136 = vmatprep.subr.mxu0 0.0
        %3137 = vmatpush1.xpose.msra.mxu0 0.0
        %3138 = vmatprep.subr.mxu0 0.0
        %3139 = vmatpush1.xpose.msra.mxu0 0.0
        %3140 = vmatprep.subr.mxu0 0.0
        %3141 = vmatpush1.xpose.msra.mxu0 0.0
        %3142 = vmatprep.subr.mxu0 0.0
        %3143 = vmatpush1.xpose.msra.mxu0 0.0
        %3144 = vmatprep.subr.mxu0 0.0
        %3145 = vmatpush1.xpose.msra.mxu0 0.0
        %3146 = vmatprep.subr.mxu0 0.0
        %3147 = vmatpush1.xpose.msra.mxu0 0.0
        %3148 = vmatprep.subr.mxu0 0.0
        %3149 = vmatpush1.xpose.msra.mxu0 0.0
        %3150 = vmatprep.subr.mxu0 0.0
        %3151 = vmatpush1.xpose.msra.mxu0 0.0
        %3152 = vmatprep.subr.mxu0 0.0
        %3153 = vmatpush1.xpose.msra.mxu0 0.0
        %3154 = vmatprep.subr.mxu0 0.0
        %3155 = vmatpush1.xpose.msra.mxu0 0.0
        %3156 = vmatprep.subr.mxu0 0.0
        %3157 = vmatpush1.xpose.msra.mxu0 0.0
        %3158 = vmatprep.subr.mxu0 0.0
        %3159 = vmatpush1.xpose.msra.mxu0 0.0
        %3160 = vmatprep.subr.mxu0 0.0
        %3161 = vmatpush1.xpose.msra.mxu0 0.0
        %3162 = vmatprep.subr.mxu0 0.0
        %3163 = vmatpush1.xpose.msra.mxu0 0.0
        %3164 = vmatprep.subr.mxu0 0.0
        %3165 = vmatpush1.xpose.msra.mxu0 0.0
        %3166 = vmatprep.subr.mxu0 0.0
        %3167 = vmatpush1.xpose.msra.mxu0 0.0
        %3168 = vmatprep.subr.mxu0 0.0
        %3169 = vmatpush1.xpose.msra.mxu0 0.0
        %3170 = vmatprep.subr.mxu0 0.0
        %3171 = vmatpush1.xpose.msra.mxu0 0.0
        %3172 = vmatprep.subr.mxu0 0.0
        %3173 = vmatpush1.xpose.msra.mxu0 0.0
        %3174 = vmatprep.subr.mxu0 0.0
        %3175 = vmatpush1.xpose.msra.mxu0 0.0
        %3176 = vmatprep.subr.mxu0 0.0
        %3177 = vmatpush1.xpose.msra.mxu0 0.0
        %3178 = vmatprep.subr.mxu0 0.0
        %3179 = vmatpush1.xpose.msra.mxu0 0.0
        %3180 = vmatprep.subr.mxu0 0.0
        %3181 = vmatpush1.xpose.msra.mxu0 0.0
        %3182 = vmatprep.subr.mxu0 0.0
        %3183 = vmatpush1.xpose.msra.mxu0 0.0
        %3184 = vmatprep.subr.mxu0 0.0
        %3185 = vmatpush1.xpose.msra.mxu0 0.0
        %3186 = vmatprep.subr.mxu0 0.0
        %3187 = vmatpush1.xpose.msra.mxu0 0.0
        %3188 = vmatprep.subr.mxu0 0.0
        %3189 = vmatpush1.xpose.msra.mxu0 0.0
        %3190 = vmatprep.subr.mxu0 0.0
        %3191 = vmatpush1.xpose.msra.mxu0 0.0
        %3192 = vmatprep.subr.mxu0 0.0
        %3193 = vmatpush1.xpose.msra.mxu0 0.0
        %3194 = vmatprep.mubr.f32.mxu0 %v994
        %3195 = vmatmul.mubr.f32.gmra.mrb[0].mxu0 %v992
        %v3196 = vpop.f32.mrb[0].mxu0
        %v3197 = vadd.f32 %v3127, %v3196
        %v3198 = vpop.f32.mrb[0].mxu0
        %3199 = vdwg.mxu0
        %3200 = vmatprep.subr.mxu0 %v329
        %3201 = vmatpush1.xpose.msra.mxu0 %v328
        %3202 = vmatprep.subr.mxu0 %v585
        %3203 = vmatpush1.xpose.msra.mxu0 %v584
        %3204 = vmatprep.subr.mxu0 0.0
        %3205 = vmatpush1.xpose.msra.mxu0 0.0
        %3206 = vmatprep.subr.mxu0 0.0
        %3207 = vmatpush1.xpose.msra.mxu0 0.0
        %3208 = vmatprep.subr.mxu0 0.0
        %3209 = vmatpush1.xpose.msra.mxu0 0.0
        %3210 = vmatprep.subr.mxu0 0.0
        %3211 = vmatpush1.xpose.msra.mxu0 0.0
        %3212 = vmatprep.subr.mxu0 0.0
        %3213 = vmatpush1.xpose.msra.mxu0 0.0
        %3214 = vmatprep.subr.mxu0 0.0
        %3215 = vmatpush1.xpose.msra.mxu0 0.0
        %3216 = vmatprep.subr.mxu0 0.0
        %3217 = vmatpush1.xpose.msra.mxu0 0.0
        %3218 = vmatprep.subr.mxu0 0.0
        %3219 = vmatpush1.xpose.msra.mxu0 0.0
        %3220 = vmatprep.subr.mxu0 0.0
        %3221 = vmatpush1.xpose.msra.mxu0 0.0
        %3222 = vmatprep.subr.mxu0 0.0
        %3223 = vmatpush1.xpose.msra.mxu0 0.0
        %3224 = vmatprep.subr.mxu0 0.0
        %3225 = vmatpush1.xpose.msra.mxu0 0.0
        %3226 = vmatprep.subr.mxu0 0.0
        %3227 = vmatpush1.xpose.msra.mxu0 0.0
        %3228 = vmatprep.subr.mxu0 0.0
        %3229 = vmatpush1.xpose.msra.mxu0 0.0
        %3230 = vmatprep.subr.mxu0 0.0
        %3231 = vmatpush1.xpose.msra.mxu0 0.0
        %3232 = vmatprep.subr.mxu0 0.0
        %3233 = vmatpush1.xpose.msra.mxu0 0.0
        %3234 = vmatprep.subr.mxu0 0.0
        %3235 = vmatpush1.xpose.msra.mxu0 0.0
        %3236 = vmatprep.subr.mxu0 0.0
        %3237 = vmatpush1.xpose.msra.mxu0 0.0
        %3238 = vmatprep.subr.mxu0 0.0
        %3239 = vmatpush1.xpose.msra.mxu0 0.0
        %3240 = vmatprep.subr.mxu0 0.0
        %3241 = vmatpush1.xpose.msra.mxu0 0.0
        %3242 = vmatprep.subr.mxu0 0.0
        %3243 = vmatpush1.xpose.msra.mxu0 0.0
        %3244 = vmatprep.subr.mxu0 0.0
        %3245 = vmatpush1.xpose.msra.mxu0 0.0
        %3246 = vmatprep.subr.mxu0 0.0
        %3247 = vmatpush1.xpose.msra.mxu0 0.0
        %3248 = vmatprep.subr.mxu0 0.0
        %3249 = vmatpush1.xpose.msra.mxu0 0.0
        %3250 = vmatprep.subr.mxu0 0.0
        %3251 = vmatpush1.xpose.msra.mxu0 0.0
        %3252 = vmatprep.subr.mxu0 0.0
        %3253 = vmatpush1.xpose.msra.mxu0 0.0
        %3254 = vmatprep.subr.mxu0 0.0
        %3255 = vmatpush1.xpose.msra.mxu0 0.0
        %3256 = vmatprep.subr.mxu0 0.0
        %3257 = vmatpush1.xpose.msra.mxu0 0.0
        %3258 = vmatprep.subr.mxu0 0.0
        %3259 = vmatpush1.xpose.msra.mxu0 0.0
        %3260 = vmatprep.subr.mxu0 0.0
        %3261 = vmatpush1.xpose.msra.mxu0 0.0
        %3262 = vmatprep.subr.mxu0 0.0
        %3263 = vmatpush1.xpose.msra.mxu0 0.0
        %3264 = vmatprep.mubr.f32.mxu0 %v1010
        %3265 = vmatmul.mubr.f32.gmra.mrb[0].mxu0 %v1002
        %v3266 = vpop.f32.mrb[0].mxu0
        %v3267 = vadd.f32 %v3197, %v3266
        %v3268 = vpop.f32.mrb[0].mxu0
        %3269 = vdwg.mxu0
        %3270 = vmatprep.subr.mxu0 %v331
        %3271 = vmatpush1.xpose.msra.mxu0 %v330
        %3272 = vmatprep.subr.mxu0 %v587
        %3273 = vmatpush1.xpose.msra.mxu0 %v586
        %3274 = vmatprep.subr.mxu0 0.0
        %3275 = vmatpush1.xpose.msra.mxu0 0.0
        %3276 = vmatprep.subr.mxu0 0.0
        %3277 = vmatpush1.xpose.msra.mxu0 0.0
        %3278 = vmatprep.subr.mxu0 0.0
        %3279 = vmatpush1.xpose.msra.mxu0 0.0
        %3280 = vmatprep.subr.mxu0 0.0
        %3281 = vmatpush1.xpose.msra.mxu0 0.0
        %3282 = vmatprep.subr.mxu0 0.0
        %3283 = vmatpush1.xpose.msra.mxu0 0.0
        %3284 = vmatprep.subr.mxu0 0.0
        %3285 = vmatpush1.xpose.msra.mxu0 0.0
        %3286 = vmatprep.subr.mxu0 0.0
        %3287 = vmatpush1.xpose.msra.mxu0 0.0
        %3288 = vmatprep.subr.mxu0 0.0
        %3289 = vmatpush1.xpose.msra.mxu0 0.0
        %3290 = vmatprep.subr.mxu0 0.0
        %3291 = vmatpush1.xpose.msra.mxu0 0.0
        %3292 = vmatprep.subr.mxu0 0.0
        %3293 = vmatpush1.xpose.msra.mxu0 0.0
        %3294 = vmatprep.subr.mxu0 0.0
        %3295 = vmatpush1.xpose.msra.mxu0 0.0
        %3296 = vmatprep.subr.mxu0 0.0
        %3297 = vmatpush1.xpose.msra.mxu0 0.0
        %3298 = vmatprep.subr.mxu0 0.0
        %3299 = vmatpush1.xpose.msra.mxu0 0.0
        %3300 = vmatprep.subr.mxu0 0.0
        %3301 = vmatpush1.xpose.msra.mxu0 0.0
        %3302 = vmatprep.subr.mxu0 0.0
        %3303 = vmatpush1.xpose.msra.mxu0 0.0
        %3304 = vmatprep.subr.mxu0 0.0
        %3305 = vmatpush1.xpose.msra.mxu0 0.0
        %3306 = vmatprep.subr.mxu0 0.0
        %3307 = vmatpush1.xpose.msra.mxu0 0.0
        %3308 = vmatprep.subr.mxu0 0.0
        %3309 = vmatpush1.xpose.msra.mxu0 0.0
        %3310 = vmatprep.subr.mxu0 0.0
        %3311 = vmatpush1.xpose.msra.mxu0 0.0
        %3312 = vmatprep.subr.mxu0 0.0
        %3313 = vmatpush1.xpose.msra.mxu0 0.0
        %3314 = vmatprep.subr.mxu0 0.0
        %3315 = vmatpush1.xpose.msra.mxu0 0.0
        %3316 = vmatprep.subr.mxu0 0.0
        %3317 = vmatpush1.xpose.msra.mxu0 0.0
        %3318 = vmatprep.subr.mxu0 0.0
        %3319 = vmatpush1.xpose.msra.mxu0 0.0
        %3320 = vmatprep.subr.mxu0 0.0
        %3321 = vmatpush1.xpose.msra.mxu0 0.0
        %3322 = vmatprep.subr.mxu0 0.0
        %3323 = vmatpush1.xpose.msra.mxu0 0.0
        %3324 = vmatprep.subr.mxu0 0.0
        %3325 = vmatpush1.xpose.msra.mxu0 0.0
        %3326 = vmatprep.subr.mxu0 0.0
        %3327 = vmatpush1.xpose.msra.mxu0 0.0
        %3328 = vmatprep.subr.mxu0 0.0
        %3329 = vmatpush1.xpose.msra.mxu0 0.0
        %3330 = vmatprep.subr.mxu0 0.0
        %3331 = vmatpush1.xpose.msra.mxu0 0.0
        %3332 = vmatprep.subr.mxu0 0.0
        %3333 = vmatpush1.xpose.msra.mxu0 0.0
        %3334 = vmatprep.mubr.f32.mxu0 %v1011
        %3335 = vmatmul.mubr.f32.gmra.mrb[0].mxu0 %v1009
        %v3336 = vpop.f32.mrb[0].mxu0
        %v3337 = vadd.f32 %v3267, %v3336
        %v3338 = vpop.f32.mrb[0].mxu0
        %3339 = vdwg.mxu0
        %3340 = vmatprep.subr.mxu0 %v333
        %3341 = vmatpush1.xpose.msra.mxu0 %v332
        %3342 = vmatprep.subr.mxu0 %v589
        %3343 = vmatpush1.xpose.msra.mxu0 %v588
        %3344 = vmatprep.subr.mxu0 0.0
        %3345 = vmatpush1.xpose.msra.mxu0 0.0
        %3346 = vmatprep.subr.mxu0 0.0
        %3347 = vmatpush1.xpose.msra.mxu0 0.0
        %3348 = vmatprep.subr.mxu0 0.0
        %3349 = vmatpush1.xpose.msra.mxu0 0.0
        %3350 = vmatprep.subr.mxu0 0.0
        %3351 = vmatpush1.xpose.msra.mxu0 0.0
        %3352 = vmatprep.subr.mxu0 0.0
        %3353 = vmatpush1.xpose.msra.mxu0 0.0
        %3354 = vmatprep.subr.mxu0 0.0
        %3355 = vmatpush1.xpose.msra.mxu0 0.0
        %3356 = vmatprep.subr.mxu0 0.0
        %3357 = vmatpush1.xpose.msra.mxu0 0.0
        %3358 = vmatprep.subr.mxu0 0.0
        %3359 = vmatpush1.xpose.msra.mxu0 0.0
        %3360 = vmatprep.subr.mxu0 0.0
        %3361 = vmatpush1.xpose.msra.mxu0 0.0
        %3362 = vmatprep.subr.mxu0 0.0
        %3363 = vmatpush1.xpose.msra.mxu0 0.0
        %3364 = vmatprep.subr.mxu0 0.0
        %3365 = vmatpush1.xpose.msra.mxu0 0.0
        %3366 = vmatprep.subr.mxu0 0.0
        %3367 = vmatpush1.xpose.msra.mxu0 0.0
        %3368 = vmatprep.subr.mxu0 0.0
        %3369 = vmatpush1.xpose.msra.mxu0 0.0
        %3370 = vmatprep.subr.mxu0 0.0
        %3371 = vmatpush1.xpose.msra.mxu0 0.0
        %3372 = vmatprep.subr.mxu0 0.0
        %3373 = vmatpush1.xpose.msra.mxu0 0.0
        %3374 = vmatprep.subr.mxu0 0.0
        %3375 = vmatpush1.xpose.msra.mxu0 0.0
        %3376 = vmatprep.subr.mxu0 0.0
        %3377 = vmatpush1.xpose.msra.mxu0 0.0
        %3378 = vmatprep.subr.mxu0 0.0
        %3379 = vmatpush1.xpose.msra.mxu0 0.0
        %3380 = vmatprep.subr.mxu0 0.0
        %3381 = vmatpush1.xpose.msra.mxu0 0.0
        %3382 = vmatprep.subr.mxu0 0.0
        %3383 = vmatpush1.xpose.msra.mxu0 0.0
        %3384 = vmatprep.subr.mxu0 0.0
        %3385 = vmatpush1.xpose.msra.mxu0 0.0
        %3386 = vmatprep.subr.mxu0 0.0
        %3387 = vmatpush1.xpose.msra.mxu0 0.0
        %3388 = vmatprep.subr.mxu0 0.0
        %3389 = vmatpush1.xpose.msra.mxu0 0.0
        %3390 = vmatprep.subr.mxu0 0.0
        %3391 = vmatpush1.xpose.msra.mxu0 0.0
        %3392 = vmatprep.subr.mxu0 0.0
        %3393 = vmatpush1.xpose.msra.mxu0 0.0
        %3394 = vmatprep.subr.mxu0 0.0
        %3395 = vmatpush1.xpose.msra.mxu0 0.0
        %3396 = vmatprep.subr.mxu0 0.0
        %3397 = vmatpush1.xpose.msra.mxu0 0.0
        %3398 = vmatprep.subr.mxu0 0.0
        %3399 = vmatpush1.xpose.msra.mxu0 0.0
        %3400 = vmatprep.subr.mxu0 0.0
        %3401 = vmatpush1.xpose.msra.mxu0 0.0
        %3402 = vmatprep.subr.mxu0 0.0
        %3403 = vmatpush1.xpose.msra.mxu0 0.0
        %3404 = vmatprep.mubr.f32.mxu0 %v1027
        %3405 = vmatmul.mubr.f32.gmra.mrb[0].mxu0 %v1019
        %v3406 = vpop.f32.mrb[0].mxu0
        %v3407 = vadd.f32 %v3337, %v3406
        %v3408 = vpop.f32.mrb[0].mxu0
        %3409 = vdwg.mxu0
        %3410 = vmatprep.subr.mxu0 %v335
        %3411 = vmatpush1.xpose.msra.mxu0 %v334
        %3412 = vmatprep.subr.mxu0 %v591
        %3413 = vmatpush1.xpose.msra.mxu0 %v590
        %3414 = vmatprep.subr.mxu0 0.0
        %3415 = vmatpush1.xpose.msra.mxu0 0.0
        %3416 = vmatprep.subr.mxu0 0.0
        %3417 = vmatpush1.xpose.msra.mxu0 0.0
        %3418 = vmatprep.subr.mxu0 0.0
        %3419 = vmatpush1.xpose.msra.mxu0 0.0
        %3420 = vmatprep.subr.mxu0 0.0
        %3421 = vmatpush1.xpose.msra.mxu0 0.0
        %3422 = vmatprep.subr.mxu0 0.0
        %3423 = vmatpush1.xpose.msra.mxu0 0.0
        %3424 = vmatprep.subr.mxu0 0.0
        %3425 = vmatpush1.xpose.msra.mxu0 0.0
        %3426 = vmatprep.subr.mxu0 0.0
        %3427 = vmatpush1.xpose.msra.mxu0 0.0
        %3428 = vmatprep.subr.mxu0 0.0
        %3429 = vmatpush1.xpose.msra.mxu0 0.0
        %3430 = vmatprep.subr.mxu0 0.0
        %3431 = vmatpush1.xpose.msra.mxu0 0.0
        %3432 = vmatprep.subr.mxu0 0.0
        %3433 = vmatpush1.xpose.msra.mxu0 0.0
        %3434 = vmatprep.subr.mxu0 0.0
        %3435 = vmatpush1.xpose.msra.mxu0 0.0
        %3436 = vmatprep.subr.mxu0 0.0
        %3437 = vmatpush1.xpose.msra.mxu0 0.0
        %3438 = vmatprep.subr.mxu0 0.0
        %3439 = vmatpush1.xpose.msra.mxu0 0.0
        %3440 = vmatprep.subr.mxu0 0.0
        %3441 = vmatpush1.xpose.msra.mxu0 0.0
        %3442 = vmatprep.subr.mxu0 0.0
        %3443 = vmatpush1.xpose.msra.mxu0 0.0
        %3444 = vmatprep.subr.mxu0 0.0
        %3445 = vmatpush1.xpose.msra.mxu0 0.0
        %3446 = vmatprep.subr.mxu0 0.0
        %3447 = vmatpush1.xpose.msra.mxu0 0.0
        %3448 = vmatprep.subr.mxu0 0.0
        %3449 = vmatpush1.xpose.msra.mxu0 0.0
        %3450 = vmatprep.subr.mxu0 0.0
        %3451 = vmatpush1.xpose.msra.mxu0 0.0
        %3452 = vmatprep.subr.mxu0 0.0
        %3453 = vmatpush1.xpose.msra.mxu0 0.0
        %3454 = vmatprep.subr.mxu0 0.0
        %3455 = vmatpush1.xpose.msra.mxu0 0.0
        %3456 = vmatprep.subr.mxu0 0.0
        %3457 = vmatpush1.xpose.msra.mxu0 0.0
        %3458 = vmatprep.subr.mxu0 0.0
        %3459 = vmatpush1.xpose.msra.mxu0 0.0
        %3460 = vmatprep.subr.mxu0 0.0
        %3461 = vmatpush1.xpose.msra.mxu0 0.0
        %3462 = vmatprep.subr.mxu0 0.0
        %3463 = vmatpush1.xpose.msra.mxu0 0.0
        %3464 = vmatprep.subr.mxu0 0.0
        %3465 = vmatpush1.xpose.msra.mxu0 0.0
        %3466 = vmatprep.subr.mxu0 0.0
        %3467 = vmatpush1.xpose.msra.mxu0 0.0
        %3468 = vmatprep.subr.mxu0 0.0
        %3469 = vmatpush1.xpose.msra.mxu0 0.0
        %3470 = vmatprep.subr.mxu0 0.0
        %3471 = vmatpush1.xpose.msra.mxu0 0.0
        %3472 = vmatprep.subr.mxu0 0.0
        %3473 = vmatpush1.xpose.msra.mxu0 0.0
        %3474 = vmatprep.mubr.f32.mxu0 %v1028
        %3475 = vmatmul.mubr.f32.gmra.mrb[0].mxu0 %v1026
        %v3476 = vpop.f32.mrb[0].mxu0
        %v3477 = vadd.f32 %v3407, %v3476
        %v3478 = vpop.f32.mrb[0].mxu0
        %3479 = vdwg.mxu0
        %3480 = vmatprep.subr.mxu0 %v337
        %3481 = vmatpush1.xpose.msra.mxu0 %v336
        %3482 = vmatprep.subr.mxu0 %v593
        %3483 = vmatpush1.xpose.msra.mxu0 %v592
        %3484 = vmatprep.subr.mxu0 0.0
        %3485 = vmatpush1.xpose.msra.mxu0 0.0
        %3486 = vmatprep.subr.mxu0 0.0
        %3487 = vmatpush1.xpose.msra.mxu0 0.0
        %3488 = vmatprep.subr.mxu0 0.0
        %3489 = vmatpush1.xpose.msra.mxu0 0.0
        %3490 = vmatprep.subr.mxu0 0.0
        %3491 = vmatpush1.xpose.msra.mxu0 0.0
        %3492 = vmatprep.subr.mxu0 0.0
        %3493 = vmatpush1.xpose.msra.mxu0 0.0
        %3494 = vmatprep.subr.mxu0 0.0
        %3495 = vmatpush1.xpose.msra.mxu0 0.0
        %3496 = vmatprep.subr.mxu0 0.0
        %3497 = vmatpush1.xpose.msra.mxu0 0.0
        %3498 = vmatprep.subr.mxu0 0.0
        %3499 = vmatpush1.xpose.msra.mxu0 0.0
        %3500 = vmatprep.subr.mxu0 0.0
        %3501 = vmatpush1.xpose.msra.mxu0 0.0
        %3502 = vmatprep.subr.mxu0 0.0
        %3503 = vmatpush1.xpose.msra.mxu0 0.0
        %3504 = vmatprep.subr.mxu0 0.0
        %3505 = vmatpush1.xpose.msra.mxu0 0.0
        %3506 = vmatprep.subr.mxu0 0.0
        %3507 = vmatpush1.xpose.msra.mxu0 0.0
        %3508 = vmatprep.subr.mxu0 0.0
        %3509 = vmatpush1.xpose.msra.mxu0 0.0
        %3510 = vmatprep.subr.mxu0 0.0
        %3511 = vmatpush1.xpose.msra.mxu0 0.0
        %3512 = vmatprep.subr.mxu0 0.0
        %3513 = vmatpush1.xpose.msra.mxu0 0.0
        %3514 = vmatprep.subr.mxu0 0.0
        %3515 = vmatpush1.xpose.msra.mxu0 0.0
        %3516 = vmatprep.subr.mxu0 0.0
        %3517 = vmatpush1.xpose.msra.mxu0 0.0
        %3518 = vmatprep.subr.mxu0 0.0
        %3519 = vmatpush1.xpose.msra.mxu0 0.0
        %3520 = vmatprep.subr.mxu0 0.0
        %3521 = vmatpush1.xpose.msra.mxu0 0.0
        %3522 = vmatprep.subr.mxu0 0.0
        %3523 = vmatpush1.xpose.msra.mxu0 0.0
        %3524 = vmatprep.subr.mxu0 0.0
        %3525 = vmatpush1.xpose.msra.mxu0 0.0
        %3526 = vmatprep.subr.mxu0 0.0
        %3527 = vmatpush1.xpose.msra.mxu0 0.0
        %3528 = vmatprep.subr.mxu0 0.0
        %3529 = vmatpush1.xpose.msra.mxu0 0.0
        %3530 = vmatprep.subr.mxu0 0.0
        %3531 = vmatpush1.xpose.msra.mxu0 0.0
        %3532 = vmatprep.subr.mxu0 0.0
        %3533 = vmatpush1.xpose.msra.mxu0 0.0
        %3534 = vmatprep.subr.mxu0 0.0
        %3535 = vmatpush1.xpose.msra.mxu0 0.0
        %3536 = vmatprep.subr.mxu0 0.0
        %3537 = vmatpush1.xpose.msra.mxu0 0.0
        %3538 = vmatprep.subr.mxu0 0.0
        %3539 = vmatpush1.xpose.msra.mxu0 0.0
        %3540 = vmatprep.subr.mxu0 0.0
        %3541 = vmatpush1.xpose.msra.mxu0 0.0
        %3542 = vmatprep.subr.mxu0 0.0
        %3543 = vmatpush1.xpose.msra.mxu0 0.0
        %3544 = vmatprep.mubr.f32.mxu0 %v1044
        %3545 = vmatmul.mubr.f32.gmra.mrb[0].mxu0 %v1036
        %v3546 = vpop.f32.mrb[0].mxu0
        %v3547 = vadd.f32 %v3477, %v3546
        %v3548 = vpop.f32.mrb[0].mxu0
        %3549 = vdwg.mxu0
        %3550 = vmatprep.subr.mxu0 %v339
        %3551 = vmatpush1.xpose.msra.mxu0 %v338
        %3552 = vmatprep.subr.mxu0 %v595
        %3553 = vmatpush1.xpose.msra.mxu0 %v594
        %3554 = vmatprep.subr.mxu0 0.0
        %3555 = vmatpush1.xpose.msra.mxu0 0.0
        %3556 = vmatprep.subr.mxu0 0.0
        %3557 = vmatpush1.xpose.msra.mxu0 0.0
        %3558 = vmatprep.subr.mxu0 0.0
        %3559 = vmatpush1.xpose.msra.mxu0 0.0
        %3560 = vmatprep.subr.mxu0 0.0
        %3561 = vmatpush1.xpose.msra.mxu0 0.0
        %3562 = vmatprep.subr.mxu0 0.0
        %3563 = vmatpush1.xpose.msra.mxu0 0.0
        %3564 = vmatprep.subr.mxu0 0.0
        %3565 = vmatpush1.xpose.msra.mxu0 0.0
        %3566 = vmatprep.subr.mxu0 0.0
        %3567 = vmatpush1.xpose.msra.mxu0 0.0
        %3568 = vmatprep.subr.mxu0 0.0
        %3569 = vmatpush1.xpose.msra.mxu0 0.0
        %3570 = vmatprep.subr.mxu0 0.0
        %3571 = vmatpush1.xpose.msra.mxu0 0.0
        %3572 = vmatprep.subr.mxu0 0.0
        %3573 = vmatpush1.xpose.msra.mxu0 0.0
        %3574 = vmatprep.subr.mxu0 0.0
        %3575 = vmatpush1.xpose.msra.mxu0 0.0
        %3576 = vmatprep.subr.mxu0 0.0
        %3577 = vmatpush1.xpose.msra.mxu0 0.0
        %3578 = vmatprep.subr.mxu0 0.0
        %3579 = vmatpush1.xpose.msra.mxu0 0.0
        %3580 = vmatprep.subr.mxu0 0.0
        %3581 = vmatpush1.xpose.msra.mxu0 0.0
        %3582 = vmatprep.subr.mxu0 0.0
        %3583 = vmatpush1.xpose.msra.mxu0 0.0
        %3584 = vmatprep.subr.mxu0 0.0
        %3585 = vmatpush1.xpose.msra.mxu0 0.0
        %3586 = vmatprep.subr.mxu0 0.0
        %3587 = vmatpush1.xpose.msra.mxu0 0.0
        %3588 = vmatprep.subr.mxu0 0.0
        %3589 = vmatpush1.xpose.msra.mxu0 0.0
        %3590 = vmatprep.subr.mxu0 0.0
        %3591 = vmatpush1.xpose.msra.mxu0 0.0
        %3592 = vmatprep.subr.mxu0 0.0
        %3593 = vmatpush1.xpose.msra.mxu0 0.0
        %3594 = vmatprep.subr.mxu0 0.0
        %3595 = vmatpush1.xpose.msra.mxu0 0.0
        %3596 = vmatprep.subr.mxu0 0.0
        %3597 = vmatpush1.xpose.msra.mxu0 0.0
        %3598 = vmatprep.subr.mxu0 0.0
        %3599 = vmatpush1.xpose.msra.mxu0 0.0
        %3600 = vmatprep.subr.mxu0 0.0
        %3601 = vmatpush1.xpose.msra.mxu0 0.0
        %3602 = vmatprep.subr.mxu0 0.0
        %3603 = vmatpush1.xpose.msra.mxu0 0.0
        %3604 = vmatprep.subr.mxu0 0.0
        %3605 = vmatpush1.xpose.msra.mxu0 0.0
        %3606 = vmatprep.subr.mxu0 0.0
        %3607 = vmatpush1.xpose.msra.mxu0 0.0
        %3608 = vmatprep.subr.mxu0 0.0
        %3609 = vmatpush1.xpose.msra.mxu0 0.0
        %3610 = vmatprep.subr.mxu0 0.0
        %3611 = vmatpush1.xpose.msra.mxu0 0.0
        %3612 = vmatprep.subr.mxu0 0.0
        %3613 = vmatpush1.xpose.msra.mxu0 0.0
        %3614 = vmatprep.mubr.f32.mxu0 %v1045
        %3615 = vmatmul.mubr.f32.gmra.mrb[0].mxu0 %v1043
        %v3616 = vpop.f32.mrb[0].mxu0
        %v3617 = vadd.f32 %v3547, %v3616
        %v3618 = vpop.f32.mrb[0].mxu0
        %3619 = vdwg.mxu0
        %3620 = vmatprep.subr.mxu0 %v341
        %3621 = vmatpush1.xpose.msra.mxu0 %v340
        %3622 = vmatprep.subr.mxu0 %v597
        %3623 = vmatpush1.xpose.msra.mxu0 %v596
        %3624 = vmatprep.subr.mxu0 0.0
        %3625 = vmatpush1.xpose.msra.mxu0 0.0
        %3626 = vmatprep.subr.mxu0 0.0
        %3627 = vmatpush1.xpose.msra.mxu0 0.0
        %3628 = vmatprep.subr.mxu0 0.0
        %3629 = vmatpush1.xpose.msra.mxu0 0.0
        %3630 = vmatprep.subr.mxu0 0.0
        %3631 = vmatpush1.xpose.msra.mxu0 0.0
        %3632 = vmatprep.subr.mxu0 0.0
        %3633 = vmatpush1.xpose.msra.mxu0 0.0
        %3634 = vmatprep.subr.mxu0 0.0
        %3635 = vmatpush1.xpose.msra.mxu0 0.0
        %3636 = vmatprep.subr.mxu0 0.0
        %3637 = vmatpush1.xpose.msra.mxu0 0.0
        %3638 = vmatprep.subr.mxu0 0.0
        %3639 = vmatpush1.xpose.msra.mxu0 0.0
        %3640 = vmatprep.subr.mxu0 0.0
        %3641 = vmatpush1.xpose.msra.mxu0 0.0
        %3642 = vmatprep.subr.mxu0 0.0
        %3643 = vmatpush1.xpose.msra.mxu0 0.0
        %3644 = vmatprep.subr.mxu0 0.0
        %3645 = vmatpush1.xpose.msra.mxu0 0.0
        %3646 = vmatprep.subr.mxu0 0.0
        %3647 = vmatpush1.xpose.msra.mxu0 0.0
        %3648 = vmatprep.subr.mxu0 0.0
        %3649 = vmatpush1.xpose.msra.mxu0 0.0
        %3650 = vmatprep.subr.mxu0 0.0
        %3651 = vmatpush1.xpose.msra.mxu0 0.0
        %3652 = vmatprep.subr.mxu0 0.0
        %3653 = vmatpush1.xpose.msra.mxu0 0.0
        %3654 = vmatprep.subr.mxu0 0.0
        %3655 = vmatpush1.xpose.msra.mxu0 0.0
        %3656 = vmatprep.subr.mxu0 0.0
        %3657 = vmatpush1.xpose.msra.mxu0 0.0
        %3658 = vmatprep.subr.mxu0 0.0
        %3659 = vmatpush1.xpose.msra.mxu0 0.0
        %3660 = vmatprep.subr.mxu0 0.0
        %3661 = vmatpush1.xpose.msra.mxu0 0.0
        %3662 = vmatprep.subr.mxu0 0.0
        %3663 = vmatpush1.xpose.msra.mxu0 0.0
        %3664 = vmatprep.subr.mxu0 0.0
        %3665 = vmatpush1.xpose.msra.mxu0 0.0
        %3666 = vmatprep.subr.mxu0 0.0
        %3667 = vmatpush1.xpose.msra.mxu0 0.0
        %3668 = vmatprep.subr.mxu0 0.0
        %3669 = vmatpush1.xpose.msra.mxu0 0.0
        %3670 = vmatprep.subr.mxu0 0.0
        %3671 = vmatpush1.xpose.msra.mxu0 0.0
        %3672 = vmatprep.subr.mxu0 0.0
        %3673 = vmatpush1.xpose.msra.mxu0 0.0
        %3674 = vmatprep.subr.mxu0 0.0
        %3675 = vmatpush1.xpose.msra.mxu0 0.0
        %3676 = vmatprep.subr.mxu0 0.0
        %3677 = vmatpush1.xpose.msra.mxu0 0.0
        %3678 = vmatprep.subr.mxu0 0.0
        %3679 = vmatpush1.xpose.msra.mxu0 0.0
        %3680 = vmatprep.subr.mxu0 0.0
        %3681 = vmatpush1.xpose.msra.mxu0 0.0
        %3682 = vmatprep.subr.mxu0 0.0
        %3683 = vmatpush1.xpose.msra.mxu0 0.0
        %3684 = vmatprep.mubr.f32.mxu0 %v1061
        %3685 = vmatmul.mubr.f32.gmra.mrb[0].mxu0 %v1053
        %v3686 = vpop.f32.mrb[0].mxu0
        %v3687 = vadd.f32 %v3617, %v3686
        %v3688 = vpop.f32.mrb[0].mxu0
        %3689 = vdwg.mxu0
        %3690 = vmatprep.subr.mxu0 %v343
        %3691 = vmatpush1.xpose.msra.mxu0 %v342
        %3692 = vmatprep.subr.mxu0 %v599
        %3693 = vmatpush1.xpose.msra.mxu0 %v598
        %3694 = vmatprep.subr.mxu0 0.0
        %3695 = vmatpush1.xpose.msra.mxu0 0.0
        %3696 = vmatprep.subr.mxu0 0.0
        %3697 = vmatpush1.xpose.msra.mxu0 0.0
        %3698 = vmatprep.subr.mxu0 0.0
        %3699 = vmatpush1.xpose.msra.mxu0 0.0
        %3700 = vmatprep.subr.mxu0 0.0
        %3701 = vmatpush1.xpose.msra.mxu0 0.0
        %3702 = vmatprep.subr.mxu0 0.0
        %3703 = vmatpush1.xpose.msra.mxu0 0.0
        %3704 = vmatprep.subr.mxu0 0.0
        %3705 = vmatpush1.xpose.msra.mxu0 0.0
        %3706 = vmatprep.subr.mxu0 0.0
        %3707 = vmatpush1.xpose.msra.mxu0 0.0
        %3708 = vmatprep.subr.mxu0 0.0
        %3709 = vmatpush1.xpose.msra.mxu0 0.0
        %3710 = vmatprep.subr.mxu0 0.0
        %3711 = vmatpush1.xpose.msra.mxu0 0.0
        %3712 = vmatprep.subr.mxu0 0.0
        %3713 = vmatpush1.xpose.msra.mxu0 0.0
        %3714 = vmatprep.subr.mxu0 0.0
        %3715 = vmatpush1.xpose.msra.mxu0 0.0
        %3716 = vmatprep.subr.mxu0 0.0
        %3717 = vmatpush1.xpose.msra.mxu0 0.0
        %3718 = vmatprep.subr.mxu0 0.0
        %3719 = vmatpush1.xpose.msra.mxu0 0.0
        %3720 = vmatprep.subr.mxu0 0.0
        %3721 = vmatpush1.xpose.msra.mxu0 0.0
        %3722 = vmatprep.subr.mxu0 0.0
        %3723 = vmatpush1.xpose.msra.mxu0 0.0
        %3724 = vmatprep.subr.mxu0 0.0
        %3725 = vmatpush1.xpose.msra.mxu0 0.0
        %3726 = vmatprep.subr.mxu0 0.0
        %3727 = vmatpush1.xpose.msra.mxu0 0.0
        %3728 = vmatprep.subr.mxu0 0.0
        %3729 = vmatpush1.xpose.msra.mxu0 0.0
        %3730 = vmatprep.subr.mxu0 0.0
        %3731 = vmatpush1.xpose.msra.mxu0 0.0
        %3732 = vmatprep.subr.mxu0 0.0
        %3733 = vmatpush1.xpose.msra.mxu0 0.0
        %3734 = vmatprep.subr.mxu0 0.0
        %3735 = vmatpush1.xpose.msra.mxu0 0.0
        %3736 = vmatprep.subr.mxu0 0.0
        %3737 = vmatpush1.xpose.msra.mxu0 0.0
        %3738 = vmatprep.subr.mxu0 0.0
        %3739 = vmatpush1.xpose.msra.mxu0 0.0
        %3740 = vmatprep.subr.mxu0 0.0
        %3741 = vmatpush1.xpose.msra.mxu0 0.0
        %3742 = vmatprep.subr.mxu0 0.0
        %3743 = vmatpush1.xpose.msra.mxu0 0.0
        %3744 = vmatprep.subr.mxu0 0.0
        %3745 = vmatpush1.xpose.msra.mxu0 0.0
        %3746 = vmatprep.subr.mxu0 0.0
        %3747 = vmatpush1.xpose.msra.mxu0 0.0
        %3748 = vmatprep.subr.mxu0 0.0
        %3749 = vmatpush1.xpose.msra.mxu0 0.0
        %3750 = vmatprep.subr.mxu0 0.0
        %3751 = vmatpush1.xpose.msra.mxu0 0.0
        %3752 = vmatprep.subr.mxu0 0.0
        %3753 = vmatpush1.xpose.msra.mxu0 0.0
        %3754 = vmatprep.mubr.f32.mxu0 %v1062
        %3755 = vmatmul.mubr.f32.gmra.mrb[0].mxu0 %v1060
        %v3756 = vpop.f32.mrb[0].mxu0
        %v3757 = vadd.f32 %v3687, %v3756
        %v3758 = vpop.f32.mrb[0].mxu0
        %3759 = vdwg.mxu0
        %3760 = vmatprep.subr.mxu0 %v345
        %3761 = vmatpush1.xpose.msra.mxu0 %v344
        %3762 = vmatprep.subr.mxu0 %v601
        %3763 = vmatpush1.xpose.msra.mxu0 %v600
        %3764 = vmatprep.subr.mxu0 0.0
        %3765 = vmatpush1.xpose.msra.mxu0 0.0
        %3766 = vmatprep.subr.mxu0 0.0
        %3767 = vmatpush1.xpose.msra.mxu0 0.0
        %3768 = vmatprep.subr.mxu0 0.0
        %3769 = vmatpush1.xpose.msra.mxu0 0.0
        %3770 = vmatprep.subr.mxu0 0.0
        %3771 = vmatpush1.xpose.msra.mxu0 0.0
        %3772 = vmatprep.subr.mxu0 0.0
        %3773 = vmatpush1.xpose.msra.mxu0 0.0
        %3774 = vmatprep.subr.mxu0 0.0
        %3775 = vmatpush1.xpose.msra.mxu0 0.0
        %3776 = vmatprep.subr.mxu0 0.0
        %3777 = vmatpush1.xpose.msra.mxu0 0.0
        %3778 = vmatprep.subr.mxu0 0.0
        %3779 = vmatpush1.xpose.msra.mxu0 0.0
        %3780 = vmatprep.subr.mxu0 0.0
        %3781 = vmatpush1.xpose.msra.mxu0 0.0
        %3782 = vmatprep.subr.mxu0 0.0
        %3783 = vmatpush1.xpose.msra.mxu0 0.0
        %3784 = vmatprep.subr.mxu0 0.0
        %3785 = vmatpush1.xpose.msra.mxu0 0.0
        %3786 = vmatprep.subr.mxu0 0.0
        %3787 = vmatpush1.xpose.msra.mxu0 0.0
        %3788 = vmatprep.subr.mxu0 0.0
        %3789 = vmatpush1.xpose.msra.mxu0 0.0
        %3790 = vmatprep.subr.mxu0 0.0
        %3791 = vmatpush1.xpose.msra.mxu0 0.0
        %3792 = vmatprep.subr.mxu0 0.0
        %3793 = vmatpush1.xpose.msra.mxu0 0.0
        %3794 = vmatprep.subr.mxu0 0.0
        %3795 = vmatpush1.xpose.msra.mxu0 0.0
        %3796 = vmatprep.subr.mxu0 0.0
        %3797 = vmatpush1.xpose.msra.mxu0 0.0
        %3798 = vmatprep.subr.mxu0 0.0
        %3799 = vmatpush1.xpose.msra.mxu0 0.0
        %3800 = vmatprep.subr.mxu0 0.0
        %3801 = vmatpush1.xpose.msra.mxu0 0.0
        %3802 = vmatprep.subr.mxu0 0.0
        %3803 = vmatpush1.xpose.msra.mxu0 0.0
        %3804 = vmatprep.subr.mxu0 0.0
        %3805 = vmatpush1.xpose.msra.mxu0 0.0
        %3806 = vmatprep.subr.mxu0 0.0
        %3807 = vmatpush1.xpose.msra.mxu0 0.0
        %3808 = vmatprep.subr.mxu0 0.0
        %3809 = vmatpush1.xpose.msra.mxu0 0.0
        %3810 = vmatprep.subr.mxu0 0.0
        %3811 = vmatpush1.xpose.msra.mxu0 0.0
        %3812 = vmatprep.subr.mxu0 0.0
        %3813 = vmatpush1.xpose.msra.mxu0 0.0
        %3814 = vmatprep.subr.mxu0 0.0
        %3815 = vmatpush1.xpose.msra.mxu0 0.0
        %3816 = vmatprep.subr.mxu0 0.0
        %3817 = vmatpush1.xpose.msra.mxu0 0.0
        %3818 = vmatprep.subr.mxu0 0.0
        %3819 = vmatpush1.xpose.msra.mxu0 0.0
        %3820 = vmatprep.subr.mxu0 0.0
        %3821 = vmatpush1.xpose.msra.mxu0 0.0
        %3822 = vmatprep.subr.mxu0 0.0
        %3823 = vmatpush1.xpose.msra.mxu0 0.0
        %3824 = vmatprep.mubr.f32.mxu0 %v1078
        %3825 = vmatmul.mubr.f32.gmra.mrb[0].mxu0 %v1070
        %v3826 = vpop.f32.mrb[0].mxu0
        %v3827 = vadd.f32 %v3757, %v3826
        %v3828 = vpop.f32.mrb[0].mxu0
        %3829 = vdwg.mxu0
        %3830 = vmatprep.subr.mxu0 %v347
        %3831 = vmatpush1.xpose.msra.mxu0 %v346
        %3832 = vmatprep.subr.mxu0 %v603
        %3833 = vmatpush1.xpose.msra.mxu0 %v602
        %3834 = vmatprep.subr.mxu0 0.0
        %3835 = vmatpush1.xpose.msra.mxu0 0.0
        %3836 = vmatprep.subr.mxu0 0.0
        %3837 = vmatpush1.xpose.msra.mxu0 0.0
        %3838 = vmatprep.subr.mxu0 0.0
        %3839 = vmatpush1.xpose.msra.mxu0 0.0
        %3840 = vmatprep.subr.mxu0 0.0
        %3841 = vmatpush1.xpose.msra.mxu0 0.0
        %3842 = vmatprep.subr.mxu0 0.0
        %3843 = vmatpush1.xpose.msra.mxu0 0.0
        %3844 = vmatprep.subr.mxu0 0.0
        %3845 = vmatpush1.xpose.msra.mxu0 0.0
        %3846 = vmatprep.subr.mxu0 0.0
        %3847 = vmatpush1.xpose.msra.mxu0 0.0
        %3848 = vmatprep.subr.mxu0 0.0
        %3849 = vmatpush1.xpose.msra.mxu0 0.0
        %3850 = vmatprep.subr.mxu0 0.0
        %3851 = vmatpush1.xpose.msra.mxu0 0.0
        %3852 = vmatprep.subr.mxu0 0.0
        %3853 = vmatpush1.xpose.msra.mxu0 0.0
        %3854 = vmatprep.subr.mxu0 0.0
        %3855 = vmatpush1.xpose.msra.mxu0 0.0
        %3856 = vmatprep.subr.mxu0 0.0
        %3857 = vmatpush1.xpose.msra.mxu0 0.0
        %3858 = vmatprep.subr.mxu0 0.0
        %3859 = vmatpush1.xpose.msra.mxu0 0.0
        %3860 = vmatprep.subr.mxu0 0.0
        %3861 = vmatpush1.xpose.msra.mxu0 0.0
        %3862 = vmatprep.subr.mxu0 0.0
        %3863 = vmatpush1.xpose.msra.mxu0 0.0
        %3864 = vmatprep.subr.mxu0 0.0
        %3865 = vmatpush1.xpose.msra.mxu0 0.0
        %3866 = vmatprep.subr.mxu0 0.0
        %3867 = vmatpush1.xpose.msra.mxu0 0.0
        %3868 = vmatprep.subr.mxu0 0.0
        %3869 = vmatpush1.xpose.msra.mxu0 0.0
        %3870 = vmatprep.subr.mxu0 0.0
        %3871 = vmatpush1.xpose.msra.mxu0 0.0
        %3872 = vmatprep.subr.mxu0 0.0
        %3873 = vmatpush1.xpose.msra.mxu0 0.0
        %3874 = vmatprep.subr.mxu0 0.0
        %3875 = vmatpush1.xpose.msra.mxu0 0.0
        %3876 = vmatprep.subr.mxu0 0.0
        %3877 = vmatpush1.xpose.msra.mxu0 0.0
        %3878 = vmatprep.subr.mxu0 0.0
        %3879 = vmatpush1.xpose.msra.mxu0 0.0
        %3880 = vmatprep.subr.mxu0 0.0
        %3881 = vmatpush1.xpose.msra.mxu0 0.0
        %3882 = vmatprep.subr.mxu0 0.0
        %3883 = vmatpush1.xpose.msra.mxu0 0.0
        %3884 = vmatprep.subr.mxu0 0.0
        %3885 = vmatpush1.xpose.msra.mxu0 0.0
        %3886 = vmatprep.subr.mxu0 0.0
        %3887 = vmatpush1.xpose.msra.mxu0 0.0
        %3888 = vmatprep.subr.mxu0 0.0
        %3889 = vmatpush1.xpose.msra.mxu0 0.0
        %3890 = vmatprep.subr.mxu0 0.0
        %3891 = vmatpush1.xpose.msra.mxu0 0.0
        %3892 = vmatprep.subr.mxu0 0.0
        %3893 = vmatpush1.xpose.msra.mxu0 0.0
        %3894 = vmatprep.mubr.f32.mxu0 %v1079
        %3895 = vmatmul.mubr.f32.gmra.mrb[0].mxu0 %v1077
        %v3896 = vpop.f32.mrb[0].mxu0
        %v3897 = vadd.f32 %v3827, %v3896
        %v3898 = vpop.f32.mrb[0].mxu0
        %3899 = vdwg.mxu0
        %3900 = vmatprep.subr.mxu0 %v349
        %3901 = vmatpush1.xpose.msra.mxu0 %v348
        %3902 = vmatprep.subr.mxu0 %v605
        %3903 = vmatpush1.xpose.msra.mxu0 %v604
        %3904 = vmatprep.subr.mxu0 0.0
        %3905 = vmatpush1.xpose.msra.mxu0 0.0
        %3906 = vmatprep.subr.mxu0 0.0
        %3907 = vmatpush1.xpose.msra.mxu0 0.0
        %3908 = vmatprep.subr.mxu0 0.0
        %3909 = vmatpush1.xpose.msra.mxu0 0.0
        %3910 = vmatprep.subr.mxu0 0.0
        %3911 = vmatpush1.xpose.msra.mxu0 0.0
        %3912 = vmatprep.subr.mxu0 0.0
        %3913 = vmatpush1.xpose.msra.mxu0 0.0
        %3914 = vmatprep.subr.mxu0 0.0
        %3915 = vmatpush1.xpose.msra.mxu0 0.0
        %3916 = vmatprep.subr.mxu0 0.0
        %3917 = vmatpush1.xpose.msra.mxu0 0.0
        %3918 = vmatprep.subr.mxu0 0.0
        %3919 = vmatpush1.xpose.msra.mxu0 0.0
        %3920 = vmatprep.subr.mxu0 0.0
        %3921 = vmatpush1.xpose.msra.mxu0 0.0
        %3922 = vmatprep.subr.mxu0 0.0
        %3923 = vmatpush1.xpose.msra.mxu0 0.0
        %3924 = vmatprep.subr.mxu0 0.0
        %3925 = vmatpush1.xpose.msra.mxu0 0.0
        %3926 = vmatprep.subr.mxu0 0.0
        %3927 = vmatpush1.xpose.msra.mxu0 0.0
        %3928 = vmatprep.subr.mxu0 0.0
        %3929 = vmatpush1.xpose.msra.mxu0 0.0
        %3930 = vmatprep.subr.mxu0 0.0
        %3931 = vmatpush1.xpose.msra.mxu0 0.0
        %3932 = vmatprep.subr.mxu0 0.0
        %3933 = vmatpush1.xpose.msra.mxu0 0.0
        %3934 = vmatprep.subr.mxu0 0.0
        %3935 = vmatpush1.xpose.msra.mxu0 0.0
        %3936 = vmatprep.subr.mxu0 0.0
        %3937 = vmatpush1.xpose.msra.mxu0 0.0
        %3938 = vmatprep.subr.mxu0 0.0
        %3939 = vmatpush1.xpose.msra.mxu0 0.0
        %3940 = vmatprep.subr.mxu0 0.0
        %3941 = vmatpush1.xpose.msra.mxu0 0.0
        %3942 = vmatprep.subr.mxu0 0.0
        %3943 = vmatpush1.xpose.msra.mxu0 0.0
        %3944 = vmatprep.subr.mxu0 0.0
        %3945 = vmatpush1.xpose.msra.mxu0 0.0
        %3946 = vmatprep.subr.mxu0 0.0
        %3947 = vmatpush1.xpose.msra.mxu0 0.0
        %3948 = vmatprep.subr.mxu0 0.0
        %3949 = vmatpush1.xpose.msra.mxu0 0.0
        %3950 = vmatprep.subr.mxu0 0.0
        %3951 = vmatpush1.xpose.msra.mxu0 0.0
        %3952 = vmatprep.subr.mxu0 0.0
        %3953 = vmatpush1.xpose.msra.mxu0 0.0
        %3954 = vmatprep.subr.mxu0 0.0
        %3955 = vmatpush1.xpose.msra.mxu0 0.0
        %3956 = vmatprep.subr.mxu0 0.0
        %3957 = vmatpush1.xpose.msra.mxu0 0.0
        %3958 = vmatprep.subr.mxu0 0.0
        %3959 = vmatpush1.xpose.msra.mxu0 0.0
        %3960 = vmatprep.subr.mxu0 0.0
        %3961 = vmatpush1.xpose.msra.mxu0 0.0
        %3962 = vmatprep.subr.mxu0 0.0
        %3963 = vmatpush1.xpose.msra.mxu0 0.0
        %3964 = vmatprep.mubr.f32.mxu0 %v1095
        %3965 = vmatmul.mubr.f32.gmra.mrb[0].mxu0 %v1087
        %v3966 = vpop.f32.mrb[0].mxu0
        %v3967 = vadd.f32 %v3897, %v3966
        %v3968 = vpop.f32.mrb[0].mxu0
        %3969 = vdwg.mxu0
        %3970 = vmatprep.subr.mxu0 %v351
        %3971 = vmatpush1.xpose.msra.mxu0 %v350
        %3972 = vmatprep.subr.mxu0 %v607
        %3973 = vmatpush1.xpose.msra.mxu0 %v606
        %3974 = vmatprep.subr.mxu0 0.0
        %3975 = vmatpush1.xpose.msra.mxu0 0.0
        %3976 = vmatprep.subr.mxu0 0.0
        %3977 = vmatpush1.xpose.msra.mxu0 0.0
        %3978 = vmatprep.subr.mxu0 0.0
        %3979 = vmatpush1.xpose.msra.mxu0 0.0
        %3980 = vmatprep.subr.mxu0 0.0
        %3981 = vmatpush1.xpose.msra.mxu0 0.0
        %3982 = vmatprep.subr.mxu0 0.0
        %3983 = vmatpush1.xpose.msra.mxu0 0.0
        %3984 = vmatprep.subr.mxu0 0.0
        %3985 = vmatpush1.xpose.msra.mxu0 0.0
        %3986 = vmatprep.subr.mxu0 0.0
        %3987 = vmatpush1.xpose.msra.mxu0 0.0
        %3988 = vmatprep.subr.mxu0 0.0
        %3989 = vmatpush1.xpose.msra.mxu0 0.0
        %3990 = vmatprep.subr.mxu0 0.0
        %3991 = vmatpush1.xpose.msra.mxu0 0.0
        %3992 = vmatprep.subr.mxu0 0.0
        %3993 = vmatpush1.xpose.msra.mxu0 0.0
        %3994 = vmatprep.subr.mxu0 0.0
        %3995 = vmatpush1.xpose.msra.mxu0 0.0
        %3996 = vmatprep.subr.mxu0 0.0
        %3997 = vmatpush1.xpose.msra.mxu0 0.0
        %3998 = vmatprep.subr.mxu0 0.0
        %3999 = vmatpush1.xpose.msra.mxu0 0.0
        %4000 = vmatprep.subr.mxu0 0.0
        %4001 = vmatpush1.xpose.msra.mxu0 0.0
        %4002 = vmatprep.subr.mxu0 0.0
        %4003 = vmatpush1.xpose.msra.mxu0 0.0
        %4004 = vmatprep.subr.mxu0 0.0
        %4005 = vmatpush1.xpose.msra.mxu0 0.0
        %4006 = vmatprep.subr.mxu0 0.0
        %4007 = vmatpush1.xpose.msra.mxu0 0.0
        %4008 = vmatprep.subr.mxu0 0.0
        %4009 = vmatpush1.xpose.msra.mxu0 0.0
        %4010 = vmatprep.subr.mxu0 0.0
        %4011 = vmatpush1.xpose.msra.mxu0 0.0
        %4012 = vmatprep.subr.mxu0 0.0
        %4013 = vmatpush1.xpose.msra.mxu0 0.0
        %4014 = vmatprep.subr.mxu0 0.0
        %4015 = vmatpush1.xpose.msra.mxu0 0.0
        %4016 = vmatprep.subr.mxu0 0.0
        %4017 = vmatpush1.xpose.msra.mxu0 0.0
        %4018 = vmatprep.subr.mxu0 0.0
        %4019 = vmatpush1.xpose.msra.mxu0 0.0
        %4020 = vmatprep.subr.mxu0 0.0
        %4021 = vmatpush1.xpose.msra.mxu0 0.0
        %4022 = vmatprep.subr.mxu0 0.0
        %4023 = vmatpush1.xpose.msra.mxu0 0.0
        %4024 = vmatprep.subr.mxu0 0.0
        %4025 = vmatpush1.xpose.msra.mxu0 0.0
        %4026 = vmatprep.subr.mxu0 0.0
        %4027 = vmatpush1.xpose.msra.mxu0 0.0
        %4028 = vmatprep.subr.mxu0 0.0
        %4029 = vmatpush1.xpose.msra.mxu0 0.0
        %4030 = vmatprep.subr.mxu0 0.0
        %4031 = vmatpush1.xpose.msra.mxu0 0.0
        %4032 = vmatprep.subr.mxu0 0.0
        %4033 = vmatpush1.xpose.msra.mxu0 0.0
        %4034 = vmatprep.mubr.f32.mxu0 %v1096
        %4035 = vmatmul.mubr.f32.gmra.mrb[0].mxu0 %v1094
        %v4036 = vpop.f32.mrb[0].mxu0
        %v4037 = vadd.f32 %v3967, %v4036
        %v4038 = vpop.f32.mrb[0].mxu0
        %4039 = vdwg.mxu0
        %4040 = vmatprep.subr.mxu0 %v353
        %4041 = vmatpush1.xpose.msra.mxu0 %v352
        %4042 = vmatprep.subr.mxu0 %v609
        %4043 = vmatpush1.xpose.msra.mxu0 %v608
        %4044 = vmatprep.subr.mxu0 0.0
        %4045 = vmatpush1.xpose.msra.mxu0 0.0
        %4046 = vmatprep.subr.mxu0 0.0
        %4047 = vmatpush1.xpose.msra.mxu0 0.0
        %4048 = vmatprep.subr.mxu0 0.0
        %4049 = vmatpush1.xpose.msra.mxu0 0.0
        %4050 = vmatprep.subr.mxu0 0.0
        %4051 = vmatpush1.xpose.msra.mxu0 0.0
        %4052 = vmatprep.subr.mxu0 0.0
        %4053 = vmatpush1.xpose.msra.mxu0 0.0
        %4054 = vmatprep.subr.mxu0 0.0
        %4055 = vmatpush1.xpose.msra.mxu0 0.0
        %4056 = vmatprep.subr.mxu0 0.0
        %4057 = vmatpush1.xpose.msra.mxu0 0.0
        %4058 = vmatprep.subr.mxu0 0.0
        %4059 = vmatpush1.xpose.msra.mxu0 0.0
        %4060 = vmatprep.subr.mxu0 0.0
        %4061 = vmatpush1.xpose.msra.mxu0 0.0
        %4062 = vmatprep.subr.mxu0 0.0
        %4063 = vmatpush1.xpose.msra.mxu0 0.0
        %4064 = vmatprep.subr.mxu0 0.0
        %4065 = vmatpush1.xpose.msra.mxu0 0.0
        %4066 = vmatprep.subr.mxu0 0.0
        %4067 = vmatpush1.xpose.msra.mxu0 0.0
        %4068 = vmatprep.subr.mxu0 0.0
        %4069 = vmatpush1.xpose.msra.mxu0 0.0
        %4070 = vmatprep.subr.mxu0 0.0
        %4071 = vmatpush1.xpose.msra.mxu0 0.0
        %4072 = vmatprep.subr.mxu0 0.0
        %4073 = vmatpush1.xpose.msra.mxu0 0.0
        %4074 = vmatprep.subr.mxu0 0.0
        %4075 = vmatpush1.xpose.msra.mxu0 0.0
        %4076 = vmatprep.subr.mxu0 0.0
        %4077 = vmatpush1.xpose.msra.mxu0 0.0
        %4078 = vmatprep.subr.mxu0 0.0
        %4079 = vmatpush1.xpose.msra.mxu0 0.0
        %4080 = vmatprep.subr.mxu0 0.0
        %4081 = vmatpush1.xpose.msra.mxu0 0.0
        %4082 = vmatprep.subr.mxu0 0.0
        %4083 = vmatpush1.xpose.msra.mxu0 0.0
        %4084 = vmatprep.subr.mxu0 0.0
        %4085 = vmatpush1.xpose.msra.mxu0 0.0
        %4086 = vmatprep.subr.mxu0 0.0
        %4087 = vmatpush1.xpose.msra.mxu0 0.0
        %4088 = vmatprep.subr.mxu0 0.0
        %4089 = vmatpush1.xpose.msra.mxu0 0.0
        %4090 = vmatprep.subr.mxu0 0.0
        %4091 = vmatpush1.xpose.msra.mxu0 0.0
        %4092 = vmatprep.subr.mxu0 0.0
        %4093 = vmatpush1.xpose.msra.mxu0 0.0
        %4094 = vmatprep.subr.mxu0 0.0
        %4095 = vmatpush1.xpose.msra.mxu0 0.0
        %4096 = vmatprep.subr.mxu0 0.0
        %4097 = vmatpush1.xpose.msra.mxu0 0.0
        %4098 = vmatprep.subr.mxu0 0.0
        %4099 = vmatpush1.xpose.msra.mxu0 0.0
        %4100 = vmatprep.subr.mxu0 0.0
        %4101 = vmatpush1.xpose.msra.mxu0 0.0
        %4102 = vmatprep.subr.mxu0 0.0
        %4103 = vmatpush1.xpose.msra.mxu0 0.0
        %4104 = vmatprep.mubr.f32.mxu0 %v1112
        %4105 = vmatmul.mubr.f32.gmra.mrb[0].mxu0 %v1104
        %v4106 = vpop.f32.mrb[0].mxu0
        %v4107 = vadd.f32 %v4037, %v4106
        %v4108 = vpop.f32.mrb[0].mxu0
        %4109 = vdwg.mxu0
        %4110 = vmatprep.subr.mxu0 %v355
        %4111 = vmatpush1.xpose.msra.mxu0 %v354
        %4112 = vmatprep.subr.mxu0 %v611
        %4113 = vmatpush1.xpose.msra.mxu0 %v610
        %4114 = vmatprep.subr.mxu0 0.0
        %4115 = vmatpush1.xpose.msra.mxu0 0.0
        %4116 = vmatprep.subr.mxu0 0.0
        %4117 = vmatpush1.xpose.msra.mxu0 0.0
        %4118 = vmatprep.subr.mxu0 0.0
        %4119 = vmatpush1.xpose.msra.mxu0 0.0
        %4120 = vmatprep.subr.mxu0 0.0
        %4121 = vmatpush1.xpose.msra.mxu0 0.0
        %4122 = vmatprep.subr.mxu0 0.0
        %4123 = vmatpush1.xpose.msra.mxu0 0.0
        %4124 = vmatprep.subr.mxu0 0.0
        %4125 = vmatpush1.xpose.msra.mxu0 0.0
        %4126 = vmatprep.subr.mxu0 0.0
        %4127 = vmatpush1.xpose.msra.mxu0 0.0
        %4128 = vmatprep.subr.mxu0 0.0
        %4129 = vmatpush1.xpose.msra.mxu0 0.0
        %4130 = vmatprep.subr.mxu0 0.0
        %4131 = vmatpush1.xpose.msra.mxu0 0.0
        %4132 = vmatprep.subr.mxu0 0.0
        %4133 = vmatpush1.xpose.msra.mxu0 0.0
        %4134 = vmatprep.subr.mxu0 0.0
        %4135 = vmatpush1.xpose.msra.mxu0 0.0
        %4136 = vmatprep.subr.mxu0 0.0
        %4137 = vmatpush1.xpose.msra.mxu0 0.0
        %4138 = vmatprep.subr.mxu0 0.0
        %4139 = vmatpush1.xpose.msra.mxu0 0.0
        %4140 = vmatprep.subr.mxu0 0.0
        %4141 = vmatpush1.xpose.msra.mxu0 0.0
        %4142 = vmatprep.subr.mxu0 0.0
        %4143 = vmatpush1.xpose.msra.mxu0 0.0
        %4144 = vmatprep.subr.mxu0 0.0
        %4145 = vmatpush1.xpose.msra.mxu0 0.0
        %4146 = vmatprep.subr.mxu0 0.0
        %4147 = vmatpush1.xpose.msra.mxu0 0.0
        %4148 = vmatprep.subr.mxu0 0.0
        %4149 = vmatpush1.xpose.msra.mxu0 0.0
        %4150 = vmatprep.subr.mxu0 0.0
        %4151 = vmatpush1.xpose.msra.mxu0 0.0
        %4152 = vmatprep.subr.mxu0 0.0
        %4153 = vmatpush1.xpose.msra.mxu0 0.0
        %4154 = vmatprep.subr.mxu0 0.0
        %4155 = vmatpush1.xpose.msra.mxu0 0.0
        %4156 = vmatprep.subr.mxu0 0.0
        %4157 = vmatpush1.xpose.msra.mxu0 0.0
        %4158 = vmatprep.subr.mxu0 0.0
        %4159 = vmatpush1.xpose.msra.mxu0 0.0
        %4160 = vmatprep.subr.mxu0 0.0
        %4161 = vmatpush1.xpose.msra.mxu0 0.0
        %4162 = vmatprep.subr.mxu0 0.0
        %4163 = vmatpush1.xpose.msra.mxu0 0.0
        %4164 = vmatprep.subr.mxu0 0.0
        %4165 = vmatpush1.xpose.msra.mxu0 0.0
        %4166 = vmatprep.subr.mxu0 0.0
        %4167 = vmatpush1.xpose.msra.mxu0 0.0
        %4168 = vmatprep.subr.mxu0 0.0
        %4169 = vmatpush1.xpose.msra.mxu0 0.0
        %4170 = vmatprep.subr.mxu0 0.0
        %4171 = vmatpush1.xpose.msra.mxu0 0.0
        %4172 = vmatprep.subr.mxu0 0.0
        %4173 = vmatpush1.xpose.msra.mxu0 0.0
        %4174 = vmatprep.mubr.f32.mxu0 %v1113
        %4175 = vmatmul.mubr.f32.gmra.mrb[0].mxu0 %v1111
        %v4176 = vpop.f32.mrb[0].mxu0
        %v4177 = vadd.f32 %v4107, %v4176
        %v4178 = vpop.f32.mrb[0].mxu0
        %4179 = vdwg.mxu0
        %4180 = vmatprep.subr.mxu0 %v357
        %4181 = vmatpush1.xpose.msra.mxu0 %v356
        %4182 = vmatprep.subr.mxu0 %v613
        %4183 = vmatpush1.xpose.msra.mxu0 %v612
        %4184 = vmatprep.subr.mxu0 0.0
        %4185 = vmatpush1.xpose.msra.mxu0 0.0
        %4186 = vmatprep.subr.mxu0 0.0
        %4187 = vmatpush1.xpose.msra.mxu0 0.0
        %4188 = vmatprep.subr.mxu0 0.0
        %4189 = vmatpush1.xpose.msra.mxu0 0.0
        %4190 = vmatprep.subr.mxu0 0.0
        %4191 = vmatpush1.xpose.msra.mxu0 0.0
        %4192 = vmatprep.subr.mxu0 0.0
        %4193 = vmatpush1.xpose.msra.mxu0 0.0
        %4194 = vmatprep.subr.mxu0 0.0
        %4195 = vmatpush1.xpose.msra.mxu0 0.0
        %4196 = vmatprep.subr.mxu0 0.0
        %4197 = vmatpush1.xpose.msra.mxu0 0.0
        %4198 = vmatprep.subr.mxu0 0.0
        %4199 = vmatpush1.xpose.msra.mxu0 0.0
        %4200 = vmatprep.subr.mxu0 0.0
        %4201 = vmatpush1.xpose.msra.mxu0 0.0
        %4202 = vmatprep.subr.mxu0 0.0
        %4203 = vmatpush1.xpose.msra.mxu0 0.0
        %4204 = vmatprep.subr.mxu0 0.0
        %4205 = vmatpush1.xpose.msra.mxu0 0.0
        %4206 = vmatprep.subr.mxu0 0.0
        %4207 = vmatpush1.xpose.msra.mxu0 0.0
        %4208 = vmatprep.subr.mxu0 0.0
        %4209 = vmatpush1.xpose.msra.mxu0 0.0
        %4210 = vmatprep.subr.mxu0 0.0
        %4211 = vmatpush1.xpose.msra.mxu0 0.0
        %4212 = vmatprep.subr.mxu0 0.0
        %4213 = vmatpush1.xpose.msra.mxu0 0.0
        %4214 = vmatprep.subr.mxu0 0.0
        %4215 = vmatpush1.xpose.msra.mxu0 0.0
        %4216 = vmatprep.subr.mxu0 0.0
        %4217 = vmatpush1.xpose.msra.mxu0 0.0
        %4218 = vmatprep.subr.mxu0 0.0
        %4219 = vmatpush1.xpose.msra.mxu0 0.0
        %4220 = vmatprep.subr.mxu0 0.0
        %4221 = vmatpush1.xpose.msra.mxu0 0.0
        %4222 = vmatprep.subr.mxu0 0.0
        %4223 = vmatpush1.xpose.msra.mxu0 0.0
        %4224 = vmatprep.subr.mxu0 0.0
        %4225 = vmatpush1.xpose.msra.mxu0 0.0
        %4226 = vmatprep.subr.mxu0 0.0
        %4227 = vmatpush1.xpose.msra.mxu0 0.0
        %4228 = vmatprep.subr.mxu0 0.0
        %4229 = vmatpush1.xpose.msra.mxu0 0.0
        %4230 = vmatprep.subr.mxu0 0.0
        %4231 = vmatpush1.xpose.msra.mxu0 0.0
        %4232 = vmatprep.subr.mxu0 0.0
        %4233 = vmatpush1.xpose.msra.mxu0 0.0
        %4234 = vmatprep.subr.mxu0 0.0
        %4235 = vmatpush1.xpose.msra.mxu0 0.0
        %4236 = vmatprep.subr.mxu0 0.0
        %4237 = vmatpush1.xpose.msra.mxu0 0.0
        %4238 = vmatprep.subr.mxu0 0.0
        %4239 = vmatpush1.xpose.msra.mxu0 0.0
        %4240 = vmatprep.subr.mxu0 0.0
        %4241 = vmatpush1.xpose.msra.mxu0 0.0
        %4242 = vmatprep.subr.mxu0 0.0
        %4243 = vmatpush1.xpose.msra.mxu0 0.0
        %4244 = vmatprep.mubr.f32.mxu0 %v1129
        %4245 = vmatmul.mubr.f32.gmra.mrb[0].mxu0 %v1121
        %v4246 = vpop.f32.mrb[0].mxu0
        %v4247 = vadd.f32 %v4177, %v4246
        %v4248 = vpop.f32.mrb[0].mxu0
        %4249 = vdwg.mxu0
        %4250 = vmatprep.subr.mxu0 %v359
        %4251 = vmatpush1.xpose.msra.mxu0 %v358
        %4252 = vmatprep.subr.mxu0 %v615
        %4253 = vmatpush1.xpose.msra.mxu0 %v614
        %4254 = vmatprep.subr.mxu0 0.0
        %4255 = vmatpush1.xpose.msra.mxu0 0.0
        %4256 = vmatprep.subr.mxu0 0.0
        %4257 = vmatpush1.xpose.msra.mxu0 0.0
        %4258 = vmatprep.subr.mxu0 0.0
        %4259 = vmatpush1.xpose.msra.mxu0 0.0
        %4260 = vmatprep.subr.mxu0 0.0
        %4261 = vmatpush1.xpose.msra.mxu0 0.0
        %4262 = vmatprep.subr.mxu0 0.0
        %4263 = vmatpush1.xpose.msra.mxu0 0.0
        %4264 = vmatprep.subr.mxu0 0.0
        %4265 = vmatpush1.xpose.msra.mxu0 0.0
        %4266 = vmatprep.subr.mxu0 0.0
        %4267 = vmatpush1.xpose.msra.mxu0 0.0
        %4268 = vmatprep.subr.mxu0 0.0
        %4269 = vmatpush1.xpose.msra.mxu0 0.0
        %4270 = vmatprep.subr.mxu0 0.0
        %4271 = vmatpush1.xpose.msra.mxu0 0.0
        %4272 = vmatprep.subr.mxu0 0.0
        %4273 = vmatpush1.xpose.msra.mxu0 0.0
        %4274 = vmatprep.subr.mxu0 0.0
        %4275 = vmatpush1.xpose.msra.mxu0 0.0
        %4276 = vmatprep.subr.mxu0 0.0
        %4277 = vmatpush1.xpose.msra.mxu0 0.0
        %4278 = vmatprep.subr.mxu0 0.0
        %4279 = vmatpush1.xpose.msra.mxu0 0.0
        %4280 = vmatprep.subr.mxu0 0.0
        %4281 = vmatpush1.xpose.msra.mxu0 0.0
        %4282 = vmatprep.subr.mxu0 0.0
        %4283 = vmatpush1.xpose.msra.mxu0 0.0
        %4284 = vmatprep.subr.mxu0 0.0
        %4285 = vmatpush1.xpose.msra.mxu0 0.0
        %4286 = vmatprep.subr.mxu0 0.0
        %4287 = vmatpush1.xpose.msra.mxu0 0.0
        %4288 = vmatprep.subr.mxu0 0.0
        %4289 = vmatpush1.xpose.msra.mxu0 0.0
        %4290 = vmatprep.subr.mxu0 0.0
        %4291 = vmatpush1.xpose.msra.mxu0 0.0
        %4292 = vmatprep.subr.mxu0 0.0
        %4293 = vmatpush1.xpose.msra.mxu0 0.0
        %4294 = vmatprep.subr.mxu0 0.0
        %4295 = vmatpush1.xpose.msra.mxu0 0.0
        %4296 = vmatprep.subr.mxu0 0.0
        %4297 = vmatpush1.xpose.msra.mxu0 0.0
        %4298 = vmatprep.subr.mxu0 0.0
        %4299 = vmatpush1.xpose.msra.mxu0 0.0
        %4300 = vmatprep.subr.mxu0 0.0
        %4301 = vmatpush1.xpose.msra.mxu0 0.0
        %4302 = vmatprep.subr.mxu0 0.0
        %4303 = vmatpush1.xpose.msra.mxu0 0.0
        %4304 = vmatprep.subr.mxu0 0.0
        %4305 = vmatpush1.xpose.msra.mxu0 0.0
        %4306 = vmatprep.subr.mxu0 0.0
        %4307 = vmatpush1.xpose.msra.mxu0 0.0
        %4308 = vmatprep.subr.mxu0 0.0
        %4309 = vmatpush1.xpose.msra.mxu0 0.0
        %4310 = vmatprep.subr.mxu0 0.0
        %4311 = vmatpush1.xpose.msra.mxu0 0.0
        %4312 = vmatprep.subr.mxu0 0.0
        %4313 = vmatpush1.xpose.msra.mxu0 0.0
        %4314 = vmatprep.mubr.f32.mxu0 %v1130
        %4315 = vmatmul.mubr.f32.gmra.mrb[0].mxu0 %v1128
        %v4316 = vpop.f32.mrb[0].mxu0
        %v4317 = vadd.f32 %v4247, %v4316
        %v4318 = vpop.f32.mrb[0].mxu0
        %4319 = vdwg.mxu0
        %4320 = vmatprep.subr.mxu0 %v361
        %4321 = vmatpush1.xpose.msra.mxu0 %v360
        %4322 = vmatprep.subr.mxu0 %v617
        %4323 = vmatpush1.xpose.msra.mxu0 %v616
        %4324 = vmatprep.subr.mxu0 0.0
        %4325 = vmatpush1.xpose.msra.mxu0 0.0
        %4326 = vmatprep.subr.mxu0 0.0
        %4327 = vmatpush1.xpose.msra.mxu0 0.0
        %4328 = vmatprep.subr.mxu0 0.0
        %4329 = vmatpush1.xpose.msra.mxu0 0.0
        %4330 = vmatprep.subr.mxu0 0.0
        %4331 = vmatpush1.xpose.msra.mxu0 0.0
        %4332 = vmatprep.subr.mxu0 0.0
        %4333 = vmatpush1.xpose.msra.mxu0 0.0
        %4334 = vmatprep.subr.mxu0 0.0
        %4335 = vmatpush1.xpose.msra.mxu0 0.0
        %4336 = vmatprep.subr.mxu0 0.0
        %4337 = vmatpush1.xpose.msra.mxu0 0.0
        %4338 = vmatprep.subr.mxu0 0.0
        %4339 = vmatpush1.xpose.msra.mxu0 0.0
        %4340 = vmatprep.subr.mxu0 0.0
        %4341 = vmatpush1.xpose.msra.mxu0 0.0
        %4342 = vmatprep.subr.mxu0 0.0
        %4343 = vmatpush1.xpose.msra.mxu0 0.0
        %4344 = vmatprep.subr.mxu0 0.0
        %4345 = vmatpush1.xpose.msra.mxu0 0.0
        %4346 = vmatprep.subr.mxu0 0.0
        %4347 = vmatpush1.xpose.msra.mxu0 0.0
        %4348 = vmatprep.subr.mxu0 0.0
        %4349 = vmatpush1.xpose.msra.mxu0 0.0
        %4350 = vmatprep.subr.mxu0 0.0
        %4351 = vmatpush1.xpose.msra.mxu0 0.0
        %4352 = vmatprep.subr.mxu0 0.0
        %4353 = vmatpush1.xpose.msra.mxu0 0.0
        %4354 = vmatprep.subr.mxu0 0.0
        %4355 = vmatpush1.xpose.msra.mxu0 0.0
        %4356 = vmatprep.subr.mxu0 0.0
        %4357 = vmatpush1.xpose.msra.mxu0 0.0
        %4358 = vmatprep.subr.mxu0 0.0
        %4359 = vmatpush1.xpose.msra.mxu0 0.0
        %4360 = vmatprep.subr.mxu0 0.0
        %4361 = vmatpush1.xpose.msra.mxu0 0.0
        %4362 = vmatprep.subr.mxu0 0.0
        %4363 = vmatpush1.xpose.msra.mxu0 0.0
        %4364 = vmatprep.subr.mxu0 0.0
        %4365 = vmatpush1.xpose.msra.mxu0 0.0
        %4366 = vmatprep.subr.mxu0 0.0
        %4367 = vmatpush1.xpose.msra.mxu0 0.0
        %4368 = vmatprep.subr.mxu0 0.0
        %4369 = vmatpush1.xpose.msra.mxu0 0.0
        %4370 = vmatprep.subr.mxu0 0.0
        %4371 = vmatpush1.xpose.msra.mxu0 0.0
        %4372 = vmatprep.subr.mxu0 0.0
        %4373 = vmatpush1.xpose.msra.mxu0 0.0
        %4374 = vmatprep.subr.mxu0 0.0
        %4375 = vmatpush1.xpose.msra.mxu0 0.0
        %4376 = vmatprep.subr.mxu0 0.0
        %4377 = vmatpush1.xpose.msra.mxu0 0.0
        %4378 = vmatprep.subr.mxu0 0.0
        %4379 = vmatpush1.xpose.msra.mxu0 0.0
        %4380 = vmatprep.subr.mxu0 0.0
        %4381 = vmatpush1.xpose.msra.mxu0 0.0
        %4382 = vmatprep.subr.mxu0 0.0
        %4383 = vmatpush1.xpose.msra.mxu0 0.0
        %4384 = vmatprep.mubr.f32.mxu0 %v1146
        %4385 = vmatmul.mubr.f32.gmra.mrb[0].mxu0 %v1138
        %v4386 = vpop.f32.mrb[0].mxu0
        %v4387 = vadd.f32 %v4317, %v4386
        %v4388 = vpop.f32.mrb[0].mxu0
        %4389 = vdwg.mxu0
        %4390 = vmatprep.subr.mxu0 %v363
        %4391 = vmatpush1.xpose.msra.mxu0 %v362
        %4392 = vmatprep.subr.mxu0 %v619
        %4393 = vmatpush1.xpose.msra.mxu0 %v618
        %4394 = vmatprep.subr.mxu0 0.0
        %4395 = vmatpush1.xpose.msra.mxu0 0.0
        %4396 = vmatprep.subr.mxu0 0.0
        %4397 = vmatpush1.xpose.msra.mxu0 0.0
        %4398 = vmatprep.subr.mxu0 0.0
        %4399 = vmatpush1.xpose.msra.mxu0 0.0
        %4400 = vmatprep.subr.mxu0 0.0
        %4401 = vmatpush1.xpose.msra.mxu0 0.0
        %4402 = vmatprep.subr.mxu0 0.0
        %4403 = vmatpush1.xpose.msra.mxu0 0.0
        %4404 = vmatprep.subr.mxu0 0.0
        %4405 = vmatpush1.xpose.msra.mxu0 0.0
        %4406 = vmatprep.subr.mxu0 0.0
        %4407 = vmatpush1.xpose.msra.mxu0 0.0
        %4408 = vmatprep.subr.mxu0 0.0
        %4409 = vmatpush1.xpose.msra.mxu0 0.0
        %4410 = vmatprep.subr.mxu0 0.0
        %4411 = vmatpush1.xpose.msra.mxu0 0.0
        %4412 = vmatprep.subr.mxu0 0.0
        %4413 = vmatpush1.xpose.msra.mxu0 0.0
        %4414 = vmatprep.subr.mxu0 0.0
        %4415 = vmatpush1.xpose.msra.mxu0 0.0
        %4416 = vmatprep.subr.mxu0 0.0
        %4417 = vmatpush1.xpose.msra.mxu0 0.0
        %4418 = vmatprep.subr.mxu0 0.0
        %4419 = vmatpush1.xpose.msra.mxu0 0.0
        %4420 = vmatprep.subr.mxu0 0.0
        %4421 = vmatpush1.xpose.msra.mxu0 0.0
        %4422 = vmatprep.subr.mxu0 0.0
        %4423 = vmatpush1.xpose.msra.mxu0 0.0
        %4424 = vmatprep.subr.mxu0 0.0
        %4425 = vmatpush1.xpose.msra.mxu0 0.0
        %4426 = vmatprep.subr.mxu0 0.0
        %4427 = vmatpush1.xpose.msra.mxu0 0.0
        %4428 = vmatprep.subr.mxu0 0.0
        %4429 = vmatpush1.xpose.msra.mxu0 0.0
        %4430 = vmatprep.subr.mxu0 0.0
        %4431 = vmatpush1.xpose.msra.mxu0 0.0
        %4432 = vmatprep.subr.mxu0 0.0
        %4433 = vmatpush1.xpose.msra.mxu0 0.0
        %4434 = vmatprep.subr.mxu0 0.0
        %4435 = vmatpush1.xpose.msra.mxu0 0.0
        %4436 = vmatprep.subr.mxu0 0.0
        %4437 = vmatpush1.xpose.msra.mxu0 0.0
        %4438 = vmatprep.subr.mxu0 0.0
        %4439 = vmatpush1.xpose.msra.mxu0 0.0
        %4440 = vmatprep.subr.mxu0 0.0
        %4441 = vmatpush1.xpose.msra.mxu0 0.0
        %4442 = vmatprep.subr.mxu0 0.0
        %4443 = vmatpush1.xpose.msra.mxu0 0.0
        %4444 = vmatprep.subr.mxu0 0.0
        %4445 = vmatpush1.xpose.msra.mxu0 0.0
        %4446 = vmatprep.subr.mxu0 0.0
        %4447 = vmatpush1.xpose.msra.mxu0 0.0
        %4448 = vmatprep.subr.mxu0 0.0
        %4449 = vmatpush1.xpose.msra.mxu0 0.0
        %4450 = vmatprep.subr.mxu0 0.0
        %4451 = vmatpush1.xpose.msra.mxu0 0.0
        %4452 = vmatprep.subr.mxu0 0.0
        %4453 = vmatpush1.xpose.msra.mxu0 0.0
        %4454 = vmatprep.mubr.f32.mxu0 %v1147
        %4455 = vmatmul.mubr.f32.gmra.mrb[0].mxu0 %v1145
        %v4456 = vpop.f32.mrb[0].mxu0
        %v4457 = vadd.f32 %v4387, %v4456
        %v4458 = vpop.f32.mrb[0].mxu0
        %4459 = vdwg.mxu0
        %4460 = vmatprep.subr.mxu0 %v365
        %4461 = vmatpush1.xpose.msra.mxu0 %v364
        %4462 = vmatprep.subr.mxu0 %v621
        %4463 = vmatpush1.xpose.msra.mxu0 %v620
        %4464 = vmatprep.subr.mxu0 0.0
        %4465 = vmatpush1.xpose.msra.mxu0 0.0
        %4466 = vmatprep.subr.mxu0 0.0
        %4467 = vmatpush1.xpose.msra.mxu0 0.0
        %4468 = vmatprep.subr.mxu0 0.0
        %4469 = vmatpush1.xpose.msra.mxu0 0.0
        %4470 = vmatprep.subr.mxu0 0.0
        %4471 = vmatpush1.xpose.msra.mxu0 0.0
        %4472 = vmatprep.subr.mxu0 0.0
        %4473 = vmatpush1.xpose.msra.mxu0 0.0
        %4474 = vmatprep.subr.mxu0 0.0
        %4475 = vmatpush1.xpose.msra.mxu0 0.0
        %4476 = vmatprep.subr.mxu0 0.0
        %4477 = vmatpush1.xpose.msra.mxu0 0.0
        %4478 = vmatprep.subr.mxu0 0.0
        %4479 = vmatpush1.xpose.msra.mxu0 0.0
        %4480 = vmatprep.subr.mxu0 0.0
        %4481 = vmatpush1.xpose.msra.mxu0 0.0
        %4482 = vmatprep.subr.mxu0 0.0
        %4483 = vmatpush1.xpose.msra.mxu0 0.0
        %4484 = vmatprep.subr.mxu0 0.0
        %4485 = vmatpush1.xpose.msra.mxu0 0.0
        %4486 = vmatprep.subr.mxu0 0.0
        %4487 = vmatpush1.xpose.msra.mxu0 0.0
        %4488 = vmatprep.subr.mxu0 0.0
        %4489 = vmatpush1.xpose.msra.mxu0 0.0
        %4490 = vmatprep.subr.mxu0 0.0
        %4491 = vmatpush1.xpose.msra.mxu0 0.0
        %4492 = vmatprep.subr.mxu0 0.0
        %4493 = vmatpush1.xpose.msra.mxu0 0.0
        %4494 = vmatprep.subr.mxu0 0.0
        %4495 = vmatpush1.xpose.msra.mxu0 0.0
        %4496 = vmatprep.subr.mxu0 0.0
        %4497 = vmatpush1.xpose.msra.mxu0 0.0
        %4498 = vmatprep.subr.mxu0 0.0
        %4499 = vmatpush1.xpose.msra.mxu0 0.0
        %4500 = vmatprep.subr.mxu0 0.0
        %4501 = vmatpush1.xpose.msra.mxu0 0.0
        %4502 = vmatprep.subr.mxu0 0.0
        %4503 = vmatpush1.xpose.msra.mxu0 0.0
        %4504 = vmatprep.subr.mxu0 0.0
        %4505 = vmatpush1.xpose.msra.mxu0 0.0
        %4506 = vmatprep.subr.mxu0 0.0
        %4507 = vmatpush1.xpose.msra.mxu0 0.0
        %4508 = vmatprep.subr.mxu0 0.0
        %4509 = vmatpush1.xpose.msra.mxu0 0.0
        %4510 = vmatprep.subr.mxu0 0.0
        %4511 = vmatpush1.xpose.msra.mxu0 0.0
        %4512 = vmatprep.subr.mxu0 0.0
        %4513 = vmatpush1.xpose.msra.mxu0 0.0
        %4514 = vmatprep.subr.mxu0 0.0
        %4515 = vmatpush1.xpose.msra.mxu0 0.0
        %4516 = vmatprep.subr.mxu0 0.0
        %4517 = vmatpush1.xpose.msra.mxu0 0.0
        %4518 = vmatprep.subr.mxu0 0.0
        %4519 = vmatpush1.xpose.msra.mxu0 0.0
        %4520 = vmatprep.subr.mxu0 0.0
        %4521 = vmatpush1.xpose.msra.mxu0 0.0
        %4522 = vmatprep.subr.mxu0 0.0
        %4523 = vmatpush1.xpose.msra.mxu0 0.0
        %4524 = vmatprep.mubr.f32.mxu0 %v1163
        %4525 = vmatmul.mubr.f32.gmra.mrb[0].mxu0 %v1155
        %v4526 = vpop.f32.mrb[0].mxu0
        %v4527 = vadd.f32 %v4457, %v4526
        %v4528 = vpop.f32.mrb[0].mxu0
        %4529 = vdwg.mxu0
        %4530 = vmatprep.subr.mxu0 %v367
        %4531 = vmatpush1.xpose.msra.mxu0 %v366
        %4532 = vmatprep.subr.mxu0 %v623
        %4533 = vmatpush1.xpose.msra.mxu0 %v622
        %4534 = vmatprep.subr.mxu0 0.0
        %4535 = vmatpush1.xpose.msra.mxu0 0.0
        %4536 = vmatprep.subr.mxu0 0.0
        %4537 = vmatpush1.xpose.msra.mxu0 0.0
        %4538 = vmatprep.subr.mxu0 0.0
        %4539 = vmatpush1.xpose.msra.mxu0 0.0
        %4540 = vmatprep.subr.mxu0 0.0
        %4541 = vmatpush1.xpose.msra.mxu0 0.0
        %4542 = vmatprep.subr.mxu0 0.0
        %4543 = vmatpush1.xpose.msra.mxu0 0.0
        %4544 = vmatprep.subr.mxu0 0.0
        %4545 = vmatpush1.xpose.msra.mxu0 0.0
        %4546 = vmatprep.subr.mxu0 0.0
        %4547 = vmatpush1.xpose.msra.mxu0 0.0
        %4548 = vmatprep.subr.mxu0 0.0
        %4549 = vmatpush1.xpose.msra.mxu0 0.0
        %4550 = vmatprep.subr.mxu0 0.0
        %4551 = vmatpush1.xpose.msra.mxu0 0.0
        %4552 = vmatprep.subr.mxu0 0.0
        %4553 = vmatpush1.xpose.msra.mxu0 0.0
        %4554 = vmatprep.subr.mxu0 0.0
        %4555 = vmatpush1.xpose.msra.mxu0 0.0
        %4556 = vmatprep.subr.mxu0 0.0
        %4557 = vmatpush1.xpose.msra.mxu0 0.0
        %4558 = vmatprep.subr.mxu0 0.0
        %4559 = vmatpush1.xpose.msra.mxu0 0.0
        %4560 = vmatprep.subr.mxu0 0.0
        %4561 = vmatpush1.xpose.msra.mxu0 0.0
        %4562 = vmatprep.subr.mxu0 0.0
        %4563 = vmatpush1.xpose.msra.mxu0 0.0
        %4564 = vmatprep.subr.mxu0 0.0
        %4565 = vmatpush1.xpose.msra.mxu0 0.0
        %4566 = vmatprep.subr.mxu0 0.0
        %4567 = vmatpush1.xpose.msra.mxu0 0.0
        %4568 = vmatprep.subr.mxu0 0.0
        %4569 = vmatpush1.xpose.msra.mxu0 0.0
        %4570 = vmatprep.subr.mxu0 0.0
        %4571 = vmatpush1.xpose.msra.mxu0 0.0
        %4572 = vmatprep.subr.mxu0 0.0
        %4573 = vmatpush1.xpose.msra.mxu0 0.0
        %4574 = vmatprep.subr.mxu0 0.0
        %4575 = vmatpush1.xpose.msra.mxu0 0.0
        %4576 = vmatprep.subr.mxu0 0.0
        %4577 = vmatpush1.xpose.msra.mxu0 0.0
        %4578 = vmatprep.subr.mxu0 0.0
        %4579 = vmatpush1.xpose.msra.mxu0 0.0
        %4580 = vmatprep.subr.mxu0 0.0
        %4581 = vmatpush1.xpose.msra.mxu0 0.0
        %4582 = vmatprep.subr.mxu0 0.0
        %4583 = vmatpush1.xpose.msra.mxu0 0.0
        %4584 = vmatprep.subr.mxu0 0.0
        %4585 = vmatpush1.xpose.msra.mxu0 0.0
        %4586 = vmatprep.subr.mxu0 0.0
        %4587 = vmatpush1.xpose.msra.mxu0 0.0
        %4588 = vmatprep.subr.mxu0 0.0
        %4589 = vmatpush1.xpose.msra.mxu0 0.0
        %4590 = vmatprep.subr.mxu0 0.0
        %4591 = vmatpush1.xpose.msra.mxu0 0.0
        %4592 = vmatprep.subr.mxu0 0.0
        %4593 = vmatpush1.xpose.msra.mxu0 0.0
        %4594 = vmatprep.mubr.f32.mxu0 %v1164
        %4595 = vmatmul.mubr.f32.gmra.mrb[0].mxu0 %v1162
        %v4596 = vpop.f32.mrb[0].mxu0
        %v4597 = vadd.f32 %v4527, %v4596
        %v4598 = vpop.f32.mrb[0].mxu0
        %4599 = vdwg.mxu0
        %4600 = vmatprep.subr.mxu0 %v369
        %4601 = vmatpush1.xpose.msra.mxu0 %v368
        %4602 = vmatprep.subr.mxu0 %v625
        %4603 = vmatpush1.xpose.msra.mxu0 %v624
        %4604 = vmatprep.subr.mxu0 0.0
        %4605 = vmatpush1.xpose.msra.mxu0 0.0
        %4606 = vmatprep.subr.mxu0 0.0
        %4607 = vmatpush1.xpose.msra.mxu0 0.0
        %4608 = vmatprep.subr.mxu0 0.0
        %4609 = vmatpush1.xpose.msra.mxu0 0.0
        %4610 = vmatprep.subr.mxu0 0.0
        %4611 = vmatpush1.xpose.msra.mxu0 0.0
        %4612 = vmatprep.subr.mxu0 0.0
        %4613 = vmatpush1.xpose.msra.mxu0 0.0
        %4614 = vmatprep.subr.mxu0 0.0
        %4615 = vmatpush1.xpose.msra.mxu0 0.0
        %4616 = vmatprep.subr.mxu0 0.0
        %4617 = vmatpush1.xpose.msra.mxu0 0.0
        %4618 = vmatprep.subr.mxu0 0.0
        %4619 = vmatpush1.xpose.msra.mxu0 0.0
        %4620 = vmatprep.subr.mxu0 0.0
        %4621 = vmatpush1.xpose.msra.mxu0 0.0
        %4622 = vmatprep.subr.mxu0 0.0
        %4623 = vmatpush1.xpose.msra.mxu0 0.0
        %4624 = vmatprep.subr.mxu0 0.0
        %4625 = vmatpush1.xpose.msra.mxu0 0.0
        %4626 = vmatprep.subr.mxu0 0.0
        %4627 = vmatpush1.xpose.msra.mxu0 0.0
        %4628 = vmatprep.subr.mxu0 0.0
        %4629 = vmatpush1.xpose.msra.mxu0 0.0
        %4630 = vmatprep.subr.mxu0 0.0
        %4631 = vmatpush1.xpose.msra.mxu0 0.0
        %4632 = vmatprep.subr.mxu0 0.0
        %4633 = vmatpush1.xpose.msra.mxu0 0.0
        %4634 = vmatprep.subr.mxu0 0.0
        %4635 = vmatpush1.xpose.msra.mxu0 0.0
        %4636 = vmatprep.subr.mxu0 0.0
        %4637 = vmatpush1.xpose.msra.mxu0 0.0
        %4638 = vmatprep.subr.mxu0 0.0
        %4639 = vmatpush1.xpose.msra.mxu0 0.0
        %4640 = vmatprep.subr.mxu0 0.0
        %4641 = vmatpush1.xpose.msra.mxu0 0.0
        %4642 = vmatprep.subr.mxu0 0.0
        %4643 = vmatpush1.xpose.msra.mxu0 0.0
        %4644 = vmatprep.subr.mxu0 0.0
        %4645 = vmatpush1.xpose.msra.mxu0 0.0
        %4646 = vmatprep.subr.mxu0 0.0
        %4647 = vmatpush1.xpose.msra.mxu0 0.0
        %4648 = vmatprep.subr.mxu0 0.0
        %4649 = vmatpush1.xpose.msra.mxu0 0.0
        %4650 = vmatprep.subr.mxu0 0.0
        %4651 = vmatpush1.xpose.msra.mxu0 0.0
        %4652 = vmatprep.subr.mxu0 0.0
        %4653 = vmatpush1.xpose.msra.mxu0 0.0
        %4654 = vmatprep.subr.mxu0 0.0
        %4655 = vmatpush1.xpose.msra.mxu0 0.0
        %4656 = vmatprep.subr.mxu0 0.0
        %4657 = vmatpush1.xpose.msra.mxu0 0.0
        %4658 = vmatprep.subr.mxu0 0.0
        %4659 = vmatpush1.xpose.msra.mxu0 0.0
        %4660 = vmatprep.subr.mxu0 0.0
        %4661 = vmatpush1.xpose.msra.mxu0 0.0
        %4662 = vmatprep.subr.mxu0 0.0
        %4663 = vmatpush1.xpose.msra.mxu0 0.0
        %4664 = vmatprep.mubr.f32.mxu0 %v1180
        %4665 = vmatmul.mubr.f32.gmra.mrb[0].mxu0 %v1172
        %v4666 = vpop.f32.mrb[0].mxu0
        %v4667 = vadd.f32 %v4597, %v4666
        %v4668 = vpop.f32.mrb[0].mxu0
        %4669 = vdwg.mxu0
        %4670 = vmatprep.subr.mxu0 %v371
        %4671 = vmatpush1.xpose.msra.mxu0 %v370
        %4672 = vmatprep.subr.mxu0 %v627
        %4673 = vmatpush1.xpose.msra.mxu0 %v626
        %4674 = vmatprep.subr.mxu0 0.0
        %4675 = vmatpush1.xpose.msra.mxu0 0.0
        %4676 = vmatprep.subr.mxu0 0.0
        %4677 = vmatpush1.xpose.msra.mxu0 0.0
        %4678 = vmatprep.subr.mxu0 0.0
        %4679 = vmatpush1.xpose.msra.mxu0 0.0
        %4680 = vmatprep.subr.mxu0 0.0
        %4681 = vmatpush1.xpose.msra.mxu0 0.0
        %4682 = vmatprep.subr.mxu0 0.0
        %4683 = vmatpush1.xpose.msra.mxu0 0.0
        %4684 = vmatprep.subr.mxu0 0.0
        %4685 = vmatpush1.xpose.msra.mxu0 0.0
        %4686 = vmatprep.subr.mxu0 0.0
        %4687 = vmatpush1.xpose.msra.mxu0 0.0
        %4688 = vmatprep.subr.mxu0 0.0
        %4689 = vmatpush1.xpose.msra.mxu0 0.0
        %4690 = vmatprep.subr.mxu0 0.0
        %4691 = vmatpush1.xpose.msra.mxu0 0.0
        %4692 = vmatprep.subr.mxu0 0.0
        %4693 = vmatpush1.xpose.msra.mxu0 0.0
        %4694 = vmatprep.subr.mxu0 0.0
        %4695 = vmatpush1.xpose.msra.mxu0 0.0
        %4696 = vmatprep.subr.mxu0 0.0
        %4697 = vmatpush1.xpose.msra.mxu0 0.0
        %4698 = vmatprep.subr.mxu0 0.0
        %4699 = vmatpush1.xpose.msra.mxu0 0.0
        %4700 = vmatprep.subr.mxu0 0.0
        %4701 = vmatpush1.xpose.msra.mxu0 0.0
        %4702 = vmatprep.subr.mxu0 0.0
        %4703 = vmatpush1.xpose.msra.mxu0 0.0
        %4704 = vmatprep.subr.mxu0 0.0
        %4705 = vmatpush1.xpose.msra.mxu0 0.0
        %4706 = vmatprep.subr.mxu0 0.0
        %4707 = vmatpush1.xpose.msra.mxu0 0.0
        %4708 = vmatprep.subr.mxu0 0.0
        %4709 = vmatpush1.xpose.msra.mxu0 0.0
        %4710 = vmatprep.subr.mxu0 0.0
        %4711 = vmatpush1.xpose.msra.mxu0 0.0
        %4712 = vmatprep.subr.mxu0 0.0
        %4713 = vmatpush1.xpose.msra.mxu0 0.0
        %4714 = vmatprep.subr.mxu0 0.0
        %4715 = vmatpush1.xpose.msra.mxu0 0.0
        %4716 = vmatprep.subr.mxu0 0.0
        %4717 = vmatpush1.xpose.msra.mxu0 0.0
        %4718 = vmatprep.subr.mxu0 0.0
        %4719 = vmatpush1.xpose.msra.mxu0 0.0
        %4720 = vmatprep.subr.mxu0 0.0
        %4721 = vmatpush1.xpose.msra.mxu0 0.0
        %4722 = vmatprep.subr.mxu0 0.0
        %4723 = vmatpush1.xpose.msra.mxu0 0.0
        %4724 = vmatprep.subr.mxu0 0.0
        %4725 = vmatpush1.xpose.msra.mxu0 0.0
        %4726 = vmatprep.subr.mxu0 0.0
        %4727 = vmatpush1.xpose.msra.mxu0 0.0
        %4728 = vmatprep.subr.mxu0 0.0
        %4729 = vmatpush1.xpose.msra.mxu0 0.0
        %4730 = vmatprep.subr.mxu0 0.0
        %4731 = vmatpush1.xpose.msra.mxu0 0.0
        %4732 = vmatprep.subr.mxu0 0.0
        %4733 = vmatpush1.xpose.msra.mxu0 0.0
        %4734 = vmatprep.mubr.f32.mxu0 %v1181
        %4735 = vmatmul.mubr.f32.gmra.mrb[0].mxu0 %v1179
        %v4736 = vpop.f32.mrb[0].mxu0
        %v4737 = vadd.f32 %v4667, %v4736
        %v4738 = vpop.f32.mrb[0].mxu0
        %4739 = vdwg.mxu0
        %4740 = vmatprep.subr.mxu0 %v373
        %4741 = vmatpush1.xpose.msra.mxu0 %v372
        %4742 = vmatprep.subr.mxu0 %v629
        %4743 = vmatpush1.xpose.msra.mxu0 %v628
        %4744 = vmatprep.subr.mxu0 0.0
        %4745 = vmatpush1.xpose.msra.mxu0 0.0
        %4746 = vmatprep.subr.mxu0 0.0
        %4747 = vmatpush1.xpose.msra.mxu0 0.0
        %4748 = vmatprep.subr.mxu0 0.0
        %4749 = vmatpush1.xpose.msra.mxu0 0.0
        %4750 = vmatprep.subr.mxu0 0.0
        %4751 = vmatpush1.xpose.msra.mxu0 0.0
        %4752 = vmatprep.subr.mxu0 0.0
        %4753 = vmatpush1.xpose.msra.mxu0 0.0
        %4754 = vmatprep.subr.mxu0 0.0
        %4755 = vmatpush1.xpose.msra.mxu0 0.0
        %4756 = vmatprep.subr.mxu0 0.0
        %4757 = vmatpush1.xpose.msra.mxu0 0.0
        %4758 = vmatprep.subr.mxu0 0.0
        %4759 = vmatpush1.xpose.msra.mxu0 0.0
        %4760 = vmatprep.subr.mxu0 0.0
        %4761 = vmatpush1.xpose.msra.mxu0 0.0
        %4762 = vmatprep.subr.mxu0 0.0
        %4763 = vmatpush1.xpose.msra.mxu0 0.0
        %4764 = vmatprep.subr.mxu0 0.0
        %4765 = vmatpush1.xpose.msra.mxu0 0.0
        %4766 = vmatprep.subr.mxu0 0.0
        %4767 = vmatpush1.xpose.msra.mxu0 0.0
        %4768 = vmatprep.subr.mxu0 0.0
        %4769 = vmatpush1.xpose.msra.mxu0 0.0
        %4770 = vmatprep.subr.mxu0 0.0
        %4771 = vmatpush1.xpose.msra.mxu0 0.0
        %4772 = vmatprep.subr.mxu0 0.0
        %4773 = vmatpush1.xpose.msra.mxu0 0.0
        %4774 = vmatprep.subr.mxu0 0.0
        %4775 = vmatpush1.xpose.msra.mxu0 0.0
        %4776 = vmatprep.subr.mxu0 0.0
        %4777 = vmatpush1.xpose.msra.mxu0 0.0
        %4778 = vmatprep.subr.mxu0 0.0
        %4779 = vmatpush1.xpose.msra.mxu0 0.0
        %4780 = vmatprep.subr.mxu0 0.0
        %4781 = vmatpush1.xpose.msra.mxu0 0.0
        %4782 = vmatprep.subr.mxu0 0.0
        %4783 = vmatpush1.xpose.msra.mxu0 0.0
        %4784 = vmatprep.subr.mxu0 0.0
        %4785 = vmatpush1.xpose.msra.mxu0 0.0
        %4786 = vmatprep.subr.mxu0 0.0
        %4787 = vmatpush1.xpose.msra.mxu0 0.0
        %4788 = vmatprep.subr.mxu0 0.0
        %4789 = vmatpush1.xpose.msra.mxu0 0.0
        %4790 = vmatprep.subr.mxu0 0.0
        %4791 = vmatpush1.xpose.msra.mxu0 0.0
        %4792 = vmatprep.subr.mxu0 0.0
        %4793 = vmatpush1.xpose.msra.mxu0 0.0
        %4794 = vmatprep.subr.mxu0 0.0
        %4795 = vmatpush1.xpose.msra.mxu0 0.0
        %4796 = vmatprep.subr.mxu0 0.0
        %4797 = vmatpush1.xpose.msra.mxu0 0.0
        %4798 = vmatprep.subr.mxu0 0.0
        %4799 = vmatpush1.xpose.msra.mxu0 0.0
        %4800 = vmatprep.subr.mxu0 0.0
        %4801 = vmatpush1.xpose.msra.mxu0 0.0
        %4802 = vmatprep.subr.mxu0 0.0
        %4803 = vmatpush1.xpose.msra.mxu0 0.0
        %4804 = vmatprep.mubr.f32.mxu0 %v1197
        %4805 = vmatmul.mubr.f32.gmra.mrb[0].mxu0 %v1189
        %v4806 = vpop.f32.mrb[0].mxu0
        %v4807 = vadd.f32 %v4737, %v4806
        %v4808 = vpop.f32.mrb[0].mxu0
        %4809 = vdwg.mxu0
        %4810 = vmatprep.subr.mxu0 %v375
        %4811 = vmatpush1.xpose.msra.mxu0 %v374
        %4812 = vmatprep.subr.mxu0 %v631
        %4813 = vmatpush1.xpose.msra.mxu0 %v630
        %4814 = vmatprep.subr.mxu0 0.0
        %4815 = vmatpush1.xpose.msra.mxu0 0.0
        %4816 = vmatprep.subr.mxu0 0.0
        %4817 = vmatpush1.xpose.msra.mxu0 0.0
        %4818 = vmatprep.subr.mxu0 0.0
        %4819 = vmatpush1.xpose.msra.mxu0 0.0
        %4820 = vmatprep.subr.mxu0 0.0
        %4821 = vmatpush1.xpose.msra.mxu0 0.0
        %4822 = vmatprep.subr.mxu0 0.0
        %4823 = vmatpush1.xpose.msra.mxu0 0.0
        %4824 = vmatprep.subr.mxu0 0.0
        %4825 = vmatpush1.xpose.msra.mxu0 0.0
        %4826 = vmatprep.subr.mxu0 0.0
        %4827 = vmatpush1.xpose.msra.mxu0 0.0
        %4828 = vmatprep.subr.mxu0 0.0
        %4829 = vmatpush1.xpose.msra.mxu0 0.0
        %4830 = vmatprep.subr.mxu0 0.0
        %4831 = vmatpush1.xpose.msra.mxu0 0.0
        %4832 = vmatprep.subr.mxu0 0.0
        %4833 = vmatpush1.xpose.msra.mxu0 0.0
        %4834 = vmatprep.subr.mxu0 0.0
        %4835 = vmatpush1.xpose.msra.mxu0 0.0
        %4836 = vmatprep.subr.mxu0 0.0
        %4837 = vmatpush1.xpose.msra.mxu0 0.0
        %4838 = vmatprep.subr.mxu0 0.0
        %4839 = vmatpush1.xpose.msra.mxu0 0.0
        %4840 = vmatprep.subr.mxu0 0.0
        %4841 = vmatpush1.xpose.msra.mxu0 0.0
        %4842 = vmatprep.subr.mxu0 0.0
        %4843 = vmatpush1.xpose.msra.mxu0 0.0
        %4844 = vmatprep.subr.mxu0 0.0
        %4845 = vmatpush1.xpose.msra.mxu0 0.0
        %4846 = vmatprep.subr.mxu0 0.0
        %4847 = vmatpush1.xpose.msra.mxu0 0.0
        %4848 = vmatprep.subr.mxu0 0.0
        %4849 = vmatpush1.xpose.msra.mxu0 0.0
        %4850 = vmatprep.subr.mxu0 0.0
        %4851 = vmatpush1.xpose.msra.mxu0 0.0
        %4852 = vmatprep.subr.mxu0 0.0
        %4853 = vmatpush1.xpose.msra.mxu0 0.0
        %4854 = vmatprep.subr.mxu0 0.0
        %4855 = vmatpush1.xpose.msra.mxu0 0.0
        %4856 = vmatprep.subr.mxu0 0.0
        %4857 = vmatpush1.xpose.msra.mxu0 0.0
        %4858 = vmatprep.subr.mxu0 0.0
        %4859 = vmatpush1.xpose.msra.mxu0 0.0
        %4860 = vmatprep.subr.mxu0 0.0
        %4861 = vmatpush1.xpose.msra.mxu0 0.0
        %4862 = vmatprep.subr.mxu0 0.0
        %4863 = vmatpush1.xpose.msra.mxu0 0.0
        %4864 = vmatprep.subr.mxu0 0.0
        %4865 = vmatpush1.xpose.msra.mxu0 0.0
        %4866 = vmatprep.subr.mxu0 0.0
        %4867 = vmatpush1.xpose.msra.mxu0 0.0
        %4868 = vmatprep.subr.mxu0 0.0
        %4869 = vmatpush1.xpose.msra.mxu0 0.0
        %4870 = vmatprep.subr.mxu0 0.0
        %4871 = vmatpush1.xpose.msra.mxu0 0.0
        %4872 = vmatprep.subr.mxu0 0.0
        %4873 = vmatpush1.xpose.msra.mxu0 0.0
        %4874 = vmatprep.mubr.f32.mxu0 %v1198
        %4875 = vmatmul.mubr.f32.gmra.mrb[0].mxu0 %v1196
        %v4876 = vpop.f32.mrb[0].mxu0
        %v4877 = vadd.f32 %v4807, %v4876
        %v4878 = vpop.f32.mrb[0].mxu0
        %4879 = vdwg.mxu0
        %4880 = vmatprep.subr.mxu0 %v377
        %4881 = vmatpush1.xpose.msra.mxu0 %v376
        %4882 = vmatprep.subr.mxu0 %v633
        %4883 = vmatpush1.xpose.msra.mxu0 %v632
        %4884 = vmatprep.subr.mxu0 0.0
        %4885 = vmatpush1.xpose.msra.mxu0 0.0
        %4886 = vmatprep.subr.mxu0 0.0
        %4887 = vmatpush1.xpose.msra.mxu0 0.0
        %4888 = vmatprep.subr.mxu0 0.0
        %4889 = vmatpush1.xpose.msra.mxu0 0.0
        %4890 = vmatprep.subr.mxu0 0.0
        %4891 = vmatpush1.xpose.msra.mxu0 0.0
        %4892 = vmatprep.subr.mxu0 0.0
        %4893 = vmatpush1.xpose.msra.mxu0 0.0
        %4894 = vmatprep.subr.mxu0 0.0
        %4895 = vmatpush1.xpose.msra.mxu0 0.0
        %4896 = vmatprep.subr.mxu0 0.0
        %4897 = vmatpush1.xpose.msra.mxu0 0.0
        %4898 = vmatprep.subr.mxu0 0.0
        %4899 = vmatpush1.xpose.msra.mxu0 0.0
        %4900 = vmatprep.subr.mxu0 0.0
        %4901 = vmatpush1.xpose.msra.mxu0 0.0
        %4902 = vmatprep.subr.mxu0 0.0
        %4903 = vmatpush1.xpose.msra.mxu0 0.0
        %4904 = vmatprep.subr.mxu0 0.0
        %4905 = vmatpush1.xpose.msra.mxu0 0.0
        %4906 = vmatprep.subr.mxu0 0.0
        %4907 = vmatpush1.xpose.msra.mxu0 0.0
        %4908 = vmatprep.subr.mxu0 0.0
        %4909 = vmatpush1.xpose.msra.mxu0 0.0
        %4910 = vmatprep.subr.mxu0 0.0
        %4911 = vmatpush1.xpose.msra.mxu0 0.0
        %4912 = vmatprep.subr.mxu0 0.0
        %4913 = vmatpush1.xpose.msra.mxu0 0.0
        %4914 = vmatprep.subr.mxu0 0.0
        %4915 = vmatpush1.xpose.msra.mxu0 0.0
        %4916 = vmatprep.subr.mxu0 0.0
        %4917 = vmatpush1.xpose.msra.mxu0 0.0
        %4918 = vmatprep.subr.mxu0 0.0
        %4919 = vmatpush1.xpose.msra.mxu0 0.0
        %4920 = vmatprep.subr.mxu0 0.0
        %4921 = vmatpush1.xpose.msra.mxu0 0.0
        %4922 = vmatprep.subr.mxu0 0.0
        %4923 = vmatpush1.xpose.msra.mxu0 0.0
        %4924 = vmatprep.subr.mxu0 0.0
        %4925 = vmatpush1.xpose.msra.mxu0 0.0
        %4926 = vmatprep.subr.mxu0 0.0
        %4927 = vmatpush1.xpose.msra.mxu0 0.0
        %4928 = vmatprep.subr.mxu0 0.0
        %4929 = vmatpush1.xpose.msra.mxu0 0.0
        %4930 = vmatprep.subr.mxu0 0.0
        %4931 = vmatpush1.xpose.msra.mxu0 0.0
        %4932 = vmatprep.subr.mxu0 0.0
        %4933 = vmatpush1.xpose.msra.mxu0 0.0
        %4934 = vmatprep.subr.mxu0 0.0
        %4935 = vmatpush1.xpose.msra.mxu0 0.0
        %4936 = vmatprep.subr.mxu0 0.0
        %4937 = vmatpush1.xpose.msra.mxu0 0.0
        %4938 = vmatprep.subr.mxu0 0.0
        %4939 = vmatpush1.xpose.msra.mxu0 0.0
        %4940 = vmatprep.subr.mxu0 0.0
        %4941 = vmatpush1.xpose.msra.mxu0 0.0
        %4942 = vmatprep.subr.mxu0 0.0
        %4943 = vmatpush1.xpose.msra.mxu0 0.0
        %4944 = vmatprep.mubr.f32.mxu0 %v1214
        %4945 = vmatmul.mubr.f32.gmra.mrb[0].mxu0 %v1206
        %v4946 = vpop.f32.mrb[0].mxu0
        %v4947 = vadd.f32 %v4877, %v4946
        %v4948 = vpop.f32.mrb[0].mxu0
        %4949 = vdwg.mxu0
        %4950 = vmatprep.subr.mxu0 %v379
        %4951 = vmatpush1.xpose.msra.mxu0 %v378
        %4952 = vmatprep.subr.mxu0 %v635
        %4953 = vmatpush1.xpose.msra.mxu0 %v634
        %4954 = vmatprep.subr.mxu0 0.0
        %4955 = vmatpush1.xpose.msra.mxu0 0.0
        %4956 = vmatprep.subr.mxu0 0.0
        %4957 = vmatpush1.xpose.msra.mxu0 0.0
        %4958 = vmatprep.subr.mxu0 0.0
        %4959 = vmatpush1.xpose.msra.mxu0 0.0
        %4960 = vmatprep.subr.mxu0 0.0
        %4961 = vmatpush1.xpose.msra.mxu0 0.0
        %4962 = vmatprep.subr.mxu0 0.0
        %4963 = vmatpush1.xpose.msra.mxu0 0.0
        %4964 = vmatprep.subr.mxu0 0.0
        %4965 = vmatpush1.xpose.msra.mxu0 0.0
        %4966 = vmatprep.subr.mxu0 0.0
        %4967 = vmatpush1.xpose.msra.mxu0 0.0
        %4968 = vmatprep.subr.mxu0 0.0
        %4969 = vmatpush1.xpose.msra.mxu0 0.0
        %4970 = vmatprep.subr.mxu0 0.0
        %4971 = vmatpush1.xpose.msra.mxu0 0.0
        %4972 = vmatprep.subr.mxu0 0.0
        %4973 = vmatpush1.xpose.msra.mxu0 0.0
        %4974 = vmatprep.subr.mxu0 0.0
        %4975 = vmatpush1.xpose.msra.mxu0 0.0
        %4976 = vmatprep.subr.mxu0 0.0
        %4977 = vmatpush1.xpose.msra.mxu0 0.0
        %4978 = vmatprep.subr.mxu0 0.0
        %4979 = vmatpush1.xpose.msra.mxu0 0.0
        %4980 = vmatprep.subr.mxu0 0.0
        %4981 = vmatpush1.xpose.msra.mxu0 0.0
        %4982 = vmatprep.subr.mxu0 0.0
        %4983 = vmatpush1.xpose.msra.mxu0 0.0
        %4984 = vmatprep.subr.mxu0 0.0
        %4985 = vmatpush1.xpose.msra.mxu0 0.0
        %4986 = vmatprep.subr.mxu0 0.0
        %4987 = vmatpush1.xpose.msra.mxu0 0.0
        %4988 = vmatprep.subr.mxu0 0.0
        %4989 = vmatpush1.xpose.msra.mxu0 0.0
        %4990 = vmatprep.subr.mxu0 0.0
        %4991 = vmatpush1.xpose.msra.mxu0 0.0
        %4992 = vmatprep.subr.mxu0 0.0
        %4993 = vmatpush1.xpose.msra.mxu0 0.0
        %4994 = vmatprep.subr.mxu0 0.0
        %4995 = vmatpush1.xpose.msra.mxu0 0.0
        %4996 = vmatprep.subr.mxu0 0.0
        %4997 = vmatpush1.xpose.msra.mxu0 0.0
        %4998 = vmatprep.subr.mxu0 0.0
        %4999 = vmatpush1.xpose.msra.mxu0 0.0
        %5000 = vmatprep.subr.mxu0 0.0
        %5001 = vmatpush1.xpose.msra.mxu0 0.0
        %5002 = vmatprep.subr.mxu0 0.0
        %5003 = vmatpush1.xpose.msra.mxu0 0.0
        %5004 = vmatprep.subr.mxu0 0.0
        %5005 = vmatpush1.xpose.msra.mxu0 0.0
        %5006 = vmatprep.subr.mxu0 0.0
        %5007 = vmatpush1.xpose.msra.mxu0 0.0
        %5008 = vmatprep.subr.mxu0 0.0
        %5009 = vmatpush1.xpose.msra.mxu0 0.0
        %5010 = vmatprep.subr.mxu0 0.0
        %5011 = vmatpush1.xpose.msra.mxu0 0.0
        %5012 = vmatprep.subr.mxu0 0.0
        %5013 = vmatpush1.xpose.msra.mxu0 0.0
        %5014 = vmatprep.mubr.f32.mxu0 %v1215
        %5015 = vmatmul.mubr.f32.gmra.mrb[0].mxu0 %v1213
        %v5016 = vpop.f32.mrb[0].mxu0
        %v5017 = vadd.f32 %v4947, %v5016
        %v5018 = vpop.f32.mrb[0].mxu0
        %5019 = vdwg.mxu0
        %5020 = vmatprep.subr.mxu0 %v381
        %5021 = vmatpush1.xpose.msra.mxu0 %v380
        %5022 = vmatprep.subr.mxu0 %v637
        %5023 = vmatpush1.xpose.msra.mxu0 %v636
        %5024 = vmatprep.subr.mxu0 0.0
        %5025 = vmatpush1.xpose.msra.mxu0 0.0
        %5026 = vmatprep.subr.mxu0 0.0
        %5027 = vmatpush1.xpose.msra.mxu0 0.0
        %5028 = vmatprep.subr.mxu0 0.0
        %5029 = vmatpush1.xpose.msra.mxu0 0.0
        %5030 = vmatprep.subr.mxu0 0.0
        %5031 = vmatpush1.xpose.msra.mxu0 0.0
        %5032 = vmatprep.subr.mxu0 0.0
        %5033 = vmatpush1.xpose.msra.mxu0 0.0
        %5034 = vmatprep.subr.mxu0 0.0
        %5035 = vmatpush1.xpose.msra.mxu0 0.0
        %5036 = vmatprep.subr.mxu0 0.0
        %5037 = vmatpush1.xpose.msra.mxu0 0.0
        %5038 = vmatprep.subr.mxu0 0.0
        %5039 = vmatpush1.xpose.msra.mxu0 0.0
        %5040 = vmatprep.subr.mxu0 0.0
        %5041 = vmatpush1.xpose.msra.mxu0 0.0
        %5042 = vmatprep.subr.mxu0 0.0
        %5043 = vmatpush1.xpose.msra.mxu0 0.0
        %5044 = vmatprep.subr.mxu0 0.0
        %5045 = vmatpush1.xpose.msra.mxu0 0.0
        %5046 = vmatprep.subr.mxu0 0.0
        %5047 = vmatpush1.xpose.msra.mxu0 0.0
        %5048 = vmatprep.subr.mxu0 0.0
        %5049 = vmatpush1.xpose.msra.mxu0 0.0
        %5050 = vmatprep.subr.mxu0 0.0
        %5051 = vmatpush1.xpose.msra.mxu0 0.0
        %5052 = vmatprep.subr.mxu0 0.0
        %5053 = vmatpush1.xpose.msra.mxu0 0.0
        %5054 = vmatprep.subr.mxu0 0.0
        %5055 = vmatpush1.xpose.msra.mxu0 0.0
        %5056 = vmatprep.subr.mxu0 0.0
        %5057 = vmatpush1.xpose.msra.mxu0 0.0
        %5058 = vmatprep.subr.mxu0 0.0
        %5059 = vmatpush1.xpose.msra.mxu0 0.0
        %5060 = vmatprep.subr.mxu0 0.0
        %5061 = vmatpush1.xpose.msra.mxu0 0.0
        %5062 = vmatprep.subr.mxu0 0.0
        %5063 = vmatpush1.xpose.msra.mxu0 0.0
        %5064 = vmatprep.subr.mxu0 0.0
        %5065 = vmatpush1.xpose.msra.mxu0 0.0
        %5066 = vmatprep.subr.mxu0 0.0
        %5067 = vmatpush1.xpose.msra.mxu0 0.0
        %5068 = vmatprep.subr.mxu0 0.0
        %5069 = vmatpush1.xpose.msra.mxu0 0.0
        %5070 = vmatprep.subr.mxu0 0.0
        %5071 = vmatpush1.xpose.msra.mxu0 0.0
        %5072 = vmatprep.subr.mxu0 0.0
        %5073 = vmatpush1.xpose.msra.mxu0 0.0
        %5074 = vmatprep.subr.mxu0 0.0
        %5075 = vmatpush1.xpose.msra.mxu0 0.0
        %5076 = vmatprep.subr.mxu0 0.0
        %5077 = vmatpush1.xpose.msra.mxu0 0.0
        %5078 = vmatprep.subr.mxu0 0.0
        %5079 = vmatpush1.xpose.msra.mxu0 0.0
        %5080 = vmatprep.subr.mxu0 0.0
        %5081 = vmatpush1.xpose.msra.mxu0 0.0
        %5082 = vmatprep.subr.mxu0 0.0
        %5083 = vmatpush1.xpose.msra.mxu0 0.0
        %5084 = vmatprep.mubr.f32.mxu0 %v1231
        %5085 = vmatmul.mubr.f32.gmra.mrb[0].mxu0 %v1223
        %v5086 = vpop.f32.mrb[0].mxu0
        %v5087 = vadd.f32 %v5017, %v5086
        %v5088 = vpop.f32.mrb[0].mxu0
        %5089 = vdwg.mxu0
        %5090 = vmatprep.subr.mxu0 %v383
        %5091 = vmatpush1.xpose.msra.mxu0 %v382
        %5092 = vmatprep.subr.mxu0 %v639
        %5093 = vmatpush1.xpose.msra.mxu0 %v638
        %5094 = vmatprep.subr.mxu0 0.0
        %5095 = vmatpush1.xpose.msra.mxu0 0.0
        %5096 = vmatprep.subr.mxu0 0.0
        %5097 = vmatpush1.xpose.msra.mxu0 0.0
        %5098 = vmatprep.subr.mxu0 0.0
        %5099 = vmatpush1.xpose.msra.mxu0 0.0
        %5100 = vmatprep.subr.mxu0 0.0
        %5101 = vmatpush1.xpose.msra.mxu0 0.0
        %5102 = vmatprep.subr.mxu0 0.0
        %5103 = vmatpush1.xpose.msra.mxu0 0.0
        %5104 = vmatprep.subr.mxu0 0.0
        %5105 = vmatpush1.xpose.msra.mxu0 0.0
        %5106 = vmatprep.subr.mxu0 0.0
        %5107 = vmatpush1.xpose.msra.mxu0 0.0
        %5108 = vmatprep.subr.mxu0 0.0
        %5109 = vmatpush1.xpose.msra.mxu0 0.0
        %5110 = vmatprep.subr.mxu0 0.0
        %5111 = vmatpush1.xpose.msra.mxu0 0.0
        %5112 = vmatprep.subr.mxu0 0.0
        %5113 = vmatpush1.xpose.msra.mxu0 0.0
        %5114 = vmatprep.subr.mxu0 0.0
        %5115 = vmatpush1.xpose.msra.mxu0 0.0
        %5116 = vmatprep.subr.mxu0 0.0
        %5117 = vmatpush1.xpose.msra.mxu0 0.0
        %5118 = vmatprep.subr.mxu0 0.0
        %5119 = vmatpush1.xpose.msra.mxu0 0.0
        %5120 = vmatprep.subr.mxu0 0.0
        %5121 = vmatpush1.xpose.msra.mxu0 0.0
        %5122 = vmatprep.subr.mxu0 0.0
        %5123 = vmatpush1.xpose.msra.mxu0 0.0
        %5124 = vmatprep.subr.mxu0 0.0
        %5125 = vmatpush1.xpose.msra.mxu0 0.0
        %5126 = vmatprep.subr.mxu0 0.0
        %5127 = vmatpush1.xpose.msra.mxu0 0.0
        %5128 = vmatprep.subr.mxu0 0.0
        %5129 = vmatpush1.xpose.msra.mxu0 0.0
        %5130 = vmatprep.subr.mxu0 0.0
        %5131 = vmatpush1.xpose.msra.mxu0 0.0
        %5132 = vmatprep.subr.mxu0 0.0
        %5133 = vmatpush1.xpose.msra.mxu0 0.0
        %5134 = vmatprep.subr.mxu0 0.0
        %5135 = vmatpush1.xpose.msra.mxu0 0.0
        %5136 = vmatprep.subr.mxu0 0.0
        %5137 = vmatpush1.xpose.msra.mxu0 0.0
        %5138 = vmatprep.subr.mxu0 0.0
        %5139 = vmatpush1.xpose.msra.mxu0 0.0
        %5140 = vmatprep.subr.mxu0 0.0
        %5141 = vmatpush1.xpose.msra.mxu0 0.0
        %5142 = vmatprep.subr.mxu0 0.0
        %5143 = vmatpush1.xpose.msra.mxu0 0.0
        %5144 = vmatprep.subr.mxu0 0.0
        %5145 = vmatpush1.xpose.msra.mxu0 0.0
        %5146 = vmatprep.subr.mxu0 0.0
        %5147 = vmatpush1.xpose.msra.mxu0 0.0
        %5148 = vmatprep.subr.mxu0 0.0
        %5149 = vmatpush1.xpose.msra.mxu0 0.0
        %5150 = vmatprep.subr.mxu0 0.0
        %5151 = vmatpush1.xpose.msra.mxu0 0.0
        %5152 = vmatprep.subr.mxu0 0.0
        %5153 = vmatpush1.xpose.msra.mxu0 0.0
        %5154 = vmatprep.mubr.f32.mxu0 %v1232
        %5155 = vmatmul.mubr.f32.gmra.mrb[0].mxu0 %v1230
        %v5156 = vpop.f32.mrb[0].mxu0
        %v5157 = vadd.f32 %v5087, %v5156
        %v5158 = vpop.f32.mrb[0].mxu0
        %5159 = vdwg.mxu0
        %5160 = vmatprep.subr.mxu0 %v385
        %5161 = vmatpush1.xpose.msra.mxu0 %v384
        %5162 = vmatprep.subr.mxu0 %v641
        %5163 = vmatpush1.xpose.msra.mxu0 %v640
        %5164 = vmatprep.subr.mxu0 0.0
        %5165 = vmatpush1.xpose.msra.mxu0 0.0
        %5166 = vmatprep.subr.mxu0 0.0
        %5167 = vmatpush1.xpose.msra.mxu0 0.0
        %5168 = vmatprep.subr.mxu0 0.0
        %5169 = vmatpush1.xpose.msra.mxu0 0.0
        %5170 = vmatprep.subr.mxu0 0.0
        %5171 = vmatpush1.xpose.msra.mxu0 0.0
        %5172 = vmatprep.subr.mxu0 0.0
        %5173 = vmatpush1.xpose.msra.mxu0 0.0
        %5174 = vmatprep.subr.mxu0 0.0
        %5175 = vmatpush1.xpose.msra.mxu0 0.0
        %5176 = vmatprep.subr.mxu0 0.0
        %5177 = vmatpush1.xpose.msra.mxu0 0.0
        %5178 = vmatprep.subr.mxu0 0.0
        %5179 = vmatpush1.xpose.msra.mxu0 0.0
        %5180 = vmatprep.subr.mxu0 0.0
        %5181 = vmatpush1.xpose.msra.mxu0 0.0
        %5182 = vmatprep.subr.mxu0 0.0
        %5183 = vmatpush1.xpose.msra.mxu0 0.0
        %5184 = vmatprep.subr.mxu0 0.0
        %5185 = vmatpush1.xpose.msra.mxu0 0.0
        %5186 = vmatprep.subr.mxu0 0.0
        %5187 = vmatpush1.xpose.msra.mxu0 0.0
        %5188 = vmatprep.subr.mxu0 0.0
        %5189 = vmatpush1.xpose.msra.mxu0 0.0
        %5190 = vmatprep.subr.mxu0 0.0
        %5191 = vmatpush1.xpose.msra.mxu0 0.0
        %5192 = vmatprep.subr.mxu0 0.0
        %5193 = vmatpush1.xpose.msra.mxu0 0.0
        %5194 = vmatprep.subr.mxu0 0.0
        %5195 = vmatpush1.xpose.msra.mxu0 0.0
        %5196 = vmatprep.subr.mxu0 0.0
        %5197 = vmatpush1.xpose.msra.mxu0 0.0
        %5198 = vmatprep.subr.mxu0 0.0
        %5199 = vmatpush1.xpose.msra.mxu0 0.0
        %5200 = vmatprep.subr.mxu0 0.0
        %5201 = vmatpush1.xpose.msra.mxu0 0.0
        %5202 = vmatprep.subr.mxu0 0.0
        %5203 = vmatpush1.xpose.msra.mxu0 0.0
        %5204 = vmatprep.subr.mxu0 0.0
        %5205 = vmatpush1.xpose.msra.mxu0 0.0
        %5206 = vmatprep.subr.mxu0 0.0
        %5207 = vmatpush1.xpose.msra.mxu0 0.0
        %5208 = vmatprep.subr.mxu0 0.0
        %5209 = vmatpush1.xpose.msra.mxu0 0.0
        %5210 = vmatprep.subr.mxu0 0.0
        %5211 = vmatpush1.xpose.msra.mxu0 0.0
        %5212 = vmatprep.subr.mxu0 0.0
        %5213 = vmatpush1.xpose.msra.mxu0 0.0
        %5214 = vmatprep.subr.mxu0 0.0
        %5215 = vmatpush1.xpose.msra.mxu0 0.0
        %5216 = vmatprep.subr.mxu0 0.0
        %5217 = vmatpush1.xpose.msra.mxu0 0.0
        %5218 = vmatprep.subr.mxu0 0.0
        %5219 = vmatpush1.xpose.msra.mxu0 0.0
        %5220 = vmatprep.subr.mxu0 0.0
        %5221 = vmatpush1.xpose.msra.mxu0 0.0
        %5222 = vmatprep.subr.mxu0 0.0
        %5223 = vmatpush1.xpose.msra.mxu0 0.0
        %5224 = vmatprep.mubr.f32.mxu0 %v1248
        %5225 = vmatmul.mubr.f32.gmra.mrb[0].mxu0 %v1240
        %v5226 = vpop.f32.mrb[0].mxu0
        %v5227 = vadd.f32 %v5157, %v5226
        %v5228 = vpop.f32.mrb[0].mxu0
        %5229 = vdwg.mxu0
        %5230 = vmatprep.subr.mxu0 %v387
        %5231 = vmatpush1.xpose.msra.mxu0 %v386
        %5232 = vmatprep.subr.mxu0 %v643
        %5233 = vmatpush1.xpose.msra.mxu0 %v642
        %5234 = vmatprep.subr.mxu0 0.0
        %5235 = vmatpush1.xpose.msra.mxu0 0.0
        %5236 = vmatprep.subr.mxu0 0.0
        %5237 = vmatpush1.xpose.msra.mxu0 0.0
        %5238 = vmatprep.subr.mxu0 0.0
        %5239 = vmatpush1.xpose.msra.mxu0 0.0
        %5240 = vmatprep.subr.mxu0 0.0
        %5241 = vmatpush1.xpose.msra.mxu0 0.0
        %5242 = vmatprep.subr.mxu0 0.0
        %5243 = vmatpush1.xpose.msra.mxu0 0.0
        %5244 = vmatprep.subr.mxu0 0.0
        %5245 = vmatpush1.xpose.msra.mxu0 0.0
        %5246 = vmatprep.subr.mxu0 0.0
        %5247 = vmatpush1.xpose.msra.mxu0 0.0
        %5248 = vmatprep.subr.mxu0 0.0
        %5249 = vmatpush1.xpose.msra.mxu0 0.0
        %5250 = vmatprep.subr.mxu0 0.0
        %5251 = vmatpush1.xpose.msra.mxu0 0.0
        %5252 = vmatprep.subr.mxu0 0.0
        %5253 = vmatpush1.xpose.msra.mxu0 0.0
        %5254 = vmatprep.subr.mxu0 0.0
        %5255 = vmatpush1.xpose.msra.mxu0 0.0
        %5256 = vmatprep.subr.mxu0 0.0
        %5257 = vmatpush1.xpose.msra.mxu0 0.0
        %5258 = vmatprep.subr.mxu0 0.0
        %5259 = vmatpush1.xpose.msra.mxu0 0.0
        %5260 = vmatprep.subr.mxu0 0.0
        %5261 = vmatpush1.xpose.msra.mxu0 0.0
        %5262 = vmatprep.subr.mxu0 0.0
        %5263 = vmatpush1.xpose.msra.mxu0 0.0
        %5264 = vmatprep.subr.mxu0 0.0
        %5265 = vmatpush1.xpose.msra.mxu0 0.0
        %5266 = vmatprep.subr.mxu0 0.0
        %5267 = vmatpush1.xpose.msra.mxu0 0.0
        %5268 = vmatprep.subr.mxu0 0.0
        %5269 = vmatpush1.xpose.msra.mxu0 0.0
        %5270 = vmatprep.subr.mxu0 0.0
        %5271 = vmatpush1.xpose.msra.mxu0 0.0
        %5272 = vmatprep.subr.mxu0 0.0
        %5273 = vmatpush1.xpose.msra.mxu0 0.0
        %5274 = vmatprep.subr.mxu0 0.0
        %5275 = vmatpush1.xpose.msra.mxu0 0.0
        %5276 = vmatprep.subr.mxu0 0.0
        %5277 = vmatpush1.xpose.msra.mxu0 0.0
        %5278 = vmatprep.subr.mxu0 0.0
        %5279 = vmatpush1.xpose.msra.mxu0 0.0
        %5280 = vmatprep.subr.mxu0 0.0
        %5281 = vmatpush1.xpose.msra.mxu0 0.0
        %5282 = vmatprep.subr.mxu0 0.0
        %5283 = vmatpush1.xpose.msra.mxu0 0.0
        %5284 = vmatprep.subr.mxu0 0.0
        %5285 = vmatpush1.xpose.msra.mxu0 0.0
        %5286 = vmatprep.subr.mxu0 0.0
        %5287 = vmatpush1.xpose.msra.mxu0 0.0
        %5288 = vmatprep.subr.mxu0 0.0
        %5289 = vmatpush1.xpose.msra.mxu0 0.0
        %5290 = vmatprep.subr.mxu0 0.0
        %5291 = vmatpush1.xpose.msra.mxu0 0.0
        %5292 = vmatprep.subr.mxu0 0.0
        %5293 = vmatpush1.xpose.msra.mxu0 0.0
        %5294 = vmatprep.mubr.f32.mxu0 %v1249
        %5295 = vmatmul.mubr.f32.gmra.mrb[0].mxu0 %v1247
        %v5296 = vpop.f32.mrb[0].mxu0
        %v5297 = vadd.f32 %v5227, %v5296
        %v5298 = vpop.f32.mrb[0].mxu0
        %5299 = vdwg.mxu0
        %5300 = vmatprep.subr.mxu0 %v389
        %5301 = vmatpush1.xpose.msra.mxu0 %v388
        %5302 = vmatprep.subr.mxu0 %v645
        %5303 = vmatpush1.xpose.msra.mxu0 %v644
        %5304 = vmatprep.subr.mxu0 0.0
        %5305 = vmatpush1.xpose.msra.mxu0 0.0
        %5306 = vmatprep.subr.mxu0 0.0
        %5307 = vmatpush1.xpose.msra.mxu0 0.0
        %5308 = vmatprep.subr.mxu0 0.0
        %5309 = vmatpush1.xpose.msra.mxu0 0.0
        %5310 = vmatprep.subr.mxu0 0.0
        %5311 = vmatpush1.xpose.msra.mxu0 0.0
        %5312 = vmatprep.subr.mxu0 0.0
        %5313 = vmatpush1.xpose.msra.mxu0 0.0
        %5314 = vmatprep.subr.mxu0 0.0
        %5315 = vmatpush1.xpose.msra.mxu0 0.0
        %5316 = vmatprep.subr.mxu0 0.0
        %5317 = vmatpush1.xpose.msra.mxu0 0.0
        %5318 = vmatprep.subr.mxu0 0.0
        %5319 = vmatpush1.xpose.msra.mxu0 0.0
        %5320 = vmatprep.subr.mxu0 0.0
        %5321 = vmatpush1.xpose.msra.mxu0 0.0
        %5322 = vmatprep.subr.mxu0 0.0
        %5323 = vmatpush1.xpose.msra.mxu0 0.0
        %5324 = vmatprep.subr.mxu0 0.0
        %5325 = vmatpush1.xpose.msra.mxu0 0.0
        %5326 = vmatprep.subr.mxu0 0.0
        %5327 = vmatpush1.xpose.msra.mxu0 0.0
        %5328 = vmatprep.subr.mxu0 0.0
        %5329 = vmatpush1.xpose.msra.mxu0 0.0
        %5330 = vmatprep.subr.mxu0 0.0
        %5331 = vmatpush1.xpose.msra.mxu0 0.0
        %5332 = vmatprep.subr.mxu0 0.0
        %5333 = vmatpush1.xpose.msra.mxu0 0.0
        %5334 = vmatprep.subr.mxu0 0.0
        %5335 = vmatpush1.xpose.msra.mxu0 0.0
        %5336 = vmatprep.subr.mxu0 0.0
        %5337 = vmatpush1.xpose.msra.mxu0 0.0
        %5338 = vmatprep.subr.mxu0 0.0
        %5339 = vmatpush1.xpose.msra.mxu0 0.0
        %5340 = vmatprep.subr.mxu0 0.0
        %5341 = vmatpush1.xpose.msra.mxu0 0.0
        %5342 = vmatprep.subr.mxu0 0.0
        %5343 = vmatpush1.xpose.msra.mxu0 0.0
        %5344 = vmatprep.subr.mxu0 0.0
        %5345 = vmatpush1.xpose.msra.mxu0 0.0
        %5346 = vmatprep.subr.mxu0 0.0
        %5347 = vmatpush1.xpose.msra.mxu0 0.0
        %5348 = vmatprep.subr.mxu0 0.0
        %5349 = vmatpush1.xpose.msra.mxu0 0.0
        %5350 = vmatprep.subr.mxu0 0.0
        %5351 = vmatpush1.xpose.msra.mxu0 0.0
        %5352 = vmatprep.subr.mxu0 0.0
        %5353 = vmatpush1.xpose.msra.mxu0 0.0
        %5354 = vmatprep.subr.mxu0 0.0
        %5355 = vmatpush1.xpose.msra.mxu0 0.0
        %5356 = vmatprep.subr.mxu0 0.0
        %5357 = vmatpush1.xpose.msra.mxu0 0.0
        %5358 = vmatprep.subr.mxu0 0.0
        %5359 = vmatpush1.xpose.msra.mxu0 0.0
        %5360 = vmatprep.subr.mxu0 0.0
        %5361 = vmatpush1.xpose.msra.mxu0 0.0
        %5362 = vmatprep.subr.mxu0 0.0
        %5363 = vmatpush1.xpose.msra.mxu0 0.0
        %5364 = vmatprep.mubr.f32.mxu0 %v1265
        %5365 = vmatmul.mubr.f32.gmra.mrb[0].mxu0 %v1257
        %v5366 = vpop.f32.mrb[0].mxu0
        %v5367 = vadd.f32 %v5297, %v5366
        %v5368 = vpop.f32.mrb[0].mxu0
        %5369 = vdwg.mxu0
        %5370 = vmatprep.subr.mxu0 %v391
        %5371 = vmatpush1.xpose.msra.mxu0 %v390
        %5372 = vmatprep.subr.mxu0 %v647
        %5373 = vmatpush1.xpose.msra.mxu0 %v646
        %5374 = vmatprep.subr.mxu0 0.0
        %5375 = vmatpush1.xpose.msra.mxu0 0.0
        %5376 = vmatprep.subr.mxu0 0.0
        %5377 = vmatpush1.xpose.msra.mxu0 0.0
        %5378 = vmatprep.subr.mxu0 0.0
        %5379 = vmatpush1.xpose.msra.mxu0 0.0
        %5380 = vmatprep.subr.mxu0 0.0
        %5381 = vmatpush1.xpose.msra.mxu0 0.0
        %5382 = vmatprep.subr.mxu0 0.0
        %5383 = vmatpush1.xpose.msra.mxu0 0.0
        %5384 = vmatprep.subr.mxu0 0.0
        %5385 = vmatpush1.xpose.msra.mxu0 0.0
        %5386 = vmatprep.subr.mxu0 0.0
        %5387 = vmatpush1.xpose.msra.mxu0 0.0
        %5388 = vmatprep.subr.mxu0 0.0
        %5389 = vmatpush1.xpose.msra.mxu0 0.0
        %5390 = vmatprep.subr.mxu0 0.0
        %5391 = vmatpush1.xpose.msra.mxu0 0.0
        %5392 = vmatprep.subr.mxu0 0.0
        %5393 = vmatpush1.xpose.msra.mxu0 0.0
        %5394 = vmatprep.subr.mxu0 0.0
        %5395 = vmatpush1.xpose.msra.mxu0 0.0
        %5396 = vmatprep.subr.mxu0 0.0
        %5397 = vmatpush1.xpose.msra.mxu0 0.0
        %5398 = vmatprep.subr.mxu0 0.0
        %5399 = vmatpush1.xpose.msra.mxu0 0.0
        %5400 = vmatprep.subr.mxu0 0.0
        %5401 = vmatpush1.xpose.msra.mxu0 0.0
        %5402 = vmatprep.subr.mxu0 0.0
        %5403 = vmatpush1.xpose.msra.mxu0 0.0
        %5404 = vmatprep.subr.mxu0 0.0
        %5405 = vmatpush1.xpose.msra.mxu0 0.0
        %5406 = vmatprep.subr.mxu0 0.0
        %5407 = vmatpush1.xpose.msra.mxu0 0.0
        %5408 = vmatprep.subr.mxu0 0.0
        %5409 = vmatpush1.xpose.msra.mxu0 0.0
        %5410 = vmatprep.subr.mxu0 0.0
        %5411 = vmatpush1.xpose.msra.mxu0 0.0
        %5412 = vmatprep.subr.mxu0 0.0
        %5413 = vmatpush1.xpose.msra.mxu0 0.0
        %5414 = vmatprep.subr.mxu0 0.0
        %5415 = vmatpush1.xpose.msra.mxu0 0.0
        %5416 = vmatprep.subr.mxu0 0.0
        %5417 = vmatpush1.xpose.msra.mxu0 0.0
        %5418 = vmatprep.subr.mxu0 0.0
        %5419 = vmatpush1.xpose.msra.mxu0 0.0
        %5420 = vmatprep.subr.mxu0 0.0
        %5421 = vmatpush1.xpose.msra.mxu0 0.0
        %5422 = vmatprep.subr.mxu0 0.0
        %5423 = vmatpush1.xpose.msra.mxu0 0.0
        %5424 = vmatprep.subr.mxu0 0.0
        %5425 = vmatpush1.xpose.msra.mxu0 0.0
        %5426 = vmatprep.subr.mxu0 0.0
        %5427 = vmatpush1.xpose.msra.mxu0 0.0
        %5428 = vmatprep.subr.mxu0 0.0
        %5429 = vmatpush1.xpose.msra.mxu0 0.0
        %5430 = vmatprep.subr.mxu0 0.0
        %5431 = vmatpush1.xpose.msra.mxu0 0.0
        %5432 = vmatprep.subr.mxu0 0.0
        %5433 = vmatpush1.xpose.msra.mxu0 0.0
        %5434 = vmatprep.mubr.f32.mxu0 %v1266
        %5435 = vmatmul.mubr.f32.gmra.mrb[0].mxu0 %v1264
        %v5436 = vpop.f32.mrb[0].mxu0
        %v5437 = vadd.f32 %v5367, %v5436
        %v5438 = vpop.f32.mrb[0].mxu0
        %5439 = vdwg.mxu0
        %5440 = vmatprep.subr.mxu0 %v393
        %5441 = vmatpush1.xpose.msra.mxu0 %v392
        %5442 = vmatprep.subr.mxu0 %v649
        %5443 = vmatpush1.xpose.msra.mxu0 %v648
        %5444 = vmatprep.subr.mxu0 0.0
        %5445 = vmatpush1.xpose.msra.mxu0 0.0
        %5446 = vmatprep.subr.mxu0 0.0
        %5447 = vmatpush1.xpose.msra.mxu0 0.0
        %5448 = vmatprep.subr.mxu0 0.0
        %5449 = vmatpush1.xpose.msra.mxu0 0.0
        %5450 = vmatprep.subr.mxu0 0.0
        %5451 = vmatpush1.xpose.msra.mxu0 0.0
        %5452 = vmatprep.subr.mxu0 0.0
        %5453 = vmatpush1.xpose.msra.mxu0 0.0
        %5454 = vmatprep.subr.mxu0 0.0
        %5455 = vmatpush1.xpose.msra.mxu0 0.0
        %5456 = vmatprep.subr.mxu0 0.0
        %5457 = vmatpush1.xpose.msra.mxu0 0.0
        %5458 = vmatprep.subr.mxu0 0.0
        %5459 = vmatpush1.xpose.msra.mxu0 0.0
        %5460 = vmatprep.subr.mxu0 0.0
        %5461 = vmatpush1.xpose.msra.mxu0 0.0
        %5462 = vmatprep.subr.mxu0 0.0
        %5463 = vmatpush1.xpose.msra.mxu0 0.0
        %5464 = vmatprep.subr.mxu0 0.0
        %5465 = vmatpush1.xpose.msra.mxu0 0.0
        %5466 = vmatprep.subr.mxu0 0.0
        %5467 = vmatpush1.xpose.msra.mxu0 0.0
        %5468 = vmatprep.subr.mxu0 0.0
        %5469 = vmatpush1.xpose.msra.mxu0 0.0
        %5470 = vmatprep.subr.mxu0 0.0
        %5471 = vmatpush1.xpose.msra.mxu0 0.0
        %5472 = vmatprep.subr.mxu0 0.0
        %5473 = vmatpush1.xpose.msra.mxu0 0.0
        %5474 = vmatprep.subr.mxu0 0.0
        %5475 = vmatpush1.xpose.msra.mxu0 0.0
        %5476 = vmatprep.subr.mxu0 0.0
        %5477 = vmatpush1.xpose.msra.mxu0 0.0
        %5478 = vmatprep.subr.mxu0 0.0
        %5479 = vmatpush1.xpose.msra.mxu0 0.0
        %5480 = vmatprep.subr.mxu0 0.0
        %5481 = vmatpush1.xpose.msra.mxu0 0.0
        %5482 = vmatprep.subr.mxu0 0.0
        %5483 = vmatpush1.xpose.msra.mxu0 0.0
        %5484 = vmatprep.subr.mxu0 0.0
        %5485 = vmatpush1.xpose.msra.mxu0 0.0
        %5486 = vmatprep.subr.mxu0 0.0
        %5487 = vmatpush1.xpose.msra.mxu0 0.0
        %5488 = vmatprep.subr.mxu0 0.0
        %5489 = vmatpush1.xpose.msra.mxu0 0.0
        %5490 = vmatprep.subr.mxu0 0.0
        %5491 = vmatpush1.xpose.msra.mxu0 0.0
        %5492 = vmatprep.subr.mxu0 0.0
        %5493 = vmatpush1.xpose.msra.mxu0 0.0
        %5494 = vmatprep.subr.mxu0 0.0
        %5495 = vmatpush1.xpose.msra.mxu0 0.0
        %5496 = vmatprep.subr.mxu0 0.0
        %5497 = vmatpush1.xpose.msra.mxu0 0.0
        %5498 = vmatprep.subr.mxu0 0.0
        %5499 = vmatpush1.xpose.msra.mxu0 0.0
        %5500 = vmatprep.subr.mxu0 0.0
        %5501 = vmatpush1.xpose.msra.mxu0 0.0
        %5502 = vmatprep.subr.mxu0 0.0
        %5503 = vmatpush1.xpose.msra.mxu0 0.0
        %5504 = vmatprep.mubr.f32.mxu0 %v1282
        %5505 = vmatmul.mubr.f32.gmra.mrb[0].mxu0 %v1274
        %v5506 = vpop.f32.mrb[0].mxu0
        %v5507 = vadd.f32 %v5437, %v5506
        %v5508 = vpop.f32.mrb[0].mxu0
        %5509 = vdwg.mxu0
        %5510 = vmatprep.subr.mxu0 %v395
        %5511 = vmatpush1.xpose.msra.mxu0 %v394
        %5512 = vmatprep.subr.mxu0 %v651
        %5513 = vmatpush1.xpose.msra.mxu0 %v650
        %5514 = vmatprep.subr.mxu0 0.0
        %5515 = vmatpush1.xpose.msra.mxu0 0.0
        %5516 = vmatprep.subr.mxu0 0.0
        %5517 = vmatpush1.xpose.msra.mxu0 0.0
        %5518 = vmatprep.subr.mxu0 0.0
        %5519 = vmatpush1.xpose.msra.mxu0 0.0
        %5520 = vmatprep.subr.mxu0 0.0
        %5521 = vmatpush1.xpose.msra.mxu0 0.0
        %5522 = vmatprep.subr.mxu0 0.0
        %5523 = vmatpush1.xpose.msra.mxu0 0.0
        %5524 = vmatprep.subr.mxu0 0.0
        %5525 = vmatpush1.xpose.msra.mxu0 0.0
        %5526 = vmatprep.subr.mxu0 0.0
        %5527 = vmatpush1.xpose.msra.mxu0 0.0
        %5528 = vmatprep.subr.mxu0 0.0
        %5529 = vmatpush1.xpose.msra.mxu0 0.0
        %5530 = vmatprep.subr.mxu0 0.0
        %5531 = vmatpush1.xpose.msra.mxu0 0.0
        %5532 = vmatprep.subr.mxu0 0.0
        %5533 = vmatpush1.xpose.msra.mxu0 0.0
        %5534 = vmatprep.subr.mxu0 0.0
        %5535 = vmatpush1.xpose.msra.mxu0 0.0
        %5536 = vmatprep.subr.mxu0 0.0
        %5537 = vmatpush1.xpose.msra.mxu0 0.0
        %5538 = vmatprep.subr.mxu0 0.0
        %5539 = vmatpush1.xpose.msra.mxu0 0.0
        %5540 = vmatprep.subr.mxu0 0.0
        %5541 = vmatpush1.xpose.msra.mxu0 0.0
        %5542 = vmatprep.subr.mxu0 0.0
        %5543 = vmatpush1.xpose.msra.mxu0 0.0
        %5544 = vmatprep.subr.mxu0 0.0
        %5545 = vmatpush1.xpose.msra.mxu0 0.0
        %5546 = vmatprep.subr.mxu0 0.0
        %5547 = vmatpush1.xpose.msra.mxu0 0.0
        %5548 = vmatprep.subr.mxu0 0.0
        %5549 = vmatpush1.xpose.msra.mxu0 0.0
        %5550 = vmatprep.subr.mxu0 0.0
        %5551 = vmatpush1.xpose.msra.mxu0 0.0
        %5552 = vmatprep.subr.mxu0 0.0
        %5553 = vmatpush1.xpose.msra.mxu0 0.0
        %5554 = vmatprep.subr.mxu0 0.0
        %5555 = vmatpush1.xpose.msra.mxu0 0.0
        %5556 = vmatprep.subr.mxu0 0.0
        %5557 = vmatpush1.xpose.msra.mxu0 0.0
        %5558 = vmatprep.subr.mxu0 0.0
        %5559 = vmatpush1.xpose.msra.mxu0 0.0
        %5560 = vmatprep.subr.mxu0 0.0
        %5561 = vmatpush1.xpose.msra.mxu0 0.0
        %5562 = vmatprep.subr.mxu0 0.0
        %5563 = vmatpush1.xpose.msra.mxu0 0.0
        %5564 = vmatprep.subr.mxu0 0.0
        %5565 = vmatpush1.xpose.msra.mxu0 0.0
        %5566 = vmatprep.subr.mxu0 0.0
        %5567 = vmatpush1.xpose.msra.mxu0 0.0
        %5568 = vmatprep.subr.mxu0 0.0
        %5569 = vmatpush1.xpose.msra.mxu0 0.0
        %5570 = vmatprep.subr.mxu0 0.0
        %5571 = vmatpush1.xpose.msra.mxu0 0.0
        %5572 = vmatprep.subr.mxu0 0.0
        %5573 = vmatpush1.xpose.msra.mxu0 0.0
        %5574 = vmatprep.mubr.f32.mxu0 %v1283
        %5575 = vmatmul.mubr.f32.gmra.mrb[0].mxu0 %v1281
        %v5576 = vpop.f32.mrb[0].mxu0
        %v5577 = vadd.f32 %v5507, %v5576
        %v5578 = vpop.f32.mrb[0].mxu0
        %5579 = vdwg.mxu0
        %5580 = vmatprep.subr.mxu0 %v397
        %5581 = vmatpush1.xpose.msra.mxu0 %v396
        %5582 = vmatprep.subr.mxu0 %v653
        %5583 = vmatpush1.xpose.msra.mxu0 %v652
        %5584 = vmatprep.subr.mxu0 0.0
        %5585 = vmatpush1.xpose.msra.mxu0 0.0
        %5586 = vmatprep.subr.mxu0 0.0
        %5587 = vmatpush1.xpose.msra.mxu0 0.0
        %5588 = vmatprep.subr.mxu0 0.0
        %5589 = vmatpush1.xpose.msra.mxu0 0.0
        %5590 = vmatprep.subr.mxu0 0.0
        %5591 = vmatpush1.xpose.msra.mxu0 0.0
        %5592 = vmatprep.subr.mxu0 0.0
        %5593 = vmatpush1.xpose.msra.mxu0 0.0
        %5594 = vmatprep.subr.mxu0 0.0
        %5595 = vmatpush1.xpose.msra.mxu0 0.0
        %5596 = vmatprep.subr.mxu0 0.0
        %5597 = vmatpush1.xpose.msra.mxu0 0.0
        %5598 = vmatprep.subr.mxu0 0.0
        %5599 = vmatpush1.xpose.msra.mxu0 0.0
        %5600 = vmatprep.subr.mxu0 0.0
        %5601 = vmatpush1.xpose.msra.mxu0 0.0
        %5602 = vmatprep.subr.mxu0 0.0
        %5603 = vmatpush1.xpose.msra.mxu0 0.0
        %5604 = vmatprep.subr.mxu0 0.0
        %5605 = vmatpush1.xpose.msra.mxu0 0.0
        %5606 = vmatprep.subr.mxu0 0.0
        %5607 = vmatpush1.xpose.msra.mxu0 0.0
        %5608 = vmatprep.subr.mxu0 0.0
        %5609 = vmatpush1.xpose.msra.mxu0 0.0
        %5610 = vmatprep.subr.mxu0 0.0
        %5611 = vmatpush1.xpose.msra.mxu0 0.0
        %5612 = vmatprep.subr.mxu0 0.0
        %5613 = vmatpush1.xpose.msra.mxu0 0.0
        %5614 = vmatprep.subr.mxu0 0.0
        %5615 = vmatpush1.xpose.msra.mxu0 0.0
        %5616 = vmatprep.subr.mxu0 0.0
        %5617 = vmatpush1.xpose.msra.mxu0 0.0
        %5618 = vmatprep.subr.mxu0 0.0
        %5619 = vmatpush1.xpose.msra.mxu0 0.0
        %5620 = vmatprep.subr.mxu0 0.0
        %5621 = vmatpush1.xpose.msra.mxu0 0.0
        %5622 = vmatprep.subr.mxu0 0.0
        %5623 = vmatpush1.xpose.msra.mxu0 0.0
        %5624 = vmatprep.subr.mxu0 0.0
        %5625 = vmatpush1.xpose.msra.mxu0 0.0
        %5626 = vmatprep.subr.mxu0 0.0
        %5627 = vmatpush1.xpose.msra.mxu0 0.0
        %5628 = vmatprep.subr.mxu0 0.0
        %5629 = vmatpush1.xpose.msra.mxu0 0.0
        %5630 = vmatprep.subr.mxu0 0.0
        %5631 = vmatpush1.xpose.msra.mxu0 0.0
        %5632 = vmatprep.subr.mxu0 0.0
        %5633 = vmatpush1.xpose.msra.mxu0 0.0
        %5634 = vmatprep.subr.mxu0 0.0
        %5635 = vmatpush1.xpose.msra.mxu0 0.0
        %5636 = vmatprep.subr.mxu0 0.0
        %5637 = vmatpush1.xpose.msra.mxu0 0.0
        %5638 = vmatprep.subr.mxu0 0.0
        %5639 = vmatpush1.xpose.msra.mxu0 0.0
        %5640 = vmatprep.subr.mxu0 0.0
        %5641 = vmatpush1.xpose.msra.mxu0 0.0
        %5642 = vmatprep.subr.mxu0 0.0
        %5643 = vmatpush1.xpose.msra.mxu0 0.0
        %5644 = vmatprep.mubr.f32.mxu0 %v1299
        %5645 = vmatmul.mubr.f32.gmra.mrb[0].mxu0 %v1291
        %v5646 = vpop.f32.mrb[0].mxu0
        %v5647 = vadd.f32 %v5577, %v5646
        %v5648 = vpop.f32.mrb[0].mxu0
        %5649 = vdwg.mxu0
        %5650 = vmatprep.subr.mxu0 %v399
        %5651 = vmatpush1.xpose.msra.mxu0 %v398
        %5652 = vmatprep.subr.mxu0 %v655
        %5653 = vmatpush1.xpose.msra.mxu0 %v654
        %5654 = vmatprep.subr.mxu0 0.0
        %5655 = vmatpush1.xpose.msra.mxu0 0.0
        %5656 = vmatprep.subr.mxu0 0.0
        %5657 = vmatpush1.xpose.msra.mxu0 0.0
        %5658 = vmatprep.subr.mxu0 0.0
        %5659 = vmatpush1.xpose.msra.mxu0 0.0
        %5660 = vmatprep.subr.mxu0 0.0
        %5661 = vmatpush1.xpose.msra.mxu0 0.0
        %5662 = vmatprep.subr.mxu0 0.0
        %5663 = vmatpush1.xpose.msra.mxu0 0.0
        %5664 = vmatprep.subr.mxu0 0.0
        %5665 = vmatpush1.xpose.msra.mxu0 0.0
        %5666 = vmatprep.subr.mxu0 0.0
        %5667 = vmatpush1.xpose.msra.mxu0 0.0
        %5668 = vmatprep.subr.mxu0 0.0
        %5669 = vmatpush1.xpose.msra.mxu0 0.0
        %5670 = vmatprep.subr.mxu0 0.0
        %5671 = vmatpush1.xpose.msra.mxu0 0.0
        %5672 = vmatprep.subr.mxu0 0.0
        %5673 = vmatpush1.xpose.msra.mxu0 0.0
        %5674 = vmatprep.subr.mxu0 0.0
        %5675 = vmatpush1.xpose.msra.mxu0 0.0
        %5676 = vmatprep.subr.mxu0 0.0
        %5677 = vmatpush1.xpose.msra.mxu0 0.0
        %5678 = vmatprep.subr.mxu0 0.0
        %5679 = vmatpush1.xpose.msra.mxu0 0.0
        %5680 = vmatprep.subr.mxu0 0.0
        %5681 = vmatpush1.xpose.msra.mxu0 0.0
        %5682 = vmatprep.subr.mxu0 0.0
        %5683 = vmatpush1.xpose.msra.mxu0 0.0
        %5684 = vmatprep.subr.mxu0 0.0
        %5685 = vmatpush1.xpose.msra.mxu0 0.0
        %5686 = vmatprep.subr.mxu0 0.0
        %5687 = vmatpush1.xpose.msra.mxu0 0.0
        %5688 = vmatprep.subr.mxu0 0.0
        %5689 = vmatpush1.xpose.msra.mxu0 0.0
        %5690 = vmatprep.subr.mxu0 0.0
        %5691 = vmatpush1.xpose.msra.mxu0 0.0
        %5692 = vmatprep.subr.mxu0 0.0
        %5693 = vmatpush1.xpose.msra.mxu0 0.0
        %5694 = vmatprep.subr.mxu0 0.0
        %5695 = vmatpush1.xpose.msra.mxu0 0.0
        %5696 = vmatprep.subr.mxu0 0.0
        %5697 = vmatpush1.xpose.msra.mxu0 0.0
        %5698 = vmatprep.subr.mxu0 0.0
        %5699 = vmatpush1.xpose.msra.mxu0 0.0
        %5700 = vmatprep.subr.mxu0 0.0
        %5701 = vmatpush1.xpose.msra.mxu0 0.0
        %5702 = vmatprep.subr.mxu0 0.0
        %5703 = vmatpush1.xpose.msra.mxu0 0.0
        %5704 = vmatprep.subr.mxu0 0.0
        %5705 = vmatpush1.xpose.msra.mxu0 0.0
        %5706 = vmatprep.subr.mxu0 0.0
        %5707 = vmatpush1.xpose.msra.mxu0 0.0
        %5708 = vmatprep.subr.mxu0 0.0
        %5709 = vmatpush1.xpose.msra.mxu0 0.0
        %5710 = vmatprep.subr.mxu0 0.0
        %5711 = vmatpush1.xpose.msra.mxu0 0.0
        %5712 = vmatprep.subr.mxu0 0.0
        %5713 = vmatpush1.xpose.msra.mxu0 0.0
        %5714 = vmatprep.mubr.f32.mxu0 %v1300
        %5715 = vmatmul.mubr.f32.gmra.mrb[0].mxu0 %v1298
        %v5716 = vpop.f32.mrb[0].mxu0
        %v5717 = vadd.f32 %v5647, %v5716
        %v5718 = vpop.f32.mrb[0].mxu0
        %5719 = vdwg.mxu0
        %5720 = vmatprep.subr.mxu0 %v401
        %5721 = vmatpush1.xpose.msra.mxu0 %v400
        %5722 = vmatprep.subr.mxu0 %v657
        %5723 = vmatpush1.xpose.msra.mxu0 %v656
        %5724 = vmatprep.subr.mxu0 0.0
        %5725 = vmatpush1.xpose.msra.mxu0 0.0
        %5726 = vmatprep.subr.mxu0 0.0
        %5727 = vmatpush1.xpose.msra.mxu0 0.0
        %5728 = vmatprep.subr.mxu0 0.0
        %5729 = vmatpush1.xpose.msra.mxu0 0.0
        %5730 = vmatprep.subr.mxu0 0.0
        %5731 = vmatpush1.xpose.msra.mxu0 0.0
        %5732 = vmatprep.subr.mxu0 0.0
        %5733 = vmatpush1.xpose.msra.mxu0 0.0
        %5734 = vmatprep.subr.mxu0 0.0
        %5735 = vmatpush1.xpose.msra.mxu0 0.0
        %5736 = vmatprep.subr.mxu0 0.0
        %5737 = vmatpush1.xpose.msra.mxu0 0.0
        %5738 = vmatprep.subr.mxu0 0.0
        %5739 = vmatpush1.xpose.msra.mxu0 0.0
        %5740 = vmatprep.subr.mxu0 0.0
        %5741 = vmatpush1.xpose.msra.mxu0 0.0
        %5742 = vmatprep.subr.mxu0 0.0
        %5743 = vmatpush1.xpose.msra.mxu0 0.0
        %5744 = vmatprep.subr.mxu0 0.0
        %5745 = vmatpush1.xpose.msra.mxu0 0.0
        %5746 = vmatprep.subr.mxu0 0.0
        %5747 = vmatpush1.xpose.msra.mxu0 0.0
        %5748 = vmatprep.subr.mxu0 0.0
        %5749 = vmatpush1.xpose.msra.mxu0 0.0
        %5750 = vmatprep.subr.mxu0 0.0
        %5751 = vmatpush1.xpose.msra.mxu0 0.0
        %5752 = vmatprep.subr.mxu0 0.0
        %5753 = vmatpush1.xpose.msra.mxu0 0.0
        %5754 = vmatprep.subr.mxu0 0.0
        %5755 = vmatpush1.xpose.msra.mxu0 0.0
        %5756 = vmatprep.subr.mxu0 0.0
        %5757 = vmatpush1.xpose.msra.mxu0 0.0
        %5758 = vmatprep.subr.mxu0 0.0
        %5759 = vmatpush1.xpose.msra.mxu0 0.0
        %5760 = vmatprep.subr.mxu0 0.0
        %5761 = vmatpush1.xpose.msra.mxu0 0.0
        %5762 = vmatprep.subr.mxu0 0.0
        %5763 = vmatpush1.xpose.msra.mxu0 0.0
        %5764 = vmatprep.subr.mxu0 0.0
        %5765 = vmatpush1.xpose.msra.mxu0 0.0
        %5766 = vmatprep.subr.mxu0 0.0
        %5767 = vmatpush1.xpose.msra.mxu0 0.0
        %5768 = vmatprep.subr.mxu0 0.0
        %5769 = vmatpush1.xpose.msra.mxu0 0.0
        %5770 = vmatprep.subr.mxu0 0.0
        %5771 = vmatpush1.xpose.msra.mxu0 0.0
        %5772 = vmatprep.subr.mxu0 0.0
        %5773 = vmatpush1.xpose.msra.mxu0 0.0
        %5774 = vmatprep.subr.mxu0 0.0
        %5775 = vmatpush1.xpose.msra.mxu0 0.0
        %5776 = vmatprep.subr.mxu0 0.0
        %5777 = vmatpush1.xpose.msra.mxu0 0.0
        %5778 = vmatprep.subr.mxu0 0.0
        %5779 = vmatpush1.xpose.msra.mxu0 0.0
        %5780 = vmatprep.subr.mxu0 0.0
        %5781 = vmatpush1.xpose.msra.mxu0 0.0
        %5782 = vmatprep.subr.mxu0 0.0
        %5783 = vmatpush1.xpose.msra.mxu0 0.0
        %5784 = vmatprep.mubr.f32.mxu0 %v1316
        %5785 = vmatmul.mubr.f32.gmra.mrb[0].mxu0 %v1308
        %v5786 = vpop.f32.mrb[0].mxu0
        %v5787 = vadd.f32 %v5717, %v5786
        %v5788 = vpop.f32.mrb[0].mxu0
        %5789 = vdwg.mxu0
        %5790 = vmatprep.subr.mxu0 %v403
        %5791 = vmatpush1.xpose.msra.mxu0 %v402
        %5792 = vmatprep.subr.mxu0 %v659
        %5793 = vmatpush1.xpose.msra.mxu0 %v658
        %5794 = vmatprep.subr.mxu0 0.0
        %5795 = vmatpush1.xpose.msra.mxu0 0.0
        %5796 = vmatprep.subr.mxu0 0.0
        %5797 = vmatpush1.xpose.msra.mxu0 0.0
        %5798 = vmatprep.subr.mxu0 0.0
        %5799 = vmatpush1.xpose.msra.mxu0 0.0
        %5800 = vmatprep.subr.mxu0 0.0
        %5801 = vmatpush1.xpose.msra.mxu0 0.0
        %5802 = vmatprep.subr.mxu0 0.0
        %5803 = vmatpush1.xpose.msra.mxu0 0.0
        %5804 = vmatprep.subr.mxu0 0.0
        %5805 = vmatpush1.xpose.msra.mxu0 0.0
        %5806 = vmatprep.subr.mxu0 0.0
        %5807 = vmatpush1.xpose.msra.mxu0 0.0
        %5808 = vmatprep.subr.mxu0 0.0
        %5809 = vmatpush1.xpose.msra.mxu0 0.0
        %5810 = vmatprep.subr.mxu0 0.0
        %5811 = vmatpush1.xpose.msra.mxu0 0.0
        %5812 = vmatprep.subr.mxu0 0.0
        %5813 = vmatpush1.xpose.msra.mxu0 0.0
        %5814 = vmatprep.subr.mxu0 0.0
        %5815 = vmatpush1.xpose.msra.mxu0 0.0
        %5816 = vmatprep.subr.mxu0 0.0
        %5817 = vmatpush1.xpose.msra.mxu0 0.0
        %5818 = vmatprep.subr.mxu0 0.0
        %5819 = vmatpush1.xpose.msra.mxu0 0.0
        %5820 = vmatprep.subr.mxu0 0.0
        %5821 = vmatpush1.xpose.msra.mxu0 0.0
        %5822 = vmatprep.subr.mxu0 0.0
        %5823 = vmatpush1.xpose.msra.mxu0 0.0
        %5824 = vmatprep.subr.mxu0 0.0
        %5825 = vmatpush1.xpose.msra.mxu0 0.0
        %5826 = vmatprep.subr.mxu0 0.0
        %5827 = vmatpush1.xpose.msra.mxu0 0.0
        %5828 = vmatprep.subr.mxu0 0.0
        %5829 = vmatpush1.xpose.msra.mxu0 0.0
        %5830 = vmatprep.subr.mxu0 0.0
        %5831 = vmatpush1.xpose.msra.mxu0 0.0
        %5832 = vmatprep.subr.mxu0 0.0
        %5833 = vmatpush1.xpose.msra.mxu0 0.0
        %5834 = vmatprep.subr.mxu0 0.0
        %5835 = vmatpush1.xpose.msra.mxu0 0.0
        %5836 = vmatprep.subr.mxu0 0.0
        %5837 = vmatpush1.xpose.msra.mxu0 0.0
        %5838 = vmatprep.subr.mxu0 0.0
        %5839 = vmatpush1.xpose.msra.mxu0 0.0
        %5840 = vmatprep.subr.mxu0 0.0
        %5841 = vmatpush1.xpose.msra.mxu0 0.0
        %5842 = vmatprep.subr.mxu0 0.0
        %5843 = vmatpush1.xpose.msra.mxu0 0.0
        %5844 = vmatprep.subr.mxu0 0.0
        %5845 = vmatpush1.xpose.msra.mxu0 0.0
        %5846 = vmatprep.subr.mxu0 0.0
        %5847 = vmatpush1.xpose.msra.mxu0 0.0
        %5848 = vmatprep.subr.mxu0 0.0
        %5849 = vmatpush1.xpose.msra.mxu0 0.0
        %5850 = vmatprep.subr.mxu0 0.0
        %5851 = vmatpush1.xpose.msra.mxu0 0.0
        %5852 = vmatprep.subr.mxu0 0.0
        %5853 = vmatpush1.xpose.msra.mxu0 0.0
        %5854 = vmatprep.mubr.f32.mxu0 %v1317
        %5855 = vmatmul.mubr.f32.gmra.mrb[0].mxu0 %v1315
        %v5856 = vpop.f32.mrb[0].mxu0
        %v5857 = vadd.f32 %v5787, %v5856
        %v5858 = vpop.f32.mrb[0].mxu0
        %5859 = vdwg.mxu0
        %5860 = vmatprep.subr.mxu0 %v405
        %5861 = vmatpush1.xpose.msra.mxu0 %v404
        %5862 = vmatprep.subr.mxu0 %v661
        %5863 = vmatpush1.xpose.msra.mxu0 %v660
        %5864 = vmatprep.subr.mxu0 0.0
        %5865 = vmatpush1.xpose.msra.mxu0 0.0
        %5866 = vmatprep.subr.mxu0 0.0
        %5867 = vmatpush1.xpose.msra.mxu0 0.0
        %5868 = vmatprep.subr.mxu0 0.0
        %5869 = vmatpush1.xpose.msra.mxu0 0.0
        %5870 = vmatprep.subr.mxu0 0.0
        %5871 = vmatpush1.xpose.msra.mxu0 0.0
        %5872 = vmatprep.subr.mxu0 0.0
        %5873 = vmatpush1.xpose.msra.mxu0 0.0
        %5874 = vmatprep.subr.mxu0 0.0
        %5875 = vmatpush1.xpose.msra.mxu0 0.0
        %5876 = vmatprep.subr.mxu0 0.0
        %5877 = vmatpush1.xpose.msra.mxu0 0.0
        %5878 = vmatprep.subr.mxu0 0.0
        %5879 = vmatpush1.xpose.msra.mxu0 0.0
        %5880 = vmatprep.subr.mxu0 0.0
        %5881 = vmatpush1.xpose.msra.mxu0 0.0
        %5882 = vmatprep.subr.mxu0 0.0
        %5883 = vmatpush1.xpose.msra.mxu0 0.0
        %5884 = vmatprep.subr.mxu0 0.0
        %5885 = vmatpush1.xpose.msra.mxu0 0.0
        %5886 = vmatprep.subr.mxu0 0.0
        %5887 = vmatpush1.xpose.msra.mxu0 0.0
        %5888 = vmatprep.subr.mxu0 0.0
        %5889 = vmatpush1.xpose.msra.mxu0 0.0
        %5890 = vmatprep.subr.mxu0 0.0
        %5891 = vmatpush1.xpose.msra.mxu0 0.0
        %5892 = vmatprep.subr.mxu0 0.0
        %5893 = vmatpush1.xpose.msra.mxu0 0.0
        %5894 = vmatprep.subr.mxu0 0.0
        %5895 = vmatpush1.xpose.msra.mxu0 0.0
        %5896 = vmatprep.subr.mxu0 0.0
        %5897 = vmatpush1.xpose.msra.mxu0 0.0
        %5898 = vmatprep.subr.mxu0 0.0
        %5899 = vmatpush1.xpose.msra.mxu0 0.0
        %5900 = vmatprep.subr.mxu0 0.0
        %5901 = vmatpush1.xpose.msra.mxu0 0.0
        %5902 = vmatprep.subr.mxu0 0.0
        %5903 = vmatpush1.xpose.msra.mxu0 0.0
        %5904 = vmatprep.subr.mxu0 0.0
        %5905 = vmatpush1.xpose.msra.mxu0 0.0
        %5906 = vmatprep.subr.mxu0 0.0
        %5907 = vmatpush1.xpose.msra.mxu0 0.0
        %5908 = vmatprep.subr.mxu0 0.0
        %5909 = vmatpush1.xpose.msra.mxu0 0.0
        %5910 = vmatprep.subr.mxu0 0.0
        %5911 = vmatpush1.xpose.msra.mxu0 0.0
        %5912 = vmatprep.subr.mxu0 0.0
        %5913 = vmatpush1.xpose.msra.mxu0 0.0
        %5914 = vmatprep.subr.mxu0 0.0
        %5915 = vmatpush1.xpose.msra.mxu0 0.0
        %5916 = vmatprep.subr.mxu0 0.0
        %5917 = vmatpush1.xpose.msra.mxu0 0.0
        %5918 = vmatprep.subr.mxu0 0.0
        %5919 = vmatpush1.xpose.msra.mxu0 0.0
        %5920 = vmatprep.subr.mxu0 0.0
        %5921 = vmatpush1.xpose.msra.mxu0 0.0
        %5922 = vmatprep.subr.mxu0 0.0
        %5923 = vmatpush1.xpose.msra.mxu0 0.0
        %5924 = vmatprep.mubr.f32.mxu0 %v1333
        %5925 = vmatmul.mubr.f32.gmra.mrb[0].mxu0 %v1325
        %v5926 = vpop.f32.mrb[0].mxu0
        %v5927 = vadd.f32 %v5857, %v5926
        %v5928 = vpop.f32.mrb[0].mxu0
        %5929 = vdwg.mxu0
        %5930 = vmatprep.subr.mxu0 %v407
        %5931 = vmatpush1.xpose.msra.mxu0 %v406
        %5932 = vmatprep.subr.mxu0 %v663
        %5933 = vmatpush1.xpose.msra.mxu0 %v662
        %5934 = vmatprep.subr.mxu0 0.0
        %5935 = vmatpush1.xpose.msra.mxu0 0.0
        %5936 = vmatprep.subr.mxu0 0.0
        %5937 = vmatpush1.xpose.msra.mxu0 0.0
        %5938 = vmatprep.subr.mxu0 0.0
        %5939 = vmatpush1.xpose.msra.mxu0 0.0
        %5940 = vmatprep.subr.mxu0 0.0
        %5941 = vmatpush1.xpose.msra.mxu0 0.0
        %5942 = vmatprep.subr.mxu0 0.0
        %5943 = vmatpush1.xpose.msra.mxu0 0.0
        %5944 = vmatprep.subr.mxu0 0.0
        %5945 = vmatpush1.xpose.msra.mxu0 0.0
        %5946 = vmatprep.subr.mxu0 0.0
        %5947 = vmatpush1.xpose.msra.mxu0 0.0
        %5948 = vmatprep.subr.mxu0 0.0
        %5949 = vmatpush1.xpose.msra.mxu0 0.0
        %5950 = vmatprep.subr.mxu0 0.0
        %5951 = vmatpush1.xpose.msra.mxu0 0.0
        %5952 = vmatprep.subr.mxu0 0.0
        %5953 = vmatpush1.xpose.msra.mxu0 0.0
        %5954 = vmatprep.subr.mxu0 0.0
        %5955 = vmatpush1.xpose.msra.mxu0 0.0
        %5956 = vmatprep.subr.mxu0 0.0
        %5957 = vmatpush1.xpose.msra.mxu0 0.0
        %5958 = vmatprep.subr.mxu0 0.0
        %5959 = vmatpush1.xpose.msra.mxu0 0.0
        %5960 = vmatprep.subr.mxu0 0.0
        %5961 = vmatpush1.xpose.msra.mxu0 0.0
        %5962 = vmatprep.subr.mxu0 0.0
        %5963 = vmatpush1.xpose.msra.mxu0 0.0
        %5964 = vmatprep.subr.mxu0 0.0
        %5965 = vmatpush1.xpose.msra.mxu0 0.0
        %5966 = vmatprep.subr.mxu0 0.0
        %5967 = vmatpush1.xpose.msra.mxu0 0.0
        %5968 = vmatprep.subr.mxu0 0.0
        %5969 = vmatpush1.xpose.msra.mxu0 0.0
        %5970 = vmatprep.subr.mxu0 0.0
        %5971 = vmatpush1.xpose.msra.mxu0 0.0
        %5972 = vmatprep.subr.mxu0 0.0
        %5973 = vmatpush1.xpose.msra.mxu0 0.0
        %5974 = vmatprep.subr.mxu0 0.0
        %5975 = vmatpush1.xpose.msra.mxu0 0.0
        %5976 = vmatprep.subr.mxu0 0.0
        %5977 = vmatpush1.xpose.msra.mxu0 0.0
        %5978 = vmatprep.subr.mxu0 0.0
        %5979 = vmatpush1.xpose.msra.mxu0 0.0
        %5980 = vmatprep.subr.mxu0 0.0
        %5981 = vmatpush1.xpose.msra.mxu0 0.0
        %5982 = vmatprep.subr.mxu0 0.0
        %5983 = vmatpush1.xpose.msra.mxu0 0.0
        %5984 = vmatprep.subr.mxu0 0.0
        %5985 = vmatpush1.xpose.msra.mxu0 0.0
        %5986 = vmatprep.subr.mxu0 0.0
        %5987 = vmatpush1.xpose.msra.mxu0 0.0
        %5988 = vmatprep.subr.mxu0 0.0
        %5989 = vmatpush1.xpose.msra.mxu0 0.0
        %5990 = vmatprep.subr.mxu0 0.0
        %5991 = vmatpush1.xpose.msra.mxu0 0.0
        %5992 = vmatprep.subr.mxu0 0.0
        %5993 = vmatpush1.xpose.msra.mxu0 0.0
        %5994 = vmatprep.mubr.f32.mxu0 %v1334
        %5995 = vmatmul.mubr.f32.gmra.mrb[0].mxu0 %v1332
        %v5996 = vpop.f32.mrb[0].mxu0
        %v5997 = vadd.f32 %v5927, %v5996
        %v5998 = vpop.f32.mrb[0].mxu0
        %5999 = vdwg.mxu0
        %6000 = vmatprep.subr.mxu0 %v409
        %6001 = vmatpush1.xpose.msra.mxu0 %v408
        %6002 = vmatprep.subr.mxu0 %v665
        %6003 = vmatpush1.xpose.msra.mxu0 %v664
        %6004 = vmatprep.subr.mxu0 0.0
        %6005 = vmatpush1.xpose.msra.mxu0 0.0
        %6006 = vmatprep.subr.mxu0 0.0
        %6007 = vmatpush1.xpose.msra.mxu0 0.0
        %6008 = vmatprep.subr.mxu0 0.0
        %6009 = vmatpush1.xpose.msra.mxu0 0.0
        %6010 = vmatprep.subr.mxu0 0.0
        %6011 = vmatpush1.xpose.msra.mxu0 0.0
        %6012 = vmatprep.subr.mxu0 0.0
        %6013 = vmatpush1.xpose.msra.mxu0 0.0
        %6014 = vmatprep.subr.mxu0 0.0
        %6015 = vmatpush1.xpose.msra.mxu0 0.0
        %6016 = vmatprep.subr.mxu0 0.0
        %6017 = vmatpush1.xpose.msra.mxu0 0.0
        %6018 = vmatprep.subr.mxu0 0.0
        %6019 = vmatpush1.xpose.msra.mxu0 0.0
        %6020 = vmatprep.subr.mxu0 0.0
        %6021 = vmatpush1.xpose.msra.mxu0 0.0
        %6022 = vmatprep.subr.mxu0 0.0
        %6023 = vmatpush1.xpose.msra.mxu0 0.0
        %6024 = vmatprep.subr.mxu0 0.0
        %6025 = vmatpush1.xpose.msra.mxu0 0.0
        %6026 = vmatprep.subr.mxu0 0.0
        %6027 = vmatpush1.xpose.msra.mxu0 0.0
        %6028 = vmatprep.subr.mxu0 0.0
        %6029 = vmatpush1.xpose.msra.mxu0 0.0
        %6030 = vmatprep.subr.mxu0 0.0
        %6031 = vmatpush1.xpose.msra.mxu0 0.0
        %6032 = vmatprep.subr.mxu0 0.0
        %6033 = vmatpush1.xpose.msra.mxu0 0.0
        %6034 = vmatprep.subr.mxu0 0.0
        %6035 = vmatpush1.xpose.msra.mxu0 0.0
        %6036 = vmatprep.subr.mxu0 0.0
        %6037 = vmatpush1.xpose.msra.mxu0 0.0
        %6038 = vmatprep.subr.mxu0 0.0
        %6039 = vmatpush1.xpose.msra.mxu0 0.0
        %6040 = vmatprep.subr.mxu0 0.0
        %6041 = vmatpush1.xpose.msra.mxu0 0.0
        %6042 = vmatprep.subr.mxu0 0.0
        %6043 = vmatpush1.xpose.msra.mxu0 0.0
        %6044 = vmatprep.subr.mxu0 0.0
        %6045 = vmatpush1.xpose.msra.mxu0 0.0
        %6046 = vmatprep.subr.mxu0 0.0
        %6047 = vmatpush1.xpose.msra.mxu0 0.0
        %6048 = vmatprep.subr.mxu0 0.0
        %6049 = vmatpush1.xpose.msra.mxu0 0.0
        %6050 = vmatprep.subr.mxu0 0.0
        %6051 = vmatpush1.xpose.msra.mxu0 0.0
        %6052 = vmatprep.subr.mxu0 0.0
        %6053 = vmatpush1.xpose.msra.mxu0 0.0
        %6054 = vmatprep.subr.mxu0 0.0
        %6055 = vmatpush1.xpose.msra.mxu0 0.0
        %6056 = vmatprep.subr.mxu0 0.0
        %6057 = vmatpush1.xpose.msra.mxu0 0.0
        %6058 = vmatprep.subr.mxu0 0.0
        %6059 = vmatpush1.xpose.msra.mxu0 0.0
        %6060 = vmatprep.subr.mxu0 0.0
        %6061 = vmatpush1.xpose.msra.mxu0 0.0
        %6062 = vmatprep.subr.mxu0 0.0
        %6063 = vmatpush1.xpose.msra.mxu0 0.0
        %6064 = vmatprep.mubr.f32.mxu0 %v1350
        %6065 = vmatmul.mubr.f32.gmra.mrb[0].mxu0 %v1342
        %v6066 = vpop.f32.mrb[0].mxu0
        %v6067 = vadd.f32 %v5997, %v6066
        %v6068 = vpop.f32.mrb[0].mxu0
        %6069 = vdwg.mxu0
        %6070 = vmatprep.subr.mxu0 %v411
        %6071 = vmatpush1.xpose.msra.mxu0 %v410
        %6072 = vmatprep.subr.mxu0 %v667
        %6073 = vmatpush1.xpose.msra.mxu0 %v666
        %6074 = vmatprep.subr.mxu0 0.0
        %6075 = vmatpush1.xpose.msra.mxu0 0.0
        %6076 = vmatprep.subr.mxu0 0.0
        %6077 = vmatpush1.xpose.msra.mxu0 0.0
        %6078 = vmatprep.subr.mxu0 0.0
        %6079 = vmatpush1.xpose.msra.mxu0 0.0
        %6080 = vmatprep.subr.mxu0 0.0
        %6081 = vmatpush1.xpose.msra.mxu0 0.0
        %6082 = vmatprep.subr.mxu0 0.0
        %6083 = vmatpush1.xpose.msra.mxu0 0.0
        %6084 = vmatprep.subr.mxu0 0.0
        %6085 = vmatpush1.xpose.msra.mxu0 0.0
        %6086 = vmatprep.subr.mxu0 0.0
        %6087 = vmatpush1.xpose.msra.mxu0 0.0
        %6088 = vmatprep.subr.mxu0 0.0
        %6089 = vmatpush1.xpose.msra.mxu0 0.0
        %6090 = vmatprep.subr.mxu0 0.0
        %6091 = vmatpush1.xpose.msra.mxu0 0.0
        %6092 = vmatprep.subr.mxu0 0.0
        %6093 = vmatpush1.xpose.msra.mxu0 0.0
        %6094 = vmatprep.subr.mxu0 0.0
        %6095 = vmatpush1.xpose.msra.mxu0 0.0
        %6096 = vmatprep.subr.mxu0 0.0
        %6097 = vmatpush1.xpose.msra.mxu0 0.0
        %6098 = vmatprep.subr.mxu0 0.0
        %6099 = vmatpush1.xpose.msra.mxu0 0.0
        %6100 = vmatprep.subr.mxu0 0.0
        %6101 = vmatpush1.xpose.msra.mxu0 0.0
        %6102 = vmatprep.subr.mxu0 0.0
        %6103 = vmatpush1.xpose.msra.mxu0 0.0
        %6104 = vmatprep.subr.mxu0 0.0
        %6105 = vmatpush1.xpose.msra.mxu0 0.0
        %6106 = vmatprep.subr.mxu0 0.0
        %6107 = vmatpush1.xpose.msra.mxu0 0.0
        %6108 = vmatprep.subr.mxu0 0.0
        %6109 = vmatpush1.xpose.msra.mxu0 0.0
        %6110 = vmatprep.subr.mxu0 0.0
        %6111 = vmatpush1.xpose.msra.mxu0 0.0
        %6112 = vmatprep.subr.mxu0 0.0
        %6113 = vmatpush1.xpose.msra.mxu0 0.0
        %6114 = vmatprep.subr.mxu0 0.0
        %6115 = vmatpush1.xpose.msra.mxu0 0.0
        %6116 = vmatprep.subr.mxu0 0.0
        %6117 = vmatpush1.xpose.msra.mxu0 0.0
        %6118 = vmatprep.subr.mxu0 0.0
        %6119 = vmatpush1.xpose.msra.mxu0 0.0
        %6120 = vmatprep.subr.mxu0 0.0
        %6121 = vmatpush1.xpose.msra.mxu0 0.0
        %6122 = vmatprep.subr.mxu0 0.0
        %6123 = vmatpush1.xpose.msra.mxu0 0.0
        %6124 = vmatprep.subr.mxu0 0.0
        %6125 = vmatpush1.xpose.msra.mxu0 0.0
        %6126 = vmatprep.subr.mxu0 0.0
        %6127 = vmatpush1.xpose.msra.mxu0 0.0
        %6128 = vmatprep.subr.mxu0 0.0
        %6129 = vmatpush1.xpose.msra.mxu0 0.0
        %6130 = vmatprep.subr.mxu0 0.0
        %6131 = vmatpush1.xpose.msra.mxu0 0.0
        %6132 = vmatprep.subr.mxu0 0.0
        %6133 = vmatpush1.xpose.msra.mxu0 0.0
        %6134 = vmatprep.mubr.f32.mxu0 %v1351
        %6135 = vmatmul.mubr.f32.gmra.mrb[0].mxu0 %v1349
        %v6136 = vpop.f32.mrb[0].mxu0
        %v6137 = vadd.f32 %v6067, %v6136
        %v6138 = vpop.f32.mrb[0].mxu0
        %6139 = vdwg.mxu0
        %6140 = vmatprep.subr.mxu0 %v413
        %6141 = vmatpush1.xpose.msra.mxu0 %v412
        %6142 = vmatprep.subr.mxu0 %v669
        %6143 = vmatpush1.xpose.msra.mxu0 %v668
        %6144 = vmatprep.subr.mxu0 0.0
        %6145 = vmatpush1.xpose.msra.mxu0 0.0
        %6146 = vmatprep.subr.mxu0 0.0
        %6147 = vmatpush1.xpose.msra.mxu0 0.0
        %6148 = vmatprep.subr.mxu0 0.0
        %6149 = vmatpush1.xpose.msra.mxu0 0.0
        %6150 = vmatprep.subr.mxu0 0.0
        %6151 = vmatpush1.xpose.msra.mxu0 0.0
        %6152 = vmatprep.subr.mxu0 0.0
        %6153 = vmatpush1.xpose.msra.mxu0 0.0
        %6154 = vmatprep.subr.mxu0 0.0
        %6155 = vmatpush1.xpose.msra.mxu0 0.0
        %6156 = vmatprep.subr.mxu0 0.0
        %6157 = vmatpush1.xpose.msra.mxu0 0.0
        %6158 = vmatprep.subr.mxu0 0.0
        %6159 = vmatpush1.xpose.msra.mxu0 0.0
        %6160 = vmatprep.subr.mxu0 0.0
        %6161 = vmatpush1.xpose.msra.mxu0 0.0
        %6162 = vmatprep.subr.mxu0 0.0
        %6163 = vmatpush1.xpose.msra.mxu0 0.0
        %6164 = vmatprep.subr.mxu0 0.0
        %6165 = vmatpush1.xpose.msra.mxu0 0.0
        %6166 = vmatprep.subr.mxu0 0.0
        %6167 = vmatpush1.xpose.msra.mxu0 0.0
        %6168 = vmatprep.subr.mxu0 0.0
        %6169 = vmatpush1.xpose.msra.mxu0 0.0
        %6170 = vmatprep.subr.mxu0 0.0
        %6171 = vmatpush1.xpose.msra.mxu0 0.0
        %6172 = vmatprep.subr.mxu0 0.0
        %6173 = vmatpush1.xpose.msra.mxu0 0.0
        %6174 = vmatprep.subr.mxu0 0.0
        %6175 = vmatpush1.xpose.msra.mxu0 0.0
        %6176 = vmatprep.subr.mxu0 0.0
        %6177 = vmatpush1.xpose.msra.mxu0 0.0
        %6178 = vmatprep.subr.mxu0 0.0
        %6179 = vmatpush1.xpose.msra.mxu0 0.0
        %6180 = vmatprep.subr.mxu0 0.0
        %6181 = vmatpush1.xpose.msra.mxu0 0.0
        %6182 = vmatprep.subr.mxu0 0.0
        %6183 = vmatpush1.xpose.msra.mxu0 0.0
        %6184 = vmatprep.subr.mxu0 0.0
        %6185 = vmatpush1.xpose.msra.mxu0 0.0
        %6186 = vmatprep.subr.mxu0 0.0
        %6187 = vmatpush1.xpose.msra.mxu0 0.0
        %6188 = vmatprep.subr.mxu0 0.0
        %6189 = vmatpush1.xpose.msra.mxu0 0.0
        %6190 = vmatprep.subr.mxu0 0.0
        %6191 = vmatpush1.xpose.msra.mxu0 0.0
        %6192 = vmatprep.subr.mxu0 0.0
        %6193 = vmatpush1.xpose.msra.mxu0 0.0
        %6194 = vmatprep.subr.mxu0 0.0
        %6195 = vmatpush1.xpose.msra.mxu0 0.0
        %6196 = vmatprep.subr.mxu0 0.0
        %6197 = vmatpush1.xpose.msra.mxu0 0.0
        %6198 = vmatprep.subr.mxu0 0.0
        %6199 = vmatpush1.xpose.msra.mxu0 0.0
        %6200 = vmatprep.subr.mxu0 0.0
        %6201 = vmatpush1.xpose.msra.mxu0 0.0
        %6202 = vmatprep.subr.mxu0 0.0
        %6203 = vmatpush1.xpose.msra.mxu0 0.0
        %6204 = vmatprep.mubr.f32.mxu0 %v1367
        %6205 = vmatmul.mubr.f32.gmra.mrb[0].mxu0 %v1359
        %v6206 = vpop.f32.mrb[0].mxu0
        %v6207 = vadd.f32 %v6137, %v6206
        %v6208 = vpop.f32.mrb[0].mxu0
        %6209 = vdwg.mxu0
        %6210 = vmatprep.subr.mxu0 %v415
        %6211 = vmatpush1.xpose.msra.mxu0 %v414
        %6212 = vmatprep.subr.mxu0 %v671
        %6213 = vmatpush1.xpose.msra.mxu0 %v670
        %6214 = vmatprep.subr.mxu0 0.0
        %6215 = vmatpush1.xpose.msra.mxu0 0.0
        %6216 = vmatprep.subr.mxu0 0.0
        %6217 = vmatpush1.xpose.msra.mxu0 0.0
        %6218 = vmatprep.subr.mxu0 0.0
        %6219 = vmatpush1.xpose.msra.mxu0 0.0
        %6220 = vmatprep.subr.mxu0 0.0
        %6221 = vmatpush1.xpose.msra.mxu0 0.0
        %6222 = vmatprep.subr.mxu0 0.0
        %6223 = vmatpush1.xpose.msra.mxu0 0.0
        %6224 = vmatprep.subr.mxu0 0.0
        %6225 = vmatpush1.xpose.msra.mxu0 0.0
        %6226 = vmatprep.subr.mxu0 0.0
        %6227 = vmatpush1.xpose.msra.mxu0 0.0
        %6228 = vmatprep.subr.mxu0 0.0
        %6229 = vmatpush1.xpose.msra.mxu0 0.0
        %6230 = vmatprep.subr.mxu0 0.0
        %6231 = vmatpush1.xpose.msra.mxu0 0.0
        %6232 = vmatprep.subr.mxu0 0.0
        %6233 = vmatpush1.xpose.msra.mxu0 0.0
        %6234 = vmatprep.subr.mxu0 0.0
        %6235 = vmatpush1.xpose.msra.mxu0 0.0
        %6236 = vmatprep.subr.mxu0 0.0
        %6237 = vmatpush1.xpose.msra.mxu0 0.0
        %6238 = vmatprep.subr.mxu0 0.0
        %6239 = vmatpush1.xpose.msra.mxu0 0.0
        %6240 = vmatprep.subr.mxu0 0.0
        %6241 = vmatpush1.xpose.msra.mxu0 0.0
        %6242 = vmatprep.subr.mxu0 0.0
        %6243 = vmatpush1.xpose.msra.mxu0 0.0
        %6244 = vmatprep.subr.mxu0 0.0
        %6245 = vmatpush1.xpose.msra.mxu0 0.0
        %6246 = vmatprep.subr.mxu0 0.0
        %6247 = vmatpush1.xpose.msra.mxu0 0.0
        %6248 = vmatprep.subr.mxu0 0.0
        %6249 = vmatpush1.xpose.msra.mxu0 0.0
        %6250 = vmatprep.subr.mxu0 0.0
        %6251 = vmatpush1.xpose.msra.mxu0 0.0
        %6252 = vmatprep.subr.mxu0 0.0
        %6253 = vmatpush1.xpose.msra.mxu0 0.0
        %6254 = vmatprep.subr.mxu0 0.0
        %6255 = vmatpush1.xpose.msra.mxu0 0.0
        %6256 = vmatprep.subr.mxu0 0.0
        %6257 = vmatpush1.xpose.msra.mxu0 0.0
        %6258 = vmatprep.subr.mxu0 0.0
        %6259 = vmatpush1.xpose.msra.mxu0 0.0
        %6260 = vmatprep.subr.mxu0 0.0
        %6261 = vmatpush1.xpose.msra.mxu0 0.0
        %6262 = vmatprep.subr.mxu0 0.0
        %6263 = vmatpush1.xpose.msra.mxu0 0.0
        %6264 = vmatprep.subr.mxu0 0.0
        %6265 = vmatpush1.xpose.msra.mxu0 0.0
        %6266 = vmatprep.subr.mxu0 0.0
        %6267 = vmatpush1.xpose.msra.mxu0 0.0
        %6268 = vmatprep.subr.mxu0 0.0
        %6269 = vmatpush1.xpose.msra.mxu0 0.0
        %6270 = vmatprep.subr.mxu0 0.0
        %6271 = vmatpush1.xpose.msra.mxu0 0.0
        %6272 = vmatprep.subr.mxu0 0.0
        %6273 = vmatpush1.xpose.msra.mxu0 0.0
        %6274 = vmatprep.mubr.f32.mxu0 %v1368
        %6275 = vmatmul.mubr.f32.gmra.mrb[0].mxu0 %v1366
        %v6276 = vpop.f32.mrb[0].mxu0
        %v6277 = vadd.f32 %v6207, %v6276
        %v6278 = vpop.f32.mrb[0].mxu0
        %6279 = vdwg.mxu0
        %6280 = vmatprep.subr.mxu0 %v417
        %6281 = vmatpush1.xpose.msra.mxu0 %v416
        %6282 = vmatprep.subr.mxu0 %v673
        %6283 = vmatpush1.xpose.msra.mxu0 %v672
        %6284 = vmatprep.subr.mxu0 0.0
        %6285 = vmatpush1.xpose.msra.mxu0 0.0
        %6286 = vmatprep.subr.mxu0 0.0
        %6287 = vmatpush1.xpose.msra.mxu0 0.0
        %6288 = vmatprep.subr.mxu0 0.0
        %6289 = vmatpush1.xpose.msra.mxu0 0.0
        %6290 = vmatprep.subr.mxu0 0.0
        %6291 = vmatpush1.xpose.msra.mxu0 0.0
        %6292 = vmatprep.subr.mxu0 0.0
        %6293 = vmatpush1.xpose.msra.mxu0 0.0
        %6294 = vmatprep.subr.mxu0 0.0
        %6295 = vmatpush1.xpose.msra.mxu0 0.0
        %6296 = vmatprep.subr.mxu0 0.0
        %6297 = vmatpush1.xpose.msra.mxu0 0.0
        %6298 = vmatprep.subr.mxu0 0.0
        %6299 = vmatpush1.xpose.msra.mxu0 0.0
        %6300 = vmatprep.subr.mxu0 0.0
        %6301 = vmatpush1.xpose.msra.mxu0 0.0
        %6302 = vmatprep.subr.mxu0 0.0
        %6303 = vmatpush1.xpose.msra.mxu0 0.0
        %6304 = vmatprep.subr.mxu0 0.0
        %6305 = vmatpush1.xpose.msra.mxu0 0.0
        %6306 = vmatprep.subr.mxu0 0.0
        %6307 = vmatpush1.xpose.msra.mxu0 0.0
        %6308 = vmatprep.subr.mxu0 0.0
        %6309 = vmatpush1.xpose.msra.mxu0 0.0
        %6310 = vmatprep.subr.mxu0 0.0
        %6311 = vmatpush1.xpose.msra.mxu0 0.0
        %6312 = vmatprep.subr.mxu0 0.0
        %6313 = vmatpush1.xpose.msra.mxu0 0.0
        %6314 = vmatprep.subr.mxu0 0.0
        %6315 = vmatpush1.xpose.msra.mxu0 0.0
        %6316 = vmatprep.subr.mxu0 0.0
        %6317 = vmatpush1.xpose.msra.mxu0 0.0
        %6318 = vmatprep.subr.mxu0 0.0
        %6319 = vmatpush1.xpose.msra.mxu0 0.0
        %6320 = vmatprep.subr.mxu0 0.0
        %6321 = vmatpush1.xpose.msra.mxu0 0.0
        %6322 = vmatprep.subr.mxu0 0.0
        %6323 = vmatpush1.xpose.msra.mxu0 0.0
        %6324 = vmatprep.subr.mxu0 0.0
        %6325 = vmatpush1.xpose.msra.mxu0 0.0
        %6326 = vmatprep.subr.mxu0 0.0
        %6327 = vmatpush1.xpose.msra.mxu0 0.0
        %6328 = vmatprep.subr.mxu0 0.0
        %6329 = vmatpush1.xpose.msra.mxu0 0.0
        %6330 = vmatprep.subr.mxu0 0.0
        %6331 = vmatpush1.xpose.msra.mxu0 0.0
        %6332 = vmatprep.subr.mxu0 0.0
        %6333 = vmatpush1.xpose.msra.mxu0 0.0
        %6334 = vmatprep.subr.mxu0 0.0
        %6335 = vmatpush1.xpose.msra.mxu0 0.0
        %6336 = vmatprep.subr.mxu0 0.0
        %6337 = vmatpush1.xpose.msra.mxu0 0.0
        %6338 = vmatprep.subr.mxu0 0.0
        %6339 = vmatpush1.xpose.msra.mxu0 0.0
        %6340 = vmatprep.subr.mxu0 0.0
        %6341 = vmatpush1.xpose.msra.mxu0 0.0
        %6342 = vmatprep.subr.mxu0 0.0
        %6343 = vmatpush1.xpose.msra.mxu0 0.0
        %6344 = vmatprep.mubr.f32.mxu0 %v1384
        %6345 = vmatmul.mubr.f32.gmra.mrb[0].mxu0 %v1376
        %v6346 = vpop.f32.mrb[0].mxu0
        %v6347 = vadd.f32 %v6277, %v6346
        %v6348 = vpop.f32.mrb[0].mxu0
        %6349 = vdwg.mxu0
        %6350 = vmatprep.subr.mxu0 %v419
        %6351 = vmatpush1.xpose.msra.mxu0 %v418
        %6352 = vmatprep.subr.mxu0 %v675
        %6353 = vmatpush1.xpose.msra.mxu0 %v674
        %6354 = vmatprep.subr.mxu0 0.0
        %6355 = vmatpush1.xpose.msra.mxu0 0.0
        %6356 = vmatprep.subr.mxu0 0.0
        %6357 = vmatpush1.xpose.msra.mxu0 0.0
        %6358 = vmatprep.subr.mxu0 0.0
        %6359 = vmatpush1.xpose.msra.mxu0 0.0
        %6360 = vmatprep.subr.mxu0 0.0
        %6361 = vmatpush1.xpose.msra.mxu0 0.0
        %6362 = vmatprep.subr.mxu0 0.0
        %6363 = vmatpush1.xpose.msra.mxu0 0.0
        %6364 = vmatprep.subr.mxu0 0.0
        %6365 = vmatpush1.xpose.msra.mxu0 0.0
        %6366 = vmatprep.subr.mxu0 0.0
        %6367 = vmatpush1.xpose.msra.mxu0 0.0
        %6368 = vmatprep.subr.mxu0 0.0
        %6369 = vmatpush1.xpose.msra.mxu0 0.0
        %6370 = vmatprep.subr.mxu0 0.0
        %6371 = vmatpush1.xpose.msra.mxu0 0.0
        %6372 = vmatprep.subr.mxu0 0.0
        %6373 = vmatpush1.xpose.msra.mxu0 0.0
        %6374 = vmatprep.subr.mxu0 0.0
        %6375 = vmatpush1.xpose.msra.mxu0 0.0
        %6376 = vmatprep.subr.mxu0 0.0
        %6377 = vmatpush1.xpose.msra.mxu0 0.0
        %6378 = vmatprep.subr.mxu0 0.0
        %6379 = vmatpush1.xpose.msra.mxu0 0.0
        %6380 = vmatprep.subr.mxu0 0.0
        %6381 = vmatpush1.xpose.msra.mxu0 0.0
        %6382 = vmatprep.subr.mxu0 0.0
        %6383 = vmatpush1.xpose.msra.mxu0 0.0
        %6384 = vmatprep.subr.mxu0 0.0
        %6385 = vmatpush1.xpose.msra.mxu0 0.0
        %6386 = vmatprep.subr.mxu0 0.0
        %6387 = vmatpush1.xpose.msra.mxu0 0.0
        %6388 = vmatprep.subr.mxu0 0.0
        %6389 = vmatpush1.xpose.msra.mxu0 0.0
        %6390 = vmatprep.subr.mxu0 0.0
        %6391 = vmatpush1.xpose.msra.mxu0 0.0
        %6392 = vmatprep.subr.mxu0 0.0
        %6393 = vmatpush1.xpose.msra.mxu0 0.0
        %6394 = vmatprep.subr.mxu0 0.0
        %6395 = vmatpush1.xpose.msra.mxu0 0.0
        %6396 = vmatprep.subr.mxu0 0.0
        %6397 = vmatpush1.xpose.msra.mxu0 0.0
        %6398 = vmatprep.subr.mxu0 0.0
        %6399 = vmatpush1.xpose.msra.mxu0 0.0
        %6400 = vmatprep.subr.mxu0 0.0
        %6401 = vmatpush1.xpose.msra.mxu0 0.0
        %6402 = vmatprep.subr.mxu0 0.0
        %6403 = vmatpush1.xpose.msra.mxu0 0.0
        %6404 = vmatprep.subr.mxu0 0.0
        %6405 = vmatpush1.xpose.msra.mxu0 0.0
        %6406 = vmatprep.subr.mxu0 0.0
        %6407 = vmatpush1.xpose.msra.mxu0 0.0
        %6408 = vmatprep.subr.mxu0 0.0
        %6409 = vmatpush1.xpose.msra.mxu0 0.0
        %6410 = vmatprep.subr.mxu0 0.0
        %6411 = vmatpush1.xpose.msra.mxu0 0.0
        %6412 = vmatprep.subr.mxu0 0.0
        %6413 = vmatpush1.xpose.msra.mxu0 0.0
        %6414 = vmatprep.mubr.f32.mxu0 %v1385
        %6415 = vmatmul.mubr.f32.gmra.mrb[0].mxu0 %v1383
        %v6416 = vpop.f32.mrb[0].mxu0
        %v6417 = vadd.f32 %v6347, %v6416
        %v6418 = vpop.f32.mrb[0].mxu0
        %6419 = vdwg.mxu0
        %6420 = vmatprep.subr.mxu0 %v421
        %6421 = vmatpush1.xpose.msra.mxu0 %v420
        %6422 = vmatprep.subr.mxu0 %v677
        %6423 = vmatpush1.xpose.msra.mxu0 %v676
        %6424 = vmatprep.subr.mxu0 0.0
        %6425 = vmatpush1.xpose.msra.mxu0 0.0
        %6426 = vmatprep.subr.mxu0 0.0
        %6427 = vmatpush1.xpose.msra.mxu0 0.0
        %6428 = vmatprep.subr.mxu0 0.0
        %6429 = vmatpush1.xpose.msra.mxu0 0.0
        %6430 = vmatprep.subr.mxu0 0.0
        %6431 = vmatpush1.xpose.msra.mxu0 0.0
        %6432 = vmatprep.subr.mxu0 0.0
        %6433 = vmatpush1.xpose.msra.mxu0 0.0
        %6434 = vmatprep.subr.mxu0 0.0
        %6435 = vmatpush1.xpose.msra.mxu0 0.0
        %6436 = vmatprep.subr.mxu0 0.0
        %6437 = vmatpush1.xpose.msra.mxu0 0.0
        %6438 = vmatprep.subr.mxu0 0.0
        %6439 = vmatpush1.xpose.msra.mxu0 0.0
        %6440 = vmatprep.subr.mxu0 0.0
        %6441 = vmatpush1.xpose.msra.mxu0 0.0
        %6442 = vmatprep.subr.mxu0 0.0
        %6443 = vmatpush1.xpose.msra.mxu0 0.0
        %6444 = vmatprep.subr.mxu0 0.0
        %6445 = vmatpush1.xpose.msra.mxu0 0.0
        %6446 = vmatprep.subr.mxu0 0.0
        %6447 = vmatpush1.xpose.msra.mxu0 0.0
        %6448 = vmatprep.subr.mxu0 0.0
        %6449 = vmatpush1.xpose.msra.mxu0 0.0
        %6450 = vmatprep.subr.mxu0 0.0
        %6451 = vmatpush1.xpose.msra.mxu0 0.0
        %6452 = vmatprep.subr.mxu0 0.0
        %6453 = vmatpush1.xpose.msra.mxu0 0.0
        %6454 = vmatprep.subr.mxu0 0.0
        %6455 = vmatpush1.xpose.msra.mxu0 0.0
        %6456 = vmatprep.subr.mxu0 0.0
        %6457 = vmatpush1.xpose.msra.mxu0 0.0
        %6458 = vmatprep.subr.mxu0 0.0
        %6459 = vmatpush1.xpose.msra.mxu0 0.0
        %6460 = vmatprep.subr.mxu0 0.0
        %6461 = vmatpush1.xpose.msra.mxu0 0.0
        %6462 = vmatprep.subr.mxu0 0.0
        %6463 = vmatpush1.xpose.msra.mxu0 0.0
        %6464 = vmatprep.subr.mxu0 0.0
        %6465 = vmatpush1.xpose.msra.mxu0 0.0
        %6466 = vmatprep.subr.mxu0 0.0
        %6467 = vmatpush1.xpose.msra.mxu0 0.0
        %6468 = vmatprep.subr.mxu0 0.0
        %6469 = vmatpush1.xpose.msra.mxu0 0.0
        %6470 = vmatprep.subr.mxu0 0.0
        %6471 = vmatpush1.xpose.msra.mxu0 0.0
        %6472 = vmatprep.subr.mxu0 0.0
        %6473 = vmatpush1.xpose.msra.mxu0 0.0
        %6474 = vmatprep.subr.mxu0 0.0
        %6475 = vmatpush1.xpose.msra.mxu0 0.0
        %6476 = vmatprep.subr.mxu0 0.0
        %6477 = vmatpush1.xpose.msra.mxu0 0.0
        %6478 = vmatprep.subr.mxu0 0.0
        %6479 = vmatpush1.xpose.msra.mxu0 0.0
        %6480 = vmatprep.subr.mxu0 0.0
        %6481 = vmatpush1.xpose.msra.mxu0 0.0
        %6482 = vmatprep.subr.mxu0 0.0
        %6483 = vmatpush1.xpose.msra.mxu0 0.0
        %6484 = vmatprep.mubr.f32.mxu0 %v1401
        %6485 = vmatmul.mubr.f32.gmra.mrb[0].mxu0 %v1393
        %v6486 = vpop.f32.mrb[0].mxu0
        %v6487 = vadd.f32 %v6417, %v6486
        %v6488 = vpop.f32.mrb[0].mxu0
        %6489 = vdwg.mxu0
        %6490 = vmatprep.subr.mxu0 %v423
        %6491 = vmatpush1.xpose.msra.mxu0 %v422
        %6492 = vmatprep.subr.mxu0 %v679
        %6493 = vmatpush1.xpose.msra.mxu0 %v678
        %6494 = vmatprep.subr.mxu0 0.0
        %6495 = vmatpush1.xpose.msra.mxu0 0.0
        %6496 = vmatprep.subr.mxu0 0.0
        %6497 = vmatpush1.xpose.msra.mxu0 0.0
        %6498 = vmatprep.subr.mxu0 0.0
        %6499 = vmatpush1.xpose.msra.mxu0 0.0
        %6500 = vmatprep.subr.mxu0 0.0
        %6501 = vmatpush1.xpose.msra.mxu0 0.0
        %6502 = vmatprep.subr.mxu0 0.0
        %6503 = vmatpush1.xpose.msra.mxu0 0.0
        %6504 = vmatprep.subr.mxu0 0.0
        %6505 = vmatpush1.xpose.msra.mxu0 0.0
        %6506 = vmatprep.subr.mxu0 0.0
        %6507 = vmatpush1.xpose.msra.mxu0 0.0
        %6508 = vmatprep.subr.mxu0 0.0
        %6509 = vmatpush1.xpose.msra.mxu0 0.0
        %6510 = vmatprep.subr.mxu0 0.0
        %6511 = vmatpush1.xpose.msra.mxu0 0.0
        %6512 = vmatprep.subr.mxu0 0.0
        %6513 = vmatpush1.xpose.msra.mxu0 0.0
        %6514 = vmatprep.subr.mxu0 0.0
        %6515 = vmatpush1.xpose.msra.mxu0 0.0
        %6516 = vmatprep.subr.mxu0 0.0
        %6517 = vmatpush1.xpose.msra.mxu0 0.0
        %6518 = vmatprep.subr.mxu0 0.0
        %6519 = vmatpush1.xpose.msra.mxu0 0.0
        %6520 = vmatprep.subr.mxu0 0.0
        %6521 = vmatpush1.xpose.msra.mxu0 0.0
        %6522 = vmatprep.subr.mxu0 0.0
        %6523 = vmatpush1.xpose.msra.mxu0 0.0
        %6524 = vmatprep.subr.mxu0 0.0
        %6525 = vmatpush1.xpose.msra.mxu0 0.0
        %6526 = vmatprep.subr.mxu0 0.0
        %6527 = vmatpush1.xpose.msra.mxu0 0.0
        %6528 = vmatprep.subr.mxu0 0.0
        %6529 = vmatpush1.xpose.msra.mxu0 0.0
        %6530 = vmatprep.subr.mxu0 0.0
        %6531 = vmatpush1.xpose.msra.mxu0 0.0
        %6532 = vmatprep.subr.mxu0 0.0
        %6533 = vmatpush1.xpose.msra.mxu0 0.0
        %6534 = vmatprep.subr.mxu0 0.0
        %6535 = vmatpush1.xpose.msra.mxu0 0.0
        %6536 = vmatprep.subr.mxu0 0.0
        %6537 = vmatpush1.xpose.msra.mxu0 0.0
        %6538 = vmatprep.subr.mxu0 0.0
        %6539 = vmatpush1.xpose.msra.mxu0 0.0
        %6540 = vmatprep.subr.mxu0 0.0
        %6541 = vmatpush1.xpose.msra.mxu0 0.0
        %6542 = vmatprep.subr.mxu0 0.0
        %6543 = vmatpush1.xpose.msra.mxu0 0.0
        %6544 = vmatprep.subr.mxu0 0.0
        %6545 = vmatpush1.xpose.msra.mxu0 0.0
        %6546 = vmatprep.subr.mxu0 0.0
        %6547 = vmatpush1.xpose.msra.mxu0 0.0
        %6548 = vmatprep.subr.mxu0 0.0
        %6549 = vmatpush1.xpose.msra.mxu0 0.0
        %6550 = vmatprep.subr.mxu0 0.0
        %6551 = vmatpush1.xpose.msra.mxu0 0.0
        %6552 = vmatprep.subr.mxu0 0.0
        %6553 = vmatpush1.xpose.msra.mxu0 0.0
        %6554 = vmatprep.mubr.f32.mxu0 %v1402
        %6555 = vmatmul.mubr.f32.gmra.mrb[0].mxu0 %v1400
        %v6556 = vpop.f32.mrb[0].mxu0
        %v6557 = vadd.f32 %v6487, %v6556
        %v6558 = vpop.f32.mrb[0].mxu0
        %6559 = vdwg.mxu0
        %6560 = vmatprep.subr.mxu0 %v425
        %6561 = vmatpush1.xpose.msra.mxu0 %v424
        %6562 = vmatprep.subr.mxu0 %v681
        %6563 = vmatpush1.xpose.msra.mxu0 %v680
        %6564 = vmatprep.subr.mxu0 0.0
        %6565 = vmatpush1.xpose.msra.mxu0 0.0
        %6566 = vmatprep.subr.mxu0 0.0
        %6567 = vmatpush1.xpose.msra.mxu0 0.0
        %6568 = vmatprep.subr.mxu0 0.0
        %6569 = vmatpush1.xpose.msra.mxu0 0.0
        %6570 = vmatprep.subr.mxu0 0.0
        %6571 = vmatpush1.xpose.msra.mxu0 0.0
        %6572 = vmatprep.subr.mxu0 0.0
        %6573 = vmatpush1.xpose.msra.mxu0 0.0
        %6574 = vmatprep.subr.mxu0 0.0
        %6575 = vmatpush1.xpose.msra.mxu0 0.0
        %6576 = vmatprep.subr.mxu0 0.0
        %6577 = vmatpush1.xpose.msra.mxu0 0.0
        %6578 = vmatprep.subr.mxu0 0.0
        %6579 = vmatpush1.xpose.msra.mxu0 0.0
        %6580 = vmatprep.subr.mxu0 0.0
        %6581 = vmatpush1.xpose.msra.mxu0 0.0
        %6582 = vmatprep.subr.mxu0 0.0
        %6583 = vmatpush1.xpose.msra.mxu0 0.0
        %6584 = vmatprep.subr.mxu0 0.0
        %6585 = vmatpush1.xpose.msra.mxu0 0.0
        %6586 = vmatprep.subr.mxu0 0.0
        %6587 = vmatpush1.xpose.msra.mxu0 0.0
        %6588 = vmatprep.subr.mxu0 0.0
        %6589 = vmatpush1.xpose.msra.mxu0 0.0
        %6590 = vmatprep.subr.mxu0 0.0
        %6591 = vmatpush1.xpose.msra.mxu0 0.0
        %6592 = vmatprep.subr.mxu0 0.0
        %6593 = vmatpush1.xpose.msra.mxu0 0.0
        %6594 = vmatprep.subr.mxu0 0.0
        %6595 = vmatpush1.xpose.msra.mxu0 0.0
        %6596 = vmatprep.subr.mxu0 0.0
        %6597 = vmatpush1.xpose.msra.mxu0 0.0
        %6598 = vmatprep.subr.mxu0 0.0
        %6599 = vmatpush1.xpose.msra.mxu0 0.0
        %6600 = vmatprep.subr.mxu0 0.0
        %6601 = vmatpush1.xpose.msra.mxu0 0.0
        %6602 = vmatprep.subr.mxu0 0.0
        %6603 = vmatpush1.xpose.msra.mxu0 0.0
        %6604 = vmatprep.subr.mxu0 0.0
        %6605 = vmatpush1.xpose.msra.mxu0 0.0
        %6606 = vmatprep.subr.mxu0 0.0
        %6607 = vmatpush1.xpose.msra.mxu0 0.0
        %6608 = vmatprep.subr.mxu0 0.0
        %6609 = vmatpush1.xpose.msra.mxu0 0.0
        %6610 = vmatprep.subr.mxu0 0.0
        %6611 = vmatpush1.xpose.msra.mxu0 0.0
        %6612 = vmatprep.subr.mxu0 0.0
        %6613 = vmatpush1.xpose.msra.mxu0 0.0
        %6614 = vmatprep.subr.mxu0 0.0
        %6615 = vmatpush1.xpose.msra.mxu0 0.0
        %6616 = vmatprep.subr.mxu0 0.0
        %6617 = vmatpush1.xpose.msra.mxu0 0.0
        %6618 = vmatprep.subr.mxu0 0.0
        %6619 = vmatpush1.xpose.msra.mxu0 0.0
        %6620 = vmatprep.subr.mxu0 0.0
        %6621 = vmatpush1.xpose.msra.mxu0 0.0
        %6622 = vmatprep.subr.mxu0 0.0
        %6623 = vmatpush1.xpose.msra.mxu0 0.0
        %6624 = vmatprep.mubr.f32.mxu0 %v1418
        %6625 = vmatmul.mubr.f32.gmra.mrb[0].mxu0 %v1410
        %v6626 = vpop.f32.mrb[0].mxu0
        %v6627 = vadd.f32 %v6557, %v6626
        %v6628 = vpop.f32.mrb[0].mxu0
        %6629 = vdwg.mxu0
        %6630 = vmatprep.subr.mxu0 %v427
        %6631 = vmatpush1.xpose.msra.mxu0 %v426
        %6632 = vmatprep.subr.mxu0 %v683
        %6633 = vmatpush1.xpose.msra.mxu0 %v682
        %6634 = vmatprep.subr.mxu0 0.0
        %6635 = vmatpush1.xpose.msra.mxu0 0.0
        %6636 = vmatprep.subr.mxu0 0.0
        %6637 = vmatpush1.xpose.msra.mxu0 0.0
        %6638 = vmatprep.subr.mxu0 0.0
        %6639 = vmatpush1.xpose.msra.mxu0 0.0
        %6640 = vmatprep.subr.mxu0 0.0
        %6641 = vmatpush1.xpose.msra.mxu0 0.0
        %6642 = vmatprep.subr.mxu0 0.0
        %6643 = vmatpush1.xpose.msra.mxu0 0.0
        %6644 = vmatprep.subr.mxu0 0.0
        %6645 = vmatpush1.xpose.msra.mxu0 0.0
        %6646 = vmatprep.subr.mxu0 0.0
        %6647 = vmatpush1.xpose.msra.mxu0 0.0
        %6648 = vmatprep.subr.mxu0 0.0
        %6649 = vmatpush1.xpose.msra.mxu0 0.0
        %6650 = vmatprep.subr.mxu0 0.0
        %6651 = vmatpush1.xpose.msra.mxu0 0.0
        %6652 = vmatprep.subr.mxu0 0.0
        %6653 = vmatpush1.xpose.msra.mxu0 0.0
        %6654 = vmatprep.subr.mxu0 0.0
        %6655 = vmatpush1.xpose.msra.mxu0 0.0
        %6656 = vmatprep.subr.mxu0 0.0
        %6657 = vmatpush1.xpose.msra.mxu0 0.0
        %6658 = vmatprep.subr.mxu0 0.0
        %6659 = vmatpush1.xpose.msra.mxu0 0.0
        %6660 = vmatprep.subr.mxu0 0.0
        %6661 = vmatpush1.xpose.msra.mxu0 0.0
        %6662 = vmatprep.subr.mxu0 0.0
        %6663 = vmatpush1.xpose.msra.mxu0 0.0
        %6664 = vmatprep.subr.mxu0 0.0
        %6665 = vmatpush1.xpose.msra.mxu0 0.0
        %6666 = vmatprep.subr.mxu0 0.0
        %6667 = vmatpush1.xpose.msra.mxu0 0.0
        %6668 = vmatprep.subr.mxu0 0.0
        %6669 = vmatpush1.xpose.msra.mxu0 0.0
        %6670 = vmatprep.subr.mxu0 0.0
        %6671 = vmatpush1.xpose.msra.mxu0 0.0
        %6672 = vmatprep.subr.mxu0 0.0
        %6673 = vmatpush1.xpose.msra.mxu0 0.0
        %6674 = vmatprep.subr.mxu0 0.0
        %6675 = vmatpush1.xpose.msra.mxu0 0.0
        %6676 = vmatprep.subr.mxu0 0.0
        %6677 = vmatpush1.xpose.msra.mxu0 0.0
        %6678 = vmatprep.subr.mxu0 0.0
        %6679 = vmatpush1.xpose.msra.mxu0 0.0
        %6680 = vmatprep.subr.mxu0 0.0
        %6681 = vmatpush1.xpose.msra.mxu0 0.0
        %6682 = vmatprep.subr.mxu0 0.0
        %6683 = vmatpush1.xpose.msra.mxu0 0.0
        %6684 = vmatprep.subr.mxu0 0.0
        %6685 = vmatpush1.xpose.msra.mxu0 0.0
        %6686 = vmatprep.subr.mxu0 0.0
        %6687 = vmatpush1.xpose.msra.mxu0 0.0
        %6688 = vmatprep.subr.mxu0 0.0
        %6689 = vmatpush1.xpose.msra.mxu0 0.0
        %6690 = vmatprep.subr.mxu0 0.0
        %6691 = vmatpush1.xpose.msra.mxu0 0.0
        %6692 = vmatprep.subr.mxu0 0.0
        %6693 = vmatpush1.xpose.msra.mxu0 0.0
        %6694 = vmatprep.mubr.f32.mxu0 %v1419
        %6695 = vmatmul.mubr.f32.gmra.mrb[0].mxu0 %v1417
        %v6696 = vpop.f32.mrb[0].mxu0
        %v6697 = vadd.f32 %v6627, %v6696
        %v6698 = vpop.f32.mrb[0].mxu0
        %6699 = vdwg.mxu0
        %6700 = vmatprep.subr.mxu0 %v429
        %6701 = vmatpush1.xpose.msra.mxu0 %v428
        %6702 = vmatprep.subr.mxu0 %v685
        %6703 = vmatpush1.xpose.msra.mxu0 %v684
        %6704 = vmatprep.subr.mxu0 0.0
        %6705 = vmatpush1.xpose.msra.mxu0 0.0
        %6706 = vmatprep.subr.mxu0 0.0
        %6707 = vmatpush1.xpose.msra.mxu0 0.0
        %6708 = vmatprep.subr.mxu0 0.0
        %6709 = vmatpush1.xpose.msra.mxu0 0.0
        %6710 = vmatprep.subr.mxu0 0.0
        %6711 = vmatpush1.xpose.msra.mxu0 0.0
        %6712 = vmatprep.subr.mxu0 0.0
        %6713 = vmatpush1.xpose.msra.mxu0 0.0
        %6714 = vmatprep.subr.mxu0 0.0
        %6715 = vmatpush1.xpose.msra.mxu0 0.0
        %6716 = vmatprep.subr.mxu0 0.0
        %6717 = vmatpush1.xpose.msra.mxu0 0.0
        %6718 = vmatprep.subr.mxu0 0.0
        %6719 = vmatpush1.xpose.msra.mxu0 0.0
        %6720 = vmatprep.subr.mxu0 0.0
        %6721 = vmatpush1.xpose.msra.mxu0 0.0
        %6722 = vmatprep.subr.mxu0 0.0
        %6723 = vmatpush1.xpose.msra.mxu0 0.0
        %6724 = vmatprep.subr.mxu0 0.0
        %6725 = vmatpush1.xpose.msra.mxu0 0.0
        %6726 = vmatprep.subr.mxu0 0.0
        %6727 = vmatpush1.xpose.msra.mxu0 0.0
        %6728 = vmatprep.subr.mxu0 0.0
        %6729 = vmatpush1.xpose.msra.mxu0 0.0
        %6730 = vmatprep.subr.mxu0 0.0
        %6731 = vmatpush1.xpose.msra.mxu0 0.0
        %6732 = vmatprep.subr.mxu0 0.0
        %6733 = vmatpush1.xpose.msra.mxu0 0.0
        %6734 = vmatprep.subr.mxu0 0.0
        %6735 = vmatpush1.xpose.msra.mxu0 0.0
        %6736 = vmatprep.subr.mxu0 0.0
        %6737 = vmatpush1.xpose.msra.mxu0 0.0
        %6738 = vmatprep.subr.mxu0 0.0
        %6739 = vmatpush1.xpose.msra.mxu0 0.0
        %6740 = vmatprep.subr.mxu0 0.0
        %6741 = vmatpush1.xpose.msra.mxu0 0.0
        %6742 = vmatprep.subr.mxu0 0.0
        %6743 = vmatpush1.xpose.msra.mxu0 0.0
        %6744 = vmatprep.subr.mxu0 0.0
        %6745 = vmatpush1.xpose.msra.mxu0 0.0
        %6746 = vmatprep.subr.mxu0 0.0
        %6747 = vmatpush1.xpose.msra.mxu0 0.0
        %6748 = vmatprep.subr.mxu0 0.0
        %6749 = vmatpush1.xpose.msra.mxu0 0.0
        %6750 = vmatprep.subr.mxu0 0.0
        %6751 = vmatpush1.xpose.msra.mxu0 0.0
        %6752 = vmatprep.subr.mxu0 0.0
        %6753 = vmatpush1.xpose.msra.mxu0 0.0
        %6754 = vmatprep.subr.mxu0 0.0
        %6755 = vmatpush1.xpose.msra.mxu0 0.0
        %6756 = vmatprep.subr.mxu0 0.0
        %6757 = vmatpush1.xpose.msra.mxu0 0.0
        %6758 = vmatprep.subr.mxu0 0.0
        %6759 = vmatpush1.xpose.msra.mxu0 0.0
        %6760 = vmatprep.subr.mxu0 0.0
        %6761 = vmatpush1.xpose.msra.mxu0 0.0
        %6762 = vmatprep.subr.mxu0 0.0
        %6763 = vmatpush1.xpose.msra.mxu0 0.0
        %6764 = vmatprep.mubr.f32.mxu0 %v1435
        %6765 = vmatmul.mubr.f32.gmra.mrb[0].mxu0 %v1427
        %v6766 = vpop.f32.mrb[0].mxu0
        %v6767 = vadd.f32 %v6697, %v6766
        %v6768 = vpop.f32.mrb[0].mxu0
        %6769 = vdwg.mxu0
        %6770 = vmatprep.subr.mxu0 %v431
        %6771 = vmatpush1.xpose.msra.mxu0 %v430
        %6772 = vmatprep.subr.mxu0 %v687
        %6773 = vmatpush1.xpose.msra.mxu0 %v686
        %6774 = vmatprep.subr.mxu0 0.0
        %6775 = vmatpush1.xpose.msra.mxu0 0.0
        %6776 = vmatprep.subr.mxu0 0.0
        %6777 = vmatpush1.xpose.msra.mxu0 0.0
        %6778 = vmatprep.subr.mxu0 0.0
        %6779 = vmatpush1.xpose.msra.mxu0 0.0
        %6780 = vmatprep.subr.mxu0 0.0
        %6781 = vmatpush1.xpose.msra.mxu0 0.0
        %6782 = vmatprep.subr.mxu0 0.0
        %6783 = vmatpush1.xpose.msra.mxu0 0.0
        %6784 = vmatprep.subr.mxu0 0.0
        %6785 = vmatpush1.xpose.msra.mxu0 0.0
        %6786 = vmatprep.subr.mxu0 0.0
        %6787 = vmatpush1.xpose.msra.mxu0 0.0
        %6788 = vmatprep.subr.mxu0 0.0
        %6789 = vmatpush1.xpose.msra.mxu0 0.0
        %6790 = vmatprep.subr.mxu0 0.0
        %6791 = vmatpush1.xpose.msra.mxu0 0.0
        %6792 = vmatprep.subr.mxu0 0.0
        %6793 = vmatpush1.xpose.msra.mxu0 0.0
        %6794 = vmatprep.subr.mxu0 0.0
        %6795 = vmatpush1.xpose.msra.mxu0 0.0
        %6796 = vmatprep.subr.mxu0 0.0
        %6797 = vmatpush1.xpose.msra.mxu0 0.0
        %6798 = vmatprep.subr.mxu0 0.0
        %6799 = vmatpush1.xpose.msra.mxu0 0.0
        %6800 = vmatprep.subr.mxu0 0.0
        %6801 = vmatpush1.xpose.msra.mxu0 0.0
        %6802 = vmatprep.subr.mxu0 0.0
        %6803 = vmatpush1.xpose.msra.mxu0 0.0
        %6804 = vmatprep.subr.mxu0 0.0
        %6805 = vmatpush1.xpose.msra.mxu0 0.0
        %6806 = vmatprep.subr.mxu0 0.0
        %6807 = vmatpush1.xpose.msra.mxu0 0.0
        %6808 = vmatprep.subr.mxu0 0.0
        %6809 = vmatpush1.xpose.msra.mxu0 0.0
        %6810 = vmatprep.subr.mxu0 0.0
        %6811 = vmatpush1.xpose.msra.mxu0 0.0
        %6812 = vmatprep.subr.mxu0 0.0
        %6813 = vmatpush1.xpose.msra.mxu0 0.0
        %6814 = vmatprep.subr.mxu0 0.0
        %6815 = vmatpush1.xpose.msra.mxu0 0.0
        %6816 = vmatprep.subr.mxu0 0.0
        %6817 = vmatpush1.xpose.msra.mxu0 0.0
        %6818 = vmatprep.subr.mxu0 0.0
        %6819 = vmatpush1.xpose.msra.mxu0 0.0
        %6820 = vmatprep.subr.mxu0 0.0
        %6821 = vmatpush1.xpose.msra.mxu0 0.0
        %6822 = vmatprep.subr.mxu0 0.0
        %6823 = vmatpush1.xpose.msra.mxu0 0.0
        %6824 = vmatprep.subr.mxu0 0.0
        %6825 = vmatpush1.xpose.msra.mxu0 0.0
        %6826 = vmatprep.subr.mxu0 0.0
        %6827 = vmatpush1.xpose.msra.mxu0 0.0
        %6828 = vmatprep.subr.mxu0 0.0
        %6829 = vmatpush1.xpose.msra.mxu0 0.0
        %6830 = vmatprep.subr.mxu0 0.0
        %6831 = vmatpush1.xpose.msra.mxu0 0.0
        %6832 = vmatprep.subr.mxu0 0.0
        %6833 = vmatpush1.xpose.msra.mxu0 0.0
        %6834 = vmatprep.mubr.f32.mxu0 %v1436
        %6835 = vmatmul.mubr.f32.gmra.mrb[0].mxu0 %v1434
        %v6836 = vpop.f32.mrb[0].mxu0
        %v6837 = vadd.f32 %v6767, %v6836
        %v6838 = vpop.f32.mrb[0].mxu0
        %6839 = vdwg.mxu0
        %6840 = vmatprep.subr.mxu0 %v433
        %6841 = vmatpush1.xpose.msra.mxu0 %v432
        %6842 = vmatprep.subr.mxu0 %v689
        %6843 = vmatpush1.xpose.msra.mxu0 %v688
        %6844 = vmatprep.subr.mxu0 0.0
        %6845 = vmatpush1.xpose.msra.mxu0 0.0
        %6846 = vmatprep.subr.mxu0 0.0
        %6847 = vmatpush1.xpose.msra.mxu0 0.0
        %6848 = vmatprep.subr.mxu0 0.0
        %6849 = vmatpush1.xpose.msra.mxu0 0.0
        %6850 = vmatprep.subr.mxu0 0.0
        %6851 = vmatpush1.xpose.msra.mxu0 0.0
        %6852 = vmatprep.subr.mxu0 0.0
        %6853 = vmatpush1.xpose.msra.mxu0 0.0
        %6854 = vmatprep.subr.mxu0 0.0
        %6855 = vmatpush1.xpose.msra.mxu0 0.0
        %6856 = vmatprep.subr.mxu0 0.0
        %6857 = vmatpush1.xpose.msra.mxu0 0.0
        %6858 = vmatprep.subr.mxu0 0.0
        %6859 = vmatpush1.xpose.msra.mxu0 0.0
        %6860 = vmatprep.subr.mxu0 0.0
        %6861 = vmatpush1.xpose.msra.mxu0 0.0
        %6862 = vmatprep.subr.mxu0 0.0
        %6863 = vmatpush1.xpose.msra.mxu0 0.0
        %6864 = vmatprep.subr.mxu0 0.0
        %6865 = vmatpush1.xpose.msra.mxu0 0.0
        %6866 = vmatprep.subr.mxu0 0.0
        %6867 = vmatpush1.xpose.msra.mxu0 0.0
        %6868 = vmatprep.subr.mxu0 0.0
        %6869 = vmatpush1.xpose.msra.mxu0 0.0
        %6870 = vmatprep.subr.mxu0 0.0
        %6871 = vmatpush1.xpose.msra.mxu0 0.0
        %6872 = vmatprep.subr.mxu0 0.0
        %6873 = vmatpush1.xpose.msra.mxu0 0.0
        %6874 = vmatprep.subr.mxu0 0.0
        %6875 = vmatpush1.xpose.msra.mxu0 0.0
        %6876 = vmatprep.subr.mxu0 0.0
        %6877 = vmatpush1.xpose.msra.mxu0 0.0
        %6878 = vmatprep.subr.mxu0 0.0
        %6879 = vmatpush1.xpose.msra.mxu0 0.0
        %6880 = vmatprep.subr.mxu0 0.0
        %6881 = vmatpush1.xpose.msra.mxu0 0.0
        %6882 = vmatprep.subr.mxu0 0.0
        %6883 = vmatpush1.xpose.msra.mxu0 0.0
        %6884 = vmatprep.subr.mxu0 0.0
        %6885 = vmatpush1.xpose.msra.mxu0 0.0
        %6886 = vmatprep.subr.mxu0 0.0
        %6887 = vmatpush1.xpose.msra.mxu0 0.0
        %6888 = vmatprep.subr.mxu0 0.0
        %6889 = vmatpush1.xpose.msra.mxu0 0.0
        %6890 = vmatprep.subr.mxu0 0.0
        %6891 = vmatpush1.xpose.msra.mxu0 0.0
        %6892 = vmatprep.subr.mxu0 0.0
        %6893 = vmatpush1.xpose.msra.mxu0 0.0
        %6894 = vmatprep.subr.mxu0 0.0
        %6895 = vmatpush1.xpose.msra.mxu0 0.0
        %6896 = vmatprep.subr.mxu0 0.0
        %6897 = vmatpush1.xpose.msra.mxu0 0.0
        %6898 = vmatprep.subr.mxu0 0.0
        %6899 = vmatpush1.xpose.msra.mxu0 0.0
        %6900 = vmatprep.subr.mxu0 0.0
        %6901 = vmatpush1.xpose.msra.mxu0 0.0
        %6902 = vmatprep.subr.mxu0 0.0
        %6903 = vmatpush1.xpose.msra.mxu0 0.0
        %6904 = vmatprep.mubr.f32.mxu0 %v1452
        %6905 = vmatmul.mubr.f32.gmra.mrb[0].mxu0 %v1444
        %v6906 = vpop.f32.mrb[0].mxu0
        %v6907 = vadd.f32 %v6837, %v6906
        %v6908 = vpop.f32.mrb[0].mxu0
        %6909 = vdwg.mxu0
        %6910 = vmatprep.subr.mxu0 %v435
        %6911 = vmatpush1.xpose.msra.mxu0 %v434
        %6912 = vmatprep.subr.mxu0 %v691
        %6913 = vmatpush1.xpose.msra.mxu0 %v690
        %6914 = vmatprep.subr.mxu0 0.0
        %6915 = vmatpush1.xpose.msra.mxu0 0.0
        %6916 = vmatprep.subr.mxu0 0.0
        %6917 = vmatpush1.xpose.msra.mxu0 0.0
        %6918 = vmatprep.subr.mxu0 0.0
        %6919 = vmatpush1.xpose.msra.mxu0 0.0
        %6920 = vmatprep.subr.mxu0 0.0
        %6921 = vmatpush1.xpose.msra.mxu0 0.0
        %6922 = vmatprep.subr.mxu0 0.0
        %6923 = vmatpush1.xpose.msra.mxu0 0.0
        %6924 = vmatprep.subr.mxu0 0.0
        %6925 = vmatpush1.xpose.msra.mxu0 0.0
        %6926 = vmatprep.subr.mxu0 0.0
        %6927 = vmatpush1.xpose.msra.mxu0 0.0
        %6928 = vmatprep.subr.mxu0 0.0
        %6929 = vmatpush1.xpose.msra.mxu0 0.0
        %6930 = vmatprep.subr.mxu0 0.0
        %6931 = vmatpush1.xpose.msra.mxu0 0.0
        %6932 = vmatprep.subr.mxu0 0.0
        %6933 = vmatpush1.xpose.msra.mxu0 0.0
        %6934 = vmatprep.subr.mxu0 0.0
        %6935 = vmatpush1.xpose.msra.mxu0 0.0
        %6936 = vmatprep.subr.mxu0 0.0
        %6937 = vmatpush1.xpose.msra.mxu0 0.0
        %6938 = vmatprep.subr.mxu0 0.0
        %6939 = vmatpush1.xpose.msra.mxu0 0.0
        %6940 = vmatprep.subr.mxu0 0.0
        %6941 = vmatpush1.xpose.msra.mxu0 0.0
        %6942 = vmatprep.subr.mxu0 0.0
        %6943 = vmatpush1.xpose.msra.mxu0 0.0
        %6944 = vmatprep.subr.mxu0 0.0
        %6945 = vmatpush1.xpose.msra.mxu0 0.0
        %6946 = vmatprep.subr.mxu0 0.0
        %6947 = vmatpush1.xpose.msra.mxu0 0.0
        %6948 = vmatprep.subr.mxu0 0.0
        %6949 = vmatpush1.xpose.msra.mxu0 0.0
        %6950 = vmatprep.subr.mxu0 0.0
        %6951 = vmatpush1.xpose.msra.mxu0 0.0
        %6952 = vmatprep.subr.mxu0 0.0
        %6953 = vmatpush1.xpose.msra.mxu0 0.0
        %6954 = vmatprep.subr.mxu0 0.0
        %6955 = vmatpush1.xpose.msra.mxu0 0.0
        %6956 = vmatprep.subr.mxu0 0.0
        %6957 = vmatpush1.xpose.msra.mxu0 0.0
        %6958 = vmatprep.subr.mxu0 0.0
        %6959 = vmatpush1.xpose.msra.mxu0 0.0
        %6960 = vmatprep.subr.mxu0 0.0
        %6961 = vmatpush1.xpose.msra.mxu0 0.0
        %6962 = vmatprep.subr.mxu0 0.0
        %6963 = vmatpush1.xpose.msra.mxu0 0.0
        %6964 = vmatprep.subr.mxu0 0.0
        %6965 = vmatpush1.xpose.msra.mxu0 0.0
        %6966 = vmatprep.subr.mxu0 0.0
        %6967 = vmatpush1.xpose.msra.mxu0 0.0
        %6968 = vmatprep.subr.mxu0 0.0
        %6969 = vmatpush1.xpose.msra.mxu0 0.0
        %6970 = vmatprep.subr.mxu0 0.0
        %6971 = vmatpush1.xpose.msra.mxu0 0.0
        %6972 = vmatprep.subr.mxu0 0.0
        %6973 = vmatpush1.xpose.msra.mxu0 0.0
        %6974 = vmatprep.mubr.f32.mxu0 %v1453
        %6975 = vmatmul.mubr.f32.gmra.mrb[0].mxu0 %v1451
        %v6976 = vpop.f32.mrb[0].mxu0
        %v6977 = vadd.f32 %v6907, %v6976
        %v6978 = vpop.f32.mrb[0].mxu0
        %6979 = vdwg.mxu0
        %6980 = vmatprep.subr.mxu0 %v437
        %6981 = vmatpush1.xpose.msra.mxu0 %v436
        %6982 = vmatprep.subr.mxu0 %v693
        %6983 = vmatpush1.xpose.msra.mxu0 %v692
        %6984 = vmatprep.subr.mxu0 0.0
        %6985 = vmatpush1.xpose.msra.mxu0 0.0
        %6986 = vmatprep.subr.mxu0 0.0
        %6987 = vmatpush1.xpose.msra.mxu0 0.0
        %6988 = vmatprep.subr.mxu0 0.0
        %6989 = vmatpush1.xpose.msra.mxu0 0.0
        %6990 = vmatprep.subr.mxu0 0.0
        %6991 = vmatpush1.xpose.msra.mxu0 0.0
        %6992 = vmatprep.subr.mxu0 0.0
        %6993 = vmatpush1.xpose.msra.mxu0 0.0
        %6994 = vmatprep.subr.mxu0 0.0
        %6995 = vmatpush1.xpose.msra.mxu0 0.0
        %6996 = vmatprep.subr.mxu0 0.0
        %6997 = vmatpush1.xpose.msra.mxu0 0.0
        %6998 = vmatprep.subr.mxu0 0.0
        %6999 = vmatpush1.xpose.msra.mxu0 0.0
        %7000 = vmatprep.subr.mxu0 0.0
        %7001 = vmatpush1.xpose.msra.mxu0 0.0
        %7002 = vmatprep.subr.mxu0 0.0
        %7003 = vmatpush1.xpose.msra.mxu0 0.0
        %7004 = vmatprep.subr.mxu0 0.0
        %7005 = vmatpush1.xpose.msra.mxu0 0.0
        %7006 = vmatprep.subr.mxu0 0.0
        %7007 = vmatpush1.xpose.msra.mxu0 0.0
        %7008 = vmatprep.subr.mxu0 0.0
        %7009 = vmatpush1.xpose.msra.mxu0 0.0
        %7010 = vmatprep.subr.mxu0 0.0
        %7011 = vmatpush1.xpose.msra.mxu0 0.0
        %7012 = vmatprep.subr.mxu0 0.0
        %7013 = vmatpush1.xpose.msra.mxu0 0.0
        %7014 = vmatprep.subr.mxu0 0.0
        %7015 = vmatpush1.xpose.msra.mxu0 0.0
        %7016 = vmatprep.subr.mxu0 0.0
        %7017 = vmatpush1.xpose.msra.mxu0 0.0
        %7018 = vmatprep.subr.mxu0 0.0
        %7019 = vmatpush1.xpose.msra.mxu0 0.0
        %7020 = vmatprep.subr.mxu0 0.0
        %7021 = vmatpush1.xpose.msra.mxu0 0.0
        %7022 = vmatprep.subr.mxu0 0.0
        %7023 = vmatpush1.xpose.msra.mxu0 0.0
        %7024 = vmatprep.subr.mxu0 0.0
        %7025 = vmatpush1.xpose.msra.mxu0 0.0
        %7026 = vmatprep.subr.mxu0 0.0
        %7027 = vmatpush1.xpose.msra.mxu0 0.0
        %7028 = vmatprep.subr.mxu0 0.0
        %7029 = vmatpush1.xpose.msra.mxu0 0.0
        %7030 = vmatprep.subr.mxu0 0.0
        %7031 = vmatpush1.xpose.msra.mxu0 0.0
        %7032 = vmatprep.subr.mxu0 0.0
        %7033 = vmatpush1.xpose.msra.mxu0 0.0
        %7034 = vmatprep.subr.mxu0 0.0
        %7035 = vmatpush1.xpose.msra.mxu0 0.0
        %7036 = vmatprep.subr.mxu0 0.0
        %7037 = vmatpush1.xpose.msra.mxu0 0.0
        %7038 = vmatprep.subr.mxu0 0.0
        %7039 = vmatpush1.xpose.msra.mxu0 0.0
        %7040 = vmatprep.subr.mxu0 0.0
        %7041 = vmatpush1.xpose.msra.mxu0 0.0
        %7042 = vmatprep.subr.mxu0 0.0
        %7043 = vmatpush1.xpose.msra.mxu0 0.0
        %7044 = vmatprep.mubr.f32.mxu0 %v1469
        %7045 = vmatmul.mubr.f32.gmra.mrb[0].mxu0 %v1461
        %v7046 = vpop.f32.mrb[0].mxu0
        %v7047 = vadd.f32 %v6977, %v7046
        %v7048 = vpop.f32.mrb[0].mxu0
        %7049 = vdwg.mxu0
        %7050 = vmatprep.subr.mxu0 %v439
        %7051 = vmatpush1.xpose.msra.mxu0 %v438
        %7052 = vmatprep.subr.mxu0 %v695
        %7053 = vmatpush1.xpose.msra.mxu0 %v694
        %7054 = vmatprep.subr.mxu0 0.0
        %7055 = vmatpush1.xpose.msra.mxu0 0.0
        %7056 = vmatprep.subr.mxu0 0.0
        %7057 = vmatpush1.xpose.msra.mxu0 0.0
        %7058 = vmatprep.subr.mxu0 0.0
        %7059 = vmatpush1.xpose.msra.mxu0 0.0
        %7060 = vmatprep.subr.mxu0 0.0
        %7061 = vmatpush1.xpose.msra.mxu0 0.0
        %7062 = vmatprep.subr.mxu0 0.0
        %7063 = vmatpush1.xpose.msra.mxu0 0.0
        %7064 = vmatprep.subr.mxu0 0.0
        %7065 = vmatpush1.xpose.msra.mxu0 0.0
        %7066 = vmatprep.subr.mxu0 0.0
        %7067 = vmatpush1.xpose.msra.mxu0 0.0
        %7068 = vmatprep.subr.mxu0 0.0
        %7069 = vmatpush1.xpose.msra.mxu0 0.0
        %7070 = vmatprep.subr.mxu0 0.0
        %7071 = vmatpush1.xpose.msra.mxu0 0.0
        %7072 = vmatprep.subr.mxu0 0.0
        %7073 = vmatpush1.xpose.msra.mxu0 0.0
        %7074 = vmatprep.subr.mxu0 0.0
        %7075 = vmatpush1.xpose.msra.mxu0 0.0
        %7076 = vmatprep.subr.mxu0 0.0
        %7077 = vmatpush1.xpose.msra.mxu0 0.0
        %7078 = vmatprep.subr.mxu0 0.0
        %7079 = vmatpush1.xpose.msra.mxu0 0.0
        %7080 = vmatprep.subr.mxu0 0.0
        %7081 = vmatpush1.xpose.msra.mxu0 0.0
        %7082 = vmatprep.subr.mxu0 0.0
        %7083 = vmatpush1.xpose.msra.mxu0 0.0
        %7084 = vmatprep.subr.mxu0 0.0
        %7085 = vmatpush1.xpose.msra.mxu0 0.0
        %7086 = vmatprep.subr.mxu0 0.0
        %7087 = vmatpush1.xpose.msra.mxu0 0.0
        %7088 = vmatprep.subr.mxu0 0.0
        %7089 = vmatpush1.xpose.msra.mxu0 0.0
        %7090 = vmatprep.subr.mxu0 0.0
        %7091 = vmatpush1.xpose.msra.mxu0 0.0
        %7092 = vmatprep.subr.mxu0 0.0
        %7093 = vmatpush1.xpose.msra.mxu0 0.0
        %7094 = vmatprep.subr.mxu0 0.0
        %7095 = vmatpush1.xpose.msra.mxu0 0.0
        %7096 = vmatprep.subr.mxu0 0.0
        %7097 = vmatpush1.xpose.msra.mxu0 0.0
        %7098 = vmatprep.subr.mxu0 0.0
        %7099 = vmatpush1.xpose.msra.mxu0 0.0
        %7100 = vmatprep.subr.mxu0 0.0
        %7101 = vmatpush1.xpose.msra.mxu0 0.0
        %7102 = vmatprep.subr.mxu0 0.0
        %7103 = vmatpush1.xpose.msra.mxu0 0.0
        %7104 = vmatprep.subr.mxu0 0.0
        %7105 = vmatpush1.xpose.msra.mxu0 0.0
        %7106 = vmatprep.subr.mxu0 0.0
        %7107 = vmatpush1.xpose.msra.mxu0 0.0
        %7108 = vmatprep.subr.mxu0 0.0
        %7109 = vmatpush1.xpose.msra.mxu0 0.0
        %7110 = vmatprep.subr.mxu0 0.0
        %7111 = vmatpush1.xpose.msra.mxu0 0.0
        %7112 = vmatprep.subr.mxu0 0.0
        %7113 = vmatpush1.xpose.msra.mxu0 0.0
        %7114 = vmatprep.mubr.f32.mxu0 %v1470
        %7115 = vmatmul.mubr.f32.gmra.mrb[0].mxu0 %v1468
        %v7116 = vpop.f32.mrb[0].mxu0
        %v7117 = vadd.f32 %v7047, %v7116
        %v7118 = vpop.f32.mrb[0].mxu0
        %7119 = vdwg.mxu0
        %7120 = vmatprep.subr.mxu0 %v441
        %7121 = vmatpush1.xpose.msra.mxu0 %v440
        %7122 = vmatprep.subr.mxu0 %v697
        %7123 = vmatpush1.xpose.msra.mxu0 %v696
        %7124 = vmatprep.subr.mxu0 0.0
        %7125 = vmatpush1.xpose.msra.mxu0 0.0
        %7126 = vmatprep.subr.mxu0 0.0
        %7127 = vmatpush1.xpose.msra.mxu0 0.0
        %7128 = vmatprep.subr.mxu0 0.0
        %7129 = vmatpush1.xpose.msra.mxu0 0.0
        %7130 = vmatprep.subr.mxu0 0.0
        %7131 = vmatpush1.xpose.msra.mxu0 0.0
        %7132 = vmatprep.subr.mxu0 0.0
        %7133 = vmatpush1.xpose.msra.mxu0 0.0
        %7134 = vmatprep.subr.mxu0 0.0
        %7135 = vmatpush1.xpose.msra.mxu0 0.0
        %7136 = vmatprep.subr.mxu0 0.0
        %7137 = vmatpush1.xpose.msra.mxu0 0.0
        %7138 = vmatprep.subr.mxu0 0.0
        %7139 = vmatpush1.xpose.msra.mxu0 0.0
        %7140 = vmatprep.subr.mxu0 0.0
        %7141 = vmatpush1.xpose.msra.mxu0 0.0
        %7142 = vmatprep.subr.mxu0 0.0
        %7143 = vmatpush1.xpose.msra.mxu0 0.0
        %7144 = vmatprep.subr.mxu0 0.0
        %7145 = vmatpush1.xpose.msra.mxu0 0.0
        %7146 = vmatprep.subr.mxu0 0.0
        %7147 = vmatpush1.xpose.msra.mxu0 0.0
        %7148 = vmatprep.subr.mxu0 0.0
        %7149 = vmatpush1.xpose.msra.mxu0 0.0
        %7150 = vmatprep.subr.mxu0 0.0
        %7151 = vmatpush1.xpose.msra.mxu0 0.0
        %7152 = vmatprep.subr.mxu0 0.0
        %7153 = vmatpush1.xpose.msra.mxu0 0.0
        %7154 = vmatprep.subr.mxu0 0.0
        %7155 = vmatpush1.xpose.msra.mxu0 0.0
        %7156 = vmatprep.subr.mxu0 0.0
        %7157 = vmatpush1.xpose.msra.mxu0 0.0
        %7158 = vmatprep.subr.mxu0 0.0
        %7159 = vmatpush1.xpose.msra.mxu0 0.0
        %7160 = vmatprep.subr.mxu0 0.0
        %7161 = vmatpush1.xpose.msra.mxu0 0.0
        %7162 = vmatprep.subr.mxu0 0.0
        %7163 = vmatpush1.xpose.msra.mxu0 0.0
        %7164 = vmatprep.subr.mxu0 0.0
        %7165 = vmatpush1.xpose.msra.mxu0 0.0
        %7166 = vmatprep.subr.mxu0 0.0
        %7167 = vmatpush1.xpose.msra.mxu0 0.0
        %7168 = vmatprep.subr.mxu0 0.0
        %7169 = vmatpush1.xpose.msra.mxu0 0.0
        %7170 = vmatprep.subr.mxu0 0.0
        %7171 = vmatpush1.xpose.msra.mxu0 0.0
        %7172 = vmatprep.subr.mxu0 0.0
        %7173 = vmatpush1.xpose.msra.mxu0 0.0
        %7174 = vmatprep.subr.mxu0 0.0
        %7175 = vmatpush1.xpose.msra.mxu0 0.0
        %7176 = vmatprep.subr.mxu0 0.0
        %7177 = vmatpush1.xpose.msra.mxu0 0.0
        %7178 = vmatprep.subr.mxu0 0.0
        %7179 = vmatpush1.xpose.msra.mxu0 0.0
        %7180 = vmatprep.subr.mxu0 0.0
        %7181 = vmatpush1.xpose.msra.mxu0 0.0
        %7182 = vmatprep.subr.mxu0 0.0
        %7183 = vmatpush1.xpose.msra.mxu0 0.0
        %7184 = vmatprep.mubr.f32.mxu0 %v1486
        %7185 = vmatmul.mubr.f32.gmra.mrb[0].mxu0 %v1478
        %v7186 = vpop.f32.mrb[0].mxu0
        %v7187 = vadd.f32 %v7117, %v7186
        %v7188 = vpop.f32.mrb[0].mxu0
        %7189 = vdwg.mxu0
        %7190 = vmatprep.subr.mxu0 %v443
        %7191 = vmatpush1.xpose.msra.mxu0 %v442
        %7192 = vmatprep.subr.mxu0 %v699
        %7193 = vmatpush1.xpose.msra.mxu0 %v698
        %7194 = vmatprep.subr.mxu0 0.0
        %7195 = vmatpush1.xpose.msra.mxu0 0.0
        %7196 = vmatprep.subr.mxu0 0.0
        %7197 = vmatpush1.xpose.msra.mxu0 0.0
        %7198 = vmatprep.subr.mxu0 0.0
        %7199 = vmatpush1.xpose.msra.mxu0 0.0
        %7200 = vmatprep.subr.mxu0 0.0
        %7201 = vmatpush1.xpose.msra.mxu0 0.0
        %7202 = vmatprep.subr.mxu0 0.0
        %7203 = vmatpush1.xpose.msra.mxu0 0.0
        %7204 = vmatprep.subr.mxu0 0.0
        %7205 = vmatpush1.xpose.msra.mxu0 0.0
        %7206 = vmatprep.subr.mxu0 0.0
        %7207 = vmatpush1.xpose.msra.mxu0 0.0
        %7208 = vmatprep.subr.mxu0 0.0
        %7209 = vmatpush1.xpose.msra.mxu0 0.0
        %7210 = vmatprep.subr.mxu0 0.0
        %7211 = vmatpush1.xpose.msra.mxu0 0.0
        %7212 = vmatprep.subr.mxu0 0.0
        %7213 = vmatpush1.xpose.msra.mxu0 0.0
        %7214 = vmatprep.subr.mxu0 0.0
        %7215 = vmatpush1.xpose.msra.mxu0 0.0
        %7216 = vmatprep.subr.mxu0 0.0
        %7217 = vmatpush1.xpose.msra.mxu0 0.0
        %7218 = vmatprep.subr.mxu0 0.0
        %7219 = vmatpush1.xpose.msra.mxu0 0.0
        %7220 = vmatprep.subr.mxu0 0.0
        %7221 = vmatpush1.xpose.msra.mxu0 0.0
        %7222 = vmatprep.subr.mxu0 0.0
        %7223 = vmatpush1.xpose.msra.mxu0 0.0
        %7224 = vmatprep.subr.mxu0 0.0
        %7225 = vmatpush1.xpose.msra.mxu0 0.0
        %7226 = vmatprep.subr.mxu0 0.0
        %7227 = vmatpush1.xpose.msra.mxu0 0.0
        %7228 = vmatprep.subr.mxu0 0.0
        %7229 = vmatpush1.xpose.msra.mxu0 0.0
        %7230 = vmatprep.subr.mxu0 0.0
        %7231 = vmatpush1.xpose.msra.mxu0 0.0
        %7232 = vmatprep.subr.mxu0 0.0
        %7233 = vmatpush1.xpose.msra.mxu0 0.0
        %7234 = vmatprep.subr.mxu0 0.0
        %7235 = vmatpush1.xpose.msra.mxu0 0.0
        %7236 = vmatprep.subr.mxu0 0.0
        %7237 = vmatpush1.xpose.msra.mxu0 0.0
        %7238 = vmatprep.subr.mxu0 0.0
        %7239 = vmatpush1.xpose.msra.mxu0 0.0
        %7240 = vmatprep.subr.mxu0 0.0
        %7241 = vmatpush1.xpose.msra.mxu0 0.0
        %7242 = vmatprep.subr.mxu0 0.0
        %7243 = vmatpush1.xpose.msra.mxu0 0.0
        %7244 = vmatprep.subr.mxu0 0.0
        %7245 = vmatpush1.xpose.msra.mxu0 0.0
        %7246 = vmatprep.subr.mxu0 0.0
        %7247 = vmatpush1.xpose.msra.mxu0 0.0
        %7248 = vmatprep.subr.mxu0 0.0
        %7249 = vmatpush1.xpose.msra.mxu0 0.0
        %7250 = vmatprep.subr.mxu0 0.0
        %7251 = vmatpush1.xpose.msra.mxu0 0.0
        %7252 = vmatprep.subr.mxu0 0.0
        %7253 = vmatpush1.xpose.msra.mxu0 0.0
        %7254 = vmatprep.mubr.f32.mxu0 %v1487
        %7255 = vmatmul.mubr.f32.gmra.mrb[0].mxu0 %v1485
        %v7256 = vpop.f32.mrb[0].mxu0
        %v7257 = vadd.f32 %v7187, %v7256
        %v7258 = vpop.f32.mrb[0].mxu0
        %7259 = vdwg.mxu0
        %7260 = vmatprep.subr.mxu0 %v445
        %7261 = vmatpush1.xpose.msra.mxu0 %v444
        %7262 = vmatprep.subr.mxu0 %v701
        %7263 = vmatpush1.xpose.msra.mxu0 %v700
        %7264 = vmatprep.subr.mxu0 0.0
        %7265 = vmatpush1.xpose.msra.mxu0 0.0
        %7266 = vmatprep.subr.mxu0 0.0
        %7267 = vmatpush1.xpose.msra.mxu0 0.0
        %7268 = vmatprep.subr.mxu0 0.0
        %7269 = vmatpush1.xpose.msra.mxu0 0.0
        %7270 = vmatprep.subr.mxu0 0.0
        %7271 = vmatpush1.xpose.msra.mxu0 0.0
        %7272 = vmatprep.subr.mxu0 0.0
        %7273 = vmatpush1.xpose.msra.mxu0 0.0
        %7274 = vmatprep.subr.mxu0 0.0
        %7275 = vmatpush1.xpose.msra.mxu0 0.0
        %7276 = vmatprep.subr.mxu0 0.0
        %7277 = vmatpush1.xpose.msra.mxu0 0.0
        %7278 = vmatprep.subr.mxu0 0.0
        %7279 = vmatpush1.xpose.msra.mxu0 0.0
        %7280 = vmatprep.subr.mxu0 0.0
        %7281 = vmatpush1.xpose.msra.mxu0 0.0
        %7282 = vmatprep.subr.mxu0 0.0
        %7283 = vmatpush1.xpose.msra.mxu0 0.0
        %7284 = vmatprep.subr.mxu0 0.0
        %7285 = vmatpush1.xpose.msra.mxu0 0.0
        %7286 = vmatprep.subr.mxu0 0.0
        %7287 = vmatpush1.xpose.msra.mxu0 0.0
        %7288 = vmatprep.subr.mxu0 0.0
        %7289 = vmatpush1.xpose.msra.mxu0 0.0
        %7290 = vmatprep.subr.mxu0 0.0
        %7291 = vmatpush1.xpose.msra.mxu0 0.0
        %7292 = vmatprep.subr.mxu0 0.0
        %7293 = vmatpush1.xpose.msra.mxu0 0.0
        %7294 = vmatprep.subr.mxu0 0.0
        %7295 = vmatpush1.xpose.msra.mxu0 0.0
        %7296 = vmatprep.subr.mxu0 0.0
        %7297 = vmatpush1.xpose.msra.mxu0 0.0
        %7298 = vmatprep.subr.mxu0 0.0
        %7299 = vmatpush1.xpose.msra.mxu0 0.0
        %7300 = vmatprep.subr.mxu0 0.0
        %7301 = vmatpush1.xpose.msra.mxu0 0.0
        %7302 = vmatprep.subr.mxu0 0.0
        %7303 = vmatpush1.xpose.msra.mxu0 0.0
        %7304 = vmatprep.subr.mxu0 0.0
        %7305 = vmatpush1.xpose.msra.mxu0 0.0
        %7306 = vmatprep.subr.mxu0 0.0
        %7307 = vmatpush1.xpose.msra.mxu0 0.0
        %7308 = vmatprep.subr.mxu0 0.0
        %7309 = vmatpush1.xpose.msra.mxu0 0.0
        %7310 = vmatprep.subr.mxu0 0.0
        %7311 = vmatpush1.xpose.msra.mxu0 0.0
        %7312 = vmatprep.subr.mxu0 0.0
        %7313 = vmatpush1.xpose.msra.mxu0 0.0
        %7314 = vmatprep.subr.mxu0 0.0
        %7315 = vmatpush1.xpose.msra.mxu0 0.0
        %7316 = vmatprep.subr.mxu0 0.0
        %7317 = vmatpush1.xpose.msra.mxu0 0.0
        %7318 = vmatprep.subr.mxu0 0.0
        %7319 = vmatpush1.xpose.msra.mxu0 0.0
        %7320 = vmatprep.subr.mxu0 0.0
        %7321 = vmatpush1.xpose.msra.mxu0 0.0
        %7322 = vmatprep.subr.mxu0 0.0
        %7323 = vmatpush1.xpose.msra.mxu0 0.0
        %7324 = vmatprep.mubr.f32.mxu0 %v1503
        %7325 = vmatmul.mubr.f32.gmra.mrb[0].mxu0 %v1495
        %v7326 = vpop.f32.mrb[0].mxu0
        %v7327 = vadd.f32 %v7257, %v7326
        %v7328 = vpop.f32.mrb[0].mxu0
        %7329 = vdwg.mxu0
        %7330 = vmatprep.subr.mxu0 %v447
        %7331 = vmatpush1.xpose.msra.mxu0 %v446
        %7332 = vmatprep.subr.mxu0 %v703
        %7333 = vmatpush1.xpose.msra.mxu0 %v702
        %7334 = vmatprep.subr.mxu0 0.0
        %7335 = vmatpush1.xpose.msra.mxu0 0.0
        %7336 = vmatprep.subr.mxu0 0.0
        %7337 = vmatpush1.xpose.msra.mxu0 0.0
        %7338 = vmatprep.subr.mxu0 0.0
        %7339 = vmatpush1.xpose.msra.mxu0 0.0
        %7340 = vmatprep.subr.mxu0 0.0
        %7341 = vmatpush1.xpose.msra.mxu0 0.0
        %7342 = vmatprep.subr.mxu0 0.0
        %7343 = vmatpush1.xpose.msra.mxu0 0.0
        %7344 = vmatprep.subr.mxu0 0.0
        %7345 = vmatpush1.xpose.msra.mxu0 0.0
        %7346 = vmatprep.subr.mxu0 0.0
        %7347 = vmatpush1.xpose.msra.mxu0 0.0
        %7348 = vmatprep.subr.mxu0 0.0
        %7349 = vmatpush1.xpose.msra.mxu0 0.0
        %7350 = vmatprep.subr.mxu0 0.0
        %7351 = vmatpush1.xpose.msra.mxu0 0.0
        %7352 = vmatprep.subr.mxu0 0.0
        %7353 = vmatpush1.xpose.msra.mxu0 0.0
        %7354 = vmatprep.subr.mxu0 0.0
        %7355 = vmatpush1.xpose.msra.mxu0 0.0
        %7356 = vmatprep.subr.mxu0 0.0
        %7357 = vmatpush1.xpose.msra.mxu0 0.0
        %7358 = vmatprep.subr.mxu0 0.0
        %7359 = vmatpush1.xpose.msra.mxu0 0.0
        %7360 = vmatprep.subr.mxu0 0.0
        %7361 = vmatpush1.xpose.msra.mxu0 0.0
        %7362 = vmatprep.subr.mxu0 0.0
        %7363 = vmatpush1.xpose.msra.mxu0 0.0
        %7364 = vmatprep.subr.mxu0 0.0
        %7365 = vmatpush1.xpose.msra.mxu0 0.0
        %7366 = vmatprep.subr.mxu0 0.0
        %7367 = vmatpush1.xpose.msra.mxu0 0.0
        %7368 = vmatprep.subr.mxu0 0.0
        %7369 = vmatpush1.xpose.msra.mxu0 0.0
        %7370 = vmatprep.subr.mxu0 0.0
        %7371 = vmatpush1.xpose.msra.mxu0 0.0
        %7372 = vmatprep.subr.mxu0 0.0
        %7373 = vmatpush1.xpose.msra.mxu0 0.0
        %7374 = vmatprep.subr.mxu0 0.0
        %7375 = vmatpush1.xpose.msra.mxu0 0.0
        %7376 = vmatprep.subr.mxu0 0.0
        %7377 = vmatpush1.xpose.msra.mxu0 0.0
        %7378 = vmatprep.subr.mxu0 0.0
        %7379 = vmatpush1.xpose.msra.mxu0 0.0
        %7380 = vmatprep.subr.mxu0 0.0
        %7381 = vmatpush1.xpose.msra.mxu0 0.0
        %7382 = vmatprep.subr.mxu0 0.0
        %7383 = vmatpush1.xpose.msra.mxu0 0.0
        %7384 = vmatprep.subr.mxu0 0.0
        %7385 = vmatpush1.xpose.msra.mxu0 0.0
        %7386 = vmatprep.subr.mxu0 0.0
        %7387 = vmatpush1.xpose.msra.mxu0 0.0
        %7388 = vmatprep.subr.mxu0 0.0
        %7389 = vmatpush1.xpose.msra.mxu0 0.0
        %7390 = vmatprep.subr.mxu0 0.0
        %7391 = vmatpush1.xpose.msra.mxu0 0.0
        %7392 = vmatprep.subr.mxu0 0.0
        %7393 = vmatpush1.xpose.msra.mxu0 0.0
        %7394 = vmatprep.mubr.f32.mxu0 %v1504
        %7395 = vmatmul.mubr.f32.gmra.mrb[0].mxu0 %v1502
        %v7396 = vpop.f32.mrb[0].mxu0
        %v7397 = vadd.f32 %v7327, %v7396
        %v7398 = vpop.f32.mrb[0].mxu0
        %7399 = vdwg.mxu0
        %7400 = vmatprep.subr.mxu0 %v449
        %7401 = vmatpush1.xpose.msra.mxu0 %v448
        %7402 = vmatprep.subr.mxu0 %v705
        %7403 = vmatpush1.xpose.msra.mxu0 %v704
        %7404 = vmatprep.subr.mxu0 0.0
        %7405 = vmatpush1.xpose.msra.mxu0 0.0
        %7406 = vmatprep.subr.mxu0 0.0
        %7407 = vmatpush1.xpose.msra.mxu0 0.0
        %7408 = vmatprep.subr.mxu0 0.0
        %7409 = vmatpush1.xpose.msra.mxu0 0.0
        %7410 = vmatprep.subr.mxu0 0.0
        %7411 = vmatpush1.xpose.msra.mxu0 0.0
        %7412 = vmatprep.subr.mxu0 0.0
        %7413 = vmatpush1.xpose.msra.mxu0 0.0
        %7414 = vmatprep.subr.mxu0 0.0
        %7415 = vmatpush1.xpose.msra.mxu0 0.0
        %7416 = vmatprep.subr.mxu0 0.0
        %7417 = vmatpush1.xpose.msra.mxu0 0.0
        %7418 = vmatprep.subr.mxu0 0.0
        %7419 = vmatpush1.xpose.msra.mxu0 0.0
        %7420 = vmatprep.subr.mxu0 0.0
        %7421 = vmatpush1.xpose.msra.mxu0 0.0
        %7422 = vmatprep.subr.mxu0 0.0
        %7423 = vmatpush1.xpose.msra.mxu0 0.0
        %7424 = vmatprep.subr.mxu0 0.0
        %7425 = vmatpush1.xpose.msra.mxu0 0.0
        %7426 = vmatprep.subr.mxu0 0.0
        %7427 = vmatpush1.xpose.msra.mxu0 0.0
        %7428 = vmatprep.subr.mxu0 0.0
        %7429 = vmatpush1.xpose.msra.mxu0 0.0
        %7430 = vmatprep.subr.mxu0 0.0
        %7431 = vmatpush1.xpose.msra.mxu0 0.0
        %7432 = vmatprep.subr.mxu0 0.0
        %7433 = vmatpush1.xpose.msra.mxu0 0.0
        %7434 = vmatprep.subr.mxu0 0.0
        %7435 = vmatpush1.xpose.msra.mxu0 0.0
        %7436 = vmatprep.subr.mxu0 0.0
        %7437 = vmatpush1.xpose.msra.mxu0 0.0
        %7438 = vmatprep.subr.mxu0 0.0
        %7439 = vmatpush1.xpose.msra.mxu0 0.0
        %7440 = vmatprep.subr.mxu0 0.0
        %7441 = vmatpush1.xpose.msra.mxu0 0.0
        %7442 = vmatprep.subr.mxu0 0.0
        %7443 = vmatpush1.xpose.msra.mxu0 0.0
        %7444 = vmatprep.subr.mxu0 0.0
        %7445 = vmatpush1.xpose.msra.mxu0 0.0
        %7446 = vmatprep.subr.mxu0 0.0
        %7447 = vmatpush1.xpose.msra.mxu0 0.0
        %7448 = vmatprep.subr.mxu0 0.0
        %7449 = vmatpush1.xpose.msra.mxu0 0.0
        %7450 = vmatprep.subr.mxu0 0.0
        %7451 = vmatpush1.xpose.msra.mxu0 0.0
        %7452 = vmatprep.subr.mxu0 0.0
        %7453 = vmatpush1.xpose.msra.mxu0 0.0
        %7454 = vmatprep.subr.mxu0 0.0
        %7455 = vmatpush1.xpose.msra.mxu0 0.0
        %7456 = vmatprep.subr.mxu0 0.0
        %7457 = vmatpush1.xpose.msra.mxu0 0.0
        %7458 = vmatprep.subr.mxu0 0.0
        %7459 = vmatpush1.xpose.msra.mxu0 0.0
        %7460 = vmatprep.subr.mxu0 0.0
        %7461 = vmatpush1.xpose.msra.mxu0 0.0
        %7462 = vmatprep.subr.mxu0 0.0
        %7463 = vmatpush1.xpose.msra.mxu0 0.0
        %7464 = vmatprep.mubr.f32.mxu0 %v1520
        %7465 = vmatmul.mubr.f32.gmra.mrb[0].mxu0 %v1512
        %v7466 = vpop.f32.mrb[0].mxu0
        %v7467 = vadd.f32 %v7397, %v7466
        %v7468 = vpop.f32.mrb[0].mxu0
        %7469 = vdwg.mxu0
        %7470 = vmatprep.subr.mxu0 %v451
        %7471 = vmatpush1.xpose.msra.mxu0 %v450
        %7472 = vmatprep.subr.mxu0 %v707
        %7473 = vmatpush1.xpose.msra.mxu0 %v706
        %7474 = vmatprep.subr.mxu0 0.0
        %7475 = vmatpush1.xpose.msra.mxu0 0.0
        %7476 = vmatprep.subr.mxu0 0.0
        %7477 = vmatpush1.xpose.msra.mxu0 0.0
        %7478 = vmatprep.subr.mxu0 0.0
        %7479 = vmatpush1.xpose.msra.mxu0 0.0
        %7480 = vmatprep.subr.mxu0 0.0
        %7481 = vmatpush1.xpose.msra.mxu0 0.0
        %7482 = vmatprep.subr.mxu0 0.0
        %7483 = vmatpush1.xpose.msra.mxu0 0.0
        %7484 = vmatprep.subr.mxu0 0.0
        %7485 = vmatpush1.xpose.msra.mxu0 0.0
        %7486 = vmatprep.subr.mxu0 0.0
        %7487 = vmatpush1.xpose.msra.mxu0 0.0
        %7488 = vmatprep.subr.mxu0 0.0
        %7489 = vmatpush1.xpose.msra.mxu0 0.0
        %7490 = vmatprep.subr.mxu0 0.0
        %7491 = vmatpush1.xpose.msra.mxu0 0.0
        %7492 = vmatprep.subr.mxu0 0.0
        %7493 = vmatpush1.xpose.msra.mxu0 0.0
        %7494 = vmatprep.subr.mxu0 0.0
        %7495 = vmatpush1.xpose.msra.mxu0 0.0
        %7496 = vmatprep.subr.mxu0 0.0
        %7497 = vmatpush1.xpose.msra.mxu0 0.0
        %7498 = vmatprep.subr.mxu0 0.0
        %7499 = vmatpush1.xpose.msra.mxu0 0.0
        %7500 = vmatprep.subr.mxu0 0.0
        %7501 = vmatpush1.xpose.msra.mxu0 0.0
        %7502 = vmatprep.subr.mxu0 0.0
        %7503 = vmatpush1.xpose.msra.mxu0 0.0
        %7504 = vmatprep.subr.mxu0 0.0
        %7505 = vmatpush1.xpose.msra.mxu0 0.0
        %7506 = vmatprep.subr.mxu0 0.0
        %7507 = vmatpush1.xpose.msra.mxu0 0.0
        %7508 = vmatprep.subr.mxu0 0.0
        %7509 = vmatpush1.xpose.msra.mxu0 0.0
        %7510 = vmatprep.subr.mxu0 0.0
        %7511 = vmatpush1.xpose.msra.mxu0 0.0
        %7512 = vmatprep.subr.mxu0 0.0
        %7513 = vmatpush1.xpose.msra.mxu0 0.0
        %7514 = vmatprep.subr.mxu0 0.0
        %7515 = vmatpush1.xpose.msra.mxu0 0.0
        %7516 = vmatprep.subr.mxu0 0.0
        %7517 = vmatpush1.xpose.msra.mxu0 0.0
        %7518 = vmatprep.subr.mxu0 0.0
        %7519 = vmatpush1.xpose.msra.mxu0 0.0
        %7520 = vmatprep.subr.mxu0 0.0
        %7521 = vmatpush1.xpose.msra.mxu0 0.0
        %7522 = vmatprep.subr.mxu0 0.0
        %7523 = vmatpush1.xpose.msra.mxu0 0.0
        %7524 = vmatprep.subr.mxu0 0.0
        %7525 = vmatpush1.xpose.msra.mxu0 0.0
        %7526 = vmatprep.subr.mxu0 0.0
        %7527 = vmatpush1.xpose.msra.mxu0 0.0
        %7528 = vmatprep.subr.mxu0 0.0
        %7529 = vmatpush1.xpose.msra.mxu0 0.0
        %7530 = vmatprep.subr.mxu0 0.0
        %7531 = vmatpush1.xpose.msra.mxu0 0.0
        %7532 = vmatprep.subr.mxu0 0.0
        %7533 = vmatpush1.xpose.msra.mxu0 0.0
        %7534 = vmatprep.mubr.f32.mxu0 %v1521
        %7535 = vmatmul.mubr.f32.gmra.mrb[0].mxu0 %v1519
        %v7536 = vpop.f32.mrb[0].mxu0
        %v7537 = vadd.f32 %v7467, %v7536
        %v7538 = vpop.f32.mrb[0].mxu0
        %7539 = vdwg.mxu0
        %7540 = vmatprep.subr.mxu0 %v453
        %7541 = vmatpush1.xpose.msra.mxu0 %v452
        %7542 = vmatprep.subr.mxu0 %v709
        %7543 = vmatpush1.xpose.msra.mxu0 %v708
        %7544 = vmatprep.subr.mxu0 0.0
        %7545 = vmatpush1.xpose.msra.mxu0 0.0
        %7546 = vmatprep.subr.mxu0 0.0
        %7547 = vmatpush1.xpose.msra.mxu0 0.0
        %7548 = vmatprep.subr.mxu0 0.0
        %7549 = vmatpush1.xpose.msra.mxu0 0.0
        %7550 = vmatprep.subr.mxu0 0.0
        %7551 = vmatpush1.xpose.msra.mxu0 0.0
        %7552 = vmatprep.subr.mxu0 0.0
        %7553 = vmatpush1.xpose.msra.mxu0 0.0
        %7554 = vmatprep.subr.mxu0 0.0
        %7555 = vmatpush1.xpose.msra.mxu0 0.0
        %7556 = vmatprep.subr.mxu0 0.0
        %7557 = vmatpush1.xpose.msra.mxu0 0.0
        %7558 = vmatprep.subr.mxu0 0.0
        %7559 = vmatpush1.xpose.msra.mxu0 0.0
        %7560 = vmatprep.subr.mxu0 0.0
        %7561 = vmatpush1.xpose.msra.mxu0 0.0
        %7562 = vmatprep.subr.mxu0 0.0
        %7563 = vmatpush1.xpose.msra.mxu0 0.0
        %7564 = vmatprep.subr.mxu0 0.0
        %7565 = vmatpush1.xpose.msra.mxu0 0.0
        %7566 = vmatprep.subr.mxu0 0.0
        %7567 = vmatpush1.xpose.msra.mxu0 0.0
        %7568 = vmatprep.subr.mxu0 0.0
        %7569 = vmatpush1.xpose.msra.mxu0 0.0
        %7570 = vmatprep.subr.mxu0 0.0
        %7571 = vmatpush1.xpose.msra.mxu0 0.0
        %7572 = vmatprep.subr.mxu0 0.0
        %7573 = vmatpush1.xpose.msra.mxu0 0.0
        %7574 = vmatprep.subr.mxu0 0.0
        %7575 = vmatpush1.xpose.msra.mxu0 0.0
        %7576 = vmatprep.subr.mxu0 0.0
        %7577 = vmatpush1.xpose.msra.mxu0 0.0
        %7578 = vmatprep.subr.mxu0 0.0
        %7579 = vmatpush1.xpose.msra.mxu0 0.0
        %7580 = vmatprep.subr.mxu0 0.0
        %7581 = vmatpush1.xpose.msra.mxu0 0.0
        %7582 = vmatprep.subr.mxu0 0.0
        %7583 = vmatpush1.xpose.msra.mxu0 0.0
        %7584 = vmatprep.subr.mxu0 0.0
        %7585 = vmatpush1.xpose.msra.mxu0 0.0
        %7586 = vmatprep.subr.mxu0 0.0
        %7587 = vmatpush1.xpose.msra.mxu0 0.0
        %7588 = vmatprep.subr.mxu0 0.0
        %7589 = vmatpush1.xpose.msra.mxu0 0.0
        %7590 = vmatprep.subr.mxu0 0.0
        %7591 = vmatpush1.xpose.msra.mxu0 0.0
        %7592 = vmatprep.subr.mxu0 0.0
        %7593 = vmatpush1.xpose.msra.mxu0 0.0
        %7594 = vmatprep.subr.mxu0 0.0
        %7595 = vmatpush1.xpose.msra.mxu0 0.0
        %7596 = vmatprep.subr.mxu0 0.0
        %7597 = vmatpush1.xpose.msra.mxu0 0.0
        %7598 = vmatprep.subr.mxu0 0.0
        %7599 = vmatpush1.xpose.msra.mxu0 0.0
        %7600 = vmatprep.subr.mxu0 0.0
        %7601 = vmatpush1.xpose.msra.mxu0 0.0
        %7602 = vmatprep.subr.mxu0 0.0
        %7603 = vmatpush1.xpose.msra.mxu0 0.0
        %7604 = vmatprep.mubr.f32.mxu0 %v1537
        %7605 = vmatmul.mubr.f32.gmra.mrb[0].mxu0 %v1529
        %v7606 = vpop.f32.mrb[0].mxu0
        %v7607 = vadd.f32 %v7537, %v7606
        %v7608 = vpop.f32.mrb[0].mxu0
        %7609 = vdwg.mxu0
        %7610 = vmatprep.subr.mxu0 %v455
        %7611 = vmatpush1.xpose.msra.mxu0 %v454
        %7612 = vmatprep.subr.mxu0 %v711
        %7613 = vmatpush1.xpose.msra.mxu0 %v710
        %7614 = vmatprep.subr.mxu0 0.0
        %7615 = vmatpush1.xpose.msra.mxu0 0.0
        %7616 = vmatprep.subr.mxu0 0.0
        %7617 = vmatpush1.xpose.msra.mxu0 0.0
        %7618 = vmatprep.subr.mxu0 0.0
        %7619 = vmatpush1.xpose.msra.mxu0 0.0
        %7620 = vmatprep.subr.mxu0 0.0
        %7621 = vmatpush1.xpose.msra.mxu0 0.0
        %7622 = vmatprep.subr.mxu0 0.0
        %7623 = vmatpush1.xpose.msra.mxu0 0.0
        %7624 = vmatprep.subr.mxu0 0.0
        %7625 = vmatpush1.xpose.msra.mxu0 0.0
        %7626 = vmatprep.subr.mxu0 0.0
        %7627 = vmatpush1.xpose.msra.mxu0 0.0
        %7628 = vmatprep.subr.mxu0 0.0
        %7629 = vmatpush1.xpose.msra.mxu0 0.0
        %7630 = vmatprep.subr.mxu0 0.0
        %7631 = vmatpush1.xpose.msra.mxu0 0.0
        %7632 = vmatprep.subr.mxu0 0.0
        %7633 = vmatpush1.xpose.msra.mxu0 0.0
        %7634 = vmatprep.subr.mxu0 0.0
        %7635 = vmatpush1.xpose.msra.mxu0 0.0
        %7636 = vmatprep.subr.mxu0 0.0
        %7637 = vmatpush1.xpose.msra.mxu0 0.0
        %7638 = vmatprep.subr.mxu0 0.0
        %7639 = vmatpush1.xpose.msra.mxu0 0.0
        %7640 = vmatprep.subr.mxu0 0.0
        %7641 = vmatpush1.xpose.msra.mxu0 0.0
        %7642 = vmatprep.subr.mxu0 0.0
        %7643 = vmatpush1.xpose.msra.mxu0 0.0
        %7644 = vmatprep.subr.mxu0 0.0
        %7645 = vmatpush1.xpose.msra.mxu0 0.0
        %7646 = vmatprep.subr.mxu0 0.0
        %7647 = vmatpush1.xpose.msra.mxu0 0.0
        %7648 = vmatprep.subr.mxu0 0.0
        %7649 = vmatpush1.xpose.msra.mxu0 0.0
        %7650 = vmatprep.subr.mxu0 0.0
        %7651 = vmatpush1.xpose.msra.mxu0 0.0
        %7652 = vmatprep.subr.mxu0 0.0
        %7653 = vmatpush1.xpose.msra.mxu0 0.0
        %7654 = vmatprep.subr.mxu0 0.0
        %7655 = vmatpush1.xpose.msra.mxu0 0.0
        %7656 = vmatprep.subr.mxu0 0.0
        %7657 = vmatpush1.xpose.msra.mxu0 0.0
        %7658 = vmatprep.subr.mxu0 0.0
        %7659 = vmatpush1.xpose.msra.mxu0 0.0
        %7660 = vmatprep.subr.mxu0 0.0
        %7661 = vmatpush1.xpose.msra.mxu0 0.0
        %7662 = vmatprep.subr.mxu0 0.0
        %7663 = vmatpush1.xpose.msra.mxu0 0.0
        %7664 = vmatprep.subr.mxu0 0.0
        %7665 = vmatpush1.xpose.msra.mxu0 0.0
        %7666 = vmatprep.subr.mxu0 0.0
        %7667 = vmatpush1.xpose.msra.mxu0 0.0
        %7668 = vmatprep.subr.mxu0 0.0
        %7669 = vmatpush1.xpose.msra.mxu0 0.0
        %7670 = vmatprep.subr.mxu0 0.0
        %7671 = vmatpush1.xpose.msra.mxu0 0.0
        %7672 = vmatprep.subr.mxu0 0.0
        %7673 = vmatpush1.xpose.msra.mxu0 0.0
        %7674 = vmatprep.mubr.f32.mxu0 %v1538
        %7675 = vmatmul.mubr.f32.gmra.mrb[0].mxu0 %v1536
        %v7676 = vpop.f32.mrb[0].mxu0
        %v7677 = vadd.f32 %v7607, %v7676
        %v7678 = vpop.f32.mrb[0].mxu0
        %7679 = vdwg.mxu0
        %7680 = vmatprep.subr.mxu0 %v457
        %7681 = vmatpush1.xpose.msra.mxu0 %v456
        %7682 = vmatprep.subr.mxu0 %v713
        %7683 = vmatpush1.xpose.msra.mxu0 %v712
        %7684 = vmatprep.subr.mxu0 0.0
        %7685 = vmatpush1.xpose.msra.mxu0 0.0
        %7686 = vmatprep.subr.mxu0 0.0
        %7687 = vmatpush1.xpose.msra.mxu0 0.0
        %7688 = vmatprep.subr.mxu0 0.0
        %7689 = vmatpush1.xpose.msra.mxu0 0.0
        %7690 = vmatprep.subr.mxu0 0.0
        %7691 = vmatpush1.xpose.msra.mxu0 0.0
        %7692 = vmatprep.subr.mxu0 0.0
        %7693 = vmatpush1.xpose.msra.mxu0 0.0
        %7694 = vmatprep.subr.mxu0 0.0
        %7695 = vmatpush1.xpose.msra.mxu0 0.0
        %7696 = vmatprep.subr.mxu0 0.0
        %7697 = vmatpush1.xpose.msra.mxu0 0.0
        %7698 = vmatprep.subr.mxu0 0.0
        %7699 = vmatpush1.xpose.msra.mxu0 0.0
        %7700 = vmatprep.subr.mxu0 0.0
        %7701 = vmatpush1.xpose.msra.mxu0 0.0
        %7702 = vmatprep.subr.mxu0 0.0
        %7703 = vmatpush1.xpose.msra.mxu0 0.0
        %7704 = vmatprep.subr.mxu0 0.0
        %7705 = vmatpush1.xpose.msra.mxu0 0.0
        %7706 = vmatprep.subr.mxu0 0.0
        %7707 = vmatpush1.xpose.msra.mxu0 0.0
        %7708 = vmatprep.subr.mxu0 0.0
        %7709 = vmatpush1.xpose.msra.mxu0 0.0
        %7710 = vmatprep.subr.mxu0 0.0
        %7711 = vmatpush1.xpose.msra.mxu0 0.0
        %7712 = vmatprep.subr.mxu0 0.0
        %7713 = vmatpush1.xpose.msra.mxu0 0.0
        %7714 = vmatprep.subr.mxu0 0.0
        %7715 = vmatpush1.xpose.msra.mxu0 0.0
        %7716 = vmatprep.subr.mxu0 0.0
        %7717 = vmatpush1.xpose.msra.mxu0 0.0
        %7718 = vmatprep.subr.mxu0 0.0
        %7719 = vmatpush1.xpose.msra.mxu0 0.0
        %7720 = vmatprep.subr.mxu0 0.0
        %7721 = vmatpush1.xpose.msra.mxu0 0.0
        %7722 = vmatprep.subr.mxu0 0.0
        %7723 = vmatpush1.xpose.msra.mxu0 0.0
        %7724 = vmatprep.subr.mxu0 0.0
        %7725 = vmatpush1.xpose.msra.mxu0 0.0
        %7726 = vmatprep.subr.mxu0 0.0
        %7727 = vmatpush1.xpose.msra.mxu0 0.0
        %7728 = vmatprep.subr.mxu0 0.0
        %7729 = vmatpush1.xpose.msra.mxu0 0.0
        %7730 = vmatprep.subr.mxu0 0.0
        %7731 = vmatpush1.xpose.msra.mxu0 0.0
        %7732 = vmatprep.subr.mxu0 0.0
        %7733 = vmatpush1.xpose.msra.mxu0 0.0
        %7734 = vmatprep.subr.mxu0 0.0
        %7735 = vmatpush1.xpose.msra.mxu0 0.0
        %7736 = vmatprep.subr.mxu0 0.0
        %7737 = vmatpush1.xpose.msra.mxu0 0.0
        %7738 = vmatprep.subr.mxu0 0.0
        %7739 = vmatpush1.xpose.msra.mxu0 0.0
        %7740 = vmatprep.subr.mxu0 0.0
        %7741 = vmatpush1.xpose.msra.mxu0 0.0
        %7742 = vmatprep.subr.mxu0 0.0
        %7743 = vmatpush1.xpose.msra.mxu0 0.0
        %7744 = vmatprep.mubr.f32.mxu0 %v1554
        %7745 = vmatmul.mubr.f32.gmra.mrb[0].mxu0 %v1546
        %v7746 = vpop.f32.mrb[0].mxu0
        %v7747 = vadd.f32 %v7677, %v7746
        %v7748 = vpop.f32.mrb[0].mxu0
        %7749 = vdwg.mxu0
        %7750 = vmatprep.subr.mxu0 %v459
        %7751 = vmatpush1.xpose.msra.mxu0 %v458
        %7752 = vmatprep.subr.mxu0 %v715
        %7753 = vmatpush1.xpose.msra.mxu0 %v714
        %7754 = vmatprep.subr.mxu0 0.0
        %7755 = vmatpush1.xpose.msra.mxu0 0.0
        %7756 = vmatprep.subr.mxu0 0.0
        %7757 = vmatpush1.xpose.msra.mxu0 0.0
        %7758 = vmatprep.subr.mxu0 0.0
        %7759 = vmatpush1.xpose.msra.mxu0 0.0
        %7760 = vmatprep.subr.mxu0 0.0
        %7761 = vmatpush1.xpose.msra.mxu0 0.0
        %7762 = vmatprep.subr.mxu0 0.0
        %7763 = vmatpush1.xpose.msra.mxu0 0.0
        %7764 = vmatprep.subr.mxu0 0.0
        %7765 = vmatpush1.xpose.msra.mxu0 0.0
        %7766 = vmatprep.subr.mxu0 0.0
        %7767 = vmatpush1.xpose.msra.mxu0 0.0
        %7768 = vmatprep.subr.mxu0 0.0
        %7769 = vmatpush1.xpose.msra.mxu0 0.0
        %7770 = vmatprep.subr.mxu0 0.0
        %7771 = vmatpush1.xpose.msra.mxu0 0.0
        %7772 = vmatprep.subr.mxu0 0.0
        %7773 = vmatpush1.xpose.msra.mxu0 0.0
        %7774 = vmatprep.subr.mxu0 0.0
        %7775 = vmatpush1.xpose.msra.mxu0 0.0
        %7776 = vmatprep.subr.mxu0 0.0
        %7777 = vmatpush1.xpose.msra.mxu0 0.0
        %7778 = vmatprep.subr.mxu0 0.0
        %7779 = vmatpush1.xpose.msra.mxu0 0.0
        %7780 = vmatprep.subr.mxu0 0.0
        %7781 = vmatpush1.xpose.msra.mxu0 0.0
        %7782 = vmatprep.subr.mxu0 0.0
        %7783 = vmatpush1.xpose.msra.mxu0 0.0
        %7784 = vmatprep.subr.mxu0 0.0
        %7785 = vmatpush1.xpose.msra.mxu0 0.0
        %7786 = vmatprep.subr.mxu0 0.0
        %7787 = vmatpush1.xpose.msra.mxu0 0.0
        %7788 = vmatprep.subr.mxu0 0.0
        %7789 = vmatpush1.xpose.msra.mxu0 0.0
        %7790 = vmatprep.subr.mxu0 0.0
        %7791 = vmatpush1.xpose.msra.mxu0 0.0
        %7792 = vmatprep.subr.mxu0 0.0
        %7793 = vmatpush1.xpose.msra.mxu0 0.0
        %7794 = vmatprep.subr.mxu0 0.0
        %7795 = vmatpush1.xpose.msra.mxu0 0.0
        %7796 = vmatprep.subr.mxu0 0.0
        %7797 = vmatpush1.xpose.msra.mxu0 0.0
        %7798 = vmatprep.subr.mxu0 0.0
        %7799 = vmatpush1.xpose.msra.mxu0 0.0
        %7800 = vmatprep.subr.mxu0 0.0
        %7801 = vmatpush1.xpose.msra.mxu0 0.0
        %7802 = vmatprep.subr.mxu0 0.0
        %7803 = vmatpush1.xpose.msra.mxu0 0.0
        %7804 = vmatprep.subr.mxu0 0.0
        %7805 = vmatpush1.xpose.msra.mxu0 0.0
        %7806 = vmatprep.subr.mxu0 0.0
        %7807 = vmatpush1.xpose.msra.mxu0 0.0
        %7808 = vmatprep.subr.mxu0 0.0
        %7809 = vmatpush1.xpose.msra.mxu0 0.0
        %7810 = vmatprep.subr.mxu0 0.0
        %7811 = vmatpush1.xpose.msra.mxu0 0.0
        %7812 = vmatprep.subr.mxu0 0.0
        %7813 = vmatpush1.xpose.msra.mxu0 0.0
        %7814 = vmatprep.mubr.f32.mxu0 %v1555
        %7815 = vmatmul.mubr.f32.gmra.mrb[0].mxu0 %v1553
        %v7816 = vpop.f32.mrb[0].mxu0
        %v7817 = vadd.f32 %v7747, %v7816
        %v7818 = vpop.f32.mrb[0].mxu0
        %7819 = vdwg.mxu0
        %7820 = vmatprep.subr.mxu0 %v461
        %7821 = vmatpush1.xpose.msra.mxu0 %v460
        %7822 = vmatprep.subr.mxu0 %v717
        %7823 = vmatpush1.xpose.msra.mxu0 %v716
        %7824 = vmatprep.subr.mxu0 0.0
        %7825 = vmatpush1.xpose.msra.mxu0 0.0
        %7826 = vmatprep.subr.mxu0 0.0
        %7827 = vmatpush1.xpose.msra.mxu0 0.0
        %7828 = vmatprep.subr.mxu0 0.0
        %7829 = vmatpush1.xpose.msra.mxu0 0.0
        %7830 = vmatprep.subr.mxu0 0.0
        %7831 = vmatpush1.xpose.msra.mxu0 0.0
        %7832 = vmatprep.subr.mxu0 0.0
        %7833 = vmatpush1.xpose.msra.mxu0 0.0
        %7834 = vmatprep.subr.mxu0 0.0
        %7835 = vmatpush1.xpose.msra.mxu0 0.0
        %7836 = vmatprep.subr.mxu0 0.0
        %7837 = vmatpush1.xpose.msra.mxu0 0.0
        %7838 = vmatprep.subr.mxu0 0.0
        %7839 = vmatpush1.xpose.msra.mxu0 0.0
        %7840 = vmatprep.subr.mxu0 0.0
        %7841 = vmatpush1.xpose.msra.mxu0 0.0
        %7842 = vmatprep.subr.mxu0 0.0
        %7843 = vmatpush1.xpose.msra.mxu0 0.0
        %7844 = vmatprep.subr.mxu0 0.0
        %7845 = vmatpush1.xpose.msra.mxu0 0.0
        %7846 = vmatprep.subr.mxu0 0.0
        %7847 = vmatpush1.xpose.msra.mxu0 0.0
        %7848 = vmatprep.subr.mxu0 0.0
        %7849 = vmatpush1.xpose.msra.mxu0 0.0
        %7850 = vmatprep.subr.mxu0 0.0
        %7851 = vmatpush1.xpose.msra.mxu0 0.0
        %7852 = vmatprep.subr.mxu0 0.0
        %7853 = vmatpush1.xpose.msra.mxu0 0.0
        %7854 = vmatprep.subr.mxu0 0.0
        %7855 = vmatpush1.xpose.msra.mxu0 0.0
        %7856 = vmatprep.subr.mxu0 0.0
        %7857 = vmatpush1.xpose.msra.mxu0 0.0
        %7858 = vmatprep.subr.mxu0 0.0
        %7859 = vmatpush1.xpose.msra.mxu0 0.0
        %7860 = vmatprep.subr.mxu0 0.0
        %7861 = vmatpush1.xpose.msra.mxu0 0.0
        %7862 = vmatprep.subr.mxu0 0.0
        %7863 = vmatpush1.xpose.msra.mxu0 0.0
        %7864 = vmatprep.subr.mxu0 0.0
        %7865 = vmatpush1.xpose.msra.mxu0 0.0
        %7866 = vmatprep.subr.mxu0 0.0
        %7867 = vmatpush1.xpose.msra.mxu0 0.0
        %7868 = vmatprep.subr.mxu0 0.0
        %7869 = vmatpush1.xpose.msra.mxu0 0.0
        %7870 = vmatprep.subr.mxu0 0.0
        %7871 = vmatpush1.xpose.msra.mxu0 0.0
        %7872 = vmatprep.subr.mxu0 0.0
        %7873 = vmatpush1.xpose.msra.mxu0 0.0
        %7874 = vmatprep.subr.mxu0 0.0
        %7875 = vmatpush1.xpose.msra.mxu0 0.0
        %7876 = vmatprep.subr.mxu0 0.0
        %7877 = vmatpush1.xpose.msra.mxu0 0.0
        %7878 = vmatprep.subr.mxu0 0.0
        %7879 = vmatpush1.xpose.msra.mxu0 0.0
        %7880 = vmatprep.subr.mxu0 0.0
        %7881 = vmatpush1.xpose.msra.mxu0 0.0
        %7882 = vmatprep.subr.mxu0 0.0
        %7883 = vmatpush1.xpose.msra.mxu0 0.0
        %7884 = vmatprep.mubr.f32.mxu0 %v1571
        %7885 = vmatmul.mubr.f32.gmra.mrb[0].mxu0 %v1563
        %v7886 = vpop.f32.mrb[0].mxu0
        %v7887 = vadd.f32 %v7817, %v7886
        %v7888 = vpop.f32.mrb[0].mxu0
        %7889 = vdwg.mxu0
        %7890 = vmatprep.subr.mxu0 %v463
        %7891 = vmatpush1.xpose.msra.mxu0 %v462
        %7892 = vmatprep.subr.mxu0 %v719
        %7893 = vmatpush1.xpose.msra.mxu0 %v718
        %7894 = vmatprep.subr.mxu0 0.0
        %7895 = vmatpush1.xpose.msra.mxu0 0.0
        %7896 = vmatprep.subr.mxu0 0.0
        %7897 = vmatpush1.xpose.msra.mxu0 0.0
        %7898 = vmatprep.subr.mxu0 0.0
        %7899 = vmatpush1.xpose.msra.mxu0 0.0
        %7900 = vmatprep.subr.mxu0 0.0
        %7901 = vmatpush1.xpose.msra.mxu0 0.0
        %7902 = vmatprep.subr.mxu0 0.0
        %7903 = vmatpush1.xpose.msra.mxu0 0.0
        %7904 = vmatprep.subr.mxu0 0.0
        %7905 = vmatpush1.xpose.msra.mxu0 0.0
        %7906 = vmatprep.subr.mxu0 0.0
        %7907 = vmatpush1.xpose.msra.mxu0 0.0
        %7908 = vmatprep.subr.mxu0 0.0
        %7909 = vmatpush1.xpose.msra.mxu0 0.0
        %7910 = vmatprep.subr.mxu0 0.0
        %7911 = vmatpush1.xpose.msra.mxu0 0.0
        %7912 = vmatprep.subr.mxu0 0.0
        %7913 = vmatpush1.xpose.msra.mxu0 0.0
        %7914 = vmatprep.subr.mxu0 0.0
        %7915 = vmatpush1.xpose.msra.mxu0 0.0
        %7916 = vmatprep.subr.mxu0 0.0
        %7917 = vmatpush1.xpose.msra.mxu0 0.0
        %7918 = vmatprep.subr.mxu0 0.0
        %7919 = vmatpush1.xpose.msra.mxu0 0.0
        %7920 = vmatprep.subr.mxu0 0.0
        %7921 = vmatpush1.xpose.msra.mxu0 0.0
        %7922 = vmatprep.subr.mxu0 0.0
        %7923 = vmatpush1.xpose.msra.mxu0 0.0
        %7924 = vmatprep.subr.mxu0 0.0
        %7925 = vmatpush1.xpose.msra.mxu0 0.0
        %7926 = vmatprep.subr.mxu0 0.0
        %7927 = vmatpush1.xpose.msra.mxu0 0.0
        %7928 = vmatprep.subr.mxu0 0.0
        %7929 = vmatpush1.xpose.msra.mxu0 0.0
        %7930 = vmatprep.subr.mxu0 0.0
        %7931 = vmatpush1.xpose.msra.mxu0 0.0
        %7932 = vmatprep.subr.mxu0 0.0
        %7933 = vmatpush1.xpose.msra.mxu0 0.0
        %7934 = vmatprep.subr.mxu0 0.0
        %7935 = vmatpush1.xpose.msra.mxu0 0.0
        %7936 = vmatprep.subr.mxu0 0.0
        %7937 = vmatpush1.xpose.msra.mxu0 0.0
        %7938 = vmatprep.subr.mxu0 0.0
        %7939 = vmatpush1.xpose.msra.mxu0 0.0
        %7940 = vmatprep.subr.mxu0 0.0
        %7941 = vmatpush1.xpose.msra.mxu0 0.0
        %7942 = vmatprep.subr.mxu0 0.0
        %7943 = vmatpush1.xpose.msra.mxu0 0.0
        %7944 = vmatprep.subr.mxu0 0.0
        %7945 = vmatpush1.xpose.msra.mxu0 0.0
        %7946 = vmatprep.subr.mxu0 0.0
        %7947 = vmatpush1.xpose.msra.mxu0 0.0
        %7948 = vmatprep.subr.mxu0 0.0
        %7949 = vmatpush1.xpose.msra.mxu0 0.0
        %7950 = vmatprep.subr.mxu0 0.0
        %7951 = vmatpush1.xpose.msra.mxu0 0.0
        %7952 = vmatprep.subr.mxu0 0.0
        %7953 = vmatpush1.xpose.msra.mxu0 0.0
        %7954 = vmatprep.mubr.f32.mxu0 %v1572
        %7955 = vmatmul.mubr.f32.gmra.mrb[0].mxu0 %v1570
        %v7956 = vpop.f32.mrb[0].mxu0
        %v7957 = vadd.f32 %v7887, %v7956
        %v7958 = vpop.f32.mrb[0].mxu0
        %7959 = vdwg.mxu0
        %7960 = vmatprep.subr.mxu0 %v465
        %7961 = vmatpush1.xpose.msra.mxu0 %v464
        %7962 = vmatprep.subr.mxu0 %v721
        %7963 = vmatpush1.xpose.msra.mxu0 %v720
        %7964 = vmatprep.subr.mxu0 0.0
        %7965 = vmatpush1.xpose.msra.mxu0 0.0
        %7966 = vmatprep.subr.mxu0 0.0
        %7967 = vmatpush1.xpose.msra.mxu0 0.0
        %7968 = vmatprep.subr.mxu0 0.0
        %7969 = vmatpush1.xpose.msra.mxu0 0.0
        %7970 = vmatprep.subr.mxu0 0.0
        %7971 = vmatpush1.xpose.msra.mxu0 0.0
        %7972 = vmatprep.subr.mxu0 0.0
        %7973 = vmatpush1.xpose.msra.mxu0 0.0
        %7974 = vmatprep.subr.mxu0 0.0
        %7975 = vmatpush1.xpose.msra.mxu0 0.0
        %7976 = vmatprep.subr.mxu0 0.0
        %7977 = vmatpush1.xpose.msra.mxu0 0.0
        %7978 = vmatprep.subr.mxu0 0.0
        %7979 = vmatpush1.xpose.msra.mxu0 0.0
        %7980 = vmatprep.subr.mxu0 0.0
        %7981 = vmatpush1.xpose.msra.mxu0 0.0
        %7982 = vmatprep.subr.mxu0 0.0
        %7983 = vmatpush1.xpose.msra.mxu0 0.0
        %7984 = vmatprep.subr.mxu0 0.0
        %7985 = vmatpush1.xpose.msra.mxu0 0.0
        %7986 = vmatprep.subr.mxu0 0.0
        %7987 = vmatpush1.xpose.msra.mxu0 0.0
        %7988 = vmatprep.subr.mxu0 0.0
        %7989 = vmatpush1.xpose.msra.mxu0 0.0
        %7990 = vmatprep.subr.mxu0 0.0
        %7991 = vmatpush1.xpose.msra.mxu0 0.0
        %7992 = vmatprep.subr.mxu0 0.0
        %7993 = vmatpush1.xpose.msra.mxu0 0.0
        %7994 = vmatprep.subr.mxu0 0.0
        %7995 = vmatpush1.xpose.msra.mxu0 0.0
        %7996 = vmatprep.subr.mxu0 0.0
        %7997 = vmatpush1.xpose.msra.mxu0 0.0
        %7998 = vmatprep.subr.mxu0 0.0
        %7999 = vmatpush1.xpose.msra.mxu0 0.0
        %8000 = vmatprep.subr.mxu0 0.0
        %8001 = vmatpush1.xpose.msra.mxu0 0.0
        %8002 = vmatprep.subr.mxu0 0.0
        %8003 = vmatpush1.xpose.msra.mxu0 0.0
        %8004 = vmatprep.subr.mxu0 0.0
        %8005 = vmatpush1.xpose.msra.mxu0 0.0
        %8006 = vmatprep.subr.mxu0 0.0
        %8007 = vmatpush1.xpose.msra.mxu0 0.0
        %8008 = vmatprep.subr.mxu0 0.0
        %8009 = vmatpush1.xpose.msra.mxu0 0.0
        %8010 = vmatprep.subr.mxu0 0.0
        %8011 = vmatpush1.xpose.msra.mxu0 0.0
        %8012 = vmatprep.subr.mxu0 0.0
        %8013 = vmatpush1.xpose.msra.mxu0 0.0
        %8014 = vmatprep.subr.mxu0 0.0
        %8015 = vmatpush1.xpose.msra.mxu0 0.0
        %8016 = vmatprep.subr.mxu0 0.0
        %8017 = vmatpush1.xpose.msra.mxu0 0.0
        %8018 = vmatprep.subr.mxu0 0.0
        %8019 = vmatpush1.xpose.msra.mxu0 0.0
        %8020 = vmatprep.subr.mxu0 0.0
        %8021 = vmatpush1.xpose.msra.mxu0 0.0
        %8022 = vmatprep.subr.mxu0 0.0
        %8023 = vmatpush1.xpose.msra.mxu0 0.0
        %8024 = vmatprep.mubr.f32.mxu0 %v1588
        %8025 = vmatmul.mubr.f32.gmra.mrb[0].mxu0 %v1580
        %v8026 = vpop.f32.mrb[0].mxu0
        %v8027 = vadd.f32 %v7957, %v8026
        %v8028 = vpop.f32.mrb[0].mxu0
        %8029 = vdwg.mxu0
        %8030 = vmatprep.subr.mxu0 %v467
        %8031 = vmatpush1.xpose.msra.mxu0 %v466
        %8032 = vmatprep.subr.mxu0 %v723
        %8033 = vmatpush1.xpose.msra.mxu0 %v722
        %8034 = vmatprep.subr.mxu0 0.0
        %8035 = vmatpush1.xpose.msra.mxu0 0.0
        %8036 = vmatprep.subr.mxu0 0.0
        %8037 = vmatpush1.xpose.msra.mxu0 0.0
        %8038 = vmatprep.subr.mxu0 0.0
        %8039 = vmatpush1.xpose.msra.mxu0 0.0
        %8040 = vmatprep.subr.mxu0 0.0
        %8041 = vmatpush1.xpose.msra.mxu0 0.0
        %8042 = vmatprep.subr.mxu0 0.0
        %8043 = vmatpush1.xpose.msra.mxu0 0.0
        %8044 = vmatprep.subr.mxu0 0.0
        %8045 = vmatpush1.xpose.msra.mxu0 0.0
        %8046 = vmatprep.subr.mxu0 0.0
        %8047 = vmatpush1.xpose.msra.mxu0 0.0
        %8048 = vmatprep.subr.mxu0 0.0
        %8049 = vmatpush1.xpose.msra.mxu0 0.0
        %8050 = vmatprep.subr.mxu0 0.0
        %8051 = vmatpush1.xpose.msra.mxu0 0.0
        %8052 = vmatprep.subr.mxu0 0.0
        %8053 = vmatpush1.xpose.msra.mxu0 0.0
        %8054 = vmatprep.subr.mxu0 0.0
        %8055 = vmatpush1.xpose.msra.mxu0 0.0
        %8056 = vmatprep.subr.mxu0 0.0
        %8057 = vmatpush1.xpose.msra.mxu0 0.0
        %8058 = vmatprep.subr.mxu0 0.0
        %8059 = vmatpush1.xpose.msra.mxu0 0.0
        %8060 = vmatprep.subr.mxu0 0.0
        %8061 = vmatpush1.xpose.msra.mxu0 0.0
        %8062 = vmatprep.subr.mxu0 0.0
        %8063 = vmatpush1.xpose.msra.mxu0 0.0
        %8064 = vmatprep.subr.mxu0 0.0
        %8065 = vmatpush1.xpose.msra.mxu0 0.0
        %8066 = vmatprep.subr.mxu0 0.0
        %8067 = vmatpush1.xpose.msra.mxu0 0.0
        %8068 = vmatprep.subr.mxu0 0.0
        %8069 = vmatpush1.xpose.msra.mxu0 0.0
        %8070 = vmatprep.subr.mxu0 0.0
        %8071 = vmatpush1.xpose.msra.mxu0 0.0
        %8072 = vmatprep.subr.mxu0 0.0
        %8073 = vmatpush1.xpose.msra.mxu0 0.0
        %8074 = vmatprep.subr.mxu0 0.0
        %8075 = vmatpush1.xpose.msra.mxu0 0.0
        %8076 = vmatprep.subr.mxu0 0.0
        %8077 = vmatpush1.xpose.msra.mxu0 0.0
        %8078 = vmatprep.subr.mxu0 0.0
        %8079 = vmatpush1.xpose.msra.mxu0 0.0
        %8080 = vmatprep.subr.mxu0 0.0
        %8081 = vmatpush1.xpose.msra.mxu0 0.0
        %8082 = vmatprep.subr.mxu0 0.0
        %8083 = vmatpush1.xpose.msra.mxu0 0.0
        %8084 = vmatprep.subr.mxu0 0.0
        %8085 = vmatpush1.xpose.msra.mxu0 0.0
        %8086 = vmatprep.subr.mxu0 0.0
        %8087 = vmatpush1.xpose.msra.mxu0 0.0
        %8088 = vmatprep.subr.mxu0 0.0
        %8089 = vmatpush1.xpose.msra.mxu0 0.0
        %8090 = vmatprep.subr.mxu0 0.0
        %8091 = vmatpush1.xpose.msra.mxu0 0.0
        %8092 = vmatprep.subr.mxu0 0.0
        %8093 = vmatpush1.xpose.msra.mxu0 0.0
        %8094 = vmatprep.mubr.f32.mxu0 %v1589
        %8095 = vmatmul.mubr.f32.gmra.mrb[0].mxu0 %v1587
        %v8096 = vpop.f32.mrb[0].mxu0
        %v8097 = vadd.f32 %v8027, %v8096
        %v8098 = vpop.f32.mrb[0].mxu0
        %8099 = vdwg.mxu0
        %8100 = vmatprep.subr.mxu0 %v469
        %8101 = vmatpush1.xpose.msra.mxu0 %v468
        %8102 = vmatprep.subr.mxu0 %v725
        %8103 = vmatpush1.xpose.msra.mxu0 %v724
        %8104 = vmatprep.subr.mxu0 0.0
        %8105 = vmatpush1.xpose.msra.mxu0 0.0
        %8106 = vmatprep.subr.mxu0 0.0
        %8107 = vmatpush1.xpose.msra.mxu0 0.0
        %8108 = vmatprep.subr.mxu0 0.0
        %8109 = vmatpush1.xpose.msra.mxu0 0.0
        %8110 = vmatprep.subr.mxu0 0.0
        %8111 = vmatpush1.xpose.msra.mxu0 0.0
        %8112 = vmatprep.subr.mxu0 0.0
        %8113 = vmatpush1.xpose.msra.mxu0 0.0
        %8114 = vmatprep.subr.mxu0 0.0
        %8115 = vmatpush1.xpose.msra.mxu0 0.0
        %8116 = vmatprep.subr.mxu0 0.0
        %8117 = vmatpush1.xpose.msra.mxu0 0.0
        %8118 = vmatprep.subr.mxu0 0.0
        %8119 = vmatpush1.xpose.msra.mxu0 0.0
        %8120 = vmatprep.subr.mxu0 0.0
        %8121 = vmatpush1.xpose.msra.mxu0 0.0
        %8122 = vmatprep.subr.mxu0 0.0
        %8123 = vmatpush1.xpose.msra.mxu0 0.0
        %8124 = vmatprep.subr.mxu0 0.0
        %8125 = vmatpush1.xpose.msra.mxu0 0.0
        %8126 = vmatprep.subr.mxu0 0.0
        %8127 = vmatpush1.xpose.msra.mxu0 0.0
        %8128 = vmatprep.subr.mxu0 0.0
        %8129 = vmatpush1.xpose.msra.mxu0 0.0
        %8130 = vmatprep.subr.mxu0 0.0
        %8131 = vmatpush1.xpose.msra.mxu0 0.0
        %8132 = vmatprep.subr.mxu0 0.0
        %8133 = vmatpush1.xpose.msra.mxu0 0.0
        %8134 = vmatprep.subr.mxu0 0.0
        %8135 = vmatpush1.xpose.msra.mxu0 0.0
        %8136 = vmatprep.subr.mxu0 0.0
        %8137 = vmatpush1.xpose.msra.mxu0 0.0
        %8138 = vmatprep.subr.mxu0 0.0
        %8139 = vmatpush1.xpose.msra.mxu0 0.0
        %8140 = vmatprep.subr.mxu0 0.0
        %8141 = vmatpush1.xpose.msra.mxu0 0.0
        %8142 = vmatprep.subr.mxu0 0.0
        %8143 = vmatpush1.xpose.msra.mxu0 0.0
        %8144 = vmatprep.subr.mxu0 0.0
        %8145 = vmatpush1.xpose.msra.mxu0 0.0
        %8146 = vmatprep.subr.mxu0 0.0
        %8147 = vmatpush1.xpose.msra.mxu0 0.0
        %8148 = vmatprep.subr.mxu0 0.0
        %8149 = vmatpush1.xpose.msra.mxu0 0.0
        %8150 = vmatprep.subr.mxu0 0.0
        %8151 = vmatpush1.xpose.msra.mxu0 0.0
        %8152 = vmatprep.subr.mxu0 0.0
        %8153 = vmatpush1.xpose.msra.mxu0 0.0
        %8154 = vmatprep.subr.mxu0 0.0
        %8155 = vmatpush1.xpose.msra.mxu0 0.0
        %8156 = vmatprep.subr.mxu0 0.0
        %8157 = vmatpush1.xpose.msra.mxu0 0.0
        %8158 = vmatprep.subr.mxu0 0.0
        %8159 = vmatpush1.xpose.msra.mxu0 0.0
        %8160 = vmatprep.subr.mxu0 0.0
        %8161 = vmatpush1.xpose.msra.mxu0 0.0
        %8162 = vmatprep.subr.mxu0 0.0
        %8163 = vmatpush1.xpose.msra.mxu0 0.0
        %8164 = vmatprep.mubr.f32.mxu0 %v1605
        %8165 = vmatmul.mubr.f32.gmra.mrb[0].mxu0 %v1597
        %v8166 = vpop.f32.mrb[0].mxu0
        %v8167 = vadd.f32 %v8097, %v8166
        %v8168 = vpop.f32.mrb[0].mxu0
        %8169 = vdwg.mxu0
        %8170 = vmatprep.subr.mxu0 %v471
        %8171 = vmatpush1.xpose.msra.mxu0 %v470
        %8172 = vmatprep.subr.mxu0 %v727
        %8173 = vmatpush1.xpose.msra.mxu0 %v726
        %8174 = vmatprep.subr.mxu0 0.0
        %8175 = vmatpush1.xpose.msra.mxu0 0.0
        %8176 = vmatprep.subr.mxu0 0.0
        %8177 = vmatpush1.xpose.msra.mxu0 0.0
        %8178 = vmatprep.subr.mxu0 0.0
        %8179 = vmatpush1.xpose.msra.mxu0 0.0
        %8180 = vmatprep.subr.mxu0 0.0
        %8181 = vmatpush1.xpose.msra.mxu0 0.0
        %8182 = vmatprep.subr.mxu0 0.0
        %8183 = vmatpush1.xpose.msra.mxu0 0.0
        %8184 = vmatprep.subr.mxu0 0.0
        %8185 = vmatpush1.xpose.msra.mxu0 0.0
        %8186 = vmatprep.subr.mxu0 0.0
        %8187 = vmatpush1.xpose.msra.mxu0 0.0
        %8188 = vmatprep.subr.mxu0 0.0
        %8189 = vmatpush1.xpose.msra.mxu0 0.0
        %8190 = vmatprep.subr.mxu0 0.0
        %8191 = vmatpush1.xpose.msra.mxu0 0.0
        %8192 = vmatprep.subr.mxu0 0.0
        %8193 = vmatpush1.xpose.msra.mxu0 0.0
        %8194 = vmatprep.subr.mxu0 0.0
        %8195 = vmatpush1.xpose.msra.mxu0 0.0
        %8196 = vmatprep.subr.mxu0 0.0
        %8197 = vmatpush1.xpose.msra.mxu0 0.0
        %8198 = vmatprep.subr.mxu0 0.0
        %8199 = vmatpush1.xpose.msra.mxu0 0.0
        %8200 = vmatprep.subr.mxu0 0.0
        %8201 = vmatpush1.xpose.msra.mxu0 0.0
        %8202 = vmatprep.subr.mxu0 0.0
        %8203 = vmatpush1.xpose.msra.mxu0 0.0
        %8204 = vmatprep.subr.mxu0 0.0
        %8205 = vmatpush1.xpose.msra.mxu0 0.0
        %8206 = vmatprep.subr.mxu0 0.0
        %8207 = vmatpush1.xpose.msra.mxu0 0.0
        %8208 = vmatprep.subr.mxu0 0.0
        %8209 = vmatpush1.xpose.msra.mxu0 0.0
        %8210 = vmatprep.subr.mxu0 0.0
        %8211 = vmatpush1.xpose.msra.mxu0 0.0
        %8212 = vmatprep.subr.mxu0 0.0
        %8213 = vmatpush1.xpose.msra.mxu0 0.0
        %8214 = vmatprep.subr.mxu0 0.0
        %8215 = vmatpush1.xpose.msra.mxu0 0.0
        %8216 = vmatprep.subr.mxu0 0.0
        %8217 = vmatpush1.xpose.msra.mxu0 0.0
        %8218 = vmatprep.subr.mxu0 0.0
        %8219 = vmatpush1.xpose.msra.mxu0 0.0
        %8220 = vmatprep.subr.mxu0 0.0
        %8221 = vmatpush1.xpose.msra.mxu0 0.0
        %8222 = vmatprep.subr.mxu0 0.0
        %8223 = vmatpush1.xpose.msra.mxu0 0.0
        %8224 = vmatprep.subr.mxu0 0.0
        %8225 = vmatpush1.xpose.msra.mxu0 0.0
        %8226 = vmatprep.subr.mxu0 0.0
        %8227 = vmatpush1.xpose.msra.mxu0 0.0
        %8228 = vmatprep.subr.mxu0 0.0
        %8229 = vmatpush1.xpose.msra.mxu0 0.0
        %8230 = vmatprep.subr.mxu0 0.0
        %8231 = vmatpush1.xpose.msra.mxu0 0.0
        %8232 = vmatprep.subr.mxu0 0.0
        %8233 = vmatpush1.xpose.msra.mxu0 0.0
        %8234 = vmatprep.mubr.f32.mxu0 %v1606
        %8235 = vmatmul.mubr.f32.gmra.mrb[0].mxu0 %v1604
        %v8236 = vpop.f32.mrb[0].mxu0
        %v8237 = vadd.f32 %v8167, %v8236
        %v8238 = vpop.f32.mrb[0].mxu0
        %8239 = vdwg.mxu0
        %8240 = vmatprep.subr.mxu0 %v473
        %8241 = vmatpush1.xpose.msra.mxu0 %v472
        %8242 = vmatprep.subr.mxu0 %v729
        %8243 = vmatpush1.xpose.msra.mxu0 %v728
        %8244 = vmatprep.subr.mxu0 0.0
        %8245 = vmatpush1.xpose.msra.mxu0 0.0
        %8246 = vmatprep.subr.mxu0 0.0
        %8247 = vmatpush1.xpose.msra.mxu0 0.0
        %8248 = vmatprep.subr.mxu0 0.0
        %8249 = vmatpush1.xpose.msra.mxu0 0.0
        %8250 = vmatprep.subr.mxu0 0.0
        %8251 = vmatpush1.xpose.msra.mxu0 0.0
        %8252 = vmatprep.subr.mxu0 0.0
        %8253 = vmatpush1.xpose.msra.mxu0 0.0
        %8254 = vmatprep.subr.mxu0 0.0
        %8255 = vmatpush1.xpose.msra.mxu0 0.0
        %8256 = vmatprep.subr.mxu0 0.0
        %8257 = vmatpush1.xpose.msra.mxu0 0.0
        %8258 = vmatprep.subr.mxu0 0.0
        %8259 = vmatpush1.xpose.msra.mxu0 0.0
        %8260 = vmatprep.subr.mxu0 0.0
        %8261 = vmatpush1.xpose.msra.mxu0 0.0
        %8262 = vmatprep.subr.mxu0 0.0
        %8263 = vmatpush1.xpose.msra.mxu0 0.0
        %8264 = vmatprep.subr.mxu0 0.0
        %8265 = vmatpush1.xpose.msra.mxu0 0.0
        %8266 = vmatprep.subr.mxu0 0.0
        %8267 = vmatpush1.xpose.msra.mxu0 0.0
        %8268 = vmatprep.subr.mxu0 0.0
        %8269 = vmatpush1.xpose.msra.mxu0 0.0
        %8270 = vmatprep.subr.mxu0 0.0
        %8271 = vmatpush1.xpose.msra.mxu0 0.0
        %8272 = vmatprep.subr.mxu0 0.0
        %8273 = vmatpush1.xpose.msra.mxu0 0.0
        %8274 = vmatprep.subr.mxu0 0.0
        %8275 = vmatpush1.xpose.msra.mxu0 0.0
        %8276 = vmatprep.subr.mxu0 0.0
        %8277 = vmatpush1.xpose.msra.mxu0 0.0
        %8278 = vmatprep.subr.mxu0 0.0
        %8279 = vmatpush1.xpose.msra.mxu0 0.0
        %8280 = vmatprep.subr.mxu0 0.0
        %8281 = vmatpush1.xpose.msra.mxu0 0.0
        %8282 = vmatprep.subr.mxu0 0.0
        %8283 = vmatpush1.xpose.msra.mxu0 0.0
        %8284 = vmatprep.subr.mxu0 0.0
        %8285 = vmatpush1.xpose.msra.mxu0 0.0
        %8286 = vmatprep.subr.mxu0 0.0
        %8287 = vmatpush1.xpose.msra.mxu0 0.0
        %8288 = vmatprep.subr.mxu0 0.0
        %8289 = vmatpush1.xpose.msra.mxu0 0.0
        %8290 = vmatprep.subr.mxu0 0.0
        %8291 = vmatpush1.xpose.msra.mxu0 0.0
        %8292 = vmatprep.subr.mxu0 0.0
        %8293 = vmatpush1.xpose.msra.mxu0 0.0
        %8294 = vmatprep.subr.mxu0 0.0
        %8295 = vmatpush1.xpose.msra.mxu0 0.0
        %8296 = vmatprep.subr.mxu0 0.0
        %8297 = vmatpush1.xpose.msra.mxu0 0.0
        %8298 = vmatprep.subr.mxu0 0.0
        %8299 = vmatpush1.xpose.msra.mxu0 0.0
        %8300 = vmatprep.subr.mxu0 0.0
        %8301 = vmatpush1.xpose.msra.mxu0 0.0
        %8302 = vmatprep.subr.mxu0 0.0
        %8303 = vmatpush1.xpose.msra.mxu0 0.0
        %8304 = vmatprep.mubr.f32.mxu0 %v1622
        %8305 = vmatmul.mubr.f32.gmra.mrb[0].mxu0 %v1614
        %v8306 = vpop.f32.mrb[0].mxu0
        %v8307 = vadd.f32 %v8237, %v8306
        %v8308 = vpop.f32.mrb[0].mxu0
        %8309 = vdwg.mxu0
        %8310 = vmatprep.subr.mxu0 %v475
        %8311 = vmatpush1.xpose.msra.mxu0 %v474
        %8312 = vmatprep.subr.mxu0 %v731
        %8313 = vmatpush1.xpose.msra.mxu0 %v730
        %8314 = vmatprep.subr.mxu0 0.0
        %8315 = vmatpush1.xpose.msra.mxu0 0.0
        %8316 = vmatprep.subr.mxu0 0.0
        %8317 = vmatpush1.xpose.msra.mxu0 0.0
        %8318 = vmatprep.subr.mxu0 0.0
        %8319 = vmatpush1.xpose.msra.mxu0 0.0
        %8320 = vmatprep.subr.mxu0 0.0
        %8321 = vmatpush1.xpose.msra.mxu0 0.0
        %8322 = vmatprep.subr.mxu0 0.0
        %8323 = vmatpush1.xpose.msra.mxu0 0.0
        %8324 = vmatprep.subr.mxu0 0.0
        %8325 = vmatpush1.xpose.msra.mxu0 0.0
        %8326 = vmatprep.subr.mxu0 0.0
        %8327 = vmatpush1.xpose.msra.mxu0 0.0
        %8328 = vmatprep.subr.mxu0 0.0
        %8329 = vmatpush1.xpose.msra.mxu0 0.0
        %8330 = vmatprep.subr.mxu0 0.0
        %8331 = vmatpush1.xpose.msra.mxu0 0.0
        %8332 = vmatprep.subr.mxu0 0.0
        %8333 = vmatpush1.xpose.msra.mxu0 0.0
        %8334 = vmatprep.subr.mxu0 0.0
        %8335 = vmatpush1.xpose.msra.mxu0 0.0
        %8336 = vmatprep.subr.mxu0 0.0
        %8337 = vmatpush1.xpose.msra.mxu0 0.0
        %8338 = vmatprep.subr.mxu0 0.0
        %8339 = vmatpush1.xpose.msra.mxu0 0.0
        %8340 = vmatprep.subr.mxu0 0.0
        %8341 = vmatpush1.xpose.msra.mxu0 0.0
        %8342 = vmatprep.subr.mxu0 0.0
        %8343 = vmatpush1.xpose.msra.mxu0 0.0
        %8344 = vmatprep.subr.mxu0 0.0
        %8345 = vmatpush1.xpose.msra.mxu0 0.0
        %8346 = vmatprep.subr.mxu0 0.0
        %8347 = vmatpush1.xpose.msra.mxu0 0.0
        %8348 = vmatprep.subr.mxu0 0.0
        %8349 = vmatpush1.xpose.msra.mxu0 0.0
        %8350 = vmatprep.subr.mxu0 0.0
        %8351 = vmatpush1.xpose.msra.mxu0 0.0
        %8352 = vmatprep.subr.mxu0 0.0
        %8353 = vmatpush1.xpose.msra.mxu0 0.0
        %8354 = vmatprep.subr.mxu0 0.0
        %8355 = vmatpush1.xpose.msra.mxu0 0.0
        %8356 = vmatprep.subr.mxu0 0.0
        %8357 = vmatpush1.xpose.msra.mxu0 0.0
        %8358 = vmatprep.subr.mxu0 0.0
        %8359 = vmatpush1.xpose.msra.mxu0 0.0
        %8360 = vmatprep.subr.mxu0 0.0
        %8361 = vmatpush1.xpose.msra.mxu0 0.0
        %8362 = vmatprep.subr.mxu0 0.0
        %8363 = vmatpush1.xpose.msra.mxu0 0.0
        %8364 = vmatprep.subr.mxu0 0.0
        %8365 = vmatpush1.xpose.msra.mxu0 0.0
        %8366 = vmatprep.subr.mxu0 0.0
        %8367 = vmatpush1.xpose.msra.mxu0 0.0
        %8368 = vmatprep.subr.mxu0 0.0
        %8369 = vmatpush1.xpose.msra.mxu0 0.0
        %8370 = vmatprep.subr.mxu0 0.0
        %8371 = vmatpush1.xpose.msra.mxu0 0.0
        %8372 = vmatprep.subr.mxu0 0.0
        %8373 = vmatpush1.xpose.msra.mxu0 0.0
        %8374 = vmatprep.mubr.f32.mxu0 %v1623
        %8375 = vmatmul.mubr.f32.gmra.mrb[0].mxu0 %v1621
        %v8376 = vpop.f32.mrb[0].mxu0
        %v8377 = vadd.f32 %v8307, %v8376
        %v8378 = vpop.f32.mrb[0].mxu0
        %8379 = vdwg.mxu0
        %8380 = vmatprep.subr.mxu0 %v477
        %8381 = vmatpush1.xpose.msra.mxu0 %v476
        %8382 = vmatprep.subr.mxu0 %v733
        %8383 = vmatpush1.xpose.msra.mxu0 %v732
        %8384 = vmatprep.subr.mxu0 0.0
        %8385 = vmatpush1.xpose.msra.mxu0 0.0
        %8386 = vmatprep.subr.mxu0 0.0
        %8387 = vmatpush1.xpose.msra.mxu0 0.0
        %8388 = vmatprep.subr.mxu0 0.0
        %8389 = vmatpush1.xpose.msra.mxu0 0.0
        %8390 = vmatprep.subr.mxu0 0.0
        %8391 = vmatpush1.xpose.msra.mxu0 0.0
        %8392 = vmatprep.subr.mxu0 0.0
        %8393 = vmatpush1.xpose.msra.mxu0 0.0
        %8394 = vmatprep.subr.mxu0 0.0
        %8395 = vmatpush1.xpose.msra.mxu0 0.0
        %8396 = vmatprep.subr.mxu0 0.0
        %8397 = vmatpush1.xpose.msra.mxu0 0.0
        %8398 = vmatprep.subr.mxu0 0.0
        %8399 = vmatpush1.xpose.msra.mxu0 0.0
        %8400 = vmatprep.subr.mxu0 0.0
        %8401 = vmatpush1.xpose.msra.mxu0 0.0
        %8402 = vmatprep.subr.mxu0 0.0
        %8403 = vmatpush1.xpose.msra.mxu0 0.0
        %8404 = vmatprep.subr.mxu0 0.0
        %8405 = vmatpush1.xpose.msra.mxu0 0.0
        %8406 = vmatprep.subr.mxu0 0.0
        %8407 = vmatpush1.xpose.msra.mxu0 0.0
        %8408 = vmatprep.subr.mxu0 0.0
        %8409 = vmatpush1.xpose.msra.mxu0 0.0
        %8410 = vmatprep.subr.mxu0 0.0
        %8411 = vmatpush1.xpose.msra.mxu0 0.0
        %8412 = vmatprep.subr.mxu0 0.0
        %8413 = vmatpush1.xpose.msra.mxu0 0.0
        %8414 = vmatprep.subr.mxu0 0.0
        %8415 = vmatpush1.xpose.msra.mxu0 0.0
        %8416 = vmatprep.subr.mxu0 0.0
        %8417 = vmatpush1.xpose.msra.mxu0 0.0
        %8418 = vmatprep.subr.mxu0 0.0
        %8419 = vmatpush1.xpose.msra.mxu0 0.0
        %8420 = vmatprep.subr.mxu0 0.0
        %8421 = vmatpush1.xpose.msra.mxu0 0.0
        %8422 = vmatprep.subr.mxu0 0.0
        %8423 = vmatpush1.xpose.msra.mxu0 0.0
        %8424 = vmatprep.subr.mxu0 0.0
        %8425 = vmatpush1.xpose.msra.mxu0 0.0
        %8426 = vmatprep.subr.mxu0 0.0
        %8427 = vmatpush1.xpose.msra.mxu0 0.0
        %8428 = vmatprep.subr.mxu0 0.0
        %8429 = vmatpush1.xpose.msra.mxu0 0.0
        %8430 = vmatprep.subr.mxu0 0.0
        %8431 = vmatpush1.xpose.msra.mxu0 0.0
        %8432 = vmatprep.subr.mxu0 0.0
        %8433 = vmatpush1.xpose.msra.mxu0 0.0
        %8434 = vmatprep.subr.mxu0 0.0
        %8435 = vmatpush1.xpose.msra.mxu0 0.0
        %8436 = vmatprep.subr.mxu0 0.0
        %8437 = vmatpush1.xpose.msra.mxu0 0.0
        %8438 = vmatprep.subr.mxu0 0.0
        %8439 = vmatpush1.xpose.msra.mxu0 0.0
        %8440 = vmatprep.subr.mxu0 0.0
        %8441 = vmatpush1.xpose.msra.mxu0 0.0
        %8442 = vmatprep.subr.mxu0 0.0
        %8443 = vmatpush1.xpose.msra.mxu0 0.0
        %8444 = vmatprep.mubr.f32.mxu0 %v1639
        %8445 = vmatmul.mubr.f32.gmra.mrb[0].mxu0 %v1631
        %v8446 = vpop.f32.mrb[0].mxu0
        %v8447 = vadd.f32 %v8377, %v8446
        %v8448 = vpop.f32.mrb[0].mxu0
        %8449 = vdwg.mxu0
        %8450 = vmatprep.subr.mxu0 %v479
        %8451 = vmatpush1.xpose.msra.mxu0 %v478
        %8452 = vmatprep.subr.mxu0 %v735
        %8453 = vmatpush1.xpose.msra.mxu0 %v734
        %8454 = vmatprep.subr.mxu0 0.0
        %8455 = vmatpush1.xpose.msra.mxu0 0.0
        %8456 = vmatprep.subr.mxu0 0.0
        %8457 = vmatpush1.xpose.msra.mxu0 0.0
        %8458 = vmatprep.subr.mxu0 0.0
        %8459 = vmatpush1.xpose.msra.mxu0 0.0
        %8460 = vmatprep.subr.mxu0 0.0
        %8461 = vmatpush1.xpose.msra.mxu0 0.0
        %8462 = vmatprep.subr.mxu0 0.0
        %8463 = vmatpush1.xpose.msra.mxu0 0.0
        %8464 = vmatprep.subr.mxu0 0.0
        %8465 = vmatpush1.xpose.msra.mxu0 0.0
        %8466 = vmatprep.subr.mxu0 0.0
        %8467 = vmatpush1.xpose.msra.mxu0 0.0
        %8468 = vmatprep.subr.mxu0 0.0
        %8469 = vmatpush1.xpose.msra.mxu0 0.0
        %8470 = vmatprep.subr.mxu0 0.0
        %8471 = vmatpush1.xpose.msra.mxu0 0.0
        %8472 = vmatprep.subr.mxu0 0.0
        %8473 = vmatpush1.xpose.msra.mxu0 0.0
        %8474 = vmatprep.subr.mxu0 0.0
        %8475 = vmatpush1.xpose.msra.mxu0 0.0
        %8476 = vmatprep.subr.mxu0 0.0
        %8477 = vmatpush1.xpose.msra.mxu0 0.0
        %8478 = vmatprep.subr.mxu0 0.0
        %8479 = vmatpush1.xpose.msra.mxu0 0.0
        %8480 = vmatprep.subr.mxu0 0.0
        %8481 = vmatpush1.xpose.msra.mxu0 0.0
        %8482 = vmatprep.subr.mxu0 0.0
        %8483 = vmatpush1.xpose.msra.mxu0 0.0
        %8484 = vmatprep.subr.mxu0 0.0
        %8485 = vmatpush1.xpose.msra.mxu0 0.0
        %8486 = vmatprep.subr.mxu0 0.0
        %8487 = vmatpush1.xpose.msra.mxu0 0.0
        %8488 = vmatprep.subr.mxu0 0.0
        %8489 = vmatpush1.xpose.msra.mxu0 0.0
        %8490 = vmatprep.subr.mxu0 0.0
        %8491 = vmatpush1.xpose.msra.mxu0 0.0
        %8492 = vmatprep.subr.mxu0 0.0
        %8493 = vmatpush1.xpose.msra.mxu0 0.0
        %8494 = vmatprep.subr.mxu0 0.0
        %8495 = vmatpush1.xpose.msra.mxu0 0.0
        %8496 = vmatprep.subr.mxu0 0.0
        %8497 = vmatpush1.xpose.msra.mxu0 0.0
        %8498 = vmatprep.subr.mxu0 0.0
        %8499 = vmatpush1.xpose.msra.mxu0 0.0
        %8500 = vmatprep.subr.mxu0 0.0
        %8501 = vmatpush1.xpose.msra.mxu0 0.0
        %8502 = vmatprep.subr.mxu0 0.0
        %8503 = vmatpush1.xpose.msra.mxu0 0.0
        %8504 = vmatprep.subr.mxu0 0.0
        %8505 = vmatpush1.xpose.msra.mxu0 0.0
        %8506 = vmatprep.subr.mxu0 0.0
        %8507 = vmatpush1.xpose.msra.mxu0 0.0
        %8508 = vmatprep.subr.mxu0 0.0
        %8509 = vmatpush1.xpose.msra.mxu0 0.0
        %8510 = vmatprep.subr.mxu0 0.0
        %8511 = vmatpush1.xpose.msra.mxu0 0.0
        %8512 = vmatprep.subr.mxu0 0.0
        %8513 = vmatpush1.xpose.msra.mxu0 0.0
        %8514 = vmatprep.mubr.f32.mxu0 %v1640
        %8515 = vmatmul.mubr.f32.gmra.mrb[0].mxu0 %v1638
        %v8516 = vpop.f32.mrb[0].mxu0
        %v8517 = vadd.f32 %v8447, %v8516
        %v8518 = vpop.f32.mrb[0].mxu0
        %8519 = vdwg.mxu0
        %8520 = vmatprep.subr.mxu0 %v481
        %8521 = vmatpush1.xpose.msra.mxu0 %v480
        %8522 = vmatprep.subr.mxu0 %v737
        %8523 = vmatpush1.xpose.msra.mxu0 %v736
        %8524 = vmatprep.subr.mxu0 0.0
        %8525 = vmatpush1.xpose.msra.mxu0 0.0
        %8526 = vmatprep.subr.mxu0 0.0
        %8527 = vmatpush1.xpose.msra.mxu0 0.0
        %8528 = vmatprep.subr.mxu0 0.0
        %8529 = vmatpush1.xpose.msra.mxu0 0.0
        %8530 = vmatprep.subr.mxu0 0.0
        %8531 = vmatpush1.xpose.msra.mxu0 0.0
        %8532 = vmatprep.subr.mxu0 0.0
        %8533 = vmatpush1.xpose.msra.mxu0 0.0
        %8534 = vmatprep.subr.mxu0 0.0
        %8535 = vmatpush1.xpose.msra.mxu0 0.0
        %8536 = vmatprep.subr.mxu0 0.0
        %8537 = vmatpush1.xpose.msra.mxu0 0.0
        %8538 = vmatprep.subr.mxu0 0.0
        %8539 = vmatpush1.xpose.msra.mxu0 0.0
        %8540 = vmatprep.subr.mxu0 0.0
        %8541 = vmatpush1.xpose.msra.mxu0 0.0
        %8542 = vmatprep.subr.mxu0 0.0
        %8543 = vmatpush1.xpose.msra.mxu0 0.0
        %8544 = vmatprep.subr.mxu0 0.0
        %8545 = vmatpush1.xpose.msra.mxu0 0.0
        %8546 = vmatprep.subr.mxu0 0.0
        %8547 = vmatpush1.xpose.msra.mxu0 0.0
        %8548 = vmatprep.subr.mxu0 0.0
        %8549 = vmatpush1.xpose.msra.mxu0 0.0
        %8550 = vmatprep.subr.mxu0 0.0
        %8551 = vmatpush1.xpose.msra.mxu0 0.0
        %8552 = vmatprep.subr.mxu0 0.0
        %8553 = vmatpush1.xpose.msra.mxu0 0.0
        %8554 = vmatprep.subr.mxu0 0.0
        %8555 = vmatpush1.xpose.msra.mxu0 0.0
        %8556 = vmatprep.subr.mxu0 0.0
        %8557 = vmatpush1.xpose.msra.mxu0 0.0
        %8558 = vmatprep.subr.mxu0 0.0
        %8559 = vmatpush1.xpose.msra.mxu0 0.0
        %8560 = vmatprep.subr.mxu0 0.0
        %8561 = vmatpush1.xpose.msra.mxu0 0.0
        %8562 = vmatprep.subr.mxu0 0.0
        %8563 = vmatpush1.xpose.msra.mxu0 0.0
        %8564 = vmatprep.subr.mxu0 0.0
        %8565 = vmatpush1.xpose.msra.mxu0 0.0
        %8566 = vmatprep.subr.mxu0 0.0
        %8567 = vmatpush1.xpose.msra.mxu0 0.0
        %8568 = vmatprep.subr.mxu0 0.0
        %8569 = vmatpush1.xpose.msra.mxu0 0.0
        %8570 = vmatprep.subr.mxu0 0.0
        %8571 = vmatpush1.xpose.msra.mxu0 0.0
        %8572 = vmatprep.subr.mxu0 0.0
        %8573 = vmatpush1.xpose.msra.mxu0 0.0
        %8574 = vmatprep.subr.mxu0 0.0
        %8575 = vmatpush1.xpose.msra.mxu0 0.0
        %8576 = vmatprep.subr.mxu0 0.0
        %8577 = vmatpush1.xpose.msra.mxu0 0.0
        %8578 = vmatprep.subr.mxu0 0.0
        %8579 = vmatpush1.xpose.msra.mxu0 0.0
        %8580 = vmatprep.subr.mxu0 0.0
        %8581 = vmatpush1.xpose.msra.mxu0 0.0
        %8582 = vmatprep.subr.mxu0 0.0
        %8583 = vmatpush1.xpose.msra.mxu0 0.0
        %8584 = vmatprep.mubr.f32.mxu0 %v1656
        %8585 = vmatmul.mubr.f32.gmra.mrb[0].mxu0 %v1648
        %v8586 = vpop.f32.mrb[0].mxu0
        %v8587 = vadd.f32 %v8517, %v8586
        %v8588 = vpop.f32.mrb[0].mxu0
        %8589 = vdwg.mxu0
        %8590 = vmatprep.subr.mxu0 %v483
        %8591 = vmatpush1.xpose.msra.mxu0 %v482
        %8592 = vmatprep.subr.mxu0 %v739
        %8593 = vmatpush1.xpose.msra.mxu0 %v738
        %8594 = vmatprep.subr.mxu0 0.0
        %8595 = vmatpush1.xpose.msra.mxu0 0.0
        %8596 = vmatprep.subr.mxu0 0.0
        %8597 = vmatpush1.xpose.msra.mxu0 0.0
        %8598 = vmatprep.subr.mxu0 0.0
        %8599 = vmatpush1.xpose.msra.mxu0 0.0
        %8600 = vmatprep.subr.mxu0 0.0
        %8601 = vmatpush1.xpose.msra.mxu0 0.0
        %8602 = vmatprep.subr.mxu0 0.0
        %8603 = vmatpush1.xpose.msra.mxu0 0.0
        %8604 = vmatprep.subr.mxu0 0.0
        %8605 = vmatpush1.xpose.msra.mxu0 0.0
        %8606 = vmatprep.subr.mxu0 0.0
        %8607 = vmatpush1.xpose.msra.mxu0 0.0
        %8608 = vmatprep.subr.mxu0 0.0
        %8609 = vmatpush1.xpose.msra.mxu0 0.0
        %8610 = vmatprep.subr.mxu0 0.0
        %8611 = vmatpush1.xpose.msra.mxu0 0.0
        %8612 = vmatprep.subr.mxu0 0.0
        %8613 = vmatpush1.xpose.msra.mxu0 0.0
        %8614 = vmatprep.subr.mxu0 0.0
        %8615 = vmatpush1.xpose.msra.mxu0 0.0
        %8616 = vmatprep.subr.mxu0 0.0
        %8617 = vmatpush1.xpose.msra.mxu0 0.0
        %8618 = vmatprep.subr.mxu0 0.0
        %8619 = vmatpush1.xpose.msra.mxu0 0.0
        %8620 = vmatprep.subr.mxu0 0.0
        %8621 = vmatpush1.xpose.msra.mxu0 0.0
        %8622 = vmatprep.subr.mxu0 0.0
        %8623 = vmatpush1.xpose.msra.mxu0 0.0
        %8624 = vmatprep.subr.mxu0 0.0
        %8625 = vmatpush1.xpose.msra.mxu0 0.0
        %8626 = vmatprep.subr.mxu0 0.0
        %8627 = vmatpush1.xpose.msra.mxu0 0.0
        %8628 = vmatprep.subr.mxu0 0.0
        %8629 = vmatpush1.xpose.msra.mxu0 0.0
        %8630 = vmatprep.subr.mxu0 0.0
        %8631 = vmatpush1.xpose.msra.mxu0 0.0
        %8632 = vmatprep.subr.mxu0 0.0
        %8633 = vmatpush1.xpose.msra.mxu0 0.0
        %8634 = vmatprep.subr.mxu0 0.0
        %8635 = vmatpush1.xpose.msra.mxu0 0.0
        %8636 = vmatprep.subr.mxu0 0.0
        %8637 = vmatpush1.xpose.msra.mxu0 0.0
        %8638 = vmatprep.subr.mxu0 0.0
        %8639 = vmatpush1.xpose.msra.mxu0 0.0
        %8640 = vmatprep.subr.mxu0 0.0
        %8641 = vmatpush1.xpose.msra.mxu0 0.0
        %8642 = vmatprep.subr.mxu0 0.0
        %8643 = vmatpush1.xpose.msra.mxu0 0.0
        %8644 = vmatprep.subr.mxu0 0.0
        %8645 = vmatpush1.xpose.msra.mxu0 0.0
        %8646 = vmatprep.subr.mxu0 0.0
        %8647 = vmatpush1.xpose.msra.mxu0 0.0
        %8648 = vmatprep.subr.mxu0 0.0
        %8649 = vmatpush1.xpose.msra.mxu0 0.0
        %8650 = vmatprep.subr.mxu0 0.0
        %8651 = vmatpush1.xpose.msra.mxu0 0.0
        %8652 = vmatprep.subr.mxu0 0.0
        %8653 = vmatpush1.xpose.msra.mxu0 0.0
        %8654 = vmatprep.mubr.f32.mxu0 %v1657
        %8655 = vmatmul.mubr.f32.gmra.mrb[0].mxu0 %v1655
        %v8656 = vpop.f32.mrb[0].mxu0
        %v8657 = vadd.f32 %v8587, %v8656
        %v8658 = vpop.f32.mrb[0].mxu0
        %8659 = vdwg.mxu0
        %8660 = vmatprep.subr.mxu0 %v485
        %8661 = vmatpush1.xpose.msra.mxu0 %v484
        %8662 = vmatprep.subr.mxu0 %v741
        %8663 = vmatpush1.xpose.msra.mxu0 %v740
        %8664 = vmatprep.subr.mxu0 0.0
        %8665 = vmatpush1.xpose.msra.mxu0 0.0
        %8666 = vmatprep.subr.mxu0 0.0
        %8667 = vmatpush1.xpose.msra.mxu0 0.0
        %8668 = vmatprep.subr.mxu0 0.0
        %8669 = vmatpush1.xpose.msra.mxu0 0.0
        %8670 = vmatprep.subr.mxu0 0.0
        %8671 = vmatpush1.xpose.msra.mxu0 0.0
        %8672 = vmatprep.subr.mxu0 0.0
        %8673 = vmatpush1.xpose.msra.mxu0 0.0
        %8674 = vmatprep.subr.mxu0 0.0
        %8675 = vmatpush1.xpose.msra.mxu0 0.0
        %8676 = vmatprep.subr.mxu0 0.0
        %8677 = vmatpush1.xpose.msra.mxu0 0.0
        %8678 = vmatprep.subr.mxu0 0.0
        %8679 = vmatpush1.xpose.msra.mxu0 0.0
        %8680 = vmatprep.subr.mxu0 0.0
        %8681 = vmatpush1.xpose.msra.mxu0 0.0
        %8682 = vmatprep.subr.mxu0 0.0
        %8683 = vmatpush1.xpose.msra.mxu0 0.0
        %8684 = vmatprep.subr.mxu0 0.0
        %8685 = vmatpush1.xpose.msra.mxu0 0.0
        %8686 = vmatprep.subr.mxu0 0.0
        %8687 = vmatpush1.xpose.msra.mxu0 0.0
        %8688 = vmatprep.subr.mxu0 0.0
        %8689 = vmatpush1.xpose.msra.mxu0 0.0
        %8690 = vmatprep.subr.mxu0 0.0
        %8691 = vmatpush1.xpose.msra.mxu0 0.0
        %8692 = vmatprep.subr.mxu0 0.0
        %8693 = vmatpush1.xpose.msra.mxu0 0.0
        %8694 = vmatprep.subr.mxu0 0.0
        %8695 = vmatpush1.xpose.msra.mxu0 0.0
        %8696 = vmatprep.subr.mxu0 0.0
        %8697 = vmatpush1.xpose.msra.mxu0 0.0
        %8698 = vmatprep.subr.mxu0 0.0
        %8699 = vmatpush1.xpose.msra.mxu0 0.0
        %8700 = vmatprep.subr.mxu0 0.0
        %8701 = vmatpush1.xpose.msra.mxu0 0.0
        %8702 = vmatprep.subr.mxu0 0.0
        %8703 = vmatpush1.xpose.msra.mxu0 0.0
        %8704 = vmatprep.subr.mxu0 0.0
        %8705 = vmatpush1.xpose.msra.mxu0 0.0
        %8706 = vmatprep.subr.mxu0 0.0
        %8707 = vmatpush1.xpose.msra.mxu0 0.0
        %8708 = vmatprep.subr.mxu0 0.0
        %8709 = vmatpush1.xpose.msra.mxu0 0.0
        %8710 = vmatprep.subr.mxu0 0.0
        %8711 = vmatpush1.xpose.msra.mxu0 0.0
        %8712 = vmatprep.subr.mxu0 0.0
        %8713 = vmatpush1.xpose.msra.mxu0 0.0
        %8714 = vmatprep.subr.mxu0 0.0
        %8715 = vmatpush1.xpose.msra.mxu0 0.0
        %8716 = vmatprep.subr.mxu0 0.0
        %8717 = vmatpush1.xpose.msra.mxu0 0.0
        %8718 = vmatprep.subr.mxu0 0.0
        %8719 = vmatpush1.xpose.msra.mxu0 0.0
        %8720 = vmatprep.subr.mxu0 0.0
        %8721 = vmatpush1.xpose.msra.mxu0 0.0
        %8722 = vmatprep.subr.mxu0 0.0
        %8723 = vmatpush1.xpose.msra.mxu0 0.0
        %8724 = vmatprep.mubr.f32.mxu0 %v1673
        %8725 = vmatmul.mubr.f32.gmra.mrb[0].mxu0 %v1665
        %v8726 = vpop.f32.mrb[0].mxu0
        %v8727 = vadd.f32 %v8657, %v8726
        %v8728 = vpop.f32.mrb[0].mxu0
        %8729 = vdwg.mxu0
        %8730 = vmatprep.subr.mxu0 %v487
        %8731 = vmatpush1.xpose.msra.mxu0 %v486
        %8732 = vmatprep.subr.mxu0 %v743
        %8733 = vmatpush1.xpose.msra.mxu0 %v742
        %8734 = vmatprep.subr.mxu0 0.0
        %8735 = vmatpush1.xpose.msra.mxu0 0.0
        %8736 = vmatprep.subr.mxu0 0.0
        %8737 = vmatpush1.xpose.msra.mxu0 0.0
        %8738 = vmatprep.subr.mxu0 0.0
        %8739 = vmatpush1.xpose.msra.mxu0 0.0
        %8740 = vmatprep.subr.mxu0 0.0
        %8741 = vmatpush1.xpose.msra.mxu0 0.0
        %8742 = vmatprep.subr.mxu0 0.0
        %8743 = vmatpush1.xpose.msra.mxu0 0.0
        %8744 = vmatprep.subr.mxu0 0.0
        %8745 = vmatpush1.xpose.msra.mxu0 0.0
        %8746 = vmatprep.subr.mxu0 0.0
        %8747 = vmatpush1.xpose.msra.mxu0 0.0
        %8748 = vmatprep.subr.mxu0 0.0
        %8749 = vmatpush1.xpose.msra.mxu0 0.0
        %8750 = vmatprep.subr.mxu0 0.0
        %8751 = vmatpush1.xpose.msra.mxu0 0.0
        %8752 = vmatprep.subr.mxu0 0.0
        %8753 = vmatpush1.xpose.msra.mxu0 0.0
        %8754 = vmatprep.subr.mxu0 0.0
        %8755 = vmatpush1.xpose.msra.mxu0 0.0
        %8756 = vmatprep.subr.mxu0 0.0
        %8757 = vmatpush1.xpose.msra.mxu0 0.0
        %8758 = vmatprep.subr.mxu0 0.0
        %8759 = vmatpush1.xpose.msra.mxu0 0.0
        %8760 = vmatprep.subr.mxu0 0.0
        %8761 = vmatpush1.xpose.msra.mxu0 0.0
        %8762 = vmatprep.subr.mxu0 0.0
        %8763 = vmatpush1.xpose.msra.mxu0 0.0
        %8764 = vmatprep.subr.mxu0 0.0
        %8765 = vmatpush1.xpose.msra.mxu0 0.0
        %8766 = vmatprep.subr.mxu0 0.0
        %8767 = vmatpush1.xpose.msra.mxu0 0.0
        %8768 = vmatprep.subr.mxu0 0.0
        %8769 = vmatpush1.xpose.msra.mxu0 0.0
        %8770 = vmatprep.subr.mxu0 0.0
        %8771 = vmatpush1.xpose.msra.mxu0 0.0
        %8772 = vmatprep.subr.mxu0 0.0
        %8773 = vmatpush1.xpose.msra.mxu0 0.0
        %8774 = vmatprep.subr.mxu0 0.0
        %8775 = vmatpush1.xpose.msra.mxu0 0.0
        %8776 = vmatprep.subr.mxu0 0.0
        %8777 = vmatpush1.xpose.msra.mxu0 0.0
        %8778 = vmatprep.subr.mxu0 0.0
        %8779 = vmatpush1.xpose.msra.mxu0 0.0
        %8780 = vmatprep.subr.mxu0 0.0
        %8781 = vmatpush1.xpose.msra.mxu0 0.0
        %8782 = vmatprep.subr.mxu0 0.0
        %8783 = vmatpush1.xpose.msra.mxu0 0.0
        %8784 = vmatprep.subr.mxu0 0.0
        %8785 = vmatpush1.xpose.msra.mxu0 0.0
        %8786 = vmatprep.subr.mxu0 0.0
        %8787 = vmatpush1.xpose.msra.mxu0 0.0
        %8788 = vmatprep.subr.mxu0 0.0
        %8789 = vmatpush1.xpose.msra.mxu0 0.0
        %8790 = vmatprep.subr.mxu0 0.0
        %8791 = vmatpush1.xpose.msra.mxu0 0.0
        %8792 = vmatprep.subr.mxu0 0.0
        %8793 = vmatpush1.xpose.msra.mxu0 0.0
        %8794 = vmatprep.mubr.f32.mxu0 %v1674
        %8795 = vmatmul.mubr.f32.gmra.mrb[0].mxu0 %v1672
        %v8796 = vpop.f32.mrb[0].mxu0
        %v8797 = vadd.f32 %v8727, %v8796
        %v8798 = vpop.f32.mrb[0].mxu0
        %8799 = vdwg.mxu0
        %8800 = vmatprep.subr.mxu0 %v489
        %8801 = vmatpush1.xpose.msra.mxu0 %v488
        %8802 = vmatprep.subr.mxu0 %v745
        %8803 = vmatpush1.xpose.msra.mxu0 %v744
        %8804 = vmatprep.subr.mxu0 0.0
        %8805 = vmatpush1.xpose.msra.mxu0 0.0
        %8806 = vmatprep.subr.mxu0 0.0
        %8807 = vmatpush1.xpose.msra.mxu0 0.0
        %8808 = vmatprep.subr.mxu0 0.0
        %8809 = vmatpush1.xpose.msra.mxu0 0.0
        %8810 = vmatprep.subr.mxu0 0.0
        %8811 = vmatpush1.xpose.msra.mxu0 0.0
        %8812 = vmatprep.subr.mxu0 0.0
        %8813 = vmatpush1.xpose.msra.mxu0 0.0
        %8814 = vmatprep.subr.mxu0 0.0
        %8815 = vmatpush1.xpose.msra.mxu0 0.0
        %8816 = vmatprep.subr.mxu0 0.0
        %8817 = vmatpush1.xpose.msra.mxu0 0.0
        %8818 = vmatprep.subr.mxu0 0.0
        %8819 = vmatpush1.xpose.msra.mxu0 0.0
        %8820 = vmatprep.subr.mxu0 0.0
        %8821 = vmatpush1.xpose.msra.mxu0 0.0
        %8822 = vmatprep.subr.mxu0 0.0
        %8823 = vmatpush1.xpose.msra.mxu0 0.0
        %8824 = vmatprep.subr.mxu0 0.0
        %8825 = vmatpush1.xpose.msra.mxu0 0.0
        %8826 = vmatprep.subr.mxu0 0.0
        %8827 = vmatpush1.xpose.msra.mxu0 0.0
        %8828 = vmatprep.subr.mxu0 0.0
        %8829 = vmatpush1.xpose.msra.mxu0 0.0
        %8830 = vmatprep.subr.mxu0 0.0
        %8831 = vmatpush1.xpose.msra.mxu0 0.0
        %8832 = vmatprep.subr.mxu0 0.0
        %8833 = vmatpush1.xpose.msra.mxu0 0.0
        %8834 = vmatprep.subr.mxu0 0.0
        %8835 = vmatpush1.xpose.msra.mxu0 0.0
        %8836 = vmatprep.subr.mxu0 0.0
        %8837 = vmatpush1.xpose.msra.mxu0 0.0
        %8838 = vmatprep.subr.mxu0 0.0
        %8839 = vmatpush1.xpose.msra.mxu0 0.0
        %8840 = vmatprep.subr.mxu0 0.0
        %8841 = vmatpush1.xpose.msra.mxu0 0.0
        %8842 = vmatprep.subr.mxu0 0.0
        %8843 = vmatpush1.xpose.msra.mxu0 0.0
        %8844 = vmatprep.subr.mxu0 0.0
        %8845 = vmatpush1.xpose.msra.mxu0 0.0
        %8846 = vmatprep.subr.mxu0 0.0
        %8847 = vmatpush1.xpose.msra.mxu0 0.0
        %8848 = vmatprep.subr.mxu0 0.0
        %8849 = vmatpush1.xpose.msra.mxu0 0.0
        %8850 = vmatprep.subr.mxu0 0.0
        %8851 = vmatpush1.xpose.msra.mxu0 0.0
        %8852 = vmatprep.subr.mxu0 0.0
        %8853 = vmatpush1.xpose.msra.mxu0 0.0
        %8854 = vmatprep.subr.mxu0 0.0
        %8855 = vmatpush1.xpose.msra.mxu0 0.0
        %8856 = vmatprep.subr.mxu0 0.0
        %8857 = vmatpush1.xpose.msra.mxu0 0.0
        %8858 = vmatprep.subr.mxu0 0.0
        %8859 = vmatpush1.xpose.msra.mxu0 0.0
        %8860 = vmatprep.subr.mxu0 0.0
        %8861 = vmatpush1.xpose.msra.mxu0 0.0
        %8862 = vmatprep.subr.mxu0 0.0
        %8863 = vmatpush1.xpose.msra.mxu0 0.0
        %8864 = vmatprep.mubr.f32.mxu0 %v1690
        %8865 = vmatmul.mubr.f32.gmra.mrb[0].mxu0 %v1682
        %v8866 = vpop.f32.mrb[0].mxu0
        %v8867 = vadd.f32 %v8797, %v8866
        %v8868 = vpop.f32.mrb[0].mxu0
        %8869 = vdwg.mxu0
        %8870 = vmatprep.subr.mxu0 %v491
        %8871 = vmatpush1.xpose.msra.mxu0 %v490
        %8872 = vmatprep.subr.mxu0 %v747
        %8873 = vmatpush1.xpose.msra.mxu0 %v746
        %8874 = vmatprep.subr.mxu0 0.0
        %8875 = vmatpush1.xpose.msra.mxu0 0.0
        %8876 = vmatprep.subr.mxu0 0.0
        %8877 = vmatpush1.xpose.msra.mxu0 0.0
        %8878 = vmatprep.subr.mxu0 0.0
        %8879 = vmatpush1.xpose.msra.mxu0 0.0
        %8880 = vmatprep.subr.mxu0 0.0
        %8881 = vmatpush1.xpose.msra.mxu0 0.0
        %8882 = vmatprep.subr.mxu0 0.0
        %8883 = vmatpush1.xpose.msra.mxu0 0.0
        %8884 = vmatprep.subr.mxu0 0.0
        %8885 = vmatpush1.xpose.msra.mxu0 0.0
        %8886 = vmatprep.subr.mxu0 0.0
        %8887 = vmatpush1.xpose.msra.mxu0 0.0
        %8888 = vmatprep.subr.mxu0 0.0
        %8889 = vmatpush1.xpose.msra.mxu0 0.0
        %8890 = vmatprep.subr.mxu0 0.0
        %8891 = vmatpush1.xpose.msra.mxu0 0.0
        %8892 = vmatprep.subr.mxu0 0.0
        %8893 = vmatpush1.xpose.msra.mxu0 0.0
        %8894 = vmatprep.subr.mxu0 0.0
        %8895 = vmatpush1.xpose.msra.mxu0 0.0
        %8896 = vmatprep.subr.mxu0 0.0
        %8897 = vmatpush1.xpose.msra.mxu0 0.0
        %8898 = vmatprep.subr.mxu0 0.0
        %8899 = vmatpush1.xpose.msra.mxu0 0.0
        %8900 = vmatprep.subr.mxu0 0.0
        %8901 = vmatpush1.xpose.msra.mxu0 0.0
        %8902 = vmatprep.subr.mxu0 0.0
        %8903 = vmatpush1.xpose.msra.mxu0 0.0
        %8904 = vmatprep.subr.mxu0 0.0
        %8905 = vmatpush1.xpose.msra.mxu0 0.0
        %8906 = vmatprep.subr.mxu0 0.0
        %8907 = vmatpush1.xpose.msra.mxu0 0.0
        %8908 = vmatprep.subr.mxu0 0.0
        %8909 = vmatpush1.xpose.msra.mxu0 0.0
        %8910 = vmatprep.subr.mxu0 0.0
        %8911 = vmatpush1.xpose.msra.mxu0 0.0
        %8912 = vmatprep.subr.mxu0 0.0
        %8913 = vmatpush1.xpose.msra.mxu0 0.0
        %8914 = vmatprep.subr.mxu0 0.0
        %8915 = vmatpush1.xpose.msra.mxu0 0.0
        %8916 = vmatprep.subr.mxu0 0.0
        %8917 = vmatpush1.xpose.msra.mxu0 0.0
        %8918 = vmatprep.subr.mxu0 0.0
        %8919 = vmatpush1.xpose.msra.mxu0 0.0
        %8920 = vmatprep.subr.mxu0 0.0
        %8921 = vmatpush1.xpose.msra.mxu0 0.0
        %8922 = vmatprep.subr.mxu0 0.0
        %8923 = vmatpush1.xpose.msra.mxu0 0.0
        %8924 = vmatprep.subr.mxu0 0.0
        %8925 = vmatpush1.xpose.msra.mxu0 0.0
        %8926 = vmatprep.subr.mxu0 0.0
        %8927 = vmatpush1.xpose.msra.mxu0 0.0
        %8928 = vmatprep.subr.mxu0 0.0
        %8929 = vmatpush1.xpose.msra.mxu0 0.0
        %8930 = vmatprep.subr.mxu0 0.0
        %8931 = vmatpush1.xpose.msra.mxu0 0.0
        %8932 = vmatprep.subr.mxu0 0.0
        %8933 = vmatpush1.xpose.msra.mxu0 0.0
        %8934 = vmatprep.mubr.f32.mxu0 %v1691
        %8935 = vmatmul.mubr.f32.gmra.mrb[0].mxu0 %v1689
        %v8936 = vpop.f32.mrb[0].mxu0
        %v8937 = vadd.f32 %v8867, %v8936
        %v8938 = vpop.f32.mrb[0].mxu0
        %8939 = vdwg.mxu0
        %8940 = vmatprep.subr.mxu0 %v493
        %8941 = vmatpush1.xpose.msra.mxu0 %v492
        %8942 = vmatprep.subr.mxu0 %v749
        %8943 = vmatpush1.xpose.msra.mxu0 %v748
        %8944 = vmatprep.subr.mxu0 0.0
        %8945 = vmatpush1.xpose.msra.mxu0 0.0
        %8946 = vmatprep.subr.mxu0 0.0
        %8947 = vmatpush1.xpose.msra.mxu0 0.0
        %8948 = vmatprep.subr.mxu0 0.0
        %8949 = vmatpush1.xpose.msra.mxu0 0.0
        %8950 = vmatprep.subr.mxu0 0.0
        %8951 = vmatpush1.xpose.msra.mxu0 0.0
        %8952 = vmatprep.subr.mxu0 0.0
        %8953 = vmatpush1.xpose.msra.mxu0 0.0
        %8954 = vmatprep.subr.mxu0 0.0
        %8955 = vmatpush1.xpose.msra.mxu0 0.0
        %8956 = vmatprep.subr.mxu0 0.0
        %8957 = vmatpush1.xpose.msra.mxu0 0.0
        %8958 = vmatprep.subr.mxu0 0.0
        %8959 = vmatpush1.xpose.msra.mxu0 0.0
        %8960 = vmatprep.subr.mxu0 0.0
        %8961 = vmatpush1.xpose.msra.mxu0 0.0
        %8962 = vmatprep.subr.mxu0 0.0
        %8963 = vmatpush1.xpose.msra.mxu0 0.0
        %8964 = vmatprep.subr.mxu0 0.0
        %8965 = vmatpush1.xpose.msra.mxu0 0.0
        %8966 = vmatprep.subr.mxu0 0.0
        %8967 = vmatpush1.xpose.msra.mxu0 0.0
        %8968 = vmatprep.subr.mxu0 0.0
        %8969 = vmatpush1.xpose.msra.mxu0 0.0
        %8970 = vmatprep.subr.mxu0 0.0
        %8971 = vmatpush1.xpose.msra.mxu0 0.0
        %8972 = vmatprep.subr.mxu0 0.0
        %8973 = vmatpush1.xpose.msra.mxu0 0.0
        %8974 = vmatprep.subr.mxu0 0.0
        %8975 = vmatpush1.xpose.msra.mxu0 0.0
        %8976 = vmatprep.subr.mxu0 0.0
        %8977 = vmatpush1.xpose.msra.mxu0 0.0
        %8978 = vmatprep.subr.mxu0 0.0
        %8979 = vmatpush1.xpose.msra.mxu0 0.0
        %8980 = vmatprep.subr.mxu0 0.0
        %8981 = vmatpush1.xpose.msra.mxu0 0.0
        %8982 = vmatprep.subr.mxu0 0.0
        %8983 = vmatpush1.xpose.msra.mxu0 0.0
        %8984 = vmatprep.subr.mxu0 0.0
        %8985 = vmatpush1.xpose.msra.mxu0 0.0
        %8986 = vmatprep.subr.mxu0 0.0
        %8987 = vmatpush1.xpose.msra.mxu0 0.0
        %8988 = vmatprep.subr.mxu0 0.0
        %8989 = vmatpush1.xpose.msra.mxu0 0.0
        %8990 = vmatprep.subr.mxu0 0.0
        %8991 = vmatpush1.xpose.msra.mxu0 0.0
        %8992 = vmatprep.subr.mxu0 0.0
        %8993 = vmatpush1.xpose.msra.mxu0 0.0
        %8994 = vmatprep.subr.mxu0 0.0
        %8995 = vmatpush1.xpose.msra.mxu0 0.0
        %8996 = vmatprep.subr.mxu0 0.0
        %8997 = vmatpush1.xpose.msra.mxu0 0.0
        %8998 = vmatprep.subr.mxu0 0.0
        %8999 = vmatpush1.xpose.msra.mxu0 0.0
        %9000 = vmatprep.subr.mxu0 0.0
        %9001 = vmatpush1.xpose.msra.mxu0 0.0
        %9002 = vmatprep.subr.mxu0 0.0
        %9003 = vmatpush1.xpose.msra.mxu0 0.0
        %9004 = vmatprep.mubr.f32.mxu0 %v1707
        %9005 = vmatmul.mubr.f32.gmra.mrb[0].mxu0 %v1699
        %v9006 = vpop.f32.mrb[0].mxu0
        %v9007 = vadd.f32 %v8937, %v9006
        %v9008 = vpop.f32.mrb[0].mxu0
        %9009 = vdwg.mxu0
        %9010 = vmatprep.subr.mxu0 %v495
        %9011 = vmatpush1.xpose.msra.mxu0 %v494
        %9012 = vmatprep.subr.mxu0 %v751
        %9013 = vmatpush1.xpose.msra.mxu0 %v750
        %9014 = vmatprep.subr.mxu0 0.0
        %9015 = vmatpush1.xpose.msra.mxu0 0.0
        %9016 = vmatprep.subr.mxu0 0.0
        %9017 = vmatpush1.xpose.msra.mxu0 0.0
        %9018 = vmatprep.subr.mxu0 0.0
        %9019 = vmatpush1.xpose.msra.mxu0 0.0
        %9020 = vmatprep.subr.mxu0 0.0
        %9021 = vmatpush1.xpose.msra.mxu0 0.0
        %9022 = vmatprep.subr.mxu0 0.0
        %9023 = vmatpush1.xpose.msra.mxu0 0.0
        %9024 = vmatprep.subr.mxu0 0.0
        %9025 = vmatpush1.xpose.msra.mxu0 0.0
        %9026 = vmatprep.subr.mxu0 0.0
        %9027 = vmatpush1.xpose.msra.mxu0 0.0
        %9028 = vmatprep.subr.mxu0 0.0
        %9029 = vmatpush1.xpose.msra.mxu0 0.0
        %9030 = vmatprep.subr.mxu0 0.0
        %9031 = vmatpush1.xpose.msra.mxu0 0.0
        %9032 = vmatprep.subr.mxu0 0.0
        %9033 = vmatpush1.xpose.msra.mxu0 0.0
        %9034 = vmatprep.subr.mxu0 0.0
        %9035 = vmatpush1.xpose.msra.mxu0 0.0
        %9036 = vmatprep.subr.mxu0 0.0
        %9037 = vmatpush1.xpose.msra.mxu0 0.0
        %9038 = vmatprep.subr.mxu0 0.0
        %9039 = vmatpush1.xpose.msra.mxu0 0.0
        %9040 = vmatprep.subr.mxu0 0.0
        %9041 = vmatpush1.xpose.msra.mxu0 0.0
        %9042 = vmatprep.subr.mxu0 0.0
        %9043 = vmatpush1.xpose.msra.mxu0 0.0
        %9044 = vmatprep.subr.mxu0 0.0
        %9045 = vmatpush1.xpose.msra.mxu0 0.0
        %9046 = vmatprep.subr.mxu0 0.0
        %9047 = vmatpush1.xpose.msra.mxu0 0.0
        %9048 = vmatprep.subr.mxu0 0.0
        %9049 = vmatpush1.xpose.msra.mxu0 0.0
        %9050 = vmatprep.subr.mxu0 0.0
        %9051 = vmatpush1.xpose.msra.mxu0 0.0
        %9052 = vmatprep.subr.mxu0 0.0
        %9053 = vmatpush1.xpose.msra.mxu0 0.0
        %9054 = vmatprep.subr.mxu0 0.0
        %9055 = vmatpush1.xpose.msra.mxu0 0.0
        %9056 = vmatprep.subr.mxu0 0.0
        %9057 = vmatpush1.xpose.msra.mxu0 0.0
        %9058 = vmatprep.subr.mxu0 0.0
        %9059 = vmatpush1.xpose.msra.mxu0 0.0
        %9060 = vmatprep.subr.mxu0 0.0
        %9061 = vmatpush1.xpose.msra.mxu0 0.0
        %9062 = vmatprep.subr.mxu0 0.0
        %9063 = vmatpush1.xpose.msra.mxu0 0.0
        %9064 = vmatprep.subr.mxu0 0.0
        %9065 = vmatpush1.xpose.msra.mxu0 0.0
        %9066 = vmatprep.subr.mxu0 0.0
        %9067 = vmatpush1.xpose.msra.mxu0 0.0
        %9068 = vmatprep.subr.mxu0 0.0
        %9069 = vmatpush1.xpose.msra.mxu0 0.0
        %9070 = vmatprep.subr.mxu0 0.0
        %9071 = vmatpush1.xpose.msra.mxu0 0.0
        %9072 = vmatprep.subr.mxu0 0.0
        %9073 = vmatpush1.xpose.msra.mxu0 0.0
        %9074 = vmatprep.mubr.f32.mxu0 %v1708
        %9075 = vmatmul.mubr.f32.gmra.mrb[0].mxu0 %v1706
        %v9076 = vpop.f32.mrb[0].mxu0
        %v9077 = vadd.f32 %v9007, %v9076
        %v9078 = vpop.f32.mrb[0].mxu0
        %9079 = vdwg.mxu0
        %9080 = vmatprep.subr.mxu0 %v497
        %9081 = vmatpush1.xpose.msra.mxu0 %v496
        %9082 = vmatprep.subr.mxu0 %v753
        %9083 = vmatpush1.xpose.msra.mxu0 %v752
        %9084 = vmatprep.subr.mxu0 0.0
        %9085 = vmatpush1.xpose.msra.mxu0 0.0
        %9086 = vmatprep.subr.mxu0 0.0
        %9087 = vmatpush1.xpose.msra.mxu0 0.0
        %9088 = vmatprep.subr.mxu0 0.0
        %9089 = vmatpush1.xpose.msra.mxu0 0.0
        %9090 = vmatprep.subr.mxu0 0.0
        %9091 = vmatpush1.xpose.msra.mxu0 0.0
        %9092 = vmatprep.subr.mxu0 0.0
        %9093 = vmatpush1.xpose.msra.mxu0 0.0
        %9094 = vmatprep.subr.mxu0 0.0
        %9095 = vmatpush1.xpose.msra.mxu0 0.0
        %9096 = vmatprep.subr.mxu0 0.0
        %9097 = vmatpush1.xpose.msra.mxu0 0.0
        %9098 = vmatprep.subr.mxu0 0.0
        %9099 = vmatpush1.xpose.msra.mxu0 0.0
        %9100 = vmatprep.subr.mxu0 0.0
        %9101 = vmatpush1.xpose.msra.mxu0 0.0
        %9102 = vmatprep.subr.mxu0 0.0
        %9103 = vmatpush1.xpose.msra.mxu0 0.0
        %9104 = vmatprep.subr.mxu0 0.0
        %9105 = vmatpush1.xpose.msra.mxu0 0.0
        %9106 = vmatprep.subr.mxu0 0.0
        %9107 = vmatpush1.xpose.msra.mxu0 0.0
        %9108 = vmatprep.subr.mxu0 0.0
        %9109 = vmatpush1.xpose.msra.mxu0 0.0
        %9110 = vmatprep.subr.mxu0 0.0
        %9111 = vmatpush1.xpose.msra.mxu0 0.0
        %9112 = vmatprep.subr.mxu0 0.0
        %9113 = vmatpush1.xpose.msra.mxu0 0.0
        %9114 = vmatprep.subr.mxu0 0.0
        %9115 = vmatpush1.xpose.msra.mxu0 0.0
        %9116 = vmatprep.subr.mxu0 0.0
        %9117 = vmatpush1.xpose.msra.mxu0 0.0
        %9118 = vmatprep.subr.mxu0 0.0
        %9119 = vmatpush1.xpose.msra.mxu0 0.0
        %9120 = vmatprep.subr.mxu0 0.0
        %9121 = vmatpush1.xpose.msra.mxu0 0.0
        %9122 = vmatprep.subr.mxu0 0.0
        %9123 = vmatpush1.xpose.msra.mxu0 0.0
        %9124 = vmatprep.subr.mxu0 0.0
        %9125 = vmatpush1.xpose.msra.mxu0 0.0
        %9126 = vmatprep.subr.mxu0 0.0
        %9127 = vmatpush1.xpose.msra.mxu0 0.0
        %9128 = vmatprep.subr.mxu0 0.0
        %9129 = vmatpush1.xpose.msra.mxu0 0.0
        %9130 = vmatprep.subr.mxu0 0.0
        %9131 = vmatpush1.xpose.msra.mxu0 0.0
        %9132 = vmatprep.subr.mxu0 0.0
        %9133 = vmatpush1.xpose.msra.mxu0 0.0
        %9134 = vmatprep.subr.mxu0 0.0
        %9135 = vmatpush1.xpose.msra.mxu0 0.0
        %9136 = vmatprep.subr.mxu0 0.0
        %9137 = vmatpush1.xpose.msra.mxu0 0.0
        %9138 = vmatprep.subr.mxu0 0.0
        %9139 = vmatpush1.xpose.msra.mxu0 0.0
        %9140 = vmatprep.subr.mxu0 0.0
        %9141 = vmatpush1.xpose.msra.mxu0 0.0
        %9142 = vmatprep.subr.mxu0 0.0
        %9143 = vmatpush1.xpose.msra.mxu0 0.0
        %9144 = vmatprep.mubr.f32.mxu0 %v1724
        %9145 = vmatmul.mubr.f32.gmra.mrb[0].mxu0 %v1716
        %v9146 = vpop.f32.mrb[0].mxu0
        %v9147 = vadd.f32 %v9077, %v9146
        %v9148 = vpop.f32.mrb[0].mxu0
        %9149 = vdwg.mxu0
        %9150 = vmatprep.subr.mxu0 %v499
        %9151 = vmatpush1.xpose.msra.mxu0 %v498
        %9152 = vmatprep.subr.mxu0 %v755
        %9153 = vmatpush1.xpose.msra.mxu0 %v754
        %9154 = vmatprep.subr.mxu0 0.0
        %9155 = vmatpush1.xpose.msra.mxu0 0.0
        %9156 = vmatprep.subr.mxu0 0.0
        %9157 = vmatpush1.xpose.msra.mxu0 0.0
        %9158 = vmatprep.subr.mxu0 0.0
        %9159 = vmatpush1.xpose.msra.mxu0 0.0
        %9160 = vmatprep.subr.mxu0 0.0
        %9161 = vmatpush1.xpose.msra.mxu0 0.0
        %9162 = vmatprep.subr.mxu0 0.0
        %9163 = vmatpush1.xpose.msra.mxu0 0.0
        %9164 = vmatprep.subr.mxu0 0.0
        %9165 = vmatpush1.xpose.msra.mxu0 0.0
        %9166 = vmatprep.subr.mxu0 0.0
        %9167 = vmatpush1.xpose.msra.mxu0 0.0
        %9168 = vmatprep.subr.mxu0 0.0
        %9169 = vmatpush1.xpose.msra.mxu0 0.0
        %9170 = vmatprep.subr.mxu0 0.0
        %9171 = vmatpush1.xpose.msra.mxu0 0.0
        %9172 = vmatprep.subr.mxu0 0.0
        %9173 = vmatpush1.xpose.msra.mxu0 0.0
        %9174 = vmatprep.subr.mxu0 0.0
        %9175 = vmatpush1.xpose.msra.mxu0 0.0
        %9176 = vmatprep.subr.mxu0 0.0
        %9177 = vmatpush1.xpose.msra.mxu0 0.0
        %9178 = vmatprep.subr.mxu0 0.0
        %9179 = vmatpush1.xpose.msra.mxu0 0.0
        %9180 = vmatprep.subr.mxu0 0.0
        %9181 = vmatpush1.xpose.msra.mxu0 0.0
        %9182 = vmatprep.subr.mxu0 0.0
        %9183 = vmatpush1.xpose.msra.mxu0 0.0
        %9184 = vmatprep.subr.mxu0 0.0
        %9185 = vmatpush1.xpose.msra.mxu0 0.0
        %9186 = vmatprep.subr.mxu0 0.0
        %9187 = vmatpush1.xpose.msra.mxu0 0.0
        %9188 = vmatprep.subr.mxu0 0.0
        %9189 = vmatpush1.xpose.msra.mxu0 0.0
        %9190 = vmatprep.subr.mxu0 0.0
        %9191 = vmatpush1.xpose.msra.mxu0 0.0
        %9192 = vmatprep.subr.mxu0 0.0
        %9193 = vmatpush1.xpose.msra.mxu0 0.0
        %9194 = vmatprep.subr.mxu0 0.0
        %9195 = vmatpush1.xpose.msra.mxu0 0.0
        %9196 = vmatprep.subr.mxu0 0.0
        %9197 = vmatpush1.xpose.msra.mxu0 0.0
        %9198 = vmatprep.subr.mxu0 0.0
        %9199 = vmatpush1.xpose.msra.mxu0 0.0
        %9200 = vmatprep.subr.mxu0 0.0
        %9201 = vmatpush1.xpose.msra.mxu0 0.0
        %9202 = vmatprep.subr.mxu0 0.0
        %9203 = vmatpush1.xpose.msra.mxu0 0.0
        %9204 = vmatprep.subr.mxu0 0.0
        %9205 = vmatpush1.xpose.msra.mxu0 0.0
        %9206 = vmatprep.subr.mxu0 0.0
        %9207 = vmatpush1.xpose.msra.mxu0 0.0
        %9208 = vmatprep.subr.mxu0 0.0
        %9209 = vmatpush1.xpose.msra.mxu0 0.0
        %9210 = vmatprep.subr.mxu0 0.0
        %9211 = vmatpush1.xpose.msra.mxu0 0.0
        %9212 = vmatprep.subr.mxu0 0.0
        %9213 = vmatpush1.xpose.msra.mxu0 0.0
        %9214 = vmatprep.mubr.f32.mxu0 %v1725
        %9215 = vmatmul.mubr.f32.gmra.mrb[0].mxu0 %v1723
        %v9216 = vpop.f32.mrb[0].mxu0
        %v9217 = vadd.f32 %v9147, %v9216
        %v9218 = vpop.f32.mrb[0].mxu0
        %9219 = vdwg.mxu0
        %9220 = vmatprep.subr.mxu0 %v501
        %9221 = vmatpush1.xpose.msra.mxu0 %v500
        %9222 = vmatprep.subr.mxu0 %v757
        %9223 = vmatpush1.xpose.msra.mxu0 %v756
        %9224 = vmatprep.subr.mxu0 0.0
        %9225 = vmatpush1.xpose.msra.mxu0 0.0
        %9226 = vmatprep.subr.mxu0 0.0
        %9227 = vmatpush1.xpose.msra.mxu0 0.0
        %9228 = vmatprep.subr.mxu0 0.0
        %9229 = vmatpush1.xpose.msra.mxu0 0.0
        %9230 = vmatprep.subr.mxu0 0.0
        %9231 = vmatpush1.xpose.msra.mxu0 0.0
        %9232 = vmatprep.subr.mxu0 0.0
        %9233 = vmatpush1.xpose.msra.mxu0 0.0
        %9234 = vmatprep.subr.mxu0 0.0
        %9235 = vmatpush1.xpose.msra.mxu0 0.0
        %9236 = vmatprep.subr.mxu0 0.0
        %9237 = vmatpush1.xpose.msra.mxu0 0.0
        %9238 = vmatprep.subr.mxu0 0.0
        %9239 = vmatpush1.xpose.msra.mxu0 0.0
        %9240 = vmatprep.subr.mxu0 0.0
        %9241 = vmatpush1.xpose.msra.mxu0 0.0
        %9242 = vmatprep.subr.mxu0 0.0
        %9243 = vmatpush1.xpose.msra.mxu0 0.0
        %9244 = vmatprep.subr.mxu0 0.0
        %9245 = vmatpush1.xpose.msra.mxu0 0.0
        %9246 = vmatprep.subr.mxu0 0.0
        %9247 = vmatpush1.xpose.msra.mxu0 0.0
        %9248 = vmatprep.subr.mxu0 0.0
        %9249 = vmatpush1.xpose.msra.mxu0 0.0
        %9250 = vmatprep.subr.mxu0 0.0
        %9251 = vmatpush1.xpose.msra.mxu0 0.0
        %9252 = vmatprep.subr.mxu0 0.0
        %9253 = vmatpush1.xpose.msra.mxu0 0.0
        %9254 = vmatprep.subr.mxu0 0.0
        %9255 = vmatpush1.xpose.msra.mxu0 0.0
        %9256 = vmatprep.subr.mxu0 0.0
        %9257 = vmatpush1.xpose.msra.mxu0 0.0
        %9258 = vmatprep.subr.mxu0 0.0
        %9259 = vmatpush1.xpose.msra.mxu0 0.0
        %9260 = vmatprep.subr.mxu0 0.0
        %9261 = vmatpush1.xpose.msra.mxu0 0.0
        %9262 = vmatprep.subr.mxu0 0.0
        %9263 = vmatpush1.xpose.msra.mxu0 0.0
        %9264 = vmatprep.subr.mxu0 0.0
        %9265 = vmatpush1.xpose.msra.mxu0 0.0
        %9266 = vmatprep.subr.mxu0 0.0
        %9267 = vmatpush1.xpose.msra.mxu0 0.0
        %9268 = vmatprep.subr.mxu0 0.0
        %9269 = vmatpush1.xpose.msra.mxu0 0.0
        %9270 = vmatprep.subr.mxu0 0.0
        %9271 = vmatpush1.xpose.msra.mxu0 0.0
        %9272 = vmatprep.subr.mxu0 0.0
        %9273 = vmatpush1.xpose.msra.mxu0 0.0
        %9274 = vmatprep.subr.mxu0 0.0
        %9275 = vmatpush1.xpose.msra.mxu0 0.0
        %9276 = vmatprep.subr.mxu0 0.0
        %9277 = vmatpush1.xpose.msra.mxu0 0.0
        %9278 = vmatprep.subr.mxu0 0.0
        %9279 = vmatpush1.xpose.msra.mxu0 0.0
        %9280 = vmatprep.subr.mxu0 0.0
        %9281 = vmatpush1.xpose.msra.mxu0 0.0
        %9282 = vmatprep.subr.mxu0 0.0
        %9283 = vmatpush1.xpose.msra.mxu0 0.0
        %9284 = vmatprep.mubr.f32.mxu0 %v1741
        %9285 = vmatmul.mubr.f32.gmra.mrb[0].mxu0 %v1733
        %v9286 = vpop.f32.mrb[0].mxu0
        %v9287 = vadd.f32 %v9217, %v9286
        %v9288 = vpop.f32.mrb[0].mxu0
        %9289 = vdwg.mxu0
        %9290 = vmatprep.subr.mxu0 %v503
        %9291 = vmatpush1.xpose.msra.mxu0 %v502
        %9292 = vmatprep.subr.mxu0 %v759
        %9293 = vmatpush1.xpose.msra.mxu0 %v758
        %9294 = vmatprep.subr.mxu0 0.0
        %9295 = vmatpush1.xpose.msra.mxu0 0.0
        %9296 = vmatprep.subr.mxu0 0.0
        %9297 = vmatpush1.xpose.msra.mxu0 0.0
        %9298 = vmatprep.subr.mxu0 0.0
        %9299 = vmatpush1.xpose.msra.mxu0 0.0
        %9300 = vmatprep.subr.mxu0 0.0
        %9301 = vmatpush1.xpose.msra.mxu0 0.0
        %9302 = vmatprep.subr.mxu0 0.0
        %9303 = vmatpush1.xpose.msra.mxu0 0.0
        %9304 = vmatprep.subr.mxu0 0.0
        %9305 = vmatpush1.xpose.msra.mxu0 0.0
        %9306 = vmatprep.subr.mxu0 0.0
        %9307 = vmatpush1.xpose.msra.mxu0 0.0
        %9308 = vmatprep.subr.mxu0 0.0
        %9309 = vmatpush1.xpose.msra.mxu0 0.0
        %9310 = vmatprep.subr.mxu0 0.0
        %9311 = vmatpush1.xpose.msra.mxu0 0.0
        %9312 = vmatprep.subr.mxu0 0.0
        %9313 = vmatpush1.xpose.msra.mxu0 0.0
        %9314 = vmatprep.subr.mxu0 0.0
        %9315 = vmatpush1.xpose.msra.mxu0 0.0
        %9316 = vmatprep.subr.mxu0 0.0
        %9317 = vmatpush1.xpose.msra.mxu0 0.0
        %9318 = vmatprep.subr.mxu0 0.0
        %9319 = vmatpush1.xpose.msra.mxu0 0.0
        %9320 = vmatprep.subr.mxu0 0.0
        %9321 = vmatpush1.xpose.msra.mxu0 0.0
        %9322 = vmatprep.subr.mxu0 0.0
        %9323 = vmatpush1.xpose.msra.mxu0 0.0
        %9324 = vmatprep.subr.mxu0 0.0
        %9325 = vmatpush1.xpose.msra.mxu0 0.0
        %9326 = vmatprep.subr.mxu0 0.0
        %9327 = vmatpush1.xpose.msra.mxu0 0.0
        %9328 = vmatprep.subr.mxu0 0.0
        %9329 = vmatpush1.xpose.msra.mxu0 0.0
        %9330 = vmatprep.subr.mxu0 0.0
        %9331 = vmatpush1.xpose.msra.mxu0 0.0
        %9332 = vmatprep.subr.mxu0 0.0
        %9333 = vmatpush1.xpose.msra.mxu0 0.0
        %9334 = vmatprep.subr.mxu0 0.0
        %9335 = vmatpush1.xpose.msra.mxu0 0.0
        %9336 = vmatprep.subr.mxu0 0.0
        %9337 = vmatpush1.xpose.msra.mxu0 0.0
        %9338 = vmatprep.subr.mxu0 0.0
        %9339 = vmatpush1.xpose.msra.mxu0 0.0
        %9340 = vmatprep.subr.mxu0 0.0
        %9341 = vmatpush1.xpose.msra.mxu0 0.0
        %9342 = vmatprep.subr.mxu0 0.0
        %9343 = vmatpush1.xpose.msra.mxu0 0.0
        %9344 = vmatprep.subr.mxu0 0.0
        %9345 = vmatpush1.xpose.msra.mxu0 0.0
        %9346 = vmatprep.subr.mxu0 0.0
        %9347 = vmatpush1.xpose.msra.mxu0 0.0
        %9348 = vmatprep.subr.mxu0 0.0
        %9349 = vmatpush1.xpose.msra.mxu0 0.0
        %9350 = vmatprep.subr.mxu0 0.0
        %9351 = vmatpush1.xpose.msra.mxu0 0.0
        %9352 = vmatprep.subr.mxu0 0.0
        %9353 = vmatpush1.xpose.msra.mxu0 0.0
        %9354 = vmatprep.mubr.f32.mxu0 %v1742
        %9355 = vmatmul.mubr.f32.gmra.mrb[0].mxu0 %v1740
        %v9356 = vpop.f32.mrb[0].mxu0
        %v9357 = vadd.f32 %v9287, %v9356
        %v9358 = vpop.f32.mrb[0].mxu0
        %9359 = vdwg.mxu0
        %9360 = vmatprep.subr.mxu0 %v505
        %9361 = vmatpush1.xpose.msra.mxu0 %v504
        %9362 = vmatprep.subr.mxu0 %v761
        %9363 = vmatpush1.xpose.msra.mxu0 %v760
        %9364 = vmatprep.subr.mxu0 0.0
        %9365 = vmatpush1.xpose.msra.mxu0 0.0
        %9366 = vmatprep.subr.mxu0 0.0
        %9367 = vmatpush1.xpose.msra.mxu0 0.0
        %9368 = vmatprep.subr.mxu0 0.0
        %9369 = vmatpush1.xpose.msra.mxu0 0.0
        %9370 = vmatprep.subr.mxu0 0.0
        %9371 = vmatpush1.xpose.msra.mxu0 0.0
        %9372 = vmatprep.subr.mxu0 0.0
        %9373 = vmatpush1.xpose.msra.mxu0 0.0
        %9374 = vmatprep.subr.mxu0 0.0
        %9375 = vmatpush1.xpose.msra.mxu0 0.0
        %9376 = vmatprep.subr.mxu0 0.0
        %9377 = vmatpush1.xpose.msra.mxu0 0.0
        %9378 = vmatprep.subr.mxu0 0.0
        %9379 = vmatpush1.xpose.msra.mxu0 0.0
        %9380 = vmatprep.subr.mxu0 0.0
        %9381 = vmatpush1.xpose.msra.mxu0 0.0
        %9382 = vmatprep.subr.mxu0 0.0
        %9383 = vmatpush1.xpose.msra.mxu0 0.0
        %9384 = vmatprep.subr.mxu0 0.0
        %9385 = vmatpush1.xpose.msra.mxu0 0.0
        %9386 = vmatprep.subr.mxu0 0.0
        %9387 = vmatpush1.xpose.msra.mxu0 0.0
        %9388 = vmatprep.subr.mxu0 0.0
        %9389 = vmatpush1.xpose.msra.mxu0 0.0
        %9390 = vmatprep.subr.mxu0 0.0
        %9391 = vmatpush1.xpose.msra.mxu0 0.0
        %9392 = vmatprep.subr.mxu0 0.0
        %9393 = vmatpush1.xpose.msra.mxu0 0.0
        %9394 = vmatprep.subr.mxu0 0.0
        %9395 = vmatpush1.xpose.msra.mxu0 0.0
        %9396 = vmatprep.subr.mxu0 0.0
        %9397 = vmatpush1.xpose.msra.mxu0 0.0
        %9398 = vmatprep.subr.mxu0 0.0
        %9399 = vmatpush1.xpose.msra.mxu0 0.0
        %9400 = vmatprep.subr.mxu0 0.0
        %9401 = vmatpush1.xpose.msra.mxu0 0.0
        %9402 = vmatprep.subr.mxu0 0.0
        %9403 = vmatpush1.xpose.msra.mxu0 0.0
        %9404 = vmatprep.subr.mxu0 0.0
        %9405 = vmatpush1.xpose.msra.mxu0 0.0
        %9406 = vmatprep.subr.mxu0 0.0
        %9407 = vmatpush1.xpose.msra.mxu0 0.0
        %9408 = vmatprep.subr.mxu0 0.0
        %9409 = vmatpush1.xpose.msra.mxu0 0.0
        %9410 = vmatprep.subr.mxu0 0.0
        %9411 = vmatpush1.xpose.msra.mxu0 0.0
        %9412 = vmatprep.subr.mxu0 0.0
        %9413 = vmatpush1.xpose.msra.mxu0 0.0
        %9414 = vmatprep.subr.mxu0 0.0
        %9415 = vmatpush1.xpose.msra.mxu0 0.0
        %9416 = vmatprep.subr.mxu0 0.0
        %9417 = vmatpush1.xpose.msra.mxu0 0.0
        %9418 = vmatprep.subr.mxu0 0.0
        %9419 = vmatpush1.xpose.msra.mxu0 0.0
        %9420 = vmatprep.subr.mxu0 0.0
        %9421 = vmatpush1.xpose.msra.mxu0 0.0
        %9422 = vmatprep.subr.mxu0 0.0
        %9423 = vmatpush1.xpose.msra.mxu0 0.0
        %9424 = vmatprep.mubr.f32.mxu0 %v1758
        %9425 = vmatmul.mubr.f32.gmra.mrb[0].mxu0 %v1750
        %v9426 = vpop.f32.mrb[0].mxu0
        %v9427 = vadd.f32 %v9357, %v9426
        %v9428 = vpop.f32.mrb[0].mxu0
        %9429 = vdwg.mxu0
        %9430 = vmatprep.subr.mxu0 %v507
        %9431 = vmatpush1.xpose.msra.mxu0 %v506
        %9432 = vmatprep.subr.mxu0 %v763
        %9433 = vmatpush1.xpose.msra.mxu0 %v762
        %9434 = vmatprep.subr.mxu0 0.0
        %9435 = vmatpush1.xpose.msra.mxu0 0.0
        %9436 = vmatprep.subr.mxu0 0.0
        %9437 = vmatpush1.xpose.msra.mxu0 0.0
        %9438 = vmatprep.subr.mxu0 0.0
        %9439 = vmatpush1.xpose.msra.mxu0 0.0
        %9440 = vmatprep.subr.mxu0 0.0
        %9441 = vmatpush1.xpose.msra.mxu0 0.0
        %9442 = vmatprep.subr.mxu0 0.0
        %9443 = vmatpush1.xpose.msra.mxu0 0.0
        %9444 = vmatprep.subr.mxu0 0.0
        %9445 = vmatpush1.xpose.msra.mxu0 0.0
        %9446 = vmatprep.subr.mxu0 0.0
        %9447 = vmatpush1.xpose.msra.mxu0 0.0
        %9448 = vmatprep.subr.mxu0 0.0
        %9449 = vmatpush1.xpose.msra.mxu0 0.0
        %9450 = vmatprep.subr.mxu0 0.0
        %9451 = vmatpush1.xpose.msra.mxu0 0.0
        %9452 = vmatprep.subr.mxu0 0.0
        %9453 = vmatpush1.xpose.msra.mxu0 0.0
        %9454 = vmatprep.subr.mxu0 0.0
        %9455 = vmatpush1.xpose.msra.mxu0 0.0
        %9456 = vmatprep.subr.mxu0 0.0
        %9457 = vmatpush1.xpose.msra.mxu0 0.0
        %9458 = vmatprep.subr.mxu0 0.0
        %9459 = vmatpush1.xpose.msra.mxu0 0.0
        %9460 = vmatprep.subr.mxu0 0.0
        %9461 = vmatpush1.xpose.msra.mxu0 0.0
        %9462 = vmatprep.subr.mxu0 0.0
        %9463 = vmatpush1.xpose.msra.mxu0 0.0
        %9464 = vmatprep.subr.mxu0 0.0
        %9465 = vmatpush1.xpose.msra.mxu0 0.0
        %9466 = vmatprep.subr.mxu0 0.0
        %9467 = vmatpush1.xpose.msra.mxu0 0.0
        %9468 = vmatprep.subr.mxu0 0.0
        %9469 = vmatpush1.xpose.msra.mxu0 0.0
        %9470 = vmatprep.subr.mxu0 0.0
        %9471 = vmatpush1.xpose.msra.mxu0 0.0
        %9472 = vmatprep.subr.mxu0 0.0
        %9473 = vmatpush1.xpose.msra.mxu0 0.0
        %9474 = vmatprep.subr.mxu0 0.0
        %9475 = vmatpush1.xpose.msra.mxu0 0.0
        %9476 = vmatprep.subr.mxu0 0.0
        %9477 = vmatpush1.xpose.msra.mxu0 0.0
        %9478 = vmatprep.subr.mxu0 0.0
        %9479 = vmatpush1.xpose.msra.mxu0 0.0
        %9480 = vmatprep.subr.mxu0 0.0
        %9481 = vmatpush1.xpose.msra.mxu0 0.0
        %9482 = vmatprep.subr.mxu0 0.0
        %9483 = vmatpush1.xpose.msra.mxu0 0.0
        %9484 = vmatprep.subr.mxu0 0.0
        %9485 = vmatpush1.xpose.msra.mxu0 0.0
        %9486 = vmatprep.subr.mxu0 0.0
        %9487 = vmatpush1.xpose.msra.mxu0 0.0
        %9488 = vmatprep.subr.mxu0 0.0
        %9489 = vmatpush1.xpose.msra.mxu0 0.0
        %9490 = vmatprep.subr.mxu0 0.0
        %9491 = vmatpush1.xpose.msra.mxu0 0.0
        %9492 = vmatprep.subr.mxu0 0.0
        %9493 = vmatpush1.xpose.msra.mxu0 0.0
        %9494 = vmatprep.mubr.f32.mxu0 %v1759
        %9495 = vmatmul.mubr.f32.gmra.mrb[0].mxu0 %v1757
        %v9496 = vpop.f32.mrb[0].mxu0
        %v9497 = vadd.f32 %v9427, %v9496
        %v9498 = vpop.f32.mrb[0].mxu0
        %9499 = vdwg.mxu0
        %9500 = vmatprep.subr.mxu0 %v509
        %9501 = vmatpush1.xpose.msra.mxu0 %v508
        %9502 = vmatprep.subr.mxu0 %v765
        %9503 = vmatpush1.xpose.msra.mxu0 %v764
        %9504 = vmatprep.subr.mxu0 0.0
        %9505 = vmatpush1.xpose.msra.mxu0 0.0
        %9506 = vmatprep.subr.mxu0 0.0
        %9507 = vmatpush1.xpose.msra.mxu0 0.0
        %9508 = vmatprep.subr.mxu0 0.0
        %9509 = vmatpush1.xpose.msra.mxu0 0.0
        %9510 = vmatprep.subr.mxu0 0.0
        %9511 = vmatpush1.xpose.msra.mxu0 0.0
        %9512 = vmatprep.subr.mxu0 0.0
        %9513 = vmatpush1.xpose.msra.mxu0 0.0
        %9514 = vmatprep.subr.mxu0 0.0
        %9515 = vmatpush1.xpose.msra.mxu0 0.0
        %9516 = vmatprep.subr.mxu0 0.0
        %9517 = vmatpush1.xpose.msra.mxu0 0.0
        %9518 = vmatprep.subr.mxu0 0.0
        %9519 = vmatpush1.xpose.msra.mxu0 0.0
        %9520 = vmatprep.subr.mxu0 0.0
        %9521 = vmatpush1.xpose.msra.mxu0 0.0
        %9522 = vmatprep.subr.mxu0 0.0
        %9523 = vmatpush1.xpose.msra.mxu0 0.0
        %9524 = vmatprep.subr.mxu0 0.0
        %9525 = vmatpush1.xpose.msra.mxu0 0.0
        %9526 = vmatprep.subr.mxu0 0.0
        %9527 = vmatpush1.xpose.msra.mxu0 0.0
        %9528 = vmatprep.subr.mxu0 0.0
        %9529 = vmatpush1.xpose.msra.mxu0 0.0
        %9530 = vmatprep.subr.mxu0 0.0
        %9531 = vmatpush1.xpose.msra.mxu0 0.0
        %9532 = vmatprep.subr.mxu0 0.0
        %9533 = vmatpush1.xpose.msra.mxu0 0.0
        %9534 = vmatprep.subr.mxu0 0.0
        %9535 = vmatpush1.xpose.msra.mxu0 0.0
        %9536 = vmatprep.subr.mxu0 0.0
        %9537 = vmatpush1.xpose.msra.mxu0 0.0
        %9538 = vmatprep.subr.mxu0 0.0
        %9539 = vmatpush1.xpose.msra.mxu0 0.0
        %9540 = vmatprep.subr.mxu0 0.0
        %9541 = vmatpush1.xpose.msra.mxu0 0.0
        %9542 = vmatprep.subr.mxu0 0.0
        %9543 = vmatpush1.xpose.msra.mxu0 0.0
        %9544 = vmatprep.subr.mxu0 0.0
        %9545 = vmatpush1.xpose.msra.mxu0 0.0
        %9546 = vmatprep.subr.mxu0 0.0
        %9547 = vmatpush1.xpose.msra.mxu0 0.0
        %9548 = vmatprep.subr.mxu0 0.0
        %9549 = vmatpush1.xpose.msra.mxu0 0.0
        %9550 = vmatprep.subr.mxu0 0.0
        %9551 = vmatpush1.xpose.msra.mxu0 0.0
        %9552 = vmatprep.subr.mxu0 0.0
        %9553 = vmatpush1.xpose.msra.mxu0 0.0
        %9554 = vmatprep.subr.mxu0 0.0
        %9555 = vmatpush1.xpose.msra.mxu0 0.0
        %9556 = vmatprep.subr.mxu0 0.0
        %9557 = vmatpush1.xpose.msra.mxu0 0.0
        %9558 = vmatprep.subr.mxu0 0.0
        %9559 = vmatpush1.xpose.msra.mxu0 0.0
        %9560 = vmatprep.subr.mxu0 0.0
        %9561 = vmatpush1.xpose.msra.mxu0 0.0
        %9562 = vmatprep.subr.mxu0 0.0
        %9563 = vmatpush1.xpose.msra.mxu0 0.0
        %9564 = vmatprep.mubr.f32.mxu0 %v1775
        %9565 = vmatmul.mubr.f32.gmra.mrb[0].mxu0 %v1767
        %v9566 = vpop.f32.mrb[0].mxu0
        %v9567 = vadd.f32 %v9497, %v9566
        %v9568 = vpop.f32.mrb[0].mxu0
        %9569 = vdwg.mxu0
        %9570 = vmatprep.subr.mxu0 %v511
        %9571 = vmatpush1.xpose.msra.mxu0 %v510
        %9572 = vmatprep.subr.mxu0 %v767
        %9573 = vmatpush1.xpose.msra.mxu0 %v766
        %9574 = vmatprep.subr.mxu0 0.0
        %9575 = vmatpush1.xpose.msra.mxu0 0.0
        %9576 = vmatprep.subr.mxu0 0.0
        %9577 = vmatpush1.xpose.msra.mxu0 0.0
        %9578 = vmatprep.subr.mxu0 0.0
        %9579 = vmatpush1.xpose.msra.mxu0 0.0
        %9580 = vmatprep.subr.mxu0 0.0
        %9581 = vmatpush1.xpose.msra.mxu0 0.0
        %9582 = vmatprep.subr.mxu0 0.0
        %9583 = vmatpush1.xpose.msra.mxu0 0.0
        %9584 = vmatprep.subr.mxu0 0.0
        %9585 = vmatpush1.xpose.msra.mxu0 0.0
        %9586 = vmatprep.subr.mxu0 0.0
        %9587 = vmatpush1.xpose.msra.mxu0 0.0
        %9588 = vmatprep.subr.mxu0 0.0
        %9589 = vmatpush1.xpose.msra.mxu0 0.0
        %9590 = vmatprep.subr.mxu0 0.0
        %9591 = vmatpush1.xpose.msra.mxu0 0.0
        %9592 = vmatprep.subr.mxu0 0.0
        %9593 = vmatpush1.xpose.msra.mxu0 0.0
        %9594 = vmatprep.subr.mxu0 0.0
        %9595 = vmatpush1.xpose.msra.mxu0 0.0
        %9596 = vmatprep.subr.mxu0 0.0
        %9597 = vmatpush1.xpose.msra.mxu0 0.0
        %9598 = vmatprep.subr.mxu0 0.0
        %9599 = vmatpush1.xpose.msra.mxu0 0.0
        %9600 = vmatprep.subr.mxu0 0.0
        %9601 = vmatpush1.xpose.msra.mxu0 0.0
        %9602 = vmatprep.subr.mxu0 0.0
        %9603 = vmatpush1.xpose.msra.mxu0 0.0
        %9604 = vmatprep.subr.mxu0 0.0
        %9605 = vmatpush1.xpose.msra.mxu0 0.0
        %9606 = vmatprep.subr.mxu0 0.0
        %9607 = vmatpush1.xpose.msra.mxu0 0.0
        %9608 = vmatprep.subr.mxu0 0.0
        %9609 = vmatpush1.xpose.msra.mxu0 0.0
        %9610 = vmatprep.subr.mxu0 0.0
        %9611 = vmatpush1.xpose.msra.mxu0 0.0
        %9612 = vmatprep.subr.mxu0 0.0
        %9613 = vmatpush1.xpose.msra.mxu0 0.0
        %9614 = vmatprep.subr.mxu0 0.0
        %9615 = vmatpush1.xpose.msra.mxu0 0.0
        %9616 = vmatprep.subr.mxu0 0.0
        %9617 = vmatpush1.xpose.msra.mxu0 0.0
        %9618 = vmatprep.subr.mxu0 0.0
        %9619 = vmatpush1.xpose.msra.mxu0 0.0
        %9620 = vmatprep.subr.mxu0 0.0
        %9621 = vmatpush1.xpose.msra.mxu0 0.0
        %9622 = vmatprep.subr.mxu0 0.0
        %9623 = vmatpush1.xpose.msra.mxu0 0.0
        %9624 = vmatprep.subr.mxu0 0.0
        %9625 = vmatpush1.xpose.msra.mxu0 0.0
        %9626 = vmatprep.subr.mxu0 0.0
        %9627 = vmatpush1.xpose.msra.mxu0 0.0
        %9628 = vmatprep.subr.mxu0 0.0
        %9629 = vmatpush1.xpose.msra.mxu0 0.0
        %9630 = vmatprep.subr.mxu0 0.0
        %9631 = vmatpush1.xpose.msra.mxu0 0.0
        %9632 = vmatprep.subr.mxu0 0.0
        %9633 = vmatpush1.xpose.msra.mxu0 0.0
        %9634 = vmatprep.mubr.f32.mxu0 %v1776
        %9635 = vmatmul.mubr.f32.gmra.mrb[0].mxu0 %v1774
        %v9636 = vpop.f32.mrb[0].mxu0
        %v9637 = vadd.f32 %v9567, %v9636
        %v9638 = vpop.f32.mrb[0].mxu0
        %9639 = vdwg.mxu0
        %9640 = vmatprep.subr.mxu0 %v513
        %9641 = vmatpush1.xpose.msra.mxu0 %v512
        %9642 = vmatprep.subr.mxu0 %v769
        %9643 = vmatpush1.xpose.msra.mxu0 %v768
        %9644 = vmatprep.subr.mxu0 0.0
        %9645 = vmatpush1.xpose.msra.mxu0 0.0
        %9646 = vmatprep.subr.mxu0 0.0
        %9647 = vmatpush1.xpose.msra.mxu0 0.0
        %9648 = vmatprep.subr.mxu0 0.0
        %9649 = vmatpush1.xpose.msra.mxu0 0.0
        %9650 = vmatprep.subr.mxu0 0.0
        %9651 = vmatpush1.xpose.msra.mxu0 0.0
        %9652 = vmatprep.subr.mxu0 0.0
        %9653 = vmatpush1.xpose.msra.mxu0 0.0
        %9654 = vmatprep.subr.mxu0 0.0
        %9655 = vmatpush1.xpose.msra.mxu0 0.0
        %9656 = vmatprep.subr.mxu0 0.0
        %9657 = vmatpush1.xpose.msra.mxu0 0.0
        %9658 = vmatprep.subr.mxu0 0.0
        %9659 = vmatpush1.xpose.msra.mxu0 0.0
        %9660 = vmatprep.subr.mxu0 0.0
        %9661 = vmatpush1.xpose.msra.mxu0 0.0
        %9662 = vmatprep.subr.mxu0 0.0
        %9663 = vmatpush1.xpose.msra.mxu0 0.0
        %9664 = vmatprep.subr.mxu0 0.0
        %9665 = vmatpush1.xpose.msra.mxu0 0.0
        %9666 = vmatprep.subr.mxu0 0.0
        %9667 = vmatpush1.xpose.msra.mxu0 0.0
        %9668 = vmatprep.subr.mxu0 0.0
        %9669 = vmatpush1.xpose.msra.mxu0 0.0
        %9670 = vmatprep.subr.mxu0 0.0
        %9671 = vmatpush1.xpose.msra.mxu0 0.0
        %9672 = vmatprep.subr.mxu0 0.0
        %9673 = vmatpush1.xpose.msra.mxu0 0.0
        %9674 = vmatprep.subr.mxu0 0.0
        %9675 = vmatpush1.xpose.msra.mxu0 0.0
        %9676 = vmatprep.subr.mxu0 0.0
        %9677 = vmatpush1.xpose.msra.mxu0 0.0
        %9678 = vmatprep.subr.mxu0 0.0
        %9679 = vmatpush1.xpose.msra.mxu0 0.0
        %9680 = vmatprep.subr.mxu0 0.0
        %9681 = vmatpush1.xpose.msra.mxu0 0.0
        %9682 = vmatprep.subr.mxu0 0.0
        %9683 = vmatpush1.xpose.msra.mxu0 0.0
        %9684 = vmatprep.subr.mxu0 0.0
        %9685 = vmatpush1.xpose.msra.mxu0 0.0
        %9686 = vmatprep.subr.mxu0 0.0
        %9687 = vmatpush1.xpose.msra.mxu0 0.0
        %9688 = vmatprep.subr.mxu0 0.0
        %9689 = vmatpush1.xpose.msra.mxu0 0.0
        %9690 = vmatprep.subr.mxu0 0.0
        %9691 = vmatpush1.xpose.msra.mxu0 0.0
        %9692 = vmatprep.subr.mxu0 0.0
        %9693 = vmatpush1.xpose.msra.mxu0 0.0
        %9694 = vmatprep.subr.mxu0 0.0
        %9695 = vmatpush1.xpose.msra.mxu0 0.0
        %9696 = vmatprep.subr.mxu0 0.0
        %9697 = vmatpush1.xpose.msra.mxu0 0.0
        %9698 = vmatprep.subr.mxu0 0.0
        %9699 = vmatpush1.xpose.msra.mxu0 0.0
        %9700 = vmatprep.subr.mxu0 0.0
        %9701 = vmatpush1.xpose.msra.mxu0 0.0
        %9702 = vmatprep.subr.mxu0 0.0
        %9703 = vmatpush1.xpose.msra.mxu0 0.0
        %9704 = vmatprep.mubr.f32.mxu0 %v1792
        %9705 = vmatmul.mubr.f32.gmra.mrb[0].mxu0 %v1784
        %v9706 = vpop.f32.mrb[0].mxu0
        %v9707 = vadd.f32 %v9637, %v9706
        %v9708 = vpop.f32.mrb[0].mxu0
        %9709 = vdwg.mxu0
        %9710 = vmatprep.subr.mxu0 %v515
        %9711 = vmatpush1.xpose.msra.mxu0 %v514
        %9712 = vmatprep.subr.mxu0 %v771
        %9713 = vmatpush1.xpose.msra.mxu0 %v770
        %9714 = vmatprep.subr.mxu0 0.0
        %9715 = vmatpush1.xpose.msra.mxu0 0.0
        %9716 = vmatprep.subr.mxu0 0.0
        %9717 = vmatpush1.xpose.msra.mxu0 0.0
        %9718 = vmatprep.subr.mxu0 0.0
        %9719 = vmatpush1.xpose.msra.mxu0 0.0
        %9720 = vmatprep.subr.mxu0 0.0
        %9721 = vmatpush1.xpose.msra.mxu0 0.0
        %9722 = vmatprep.subr.mxu0 0.0
        %9723 = vmatpush1.xpose.msra.mxu0 0.0
        %9724 = vmatprep.subr.mxu0 0.0
        %9725 = vmatpush1.xpose.msra.mxu0 0.0
        %9726 = vmatprep.subr.mxu0 0.0
        %9727 = vmatpush1.xpose.msra.mxu0 0.0
        %9728 = vmatprep.subr.mxu0 0.0
        %9729 = vmatpush1.xpose.msra.mxu0 0.0
        %9730 = vmatprep.subr.mxu0 0.0
        %9731 = vmatpush1.xpose.msra.mxu0 0.0
        %9732 = vmatprep.subr.mxu0 0.0
        %9733 = vmatpush1.xpose.msra.mxu0 0.0
        %9734 = vmatprep.subr.mxu0 0.0
        %9735 = vmatpush1.xpose.msra.mxu0 0.0
        %9736 = vmatprep.subr.mxu0 0.0
        %9737 = vmatpush1.xpose.msra.mxu0 0.0
        %9738 = vmatprep.subr.mxu0 0.0
        %9739 = vmatpush1.xpose.msra.mxu0 0.0
        %9740 = vmatprep.subr.mxu0 0.0
        %9741 = vmatpush1.xpose.msra.mxu0 0.0
        %9742 = vmatprep.subr.mxu0 0.0
        %9743 = vmatpush1.xpose.msra.mxu0 0.0
        %9744 = vmatprep.subr.mxu0 0.0
        %9745 = vmatpush1.xpose.msra.mxu0 0.0
        %9746 = vmatprep.subr.mxu0 0.0
        %9747 = vmatpush1.xpose.msra.mxu0 0.0
        %9748 = vmatprep.subr.mxu0 0.0
        %9749 = vmatpush1.xpose.msra.mxu0 0.0
        %9750 = vmatprep.subr.mxu0 0.0
        %9751 = vmatpush1.xpose.msra.mxu0 0.0
        %9752 = vmatprep.subr.mxu0 0.0
        %9753 = vmatpush1.xpose.msra.mxu0 0.0
        %9754 = vmatprep.subr.mxu0 0.0
        %9755 = vmatpush1.xpose.msra.mxu0 0.0
        %9756 = vmatprep.subr.mxu0 0.0
        %9757 = vmatpush1.xpose.msra.mxu0 0.0
        %9758 = vmatprep.subr.mxu0 0.0
        %9759 = vmatpush1.xpose.msra.mxu0 0.0
        %9760 = vmatprep.subr.mxu0 0.0
        %9761 = vmatpush1.xpose.msra.mxu0 0.0
        %9762 = vmatprep.subr.mxu0 0.0
        %9763 = vmatpush1.xpose.msra.mxu0 0.0
        %9764 = vmatprep.subr.mxu0 0.0
        %9765 = vmatpush1.xpose.msra.mxu0 0.0
        %9766 = vmatprep.subr.mxu0 0.0
        %9767 = vmatpush1.xpose.msra.mxu0 0.0
        %9768 = vmatprep.subr.mxu0 0.0
        %9769 = vmatpush1.xpose.msra.mxu0 0.0
        %9770 = vmatprep.subr.mxu0 0.0
        %9771 = vmatpush1.xpose.msra.mxu0 0.0
        %9772 = vmatprep.subr.mxu0 0.0
        %9773 = vmatpush1.xpose.msra.mxu0 0.0
        %9774 = vmatprep.mubr.f32.mxu0 %v1793
        %9775 = vmatmul.mubr.f32.gmra.mrb[0].mxu0 %v1791
        %v9776 = vpop.f32.mrb[0].mxu0
        %v9777 = vadd.f32 %v9707, %v9776
        %v9778 = vpop.f32.mrb[0].mxu0
        %9779 = vdwg.mxu0
        %9780 = vmatprep.subr.mxu0 %v517
        %9781 = vmatpush1.xpose.msra.mxu0 %v516
        %9782 = vmatprep.subr.mxu0 %v773
        %9783 = vmatpush1.xpose.msra.mxu0 %v772
        %9784 = vmatprep.subr.mxu0 0.0
        %9785 = vmatpush1.xpose.msra.mxu0 0.0
        %9786 = vmatprep.subr.mxu0 0.0
        %9787 = vmatpush1.xpose.msra.mxu0 0.0
        %9788 = vmatprep.subr.mxu0 0.0
        %9789 = vmatpush1.xpose.msra.mxu0 0.0
        %9790 = vmatprep.subr.mxu0 0.0
        %9791 = vmatpush1.xpose.msra.mxu0 0.0
        %9792 = vmatprep.subr.mxu0 0.0
        %9793 = vmatpush1.xpose.msra.mxu0 0.0
        %9794 = vmatprep.subr.mxu0 0.0
        %9795 = vmatpush1.xpose.msra.mxu0 0.0
        %9796 = vmatprep.subr.mxu0 0.0
        %9797 = vmatpush1.xpose.msra.mxu0 0.0
        %9798 = vmatprep.subr.mxu0 0.0
        %9799 = vmatpush1.xpose.msra.mxu0 0.0
        %9800 = vmatprep.subr.mxu0 0.0
        %9801 = vmatpush1.xpose.msra.mxu0 0.0
        %9802 = vmatprep.subr.mxu0 0.0
        %9803 = vmatpush1.xpose.msra.mxu0 0.0
        %9804 = vmatprep.subr.mxu0 0.0
        %9805 = vmatpush1.xpose.msra.mxu0 0.0
        %9806 = vmatprep.subr.mxu0 0.0
        %9807 = vmatpush1.xpose.msra.mxu0 0.0
        %9808 = vmatprep.subr.mxu0 0.0
        %9809 = vmatpush1.xpose.msra.mxu0 0.0
        %9810 = vmatprep.subr.mxu0 0.0
        %9811 = vmatpush1.xpose.msra.mxu0 0.0
        %9812 = vmatprep.subr.mxu0 0.0
        %9813 = vmatpush1.xpose.msra.mxu0 0.0
        %9814 = vmatprep.subr.mxu0 0.0
        %9815 = vmatpush1.xpose.msra.mxu0 0.0
        %9816 = vmatprep.subr.mxu0 0.0
        %9817 = vmatpush1.xpose.msra.mxu0 0.0
        %9818 = vmatprep.subr.mxu0 0.0
        %9819 = vmatpush1.xpose.msra.mxu0 0.0
        %9820 = vmatprep.subr.mxu0 0.0
        %9821 = vmatpush1.xpose.msra.mxu0 0.0
        %9822 = vmatprep.subr.mxu0 0.0
        %9823 = vmatpush1.xpose.msra.mxu0 0.0
        %9824 = vmatprep.subr.mxu0 0.0
        %9825 = vmatpush1.xpose.msra.mxu0 0.0
        %9826 = vmatprep.subr.mxu0 0.0
        %9827 = vmatpush1.xpose.msra.mxu0 0.0
        %9828 = vmatprep.subr.mxu0 0.0
        %9829 = vmatpush1.xpose.msra.mxu0 0.0
        %9830 = vmatprep.subr.mxu0 0.0
        %9831 = vmatpush1.xpose.msra.mxu0 0.0
        %9832 = vmatprep.subr.mxu0 0.0
        %9833 = vmatpush1.xpose.msra.mxu0 0.0
        %9834 = vmatprep.subr.mxu0 0.0
        %9835 = vmatpush1.xpose.msra.mxu0 0.0
        %9836 = vmatprep.subr.mxu0 0.0
        %9837 = vmatpush1.xpose.msra.mxu0 0.0
        %9838 = vmatprep.subr.mxu0 0.0
        %9839 = vmatpush1.xpose.msra.mxu0 0.0
        %9840 = vmatprep.subr.mxu0 0.0
        %9841 = vmatpush1.xpose.msra.mxu0 0.0
        %9842 = vmatprep.subr.mxu0 0.0
        %9843 = vmatpush1.xpose.msra.mxu0 0.0
        %9844 = vmatprep.mubr.f32.mxu0 %v1809
        %9845 = vmatmul.mubr.f32.gmra.mrb[0].mxu0 %v1801
        %v9846 = vpop.f32.mrb[0].mxu0
        %v9847 = vadd.f32 %v9777, %v9846
        %v9848 = vpop.f32.mrb[0].mxu0
        %9849 = vdwg.mxu0
        %9850 = vmatprep.subr.mxu0 %v519
        %9851 = vmatpush1.xpose.msra.mxu0 %v518
        %9852 = vmatprep.subr.mxu0 %v775
        %9853 = vmatpush1.xpose.msra.mxu0 %v774
        %9854 = vmatprep.subr.mxu0 0.0
        %9855 = vmatpush1.xpose.msra.mxu0 0.0
        %9856 = vmatprep.subr.mxu0 0.0
        %9857 = vmatpush1.xpose.msra.mxu0 0.0
        %9858 = vmatprep.subr.mxu0 0.0
        %9859 = vmatpush1.xpose.msra.mxu0 0.0
        %9860 = vmatprep.subr.mxu0 0.0
        %9861 = vmatpush1.xpose.msra.mxu0 0.0
        %9862 = vmatprep.subr.mxu0 0.0
        %9863 = vmatpush1.xpose.msra.mxu0 0.0
        %9864 = vmatprep.subr.mxu0 0.0
        %9865 = vmatpush1.xpose.msra.mxu0 0.0
        %9866 = vmatprep.subr.mxu0 0.0
        %9867 = vmatpush1.xpose.msra.mxu0 0.0
        %9868 = vmatprep.subr.mxu0 0.0
        %9869 = vmatpush1.xpose.msra.mxu0 0.0
        %9870 = vmatprep.subr.mxu0 0.0
        %9871 = vmatpush1.xpose.msra.mxu0 0.0
        %9872 = vmatprep.subr.mxu0 0.0
        %9873 = vmatpush1.xpose.msra.mxu0 0.0
        %9874 = vmatprep.subr.mxu0 0.0
        %9875 = vmatpush1.xpose.msra.mxu0 0.0
        %9876 = vmatprep.subr.mxu0 0.0
        %9877 = vmatpush1.xpose.msra.mxu0 0.0
        %9878 = vmatprep.subr.mxu0 0.0
        %9879 = vmatpush1.xpose.msra.mxu0 0.0
        %9880 = vmatprep.subr.mxu0 0.0
        %9881 = vmatpush1.xpose.msra.mxu0 0.0
        %9882 = vmatprep.subr.mxu0 0.0
        %9883 = vmatpush1.xpose.msra.mxu0 0.0
        %9884 = vmatprep.subr.mxu0 0.0
        %9885 = vmatpush1.xpose.msra.mxu0 0.0
        %9886 = vmatprep.subr.mxu0 0.0
        %9887 = vmatpush1.xpose.msra.mxu0 0.0
        %9888 = vmatprep.subr.mxu0 0.0
        %9889 = vmatpush1.xpose.msra.mxu0 0.0
        %9890 = vmatprep.subr.mxu0 0.0
        %9891 = vmatpush1.xpose.msra.mxu0 0.0
        %9892 = vmatprep.subr.mxu0 0.0
        %9893 = vmatpush1.xpose.msra.mxu0 0.0
        %9894 = vmatprep.subr.mxu0 0.0
        %9895 = vmatpush1.xpose.msra.mxu0 0.0
        %9896 = vmatprep.subr.mxu0 0.0
        %9897 = vmatpush1.xpose.msra.mxu0 0.0
        %9898 = vmatprep.subr.mxu0 0.0
        %9899 = vmatpush1.xpose.msra.mxu0 0.0
        %9900 = vmatprep.subr.mxu0 0.0
        %9901 = vmatpush1.xpose.msra.mxu0 0.0
        %9902 = vmatprep.subr.mxu0 0.0
        %9903 = vmatpush1.xpose.msra.mxu0 0.0
        %9904 = vmatprep.subr.mxu0 0.0
        %9905 = vmatpush1.xpose.msra.mxu0 0.0
        %9906 = vmatprep.subr.mxu0 0.0
        %9907 = vmatpush1.xpose.msra.mxu0 0.0
        %9908 = vmatprep.subr.mxu0 0.0
        %9909 = vmatpush1.xpose.msra.mxu0 0.0
        %9910 = vmatprep.subr.mxu0 0.0
        %9911 = vmatpush1.xpose.msra.mxu0 0.0
        %9912 = vmatprep.subr.mxu0 0.0
        %9913 = vmatpush1.xpose.msra.mxu0 0.0
        %9914 = vmatprep.mubr.f32.mxu0 %v1810
        %9915 = vmatmul.mubr.f32.gmra.mrb[0].mxu0 %v1808
        %v9916 = vpop.f32.mrb[0].mxu0
        %v9917 = vadd.f32 %v9847, %v9916
        %v9918 = vpop.f32.mrb[0].mxu0
        %9919 = vdwg.mxu0
        %9920 = vmatprep.subr.mxu0 %v521
        %9921 = vmatpush1.xpose.msra.mxu0 %v520
        %9922 = vmatprep.subr.mxu0 %v777
        %9923 = vmatpush1.xpose.msra.mxu0 %v776
        %9924 = vmatprep.subr.mxu0 0.0
        %9925 = vmatpush1.xpose.msra.mxu0 0.0
        %9926 = vmatprep.subr.mxu0 0.0
        %9927 = vmatpush1.xpose.msra.mxu0 0.0
        %9928 = vmatprep.subr.mxu0 0.0
        %9929 = vmatpush1.xpose.msra.mxu0 0.0
        %9930 = vmatprep.subr.mxu0 0.0
        %9931 = vmatpush1.xpose.msra.mxu0 0.0
        %9932 = vmatprep.subr.mxu0 0.0
        %9933 = vmatpush1.xpose.msra.mxu0 0.0
        %9934 = vmatprep.subr.mxu0 0.0
        %9935 = vmatpush1.xpose.msra.mxu0 0.0
        %9936 = vmatprep.subr.mxu0 0.0
        %9937 = vmatpush1.xpose.msra.mxu0 0.0
        %9938 = vmatprep.subr.mxu0 0.0
        %9939 = vmatpush1.xpose.msra.mxu0 0.0
        %9940 = vmatprep.subr.mxu0 0.0
        %9941 = vmatpush1.xpose.msra.mxu0 0.0
        %9942 = vmatprep.subr.mxu0 0.0
        %9943 = vmatpush1.xpose.msra.mxu0 0.0
        %9944 = vmatprep.subr.mxu0 0.0
        %9945 = vmatpush1.xpose.msra.mxu0 0.0
        %9946 = vmatprep.subr.mxu0 0.0
        %9947 = vmatpush1.xpose.msra.mxu0 0.0
        %9948 = vmatprep.subr.mxu0 0.0
        %9949 = vmatpush1.xpose.msra.mxu0 0.0
        %9950 = vmatprep.subr.mxu0 0.0
        %9951 = vmatpush1.xpose.msra.mxu0 0.0
        %9952 = vmatprep.subr.mxu0 0.0
        %9953 = vmatpush1.xpose.msra.mxu0 0.0
        %9954 = vmatprep.subr.mxu0 0.0
        %9955 = vmatpush1.xpose.msra.mxu0 0.0
        %9956 = vmatprep.subr.mxu0 0.0
        %9957 = vmatpush1.xpose.msra.mxu0 0.0
        %9958 = vmatprep.subr.mxu0 0.0
        %9959 = vmatpush1.xpose.msra.mxu0 0.0
        %9960 = vmatprep.subr.mxu0 0.0
        %9961 = vmatpush1.xpose.msra.mxu0 0.0
        %9962 = vmatprep.subr.mxu0 0.0
        %9963 = vmatpush1.xpose.msra.mxu0 0.0
        %9964 = vmatprep.subr.mxu0 0.0
        %9965 = vmatpush1.xpose.msra.mxu0 0.0
        %9966 = vmatprep.subr.mxu0 0.0
        %9967 = vmatpush1.xpose.msra.mxu0 0.0
        %9968 = vmatprep.subr.mxu0 0.0
        %9969 = vmatpush1.xpose.msra.mxu0 0.0
        %9970 = vmatprep.subr.mxu0 0.0
        %9971 = vmatpush1.xpose.msra.mxu0 0.0
        %9972 = vmatprep.subr.mxu0 0.0
        %9973 = vmatpush1.xpose.msra.mxu0 0.0
        %9974 = vmatprep.subr.mxu0 0.0
        %9975 = vmatpush1.xpose.msra.mxu0 0.0
        %9976 = vmatprep.subr.mxu0 0.0
        %9977 = vmatpush1.xpose.msra.mxu0 0.0
        %9978 = vmatprep.subr.mxu0 0.0
        %9979 = vmatpush1.xpose.msra.mxu0 0.0
        %9980 = vmatprep.subr.mxu0 0.0
        %9981 = vmatpush1.xpose.msra.mxu0 0.0
        %9982 = vmatprep.subr.mxu0 0.0
        %9983 = vmatpush1.xpose.msra.mxu0 0.0
        %9984 = vmatprep.mubr.f32.mxu0 %v1826
        %9985 = vmatmul.mubr.f32.gmra.mrb[0].mxu0 %v1818
        %v9986 = vpop.f32.mrb[0].mxu0
        %v9987 = vadd.f32 %v9917, %v9986
        %v9988 = vpop.f32.mrb[0].mxu0
        %9989 = vdwg.mxu0
        %9990 = vmatprep.subr.mxu0 %v523
        %9991 = vmatpush1.xpose.msra.mxu0 %v522
        %9992 = vmatprep.subr.mxu0 %v779
        %9993 = vmatpush1.xpose.msra.mxu0 %v778
        %9994 = vmatprep.subr.mxu0 0.0
        %9995 = vmatpush1.xpose.msra.mxu0 0.0
        %9996 = vmatprep.subr.mxu0 0.0
        %9997 = vmatpush1.xpose.msra.mxu0 0.0
        %9998 = vmatprep.subr.mxu0 0.0
        %9999 = vmatpush1.xpose.msra.mxu0 0.0
        %10000 = vmatprep.subr.mxu0 0.0
        %10001 = vmatpush1.xpose.msra.mxu0 0.0
        %10002 = vmatprep.subr.mxu0 0.0
        %10003 = vmatpush1.xpose.msra.mxu0 0.0
        %10004 = vmatprep.subr.mxu0 0.0
        %10005 = vmatpush1.xpose.msra.mxu0 0.0
        %10006 = vmatprep.subr.mxu0 0.0
        %10007 = vmatpush1.xpose.msra.mxu0 0.0
        %10008 = vmatprep.subr.mxu0 0.0
        %10009 = vmatpush1.xpose.msra.mxu0 0.0
        %10010 = vmatprep.subr.mxu0 0.0
        %10011 = vmatpush1.xpose.msra.mxu0 0.0
        %10012 = vmatprep.subr.mxu0 0.0
        %10013 = vmatpush1.xpose.msra.mxu0 0.0
        %10014 = vmatprep.subr.mxu0 0.0
        %10015 = vmatpush1.xpose.msra.mxu0 0.0
        %10016 = vmatprep.subr.mxu0 0.0
        %10017 = vmatpush1.xpose.msra.mxu0 0.0
        %10018 = vmatprep.subr.mxu0 0.0
        %10019 = vmatpush1.xpose.msra.mxu0 0.0
        %10020 = vmatprep.subr.mxu0 0.0
        %10021 = vmatpush1.xpose.msra.mxu0 0.0
        %10022 = vmatprep.subr.mxu0 0.0
        %10023 = vmatpush1.xpose.msra.mxu0 0.0
        %10024 = vmatprep.subr.mxu0 0.0
        %10025 = vmatpush1.xpose.msra.mxu0 0.0
        %10026 = vmatprep.subr.mxu0 0.0
        %10027 = vmatpush1.xpose.msra.mxu0 0.0
        %10028 = vmatprep.subr.mxu0 0.0
        %10029 = vmatpush1.xpose.msra.mxu0 0.0
        %10030 = vmatprep.subr.mxu0 0.0
        %10031 = vmatpush1.xpose.msra.mxu0 0.0
        %10032 = vmatprep.subr.mxu0 0.0
        %10033 = vmatpush1.xpose.msra.mxu0 0.0
        %10034 = vmatprep.subr.mxu0 0.0
        %10035 = vmatpush1.xpose.msra.mxu0 0.0
        %10036 = vmatprep.subr.mxu0 0.0
        %10037 = vmatpush1.xpose.msra.mxu0 0.0
        %10038 = vmatprep.subr.mxu0 0.0
        %10039 = vmatpush1.xpose.msra.mxu0 0.0
        %10040 = vmatprep.subr.mxu0 0.0
        %10041 = vmatpush1.xpose.msra.mxu0 0.0
        %10042 = vmatprep.subr.mxu0 0.0
        %10043 = vmatpush1.xpose.msra.mxu0 0.0
        %10044 = vmatprep.subr.mxu0 0.0
        %10045 = vmatpush1.xpose.msra.mxu0 0.0
        %10046 = vmatprep.subr.mxu0 0.0
        %10047 = vmatpush1.xpose.msra.mxu0 0.0
        %10048 = vmatprep.subr.mxu0 0.0
        %10049 = vmatpush1.xpose.msra.mxu0 0.0
        %10050 = vmatprep.subr.mxu0 0.0
        %10051 = vmatpush1.xpose.msra.mxu0 0.0
        %10052 = vmatprep.subr.mxu0 0.0
        %10053 = vmatpush1.xpose.msra.mxu0 0.0
        %10054 = vmatprep.mubr.f32.mxu0 %v1827
        %10055 = vmatmul.mubr.f32.gmra.mrb[0].mxu0 %v1825
        %v10056 = vpop.f32.mrb[0].mxu0
        %v10057 = vadd.f32 %v9987, %v10056
        %v10058 = vpop.f32.mrb[0].mxu0
        %10059 = vdwg.mxu0
        %10060 = vmatprep.subr.mxu0 %v525
        %10061 = vmatpush1.xpose.msra.mxu0 %v524
        %10062 = vmatprep.subr.mxu0 %v781
        %10063 = vmatpush1.xpose.msra.mxu0 %v780
        %10064 = vmatprep.subr.mxu0 0.0
        %10065 = vmatpush1.xpose.msra.mxu0 0.0
        %10066 = vmatprep.subr.mxu0 0.0
        %10067 = vmatpush1.xpose.msra.mxu0 0.0
        %10068 = vmatprep.subr.mxu0 0.0
        %10069 = vmatpush1.xpose.msra.mxu0 0.0
        %10070 = vmatprep.subr.mxu0 0.0
        %10071 = vmatpush1.xpose.msra.mxu0 0.0
        %10072 = vmatprep.subr.mxu0 0.0
        %10073 = vmatpush1.xpose.msra.mxu0 0.0
        %10074 = vmatprep.subr.mxu0 0.0
        %10075 = vmatpush1.xpose.msra.mxu0 0.0
        %10076 = vmatprep.subr.mxu0 0.0
        %10077 = vmatpush1.xpose.msra.mxu0 0.0
        %10078 = vmatprep.subr.mxu0 0.0
        %10079 = vmatpush1.xpose.msra.mxu0 0.0
        %10080 = vmatprep.subr.mxu0 0.0
        %10081 = vmatpush1.xpose.msra.mxu0 0.0
        %10082 = vmatprep.subr.mxu0 0.0
        %10083 = vmatpush1.xpose.msra.mxu0 0.0
        %10084 = vmatprep.subr.mxu0 0.0
        %10085 = vmatpush1.xpose.msra.mxu0 0.0
        %10086 = vmatprep.subr.mxu0 0.0
        %10087 = vmatpush1.xpose.msra.mxu0 0.0
        %10088 = vmatprep.subr.mxu0 0.0
        %10089 = vmatpush1.xpose.msra.mxu0 0.0
        %10090 = vmatprep.subr.mxu0 0.0
        %10091 = vmatpush1.xpose.msra.mxu0 0.0
        %10092 = vmatprep.subr.mxu0 0.0
        %10093 = vmatpush1.xpose.msra.mxu0 0.0
        %10094 = vmatprep.subr.mxu0 0.0
        %10095 = vmatpush1.xpose.msra.mxu0 0.0
        %10096 = vmatprep.subr.mxu0 0.0
        %10097 = vmatpush1.xpose.msra.mxu0 0.0
        %10098 = vmatprep.subr.mxu0 0.0
        %10099 = vmatpush1.xpose.msra.mxu0 0.0
        %10100 = vmatprep.subr.mxu0 0.0
        %10101 = vmatpush1.xpose.msra.mxu0 0.0
        %10102 = vmatprep.subr.mxu0 0.0
        %10103 = vmatpush1.xpose.msra.mxu0 0.0
        %10104 = vmatprep.subr.mxu0 0.0
        %10105 = vmatpush1.xpose.msra.mxu0 0.0
        %10106 = vmatprep.subr.mxu0 0.0
        %10107 = vmatpush1.xpose.msra.mxu0 0.0
        %10108 = vmatprep.subr.mxu0 0.0
        %10109 = vmatpush1.xpose.msra.mxu0 0.0
        %10110 = vmatprep.subr.mxu0 0.0
        %10111 = vmatpush1.xpose.msra.mxu0 0.0
        %10112 = vmatprep.subr.mxu0 0.0
        %10113 = vmatpush1.xpose.msra.mxu0 0.0
        %10114 = vmatprep.subr.mxu0 0.0
        %10115 = vmatpush1.xpose.msra.mxu0 0.0
        %10116 = vmatprep.subr.mxu0 0.0
        %10117 = vmatpush1.xpose.msra.mxu0 0.0
        %10118 = vmatprep.subr.mxu0 0.0
        %10119 = vmatpush1.xpose.msra.mxu0 0.0
        %10120 = vmatprep.subr.mxu0 0.0
        %10121 = vmatpush1.xpose.msra.mxu0 0.0
        %10122 = vmatprep.subr.mxu0 0.0
        %10123 = vmatpush1.xpose.msra.mxu0 0.0
        %10124 = vmatprep.mubr.f32.mxu0 %v1843
        %10125 = vmatmul.mubr.f32.gmra.mrb[0].mxu0 %v1835
        %v10126 = vpop.f32.mrb[0].mxu0
        %v10127 = vadd.f32 %v10057, %v10126
        %v10128 = vpop.f32.mrb[0].mxu0
        %10129 = vdwg.mxu0
        %10130 = vmatprep.subr.mxu0 %v527
        %10131 = vmatpush1.xpose.msra.mxu0 %v526
        %10132 = vmatprep.subr.mxu0 %v783
        %10133 = vmatpush1.xpose.msra.mxu0 %v782
        %10134 = vmatprep.subr.mxu0 0.0
        %10135 = vmatpush1.xpose.msra.mxu0 0.0
        %10136 = vmatprep.subr.mxu0 0.0
        %10137 = vmatpush1.xpose.msra.mxu0 0.0
        %10138 = vmatprep.subr.mxu0 0.0
        %10139 = vmatpush1.xpose.msra.mxu0 0.0
        %10140 = vmatprep.subr.mxu0 0.0
        %10141 = vmatpush1.xpose.msra.mxu0 0.0
        %10142 = vmatprep.subr.mxu0 0.0
        %10143 = vmatpush1.xpose.msra.mxu0 0.0
        %10144 = vmatprep.subr.mxu0 0.0
        %10145 = vmatpush1.xpose.msra.mxu0 0.0
        %10146 = vmatprep.subr.mxu0 0.0
        %10147 = vmatpush1.xpose.msra.mxu0 0.0
        %10148 = vmatprep.subr.mxu0 0.0
        %10149 = vmatpush1.xpose.msra.mxu0 0.0
        %10150 = vmatprep.subr.mxu0 0.0
        %10151 = vmatpush1.xpose.msra.mxu0 0.0
        %10152 = vmatprep.subr.mxu0 0.0
        %10153 = vmatpush1.xpose.msra.mxu0 0.0
        %10154 = vmatprep.subr.mxu0 0.0
        %10155 = vmatpush1.xpose.msra.mxu0 0.0
        %10156 = vmatprep.subr.mxu0 0.0
        %10157 = vmatpush1.xpose.msra.mxu0 0.0
        %10158 = vmatprep.subr.mxu0 0.0
        %10159 = vmatpush1.xpose.msra.mxu0 0.0
        %10160 = vmatprep.subr.mxu0 0.0
        %10161 = vmatpush1.xpose.msra.mxu0 0.0
        %10162 = vmatprep.subr.mxu0 0.0
        %10163 = vmatpush1.xpose.msra.mxu0 0.0
        %10164 = vmatprep.subr.mxu0 0.0
        %10165 = vmatpush1.xpose.msra.mxu0 0.0
        %10166 = vmatprep.subr.mxu0 0.0
        %10167 = vmatpush1.xpose.msra.mxu0 0.0
        %10168 = vmatprep.subr.mxu0 0.0
        %10169 = vmatpush1.xpose.msra.mxu0 0.0
        %10170 = vmatprep.subr.mxu0 0.0
        %10171 = vmatpush1.xpose.msra.mxu0 0.0
        %10172 = vmatprep.subr.mxu0 0.0
        %10173 = vmatpush1.xpose.msra.mxu0 0.0
        %10174 = vmatprep.subr.mxu0 0.0
        %10175 = vmatpush1.xpose.msra.mxu0 0.0
        %10176 = vmatprep.subr.mxu0 0.0
        %10177 = vmatpush1.xpose.msra.mxu0 0.0
        %10178 = vmatprep.subr.mxu0 0.0
        %10179 = vmatpush1.xpose.msra.mxu0 0.0
        %10180 = vmatprep.subr.mxu0 0.0
        %10181 = vmatpush1.xpose.msra.mxu0 0.0
        %10182 = vmatprep.subr.mxu0 0.0
        %10183 = vmatpush1.xpose.msra.mxu0 0.0
        %10184 = vmatprep.subr.mxu0 0.0
        %10185 = vmatpush1.xpose.msra.mxu0 0.0
        %10186 = vmatprep.subr.mxu0 0.0
        %10187 = vmatpush1.xpose.msra.mxu0 0.0
        %10188 = vmatprep.subr.mxu0 0.0
        %10189 = vmatpush1.xpose.msra.mxu0 0.0
        %10190 = vmatprep.subr.mxu0 0.0
        %10191 = vmatpush1.xpose.msra.mxu0 0.0
        %10192 = vmatprep.subr.mxu0 0.0
        %10193 = vmatpush1.xpose.msra.mxu0 0.0
        %10194 = vmatprep.mubr.f32.mxu0 %v1844
        %10195 = vmatmul.mubr.f32.gmra.mrb[0].mxu0 %v1842
        %v10196 = vpop.f32.mrb[0].mxu0
        %v10197 = vadd.f32 %v10127, %v10196
        %v10198 = vpop.f32.mrb[0].mxu0
        %10199 = vdwg.mxu0
        %10200 = vmatprep.subr.mxu0 %v529
        %10201 = vmatpush1.xpose.msra.mxu0 %v528
        %10202 = vmatprep.subr.mxu0 %v785
        %10203 = vmatpush1.xpose.msra.mxu0 %v784
        %10204 = vmatprep.subr.mxu0 0.0
        %10205 = vmatpush1.xpose.msra.mxu0 0.0
        %10206 = vmatprep.subr.mxu0 0.0
        %10207 = vmatpush1.xpose.msra.mxu0 0.0
        %10208 = vmatprep.subr.mxu0 0.0
        %10209 = vmatpush1.xpose.msra.mxu0 0.0
        %10210 = vmatprep.subr.mxu0 0.0
        %10211 = vmatpush1.xpose.msra.mxu0 0.0
        %10212 = vmatprep.subr.mxu0 0.0
        %10213 = vmatpush1.xpose.msra.mxu0 0.0
        %10214 = vmatprep.subr.mxu0 0.0
        %10215 = vmatpush1.xpose.msra.mxu0 0.0
        %10216 = vmatprep.subr.mxu0 0.0
        %10217 = vmatpush1.xpose.msra.mxu0 0.0
        %10218 = vmatprep.subr.mxu0 0.0
        %10219 = vmatpush1.xpose.msra.mxu0 0.0
        %10220 = vmatprep.subr.mxu0 0.0
        %10221 = vmatpush1.xpose.msra.mxu0 0.0
        %10222 = vmatprep.subr.mxu0 0.0
        %10223 = vmatpush1.xpose.msra.mxu0 0.0
        %10224 = vmatprep.subr.mxu0 0.0
        %10225 = vmatpush1.xpose.msra.mxu0 0.0
        %10226 = vmatprep.subr.mxu0 0.0
        %10227 = vmatpush1.xpose.msra.mxu0 0.0
        %10228 = vmatprep.subr.mxu0 0.0
        %10229 = vmatpush1.xpose.msra.mxu0 0.0
        %10230 = vmatprep.subr.mxu0 0.0
        %10231 = vmatpush1.xpose.msra.mxu0 0.0
        %10232 = vmatprep.subr.mxu0 0.0
        %10233 = vmatpush1.xpose.msra.mxu0 0.0
        %10234 = vmatprep.subr.mxu0 0.0
        %10235 = vmatpush1.xpose.msra.mxu0 0.0
        %10236 = vmatprep.subr.mxu0 0.0
        %10237 = vmatpush1.xpose.msra.mxu0 0.0
        %10238 = vmatprep.subr.mxu0 0.0
        %10239 = vmatpush1.xpose.msra.mxu0 0.0
        %10240 = vmatprep.subr.mxu0 0.0
        %10241 = vmatpush1.xpose.msra.mxu0 0.0
        %10242 = vmatprep.subr.mxu0 0.0
        %10243 = vmatpush1.xpose.msra.mxu0 0.0
        %10244 = vmatprep.subr.mxu0 0.0
        %10245 = vmatpush1.xpose.msra.mxu0 0.0
        %10246 = vmatprep.subr.mxu0 0.0
        %10247 = vmatpush1.xpose.msra.mxu0 0.0
        %10248 = vmatprep.subr.mxu0 0.0
        %10249 = vmatpush1.xpose.msra.mxu0 0.0
        %10250 = vmatprep.subr.mxu0 0.0
        %10251 = vmatpush1.xpose.msra.mxu0 0.0
        %10252 = vmatprep.subr.mxu0 0.0
        %10253 = vmatpush1.xpose.msra.mxu0 0.0
        %10254 = vmatprep.subr.mxu0 0.0
        %10255 = vmatpush1.xpose.msra.mxu0 0.0
        %10256 = vmatprep.subr.mxu0 0.0
        %10257 = vmatpush1.xpose.msra.mxu0 0.0
        %10258 = vmatprep.subr.mxu0 0.0
        %10259 = vmatpush1.xpose.msra.mxu0 0.0
        %10260 = vmatprep.subr.mxu0 0.0
        %10261 = vmatpush1.xpose.msra.mxu0 0.0
        %10262 = vmatprep.subr.mxu0 0.0
        %10263 = vmatpush1.xpose.msra.mxu0 0.0
        %10264 = vmatprep.mubr.f32.mxu0 %v1860
        %10265 = vmatmul.mubr.f32.gmra.mrb[0].mxu0 %v1852
        %v10266 = vpop.f32.mrb[0].mxu0
        %v10267 = vadd.f32 %v10197, %v10266
        %v10268 = vpop.f32.mrb[0].mxu0
        %10269 = vdwg.mxu0
        %10270 = vmatprep.subr.mxu0 %v531
        %10271 = vmatpush1.xpose.msra.mxu0 %v530
        %10272 = vmatprep.subr.mxu0 %v787
        %10273 = vmatpush1.xpose.msra.mxu0 %v786
        %10274 = vmatprep.subr.mxu0 0.0
        %10275 = vmatpush1.xpose.msra.mxu0 0.0
        %10276 = vmatprep.subr.mxu0 0.0
        %10277 = vmatpush1.xpose.msra.mxu0 0.0
        %10278 = vmatprep.subr.mxu0 0.0
        %10279 = vmatpush1.xpose.msra.mxu0 0.0
        %10280 = vmatprep.subr.mxu0 0.0
        %10281 = vmatpush1.xpose.msra.mxu0 0.0
        %10282 = vmatprep.subr.mxu0 0.0
        %10283 = vmatpush1.xpose.msra.mxu0 0.0
        %10284 = vmatprep.subr.mxu0 0.0
        %10285 = vmatpush1.xpose.msra.mxu0 0.0
        %10286 = vmatprep.subr.mxu0 0.0
        %10287 = vmatpush1.xpose.msra.mxu0 0.0
        %10288 = vmatprep.subr.mxu0 0.0
        %10289 = vmatpush1.xpose.msra.mxu0 0.0
        %10290 = vmatprep.subr.mxu0 0.0
        %10291 = vmatpush1.xpose.msra.mxu0 0.0
        %10292 = vmatprep.subr.mxu0 0.0
        %10293 = vmatpush1.xpose.msra.mxu0 0.0
        %10294 = vmatprep.subr.mxu0 0.0
        %10295 = vmatpush1.xpose.msra.mxu0 0.0
        %10296 = vmatprep.subr.mxu0 0.0
        %10297 = vmatpush1.xpose.msra.mxu0 0.0
        %10298 = vmatprep.subr.mxu0 0.0
        %10299 = vmatpush1.xpose.msra.mxu0 0.0
        %10300 = vmatprep.subr.mxu0 0.0
        %10301 = vmatpush1.xpose.msra.mxu0 0.0
        %10302 = vmatprep.subr.mxu0 0.0
        %10303 = vmatpush1.xpose.msra.mxu0 0.0
        %10304 = vmatprep.subr.mxu0 0.0
        %10305 = vmatpush1.xpose.msra.mxu0 0.0
        %10306 = vmatprep.subr.mxu0 0.0
        %10307 = vmatpush1.xpose.msra.mxu0 0.0
        %10308 = vmatprep.subr.mxu0 0.0
        %10309 = vmatpush1.xpose.msra.mxu0 0.0
        %10310 = vmatprep.subr.mxu0 0.0
        %10311 = vmatpush1.xpose.msra.mxu0 0.0
        %10312 = vmatprep.subr.mxu0 0.0
        %10313 = vmatpush1.xpose.msra.mxu0 0.0
        %10314 = vmatprep.subr.mxu0 0.0
        %10315 = vmatpush1.xpose.msra.mxu0 0.0
        %10316 = vmatprep.subr.mxu0 0.0
        %10317 = vmatpush1.xpose.msra.mxu0 0.0
        %10318 = vmatprep.subr.mxu0 0.0
        %10319 = vmatpush1.xpose.msra.mxu0 0.0
        %10320 = vmatprep.subr.mxu0 0.0
        %10321 = vmatpush1.xpose.msra.mxu0 0.0
        %10322 = vmatprep.subr.mxu0 0.0
        %10323 = vmatpush1.xpose.msra.mxu0 0.0
        %10324 = vmatprep.subr.mxu0 0.0
        %10325 = vmatpush1.xpose.msra.mxu0 0.0
        %10326 = vmatprep.subr.mxu0 0.0
        %10327 = vmatpush1.xpose.msra.mxu0 0.0
        %10328 = vmatprep.subr.mxu0 0.0
        %10329 = vmatpush1.xpose.msra.mxu0 0.0
        %10330 = vmatprep.subr.mxu0 0.0
        %10331 = vmatpush1.xpose.msra.mxu0 0.0
        %10332 = vmatprep.subr.mxu0 0.0
        %10333 = vmatpush1.xpose.msra.mxu0 0.0
        %10334 = vmatprep.mubr.f32.mxu0 %v1861
        %10335 = vmatmul.mubr.f32.gmra.mrb[0].mxu0 %v1859
        %v10336 = vpop.f32.mrb[0].mxu0
        %v10337 = vadd.f32 %v10267, %v10336
        %v10338 = vpop.f32.mrb[0].mxu0
        %10339 = vdwg.mxu0
        %10340 = vmatprep.subr.mxu0 %v533
        %10341 = vmatpush1.xpose.msra.mxu0 %v532
        %10342 = vmatprep.subr.mxu0 %v789
        %10343 = vmatpush1.xpose.msra.mxu0 %v788
        %10344 = vmatprep.subr.mxu0 0.0
        %10345 = vmatpush1.xpose.msra.mxu0 0.0
        %10346 = vmatprep.subr.mxu0 0.0
        %10347 = vmatpush1.xpose.msra.mxu0 0.0
        %10348 = vmatprep.subr.mxu0 0.0
        %10349 = vmatpush1.xpose.msra.mxu0 0.0
        %10350 = vmatprep.subr.mxu0 0.0
        %10351 = vmatpush1.xpose.msra.mxu0 0.0
        %10352 = vmatprep.subr.mxu0 0.0
        %10353 = vmatpush1.xpose.msra.mxu0 0.0
        %10354 = vmatprep.subr.mxu0 0.0
        %10355 = vmatpush1.xpose.msra.mxu0 0.0
        %10356 = vmatprep.subr.mxu0 0.0
        %10357 = vmatpush1.xpose.msra.mxu0 0.0
        %10358 = vmatprep.subr.mxu0 0.0
        %10359 = vmatpush1.xpose.msra.mxu0 0.0
        %10360 = vmatprep.subr.mxu0 0.0
        %10361 = vmatpush1.xpose.msra.mxu0 0.0
        %10362 = vmatprep.subr.mxu0 0.0
        %10363 = vmatpush1.xpose.msra.mxu0 0.0
        %10364 = vmatprep.subr.mxu0 0.0
        %10365 = vmatpush1.xpose.msra.mxu0 0.0
        %10366 = vmatprep.subr.mxu0 0.0
        %10367 = vmatpush1.xpose.msra.mxu0 0.0
        %10368 = vmatprep.subr.mxu0 0.0
        %10369 = vmatpush1.xpose.msra.mxu0 0.0
        %10370 = vmatprep.subr.mxu0 0.0
        %10371 = vmatpush1.xpose.msra.mxu0 0.0
        %10372 = vmatprep.subr.mxu0 0.0
        %10373 = vmatpush1.xpose.msra.mxu0 0.0
        %10374 = vmatprep.subr.mxu0 0.0
        %10375 = vmatpush1.xpose.msra.mxu0 0.0
        %10376 = vmatprep.subr.mxu0 0.0
        %10377 = vmatpush1.xpose.msra.mxu0 0.0
        %10378 = vmatprep.subr.mxu0 0.0
        %10379 = vmatpush1.xpose.msra.mxu0 0.0
        %10380 = vmatprep.subr.mxu0 0.0
        %10381 = vmatpush1.xpose.msra.mxu0 0.0
        %10382 = vmatprep.subr.mxu0 0.0
        %10383 = vmatpush1.xpose.msra.mxu0 0.0
        %10384 = vmatprep.subr.mxu0 0.0
        %10385 = vmatpush1.xpose.msra.mxu0 0.0
        %10386 = vmatprep.subr.mxu0 0.0
        %10387 = vmatpush1.xpose.msra.mxu0 0.0
        %10388 = vmatprep.subr.mxu0 0.0
        %10389 = vmatpush1.xpose.msra.mxu0 0.0
        %10390 = vmatprep.subr.mxu0 0.0
        %10391 = vmatpush1.xpose.msra.mxu0 0.0
        %10392 = vmatprep.subr.mxu0 0.0
        %10393 = vmatpush1.xpose.msra.mxu0 0.0
        %10394 = vmatprep.subr.mxu0 0.0
        %10395 = vmatpush1.xpose.msra.mxu0 0.0
        %10396 = vmatprep.subr.mxu0 0.0
        %10397 = vmatpush1.xpose.msra.mxu0 0.0
        %10398 = vmatprep.subr.mxu0 0.0
        %10399 = vmatpush1.xpose.msra.mxu0 0.0
        %10400 = vmatprep.subr.mxu0 0.0
        %10401 = vmatpush1.xpose.msra.mxu0 0.0
        %10402 = vmatprep.subr.mxu0 0.0
        %10403 = vmatpush1.xpose.msra.mxu0 0.0
        %10404 = vmatprep.mubr.f32.mxu0 %v1877
        %10405 = vmatmul.mubr.f32.gmra.mrb[0].mxu0 %v1869
        %v10406 = vpop.f32.mrb[0].mxu0
        %v10407 = vadd.f32 %v10337, %v10406
        %v10408 = vpop.f32.mrb[0].mxu0
        %10409 = vdwg.mxu0
        %10410 = vmatprep.subr.mxu0 %v535
        %10411 = vmatpush1.xpose.msra.mxu0 %v534
        %10412 = vmatprep.subr.mxu0 %v791
        %10413 = vmatpush1.xpose.msra.mxu0 %v790
        %10414 = vmatprep.subr.mxu0 0.0
        %10415 = vmatpush1.xpose.msra.mxu0 0.0
        %10416 = vmatprep.subr.mxu0 0.0
        %10417 = vmatpush1.xpose.msra.mxu0 0.0
        %10418 = vmatprep.subr.mxu0 0.0
        %10419 = vmatpush1.xpose.msra.mxu0 0.0
        %10420 = vmatprep.subr.mxu0 0.0
        %10421 = vmatpush1.xpose.msra.mxu0 0.0
        %10422 = vmatprep.subr.mxu0 0.0
        %10423 = vmatpush1.xpose.msra.mxu0 0.0
        %10424 = vmatprep.subr.mxu0 0.0
        %10425 = vmatpush1.xpose.msra.mxu0 0.0
        %10426 = vmatprep.subr.mxu0 0.0
        %10427 = vmatpush1.xpose.msra.mxu0 0.0
        %10428 = vmatprep.subr.mxu0 0.0
        %10429 = vmatpush1.xpose.msra.mxu0 0.0
        %10430 = vmatprep.subr.mxu0 0.0
        %10431 = vmatpush1.xpose.msra.mxu0 0.0
        %10432 = vmatprep.subr.mxu0 0.0
        %10433 = vmatpush1.xpose.msra.mxu0 0.0
        %10434 = vmatprep.subr.mxu0 0.0
        %10435 = vmatpush1.xpose.msra.mxu0 0.0
        %10436 = vmatprep.subr.mxu0 0.0
        %10437 = vmatpush1.xpose.msra.mxu0 0.0
        %10438 = vmatprep.subr.mxu0 0.0
        %10439 = vmatpush1.xpose.msra.mxu0 0.0
        %10440 = vmatprep.subr.mxu0 0.0
        %10441 = vmatpush1.xpose.msra.mxu0 0.0
        %10442 = vmatprep.subr.mxu0 0.0
        %10443 = vmatpush1.xpose.msra.mxu0 0.0
        %10444 = vmatprep.subr.mxu0 0.0
        %10445 = vmatpush1.xpose.msra.mxu0 0.0
        %10446 = vmatprep.subr.mxu0 0.0
        %10447 = vmatpush1.xpose.msra.mxu0 0.0
        %10448 = vmatprep.subr.mxu0 0.0
        %10449 = vmatpush1.xpose.msra.mxu0 0.0
        %10450 = vmatprep.subr.mxu0 0.0
        %10451 = vmatpush1.xpose.msra.mxu0 0.0
        %10452 = vmatprep.subr.mxu0 0.0
        %10453 = vmatpush1.xpose.msra.mxu0 0.0
        %10454 = vmatprep.subr.mxu0 0.0
        %10455 = vmatpush1.xpose.msra.mxu0 0.0
        %10456 = vmatprep.subr.mxu0 0.0
        %10457 = vmatpush1.xpose.msra.mxu0 0.0
        %10458 = vmatprep.subr.mxu0 0.0
        %10459 = vmatpush1.xpose.msra.mxu0 0.0
        %10460 = vmatprep.subr.mxu0 0.0
        %10461 = vmatpush1.xpose.msra.mxu0 0.0
        %10462 = vmatprep.subr.mxu0 0.0
        %10463 = vmatpush1.xpose.msra.mxu0 0.0
        %10464 = vmatprep.subr.mxu0 0.0
        %10465 = vmatpush1.xpose.msra.mxu0 0.0
        %10466 = vmatprep.subr.mxu0 0.0
        %10467 = vmatpush1.xpose.msra.mxu0 0.0
        %10468 = vmatprep.subr.mxu0 0.0
        %10469 = vmatpush1.xpose.msra.mxu0 0.0
        %10470 = vmatprep.subr.mxu0 0.0
        %10471 = vmatpush1.xpose.msra.mxu0 0.0
        %10472 = vmatprep.subr.mxu0 0.0
        %10473 = vmatpush1.xpose.msra.mxu0 0.0
        %10474 = vmatprep.mubr.f32.mxu0 %v1878
        %10475 = vmatmul.mubr.f32.gmra.mrb[0].mxu0 %v1876
        %v10476 = vpop.f32.mrb[0].mxu0
        %v10477 = vadd.f32 %v10407, %v10476
        %v10478 = vpop.f32.mrb[0].mxu0
        %10479 = vdwg.mxu0
        %10480 = vmatprep.subr.mxu0 %v537
        %10481 = vmatpush1.xpose.msra.mxu0 %v536
        %10482 = vmatprep.subr.mxu0 %v793
        %10483 = vmatpush1.xpose.msra.mxu0 %v792
        %10484 = vmatprep.subr.mxu0 0.0
        %10485 = vmatpush1.xpose.msra.mxu0 0.0
        %10486 = vmatprep.subr.mxu0 0.0
        %10487 = vmatpush1.xpose.msra.mxu0 0.0
        %10488 = vmatprep.subr.mxu0 0.0
        %10489 = vmatpush1.xpose.msra.mxu0 0.0
        %10490 = vmatprep.subr.mxu0 0.0
        %10491 = vmatpush1.xpose.msra.mxu0 0.0
        %10492 = vmatprep.subr.mxu0 0.0
        %10493 = vmatpush1.xpose.msra.mxu0 0.0
        %10494 = vmatprep.subr.mxu0 0.0
        %10495 = vmatpush1.xpose.msra.mxu0 0.0
        %10496 = vmatprep.subr.mxu0 0.0
        %10497 = vmatpush1.xpose.msra.mxu0 0.0
        %10498 = vmatprep.subr.mxu0 0.0
        %10499 = vmatpush1.xpose.msra.mxu0 0.0
        %10500 = vmatprep.subr.mxu0 0.0
        %10501 = vmatpush1.xpose.msra.mxu0 0.0
        %10502 = vmatprep.subr.mxu0 0.0
        %10503 = vmatpush1.xpose.msra.mxu0 0.0
        %10504 = vmatprep.subr.mxu0 0.0
        %10505 = vmatpush1.xpose.msra.mxu0 0.0
        %10506 = vmatprep.subr.mxu0 0.0
        %10507 = vmatpush1.xpose.msra.mxu0 0.0
        %10508 = vmatprep.subr.mxu0 0.0
        %10509 = vmatpush1.xpose.msra.mxu0 0.0
        %10510 = vmatprep.subr.mxu0 0.0
        %10511 = vmatpush1.xpose.msra.mxu0 0.0
        %10512 = vmatprep.subr.mxu0 0.0
        %10513 = vmatpush1.xpose.msra.mxu0 0.0
        %10514 = vmatprep.subr.mxu0 0.0
        %10515 = vmatpush1.xpose.msra.mxu0 0.0
        %10516 = vmatprep.subr.mxu0 0.0
        %10517 = vmatpush1.xpose.msra.mxu0 0.0
        %10518 = vmatprep.subr.mxu0 0.0
        %10519 = vmatpush1.xpose.msra.mxu0 0.0
        %10520 = vmatprep.subr.mxu0 0.0
        %10521 = vmatpush1.xpose.msra.mxu0 0.0
        %10522 = vmatprep.subr.mxu0 0.0
        %10523 = vmatpush1.xpose.msra.mxu0 0.0
        %10524 = vmatprep.subr.mxu0 0.0
        %10525 = vmatpush1.xpose.msra.mxu0 0.0
        %10526 = vmatprep.subr.mxu0 0.0
        %10527 = vmatpush1.xpose.msra.mxu0 0.0
        %10528 = vmatprep.subr.mxu0 0.0
        %10529 = vmatpush1.xpose.msra.mxu0 0.0
        %10530 = vmatprep.subr.mxu0 0.0
        %10531 = vmatpush1.xpose.msra.mxu0 0.0
        %10532 = vmatprep.subr.mxu0 0.0
        %10533 = vmatpush1.xpose.msra.mxu0 0.0
        %10534 = vmatprep.subr.mxu0 0.0
        %10535 = vmatpush1.xpose.msra.mxu0 0.0
        %10536 = vmatprep.subr.mxu0 0.0
        %10537 = vmatpush1.xpose.msra.mxu0 0.0
        %10538 = vmatprep.subr.mxu0 0.0
        %10539 = vmatpush1.xpose.msra.mxu0 0.0
        %10540 = vmatprep.subr.mxu0 0.0
        %10541 = vmatpush1.xpose.msra.mxu0 0.0
        %10542 = vmatprep.subr.mxu0 0.0
        %10543 = vmatpush1.xpose.msra.mxu0 0.0
        %10544 = vmatprep.mubr.f32.mxu0 %v1894
        %10545 = vmatmul.mubr.f32.gmra.mrb[0].mxu0 %v1886
        %v10546 = vpop.f32.mrb[0].mxu0
        %v10547 = vadd.f32 %v10477, %v10546
        %v10548 = vpop.f32.mrb[0].mxu0
        %10549 = vdwg.mxu0
        %10550 = vmatprep.subr.mxu0 %v539
        %10551 = vmatpush1.xpose.msra.mxu0 %v538
        %10552 = vmatprep.subr.mxu0 %v795
        %10553 = vmatpush1.xpose.msra.mxu0 %v794
        %10554 = vmatprep.subr.mxu0 0.0
        %10555 = vmatpush1.xpose.msra.mxu0 0.0
        %10556 = vmatprep.subr.mxu0 0.0
        %10557 = vmatpush1.xpose.msra.mxu0 0.0
        %10558 = vmatprep.subr.mxu0 0.0
        %10559 = vmatpush1.xpose.msra.mxu0 0.0
        %10560 = vmatprep.subr.mxu0 0.0
        %10561 = vmatpush1.xpose.msra.mxu0 0.0
        %10562 = vmatprep.subr.mxu0 0.0
        %10563 = vmatpush1.xpose.msra.mxu0 0.0
        %10564 = vmatprep.subr.mxu0 0.0
        %10565 = vmatpush1.xpose.msra.mxu0 0.0
        %10566 = vmatprep.subr.mxu0 0.0
        %10567 = vmatpush1.xpose.msra.mxu0 0.0
        %10568 = vmatprep.subr.mxu0 0.0
        %10569 = vmatpush1.xpose.msra.mxu0 0.0
        %10570 = vmatprep.subr.mxu0 0.0
        %10571 = vmatpush1.xpose.msra.mxu0 0.0
        %10572 = vmatprep.subr.mxu0 0.0
        %10573 = vmatpush1.xpose.msra.mxu0 0.0
        %10574 = vmatprep.subr.mxu0 0.0
        %10575 = vmatpush1.xpose.msra.mxu0 0.0
        %10576 = vmatprep.subr.mxu0 0.0
        %10577 = vmatpush1.xpose.msra.mxu0 0.0
        %10578 = vmatprep.subr.mxu0 0.0
        %10579 = vmatpush1.xpose.msra.mxu0 0.0
        %10580 = vmatprep.subr.mxu0 0.0
        %10581 = vmatpush1.xpose.msra.mxu0 0.0
        %10582 = vmatprep.subr.mxu0 0.0
        %10583 = vmatpush1.xpose.msra.mxu0 0.0
        %10584 = vmatprep.subr.mxu0 0.0
        %10585 = vmatpush1.xpose.msra.mxu0 0.0
        %10586 = vmatprep.subr.mxu0 0.0
        %10587 = vmatpush1.xpose.msra.mxu0 0.0
        %10588 = vmatprep.subr.mxu0 0.0
        %10589 = vmatpush1.xpose.msra.mxu0 0.0
        %10590 = vmatprep.subr.mxu0 0.0
        %10591 = vmatpush1.xpose.msra.mxu0 0.0
        %10592 = vmatprep.subr.mxu0 0.0
        %10593 = vmatpush1.xpose.msra.mxu0 0.0
        %10594 = vmatprep.subr.mxu0 0.0
        %10595 = vmatpush1.xpose.msra.mxu0 0.0
        %10596 = vmatprep.subr.mxu0 0.0
        %10597 = vmatpush1.xpose.msra.mxu0 0.0
        %10598 = vmatprep.subr.mxu0 0.0
        %10599 = vmatpush1.xpose.msra.mxu0 0.0
        %10600 = vmatprep.subr.mxu0 0.0
        %10601 = vmatpush1.xpose.msra.mxu0 0.0
        %10602 = vmatprep.subr.mxu0 0.0
        %10603 = vmatpush1.xpose.msra.mxu0 0.0
        %10604 = vmatprep.subr.mxu0 0.0
        %10605 = vmatpush1.xpose.msra.mxu0 0.0
        %10606 = vmatprep.subr.mxu0 0.0
        %10607 = vmatpush1.xpose.msra.mxu0 0.0
        %10608 = vmatprep.subr.mxu0 0.0
        %10609 = vmatpush1.xpose.msra.mxu0 0.0
        %10610 = vmatprep.subr.mxu0 0.0
        %10611 = vmatpush1.xpose.msra.mxu0 0.0
        %10612 = vmatprep.subr.mxu0 0.0
        %10613 = vmatpush1.xpose.msra.mxu0 0.0
        %10614 = vmatprep.mubr.f32.mxu0 %v1895
        %10615 = vmatmul.mubr.f32.gmra.mrb[0].mxu0 %v1893
        %v10616 = vpop.f32.mrb[0].mxu0
        %v10617 = vadd.f32 %v10547, %v10616
        %v10618 = vpop.f32.mrb[0].mxu0
        %10619 = vdwg.mxu0
        %10620 = vmatprep.subr.mxu0 %v541
        %10621 = vmatpush1.xpose.msra.mxu0 %v540
        %10622 = vmatprep.subr.mxu0 %v797
        %10623 = vmatpush1.xpose.msra.mxu0 %v796
        %10624 = vmatprep.subr.mxu0 0.0
        %10625 = vmatpush1.xpose.msra.mxu0 0.0
        %10626 = vmatprep.subr.mxu0 0.0
        %10627 = vmatpush1.xpose.msra.mxu0 0.0
        %10628 = vmatprep.subr.mxu0 0.0
        %10629 = vmatpush1.xpose.msra.mxu0 0.0
        %10630 = vmatprep.subr.mxu0 0.0
        %10631 = vmatpush1.xpose.msra.mxu0 0.0
        %10632 = vmatprep.subr.mxu0 0.0
        %10633 = vmatpush1.xpose.msra.mxu0 0.0
        %10634 = vmatprep.subr.mxu0 0.0
        %10635 = vmatpush1.xpose.msra.mxu0 0.0
        %10636 = vmatprep.subr.mxu0 0.0
        %10637 = vmatpush1.xpose.msra.mxu0 0.0
        %10638 = vmatprep.subr.mxu0 0.0
        %10639 = vmatpush1.xpose.msra.mxu0 0.0
        %10640 = vmatprep.subr.mxu0 0.0
        %10641 = vmatpush1.xpose.msra.mxu0 0.0
        %10642 = vmatprep.subr.mxu0 0.0
        %10643 = vmatpush1.xpose.msra.mxu0 0.0
        %10644 = vmatprep.subr.mxu0 0.0
        %10645 = vmatpush1.xpose.msra.mxu0 0.0
        %10646 = vmatprep.subr.mxu0 0.0
        %10647 = vmatpush1.xpose.msra.mxu0 0.0
        %10648 = vmatprep.subr.mxu0 0.0
        %10649 = vmatpush1.xpose.msra.mxu0 0.0
        %10650 = vmatprep.subr.mxu0 0.0
        %10651 = vmatpush1.xpose.msra.mxu0 0.0
        %10652 = vmatprep.subr.mxu0 0.0
        %10653 = vmatpush1.xpose.msra.mxu0 0.0
        %10654 = vmatprep.subr.mxu0 0.0
        %10655 = vmatpush1.xpose.msra.mxu0 0.0
        %10656 = vmatprep.subr.mxu0 0.0
        %10657 = vmatpush1.xpose.msra.mxu0 0.0
        %10658 = vmatprep.subr.mxu0 0.0
        %10659 = vmatpush1.xpose.msra.mxu0 0.0
        %10660 = vmatprep.subr.mxu0 0.0
        %10661 = vmatpush1.xpose.msra.mxu0 0.0
        %10662 = vmatprep.subr.mxu0 0.0
        %10663 = vmatpush1.xpose.msra.mxu0 0.0
        %10664 = vmatprep.subr.mxu0 0.0
        %10665 = vmatpush1.xpose.msra.mxu0 0.0
        %10666 = vmatprep.subr.mxu0 0.0
        %10667 = vmatpush1.xpose.msra.mxu0 0.0
        %10668 = vmatprep.subr.mxu0 0.0
        %10669 = vmatpush1.xpose.msra.mxu0 0.0
        %10670 = vmatprep.subr.mxu0 0.0
        %10671 = vmatpush1.xpose.msra.mxu0 0.0
        %10672 = vmatprep.subr.mxu0 0.0
        %10673 = vmatpush1.xpose.msra.mxu0 0.0
        %10674 = vmatprep.subr.mxu0 0.0
        %10675 = vmatpush1.xpose.msra.mxu0 0.0
        %10676 = vmatprep.subr.mxu0 0.0
        %10677 = vmatpush1.xpose.msra.mxu0 0.0
        %10678 = vmatprep.subr.mxu0 0.0
        %10679 = vmatpush1.xpose.msra.mxu0 0.0
        %10680 = vmatprep.subr.mxu0 0.0
        %10681 = vmatpush1.xpose.msra.mxu0 0.0
        %10682 = vmatprep.subr.mxu0 0.0
        %10683 = vmatpush1.xpose.msra.mxu0 0.0
        %10684 = vmatprep.mubr.f32.mxu0 %v1911
        %10685 = vmatmul.mubr.f32.gmra.mrb[0].mxu0 %v1903
        %v10686 = vpop.f32.mrb[0].mxu0
        %v10687 = vadd.f32 %v10617, %v10686
        %v10688 = vpop.f32.mrb[0].mxu0
        %10689 = vdwg.mxu0
        %10690 = vmatprep.subr.mxu0 %v543
        %10691 = vmatpush1.xpose.msra.mxu0 %v542
        %10692 = vmatprep.subr.mxu0 %v799
        %10693 = vmatpush1.xpose.msra.mxu0 %v798
        %10694 = vmatprep.subr.mxu0 0.0
        %10695 = vmatpush1.xpose.msra.mxu0 0.0
        %10696 = vmatprep.subr.mxu0 0.0
        %10697 = vmatpush1.xpose.msra.mxu0 0.0
        %10698 = vmatprep.subr.mxu0 0.0
        %10699 = vmatpush1.xpose.msra.mxu0 0.0
        %10700 = vmatprep.subr.mxu0 0.0
        %10701 = vmatpush1.xpose.msra.mxu0 0.0
        %10702 = vmatprep.subr.mxu0 0.0
        %10703 = vmatpush1.xpose.msra.mxu0 0.0
        %10704 = vmatprep.subr.mxu0 0.0
        %10705 = vmatpush1.xpose.msra.mxu0 0.0
        %10706 = vmatprep.subr.mxu0 0.0
        %10707 = vmatpush1.xpose.msra.mxu0 0.0
        %10708 = vmatprep.subr.mxu0 0.0
        %10709 = vmatpush1.xpose.msra.mxu0 0.0
        %10710 = vmatprep.subr.mxu0 0.0
        %10711 = vmatpush1.xpose.msra.mxu0 0.0
        %10712 = vmatprep.subr.mxu0 0.0
        %10713 = vmatpush1.xpose.msra.mxu0 0.0
        %10714 = vmatprep.subr.mxu0 0.0
        %10715 = vmatpush1.xpose.msra.mxu0 0.0
        %10716 = vmatprep.subr.mxu0 0.0
        %10717 = vmatpush1.xpose.msra.mxu0 0.0
        %10718 = vmatprep.subr.mxu0 0.0
        %10719 = vmatpush1.xpose.msra.mxu0 0.0
        %10720 = vmatprep.subr.mxu0 0.0
        %10721 = vmatpush1.xpose.msra.mxu0 0.0
        %10722 = vmatprep.subr.mxu0 0.0
        %10723 = vmatpush1.xpose.msra.mxu0 0.0
        %10724 = vmatprep.subr.mxu0 0.0
        %10725 = vmatpush1.xpose.msra.mxu0 0.0
        %10726 = vmatprep.subr.mxu0 0.0
        %10727 = vmatpush1.xpose.msra.mxu0 0.0
        %10728 = vmatprep.subr.mxu0 0.0
        %10729 = vmatpush1.xpose.msra.mxu0 0.0
        %10730 = vmatprep.subr.mxu0 0.0
        %10731 = vmatpush1.xpose.msra.mxu0 0.0
        %10732 = vmatprep.subr.mxu0 0.0
        %10733 = vmatpush1.xpose.msra.mxu0 0.0
        %10734 = vmatprep.subr.mxu0 0.0
        %10735 = vmatpush1.xpose.msra.mxu0 0.0
        %10736 = vmatprep.subr.mxu0 0.0
        %10737 = vmatpush1.xpose.msra.mxu0 0.0
        %10738 = vmatprep.subr.mxu0 0.0
        %10739 = vmatpush1.xpose.msra.mxu0 0.0
        %10740 = vmatprep.subr.mxu0 0.0
        %10741 = vmatpush1.xpose.msra.mxu0 0.0
        %10742 = vmatprep.subr.mxu0 0.0
        %10743 = vmatpush1.xpose.msra.mxu0 0.0
        %10744 = vmatprep.subr.mxu0 0.0
        %10745 = vmatpush1.xpose.msra.mxu0 0.0
        %10746 = vmatprep.subr.mxu0 0.0
        %10747 = vmatpush1.xpose.msra.mxu0 0.0
        %10748 = vmatprep.subr.mxu0 0.0
        %10749 = vmatpush1.xpose.msra.mxu0 0.0
        %10750 = vmatprep.subr.mxu0 0.0
        %10751 = vmatpush1.xpose.msra.mxu0 0.0
        %10752 = vmatprep.subr.mxu0 0.0
        %10753 = vmatpush1.xpose.msra.mxu0 0.0
        %10754 = vmatprep.mubr.f32.mxu0 %v1912
        %10755 = vmatmul.mubr.f32.gmra.mrb[0].mxu0 %v1910
        %v10756 = vpop.f32.mrb[0].mxu0
        %v10757 = vadd.f32 %v10687, %v10756
        %v10758 = vpop.f32.mrb[0].mxu0
        %10759 = vdwg.mxu0
        %10760 = vmatprep.subr.mxu0 %v545
        %10761 = vmatpush1.xpose.msra.mxu0 %v544
        %10762 = vmatprep.subr.mxu0 %v801
        %10763 = vmatpush1.xpose.msra.mxu0 %v800
        %10764 = vmatprep.subr.mxu0 0.0
        %10765 = vmatpush1.xpose.msra.mxu0 0.0
        %10766 = vmatprep.subr.mxu0 0.0
        %10767 = vmatpush1.xpose.msra.mxu0 0.0
        %10768 = vmatprep.subr.mxu0 0.0
        %10769 = vmatpush1.xpose.msra.mxu0 0.0
        %10770 = vmatprep.subr.mxu0 0.0
        %10771 = vmatpush1.xpose.msra.mxu0 0.0
        %10772 = vmatprep.subr.mxu0 0.0
        %10773 = vmatpush1.xpose.msra.mxu0 0.0
        %10774 = vmatprep.subr.mxu0 0.0
        %10775 = vmatpush1.xpose.msra.mxu0 0.0
        %10776 = vmatprep.subr.mxu0 0.0
        %10777 = vmatpush1.xpose.msra.mxu0 0.0
        %10778 = vmatprep.subr.mxu0 0.0
        %10779 = vmatpush1.xpose.msra.mxu0 0.0
        %10780 = vmatprep.subr.mxu0 0.0
        %10781 = vmatpush1.xpose.msra.mxu0 0.0
        %10782 = vmatprep.subr.mxu0 0.0
        %10783 = vmatpush1.xpose.msra.mxu0 0.0
        %10784 = vmatprep.subr.mxu0 0.0
        %10785 = vmatpush1.xpose.msra.mxu0 0.0
        %10786 = vmatprep.subr.mxu0 0.0
        %10787 = vmatpush1.xpose.msra.mxu0 0.0
        %10788 = vmatprep.subr.mxu0 0.0
        %10789 = vmatpush1.xpose.msra.mxu0 0.0
        %10790 = vmatprep.subr.mxu0 0.0
        %10791 = vmatpush1.xpose.msra.mxu0 0.0
        %10792 = vmatprep.subr.mxu0 0.0
        %10793 = vmatpush1.xpose.msra.mxu0 0.0
        %10794 = vmatprep.subr.mxu0 0.0
        %10795 = vmatpush1.xpose.msra.mxu0 0.0
        %10796 = vmatprep.subr.mxu0 0.0
        %10797 = vmatpush1.xpose.msra.mxu0 0.0
        %10798 = vmatprep.subr.mxu0 0.0
        %10799 = vmatpush1.xpose.msra.mxu0 0.0
        %10800 = vmatprep.subr.mxu0 0.0
        %10801 = vmatpush1.xpose.msra.mxu0 0.0
        %10802 = vmatprep.subr.mxu0 0.0
        %10803 = vmatpush1.xpose.msra.mxu0 0.0
        %10804 = vmatprep.subr.mxu0 0.0
        %10805 = vmatpush1.xpose.msra.mxu0 0.0
        %10806 = vmatprep.subr.mxu0 0.0
        %10807 = vmatpush1.xpose.msra.mxu0 0.0
        %10808 = vmatprep.subr.mxu0 0.0
        %10809 = vmatpush1.xpose.msra.mxu0 0.0
        %10810 = vmatprep.subr.mxu0 0.0
        %10811 = vmatpush1.xpose.msra.mxu0 0.0
        %10812 = vmatprep.subr.mxu0 0.0
        %10813 = vmatpush1.xpose.msra.mxu0 0.0
        %10814 = vmatprep.subr.mxu0 0.0
        %10815 = vmatpush1.xpose.msra.mxu0 0.0
        %10816 = vmatprep.subr.mxu0 0.0
        %10817 = vmatpush1.xpose.msra.mxu0 0.0
        %10818 = vmatprep.subr.mxu0 0.0
        %10819 = vmatpush1.xpose.msra.mxu0 0.0
        %10820 = vmatprep.subr.mxu0 0.0
        %10821 = vmatpush1.xpose.msra.mxu0 0.0
        %10822 = vmatprep.subr.mxu0 0.0
        %10823 = vmatpush1.xpose.msra.mxu0 0.0
        %10824 = vmatprep.mubr.f32.mxu0 %v1928
        %10825 = vmatmul.mubr.f32.gmra.mrb[0].mxu0 %v1920
        %v10826 = vpop.f32.mrb[0].mxu0
        %v10827 = vadd.f32 %v10757, %v10826
        %v10828 = vpop.f32.mrb[0].mxu0
        %10829 = vdwg.mxu0
        %10830 = vmatprep.subr.mxu0 %v547
        %10831 = vmatpush1.xpose.msra.mxu0 %v546
        %10832 = vmatprep.subr.mxu0 %v803
        %10833 = vmatpush1.xpose.msra.mxu0 %v802
        %10834 = vmatprep.subr.mxu0 0.0
        %10835 = vmatpush1.xpose.msra.mxu0 0.0
        %10836 = vmatprep.subr.mxu0 0.0
        %10837 = vmatpush1.xpose.msra.mxu0 0.0
        %10838 = vmatprep.subr.mxu0 0.0
        %10839 = vmatpush1.xpose.msra.mxu0 0.0
        %10840 = vmatprep.subr.mxu0 0.0
        %10841 = vmatpush1.xpose.msra.mxu0 0.0
        %10842 = vmatprep.subr.mxu0 0.0
        %10843 = vmatpush1.xpose.msra.mxu0 0.0
        %10844 = vmatprep.subr.mxu0 0.0
        %10845 = vmatpush1.xpose.msra.mxu0 0.0
        %10846 = vmatprep.subr.mxu0 0.0
        %10847 = vmatpush1.xpose.msra.mxu0 0.0
        %10848 = vmatprep.subr.mxu0 0.0
        %10849 = vmatpush1.xpose.msra.mxu0 0.0
        %10850 = vmatprep.subr.mxu0 0.0
        %10851 = vmatpush1.xpose.msra.mxu0 0.0
        %10852 = vmatprep.subr.mxu0 0.0
        %10853 = vmatpush1.xpose.msra.mxu0 0.0
        %10854 = vmatprep.subr.mxu0 0.0
        %10855 = vmatpush1.xpose.msra.mxu0 0.0
        %10856 = vmatprep.subr.mxu0 0.0
        %10857 = vmatpush1.xpose.msra.mxu0 0.0
        %10858 = vmatprep.subr.mxu0 0.0
        %10859 = vmatpush1.xpose.msra.mxu0 0.0
        %10860 = vmatprep.subr.mxu0 0.0
        %10861 = vmatpush1.xpose.msra.mxu0 0.0
        %10862 = vmatprep.subr.mxu0 0.0
        %10863 = vmatpush1.xpose.msra.mxu0 0.0
        %10864 = vmatprep.subr.mxu0 0.0
        %10865 = vmatpush1.xpose.msra.mxu0 0.0
        %10866 = vmatprep.subr.mxu0 0.0
        %10867 = vmatpush1.xpose.msra.mxu0 0.0
        %10868 = vmatprep.subr.mxu0 0.0
        %10869 = vmatpush1.xpose.msra.mxu0 0.0
        %10870 = vmatprep.subr.mxu0 0.0
        %10871 = vmatpush1.xpose.msra.mxu0 0.0
        %10872 = vmatprep.subr.mxu0 0.0
        %10873 = vmatpush1.xpose.msra.mxu0 0.0
        %10874 = vmatprep.subr.mxu0 0.0
        %10875 = vmatpush1.xpose.msra.mxu0 0.0
        %10876 = vmatprep.subr.mxu0 0.0
        %10877 = vmatpush1.xpose.msra.mxu0 0.0
        %10878 = vmatprep.subr.mxu0 0.0
        %10879 = vmatpush1.xpose.msra.mxu0 0.0
        %10880 = vmatprep.subr.mxu0 0.0
        %10881 = vmatpush1.xpose.msra.mxu0 0.0
        %10882 = vmatprep.subr.mxu0 0.0
        %10883 = vmatpush1.xpose.msra.mxu0 0.0
        %10884 = vmatprep.subr.mxu0 0.0
        %10885 = vmatpush1.xpose.msra.mxu0 0.0
        %10886 = vmatprep.subr.mxu0 0.0
        %10887 = vmatpush1.xpose.msra.mxu0 0.0
        %10888 = vmatprep.subr.mxu0 0.0
        %10889 = vmatpush1.xpose.msra.mxu0 0.0
        %10890 = vmatprep.subr.mxu0 0.0
        %10891 = vmatpush1.xpose.msra.mxu0 0.0
        %10892 = vmatprep.subr.mxu0 0.0
        %10893 = vmatpush1.xpose.msra.mxu0 0.0
        %10894 = vmatprep.mubr.f32.mxu0 %v1929
        %10895 = vmatmul.mubr.f32.gmra.mrb[0].mxu0 %v1927
        %v10896 = vpop.f32.mrb[0].mxu0
        %v10897 = vadd.f32 %v10827, %v10896
        %v10898 = vpop.f32.mrb[0].mxu0
        %10899 = vdwg.mxu0
        %10900 = vmatprep.subr.mxu0 %v549
        %10901 = vmatpush1.xpose.msra.mxu0 %v548
        %10902 = vmatprep.subr.mxu0 %v805
        %10903 = vmatpush1.xpose.msra.mxu0 %v804
        %10904 = vmatprep.subr.mxu0 0.0
        %10905 = vmatpush1.xpose.msra.mxu0 0.0
        %10906 = vmatprep.subr.mxu0 0.0
        %10907 = vmatpush1.xpose.msra.mxu0 0.0
        %10908 = vmatprep.subr.mxu0 0.0
        %10909 = vmatpush1.xpose.msra.mxu0 0.0
        %10910 = vmatprep.subr.mxu0 0.0
        %10911 = vmatpush1.xpose.msra.mxu0 0.0
        %10912 = vmatprep.subr.mxu0 0.0
        %10913 = vmatpush1.xpose.msra.mxu0 0.0
        %10914 = vmatprep.subr.mxu0 0.0
        %10915 = vmatpush1.xpose.msra.mxu0 0.0
        %10916 = vmatprep.subr.mxu0 0.0
        %10917 = vmatpush1.xpose.msra.mxu0 0.0
        %10918 = vmatprep.subr.mxu0 0.0
        %10919 = vmatpush1.xpose.msra.mxu0 0.0
        %10920 = vmatprep.subr.mxu0 0.0
        %10921 = vmatpush1.xpose.msra.mxu0 0.0
        %10922 = vmatprep.subr.mxu0 0.0
        %10923 = vmatpush1.xpose.msra.mxu0 0.0
        %10924 = vmatprep.subr.mxu0 0.0
        %10925 = vmatpush1.xpose.msra.mxu0 0.0
        %10926 = vmatprep.subr.mxu0 0.0
        %10927 = vmatpush1.xpose.msra.mxu0 0.0
        %10928 = vmatprep.subr.mxu0 0.0
        %10929 = vmatpush1.xpose.msra.mxu0 0.0
        %10930 = vmatprep.subr.mxu0 0.0
        %10931 = vmatpush1.xpose.msra.mxu0 0.0
        %10932 = vmatprep.subr.mxu0 0.0
        %10933 = vmatpush1.xpose.msra.mxu0 0.0
        %10934 = vmatprep.subr.mxu0 0.0
        %10935 = vmatpush1.xpose.msra.mxu0 0.0
        %10936 = vmatprep.subr.mxu0 0.0
        %10937 = vmatpush1.xpose.msra.mxu0 0.0
        %10938 = vmatprep.subr.mxu0 0.0
        %10939 = vmatpush1.xpose.msra.mxu0 0.0
        %10940 = vmatprep.subr.mxu0 0.0
        %10941 = vmatpush1.xpose.msra.mxu0 0.0
        %10942 = vmatprep.subr.mxu0 0.0
        %10943 = vmatpush1.xpose.msra.mxu0 0.0
        %10944 = vmatprep.subr.mxu0 0.0
        %10945 = vmatpush1.xpose.msra.mxu0 0.0
        %10946 = vmatprep.subr.mxu0 0.0
        %10947 = vmatpush1.xpose.msra.mxu0 0.0
        %10948 = vmatprep.subr.mxu0 0.0
        %10949 = vmatpush1.xpose.msra.mxu0 0.0
        %10950 = vmatprep.subr.mxu0 0.0
        %10951 = vmatpush1.xpose.msra.mxu0 0.0
        %10952 = vmatprep.subr.mxu0 0.0
        %10953 = vmatpush1.xpose.msra.mxu0 0.0
        %10954 = vmatprep.subr.mxu0 0.0
        %10955 = vmatpush1.xpose.msra.mxu0 0.0
        %10956 = vmatprep.subr.mxu0 0.0
        %10957 = vmatpush1.xpose.msra.mxu0 0.0
        %10958 = vmatprep.subr.mxu0 0.0
        %10959 = vmatpush1.xpose.msra.mxu0 0.0
        %10960 = vmatprep.subr.mxu0 0.0
        %10961 = vmatpush1.xpose.msra.mxu0 0.0
        %10962 = vmatprep.subr.mxu0 0.0
        %10963 = vmatpush1.xpose.msra.mxu0 0.0
        %10964 = vmatprep.mubr.f32.mxu0 %v1945
        %10965 = vmatmul.mubr.f32.gmra.mrb[0].mxu0 %v1937
        %v10966 = vpop.f32.mrb[0].mxu0
        %v10967 = vadd.f32 %v10897, %v10966
        %v10968 = vpop.f32.mrb[0].mxu0
        %10969 = vdwg.mxu0
        %10970 = vmatprep.subr.mxu0 %v551
        %10971 = vmatpush1.xpose.msra.mxu0 %v550
        %10972 = vmatprep.subr.mxu0 %v807
        %10973 = vmatpush1.xpose.msra.mxu0 %v806
        %10974 = vmatprep.subr.mxu0 0.0
        %10975 = vmatpush1.xpose.msra.mxu0 0.0
        %10976 = vmatprep.subr.mxu0 0.0
        %10977 = vmatpush1.xpose.msra.mxu0 0.0
        %10978 = vmatprep.subr.mxu0 0.0
        %10979 = vmatpush1.xpose.msra.mxu0 0.0
        %10980 = vmatprep.subr.mxu0 0.0
        %10981 = vmatpush1.xpose.msra.mxu0 0.0
        %10982 = vmatprep.subr.mxu0 0.0
        %10983 = vmatpush1.xpose.msra.mxu0 0.0
        %10984 = vmatprep.subr.mxu0 0.0
        %10985 = vmatpush1.xpose.msra.mxu0 0.0
        %10986 = vmatprep.subr.mxu0 0.0
        %10987 = vmatpush1.xpose.msra.mxu0 0.0
        %10988 = vmatprep.subr.mxu0 0.0
        %10989 = vmatpush1.xpose.msra.mxu0 0.0
        %10990 = vmatprep.subr.mxu0 0.0
        %10991 = vmatpush1.xpose.msra.mxu0 0.0
        %10992 = vmatprep.subr.mxu0 0.0
        %10993 = vmatpush1.xpose.msra.mxu0 0.0
        %10994 = vmatprep.subr.mxu0 0.0
        %10995 = vmatpush1.xpose.msra.mxu0 0.0
        %10996 = vmatprep.subr.mxu0 0.0
        %10997 = vmatpush1.xpose.msra.mxu0 0.0
        %10998 = vmatprep.subr.mxu0 0.0
        %10999 = vmatpush1.xpose.msra.mxu0 0.0
        %11000 = vmatprep.subr.mxu0 0.0
        %11001 = vmatpush1.xpose.msra.mxu0 0.0
        %11002 = vmatprep.subr.mxu0 0.0
        %11003 = vmatpush1.xpose.msra.mxu0 0.0
        %11004 = vmatprep.subr.mxu0 0.0
        %11005 = vmatpush1.xpose.msra.mxu0 0.0
        %11006 = vmatprep.subr.mxu0 0.0
        %11007 = vmatpush1.xpose.msra.mxu0 0.0
        %11008 = vmatprep.subr.mxu0 0.0
        %11009 = vmatpush1.xpose.msra.mxu0 0.0
        %11010 = vmatprep.subr.mxu0 0.0
        %11011 = vmatpush1.xpose.msra.mxu0 0.0
        %11012 = vmatprep.subr.mxu0 0.0
        %11013 = vmatpush1.xpose.msra.mxu0 0.0
        %11014 = vmatprep.subr.mxu0 0.0
        %11015 = vmatpush1.xpose.msra.mxu0 0.0
        %11016 = vmatprep.subr.mxu0 0.0
        %11017 = vmatpush1.xpose.msra.mxu0 0.0
        %11018 = vmatprep.subr.mxu0 0.0
        %11019 = vmatpush1.xpose.msra.mxu0 0.0
        %11020 = vmatprep.subr.mxu0 0.0
        %11021 = vmatpush1.xpose.msra.mxu0 0.0
        %11022 = vmatprep.subr.mxu0 0.0
        %11023 = vmatpush1.xpose.msra.mxu0 0.0
        %11024 = vmatprep.subr.mxu0 0.0
        %11025 = vmatpush1.xpose.msra.mxu0 0.0
        %11026 = vmatprep.subr.mxu0 0.0
        %11027 = vmatpush1.xpose.msra.mxu0 0.0
        %11028 = vmatprep.subr.mxu0 0.0
        %11029 = vmatpush1.xpose.msra.mxu0 0.0
        %11030 = vmatprep.subr.mxu0 0.0
        %11031 = vmatpush1.xpose.msra.mxu0 0.0
        %11032 = vmatprep.subr.mxu0 0.0
        %11033 = vmatpush1.xpose.msra.mxu0 0.0
        %11034 = vmatprep.mubr.f32.mxu0 %v1946
        %11035 = vmatmul.mubr.f32.gmra.mrb[0].mxu0 %v1944
        %v11036 = vpop.f32.mrb[0].mxu0
        %v11037 = vadd.f32 %v10967, %v11036
        %v11038 = vpop.f32.mrb[0].mxu0
        %11039 = vdwg.mxu0
        %11040 = vmatprep.subr.mxu0 %v553
        %11041 = vmatpush1.xpose.msra.mxu0 %v552
        %11042 = vmatprep.subr.mxu0 %v809
        %11043 = vmatpush1.xpose.msra.mxu0 %v808
        %11044 = vmatprep.subr.mxu0 0.0
        %11045 = vmatpush1.xpose.msra.mxu0 0.0
        %11046 = vmatprep.subr.mxu0 0.0
        %11047 = vmatpush1.xpose.msra.mxu0 0.0
        %11048 = vmatprep.subr.mxu0 0.0
        %11049 = vmatpush1.xpose.msra.mxu0 0.0
        %11050 = vmatprep.subr.mxu0 0.0
        %11051 = vmatpush1.xpose.msra.mxu0 0.0
        %11052 = vmatprep.subr.mxu0 0.0
        %11053 = vmatpush1.xpose.msra.mxu0 0.0
        %11054 = vmatprep.subr.mxu0 0.0
        %11055 = vmatpush1.xpose.msra.mxu0 0.0
        %11056 = vmatprep.subr.mxu0 0.0
        %11057 = vmatpush1.xpose.msra.mxu0 0.0
        %11058 = vmatprep.subr.mxu0 0.0
        %11059 = vmatpush1.xpose.msra.mxu0 0.0
        %11060 = vmatprep.subr.mxu0 0.0
        %11061 = vmatpush1.xpose.msra.mxu0 0.0
        %11062 = vmatprep.subr.mxu0 0.0
        %11063 = vmatpush1.xpose.msra.mxu0 0.0
        %11064 = vmatprep.subr.mxu0 0.0
        %11065 = vmatpush1.xpose.msra.mxu0 0.0
        %11066 = vmatprep.subr.mxu0 0.0
        %11067 = vmatpush1.xpose.msra.mxu0 0.0
        %11068 = vmatprep.subr.mxu0 0.0
        %11069 = vmatpush1.xpose.msra.mxu0 0.0
        %11070 = vmatprep.subr.mxu0 0.0
        %11071 = vmatpush1.xpose.msra.mxu0 0.0
        %11072 = vmatprep.subr.mxu0 0.0
        %11073 = vmatpush1.xpose.msra.mxu0 0.0
        %11074 = vmatprep.subr.mxu0 0.0
        %11075 = vmatpush1.xpose.msra.mxu0 0.0
        %11076 = vmatprep.subr.mxu0 0.0
        %11077 = vmatpush1.xpose.msra.mxu0 0.0
        %11078 = vmatprep.subr.mxu0 0.0
        %11079 = vmatpush1.xpose.msra.mxu0 0.0
        %11080 = vmatprep.subr.mxu0 0.0
        %11081 = vmatpush1.xpose.msra.mxu0 0.0
        %11082 = vmatprep.subr.mxu0 0.0
        %11083 = vmatpush1.xpose.msra.mxu0 0.0
        %11084 = vmatprep.subr.mxu0 0.0
        %11085 = vmatpush1.xpose.msra.mxu0 0.0
        %11086 = vmatprep.subr.mxu0 0.0
        %11087 = vmatpush1.xpose.msra.mxu0 0.0
        %11088 = vmatprep.subr.mxu0 0.0
        %11089 = vmatpush1.xpose.msra.mxu0 0.0
        %11090 = vmatprep.subr.mxu0 0.0
        %11091 = vmatpush1.xpose.msra.mxu0 0.0
        %11092 = vmatprep.subr.mxu0 0.0
        %11093 = vmatpush1.xpose.msra.mxu0 0.0
        %11094 = vmatprep.subr.mxu0 0.0
        %11095 = vmatpush1.xpose.msra.mxu0 0.0
        %11096 = vmatprep.subr.mxu0 0.0
        %11097 = vmatpush1.xpose.msra.mxu0 0.0
        %11098 = vmatprep.subr.mxu0 0.0
        %11099 = vmatpush1.xpose.msra.mxu0 0.0
        %11100 = vmatprep.subr.mxu0 0.0
        %11101 = vmatpush1.xpose.msra.mxu0 0.0
        %11102 = vmatprep.subr.mxu0 0.0
        %11103 = vmatpush1.xpose.msra.mxu0 0.0
        %11104 = vmatprep.mubr.f32.mxu0 %v1962
        %11105 = vmatmul.mubr.f32.gmra.mrb[0].mxu0 %v1954
        %v11106 = vpop.f32.mrb[0].mxu0
        %v11107 = vadd.f32 %v11037, %v11106
        %v11108 = vpop.f32.mrb[0].mxu0
        %11109 = vdwg.mxu0
        %11110 = vmatprep.subr.mxu0 %v555
        %11111 = vmatpush1.xpose.msra.mxu0 %v554
        %11112 = vmatprep.subr.mxu0 %v811
        %11113 = vmatpush1.xpose.msra.mxu0 %v810
        %11114 = vmatprep.subr.mxu0 0.0
        %11115 = vmatpush1.xpose.msra.mxu0 0.0
        %11116 = vmatprep.subr.mxu0 0.0
        %11117 = vmatpush1.xpose.msra.mxu0 0.0
        %11118 = vmatprep.subr.mxu0 0.0
        %11119 = vmatpush1.xpose.msra.mxu0 0.0
        %11120 = vmatprep.subr.mxu0 0.0
        %11121 = vmatpush1.xpose.msra.mxu0 0.0
        %11122 = vmatprep.subr.mxu0 0.0
        %11123 = vmatpush1.xpose.msra.mxu0 0.0
        %11124 = vmatprep.subr.mxu0 0.0
        %11125 = vmatpush1.xpose.msra.mxu0 0.0
        %11126 = vmatprep.subr.mxu0 0.0
        %11127 = vmatpush1.xpose.msra.mxu0 0.0
        %11128 = vmatprep.subr.mxu0 0.0
        %11129 = vmatpush1.xpose.msra.mxu0 0.0
        %11130 = vmatprep.subr.mxu0 0.0
        %11131 = vmatpush1.xpose.msra.mxu0 0.0
        %11132 = vmatprep.subr.mxu0 0.0
        %11133 = vmatpush1.xpose.msra.mxu0 0.0
        %11134 = vmatprep.subr.mxu0 0.0
        %11135 = vmatpush1.xpose.msra.mxu0 0.0
        %11136 = vmatprep.subr.mxu0 0.0
        %11137 = vmatpush1.xpose.msra.mxu0 0.0
        %11138 = vmatprep.subr.mxu0 0.0
        %11139 = vmatpush1.xpose.msra.mxu0 0.0
        %11140 = vmatprep.subr.mxu0 0.0
        %11141 = vmatpush1.xpose.msra.mxu0 0.0
        %11142 = vmatprep.subr.mxu0 0.0
        %11143 = vmatpush1.xpose.msra.mxu0 0.0
        %11144 = vmatprep.subr.mxu0 0.0
        %11145 = vmatpush1.xpose.msra.mxu0 0.0
        %11146 = vmatprep.subr.mxu0 0.0
        %11147 = vmatpush1.xpose.msra.mxu0 0.0
        %11148 = vmatprep.subr.mxu0 0.0
        %11149 = vmatpush1.xpose.msra.mxu0 0.0
        %11150 = vmatprep.subr.mxu0 0.0
        %11151 = vmatpush1.xpose.msra.mxu0 0.0
        %11152 = vmatprep.subr.mxu0 0.0
        %11153 = vmatpush1.xpose.msra.mxu0 0.0
        %11154 = vmatprep.subr.mxu0 0.0
        %11155 = vmatpush1.xpose.msra.mxu0 0.0
        %11156 = vmatprep.subr.mxu0 0.0
        %11157 = vmatpush1.xpose.msra.mxu0 0.0
        %11158 = vmatprep.subr.mxu0 0.0
        %11159 = vmatpush1.xpose.msra.mxu0 0.0
        %11160 = vmatprep.subr.mxu0 0.0
        %11161 = vmatpush1.xpose.msra.mxu0 0.0
        %11162 = vmatprep.subr.mxu0 0.0
        %11163 = vmatpush1.xpose.msra.mxu0 0.0
        %11164 = vmatprep.subr.mxu0 0.0
        %11165 = vmatpush1.xpose.msra.mxu0 0.0
        %11166 = vmatprep.subr.mxu0 0.0
        %11167 = vmatpush1.xpose.msra.mxu0 0.0
        %11168 = vmatprep.subr.mxu0 0.0
        %11169 = vmatpush1.xpose.msra.mxu0 0.0
        %11170 = vmatprep.subr.mxu0 0.0
        %11171 = vmatpush1.xpose.msra.mxu0 0.0
        %11172 = vmatprep.subr.mxu0 0.0
        %11173 = vmatpush1.xpose.msra.mxu0 0.0
        %11174 = vmatprep.mubr.f32.mxu0 %v1963
        %11175 = vmatmul.mubr.f32.gmra.mrb[0].mxu0 %v1961
        %v11176 = vpop.f32.mrb[0].mxu0
        %v11177 = vadd.f32 %v11107, %v11176
        %v11178 = vpop.f32.mrb[0].mxu0
        %11179 = vdwg.mxu0
        %v11180 = vld [vmem:[%s223] sm:$0x3]
        %v11181 = vadd.f32 %v11180, %v11177
        %vm11182 = vcmask 74752
        %11183 = vst.msk [vmem:[%s223] sm:$0x3] %vm11182, %v11181
        %s11184 = sand.u32 %s102, 1
        %s11185 = scalar_lea.sflag [#allocation4], %s11184
        %s11186 = sand.u32 %s102, 1
        %s11187 = smul.addr %s11186, 2
        %s11188 = scalar_lea.vmem [#allocation7], %s11187
        // Predicated region
        $region41: #{tpu_custom_call.1} parent=27 // pred_check
          %p11189 = pneg %p112
        $region42: #{tpu_custom_call.1} parent=27 // pred_check_branch
          %11191 = sbr.rel (%p11189) target = $region44
        $region43: #{tpu_custom_call.1} parent=27 // pred_region
          %s11193 = ssub.s32 32, 32
          %11194 = vsyncadd %s11185, %s11193
          %s11195 = smul.addr %s26, 32
          %s11196 = scalar_lea.hbm %s2, %s11195
          %s11198 = sshll.u32 %s11188, 4
          %s11199 = int_to_ptr.vmem [resolvable:$true] %s11198
          %11201 = dma.vmem_to_hbm [thread:$0]  %s11199, 32, %s11196, %s11185
        $region44: #{tpu_custom_call.1} parent=27 // pred_fallthru
          _
      $region28: #{tpu_custom_call.1} parent=5 // pred_fallthru
        _
      %p11202 = scmp.le.s32.totalorder 2, %s17
      // Predicated region
      $region45: #{tpu_custom_call.1} parent=5 // pred_check
        %p11203 = pneg %p11202
      $region46: #{tpu_custom_call.1} parent=5 // pred_check_branch
        %11205 = sbr.rel (%p11203) target = $region48
      $region47: #{tpu_custom_call.1} parent=5 // pred_region
        %s11206 = ssub.s32 %s17, 2
        // Predicated region
        $region49: #{tpu_custom_call.1} parent=47 // pred_check
          %p11207 = pneg %p118
        $region50: #{tpu_custom_call.1} parent=47 // pred_check_branch
          %11209 = sbr.rel (%p11207) target = $region52
        $region51: #{tpu_custom_call.1} parent=47 // pred_region
          %s11210 = sand.u32 %s103, 1
          %s11211 = scalar_lea.sflag [#allocation4], %s11210
          %s11212 = sand.u32 %s103, 1
          %s11213 = smul.addr %s11212, 2
          %s11214 = scalar_lea.vmem [#allocation7], %s11213
          %11215 = dma.done %s11211, 32
        $region52: #{tpu_custom_call.1} parent=47 // pred_fallthru
          _
      $region48: #{tpu_custom_call.1} parent=5 // pred_fallthru
        _
    $region6: #{tpu_custom_call.1} parent=1 // loop_footer
      %s21 = sadd.s32 1, %s17
    $region7: #{tpu_custom_call.1} parent=1 // loop_footer_branch
      %16 = sbr.rel target = $region3
    $region8: #{tpu_custom_call.1} parent=1 // loop_exit
      _
    %11216 = vsyncpa [#allocation3], 1
    %s11217 = scalar_lea.sflag [#allocation3], 1
    %11218 = vsyncpa %s11217, 1
    %11219 = vsyncpa [#allocation6], 1
    %s11220 = scalar_lea.sflag [#allocation6], 1
    %11221 = vsyncpa %s11220, 1
    %11222 = vsyncpa [#allocation4], 1
    %s11223 = scalar_lea.sflag [#allocation4], 1
    %11224 = vsyncpa %s11223, 1

</llo_original>
